<compile_context>
chip_gen: v6e
topology: v6e:2x2x1
jax: 0.10.0
libtpu: 0.0.40
codegen_flags: <defaults>
</compile_context>

<pallas_src>
import functools

import jax
import jax.numpy as jnp
import numpy as np
from jax.experimental import pallas as pl
from jax.experimental.pallas import tpu as pltpu

LN_EPS = 1e-5  # torch.nn.LayerNorm default


def _layer_norm(h, gamma, beta):
    mu = jnp.mean(h, axis=-1, keepdims=True)
    var = jnp.mean((h - mu) ** 2, axis=-1, keepdims=True)
    return (h - mu) * jax.lax.rsqrt(var + LN_EPS) * gamma + beta


# ----------------------------- Pallas kernel -----------------------------

def _decoder_layer_kernel(num_head, approx_recip,
                          x_ref, mem_ref, mbias_ref, mmbias_ref,
                          w_qkv1, b_qkv1, wo1, bo1, g1, be1,
                          wq2, bq2, w_kv2, b_kv2, wo2, bo2, g2, be2,
                          w1, b1, w2, b2, g3, be3,
                          out_ref, slf_ref, src_ref):
    Bt, T, D = x_ref.shape
    S = mem_ref.shape[1]
    H = num_head
    dk = D // H
    f32 = jnp.float32
    cdt = w_qkv1.dtype                       # matmul-operand dtype (bf16 or f32)

    x = x_ref[...].reshape(Bt * T, D).astype(f32)
    mem = mem_ref[...].reshape(Bt * S, D)

    def mm(a, w_ref, b_ref):
        # matmul operands in `cdt`, accumulation always f32 on the MXU
        return jnp.dot(a.astype(cdt), w_ref[...], preferred_element_type=f32) + b_ref[...]

    def attention(q_flat, k_flat, v_flat, kv_rows, bias_ref, wo_ref, bo_ref, attn_ref):
        # (Bt*rows, D) -> (Bt, rows, D): leading-dim split only (no lane/sublane relayout).
        # Activations are cast to the compute dtype once per tensor, then sliced per head.
        q3 = q_flat.reshape(Bt, T, D).astype(cdt)          # Q already pre-scaled by 1/sqrt(dk)
        k3 = k_flat.reshape(Bt, kv_rows, D).astype(cdt)
        v3 = v_flat.reshape(Bt, kv_rows, D).astype(cdt)
        bias = bias_ref[...].astype(f32)                   # (Mb, T, kv), Mb in {1, Bt}

        ctx_heads = []
        for h in range(H):                                  # unrolled over H (not Bt*H)
            sl = slice(h * dk, (h + 1) * dk)
            # scores[b,t,s] = sum_d Q[b,t,h,d] K[b,s,h,d]  — one Bt-batched MXU contraction
            scores = jax.lax.dot_general(
                q3[:, :, sl], k3[:, :, sl],
                dimension_numbers=(((2,), (2,)), ((0,), (0,))),
                preferred_element_type=f32)                 # (Bt, T, kv)
            scores = scores + bias                          # implicit broadcast if Mb == 1

            m = jnp.max(scores, axis=-1, keepdims=True)
            e = jnp.exp(scores - m)
            denom = jnp.sum(e, axis=-1, keepdims=True)
            attn = e * pl.reciprocal(denom, approx=approx_recip)   # EUP reciprocal

            # dense (T, kv) store per head / batch slab into the attention-map block
            attn_ref[:, h, :, :] = attn.astype(attn_ref.dtype)

            ctx_heads.append(jax.lax.dot_general(
                attn.astype(cdt), v3[:, :, sl],
                dimension_numbers=(((2,), (1,)), ((0,), (0,))),
                preferred_element_type=f32))                # (Bt, T, dk)

        # one lane-concat of the head contexts, then a single full-depth Wo matmul
        ctx = jnp.concatenate(ctx_heads, axis=-1).reshape(Bt * T, D)
        return mm(ctx, wo_ref, bo_ref)

    # ---- self-attention: fused QKV projection (Q columns pre-scaled on host) ----
    qkv = mm(x, w_qkv1, b_qkv1)                 # (Bt*T, 3D)
    o1 = attention(qkv[:, :D], qkv[:, D:2 * D], qkv[:, 2 * D:], T,
                   mbias_ref, wo1, bo1, slf_ref)
    h1 = _layer_norm(x + o1, g1[...], be1[...])

    # ---- source (memory) attention: fused KV projection on memory ----
    q2 = mm(h1, wq2, bq2)                       # (Bt*T, D), pre-scaled
    kv = mm(mem, w_kv2, b_kv2)                  # (Bt*S, 2D)
    o2 = attention(q2, kv[:, :D], kv[:, D:], S,
                   mmbias_ref, wo2, bo2, src_ref)
    h2 = _layer_norm(h1 + o2, g2[...], be2[...])

    # ---- position-wise FFN (dropout = identity in eval mode) ----
    u = jnp.maximum(mm(h2, w1, b1), 0.0)
    o3 = mm(u, w2, b2)
    y = _layer_norm(h2 + o3, g3[...], be3[...])

    out_ref[...] = y.reshape(Bt, T, D).astype(out_ref.dtype)


# ----------------------------- sizing helpers -----------------------------

def _vmem_limit_bytes():
    """Per-generation VMEM limit: ~104 MiB on v5e/v6e (128 MiB), 48 MiB fallback (v7x)."""
    try:
        cap = int(pltpu.get_tpu_info().vmem_capacity_bytes)
    except Exception:
        cap = 64 * 1024 * 1024                 # conservative: v7x per-TC VMEM
    return max(int(cap * 0.75), cap - 24 * 1024 * 1024)


def _per_step_vmem_bytes(Bt, T, S, D, F, H, attn_itemsize, weight_bytes):
    f32b = 4
    kv = max(T, S)
    act = Bt * T * (8 * D + F) * f32b          # x, qkv, h1, h2, attn outs, ffn hidden
    act += Bt * S * 3 * D * f32b               # memory tokens + fused KV projection
    soft = 6 * Bt * T * kv * f32b              # live softmax intermediates (a few heads deep)
    maps = 2 * Bt * H * T * (T + S) * attn_itemsize   # attention-map output blocks (2 bufs)
    io = 2 * 2 * Bt * (T + S) * D * f32b       # x/mem in + out activation blocks
    return act + soft + maps + io + weight_bytes


def _choose_batch_block(B, T, S, D, F, H, compute_dtype, attn_dtype, vmem_limit,
                        token_target=256):
    """>=256 tokens per step (256x256 MXU on v6e/v7x), VMEM-budgeted, >=2 grid steps
    when B allows so both v7x TensorCores get work (single step is fine for 1-TC chips)."""
    cdt_size = jnp.dtype(compute_dtype).itemsize
    attn_size = jnp.dtype(attn_dtype).itemsize
    weight_bytes = (8 * D * D + 2 * D * F) * cdt_size    # single-buffered packed weights
    budget = int(vmem_limit * 0.7)

    divisors = [d for d in range(1, B + 1) if B % d == 0]
    fitting = [d for d in divisors
               if _per_step_vmem_bytes(d, T, S, D, F, H, attn_size, weight_bytes) <= budget]
    if not fitting:
        fitting = [1]
    pref = [d for d in fitting if B // d >= 2] or fitting
    for d in pref:                              # smallest block hitting the token target
        if d * T >= token_target:
            return d
    return pref[-1]                             # otherwise the largest fitting block


# ----------------------------- wrapper -----------------------------

_SINGLE_BUFFER_OK = True  # flipped off if this Pallas version rejects pl.Buffered(1)


def decoder_layer_pallas(x, memory, mask_bias, mem_bias, packed_params,
                         num_head, batch_block, approx_recip, attn_dtype, vmem_limit):
    global _SINGLE_BUFFER_OK
    B, T, D = x.shape
    S = memory.shape[1]
    Bt = batch_block
    assert B % Bt == 0

    def const_spec(a, single_buffer):
        nd = a.ndim
        idx = lambda b, _nd=nd: (0,) * _nd
        if single_buffer:
            # grid-invariant block: one VMEM buffer instead of two (critical on v7x 64 MiB)
            return pl.BlockSpec(a.shape, idx, pipeline_mode=pl.Buffered(1))
        return pl.BlockSpec(a.shape, idx)

    def mask_spec(m, kv, single_buffer):
        if m.shape[0] == 1:                     # shared mask: fetched once, no per-step DMA
            return const_spec(m, single_buffer)
        assert m.shape[0] == B
        return pl.BlockSpec((Bt, T, kv), lambda b: (b, 0, 0))

    def build_and_run(single_buffer):
        in_specs = [
            pl.BlockSpec((Bt, T, D), lambda b: (b, 0, 0)),
            pl.BlockSpec((Bt, S, D), lambda b: (b, 0, 0)),
            mask_spec(mask_bias, T, single_buffer),
            mask_spec(mem_bias, S, single_buffer),
        ] + [const_spec(w, single_buffer) for w in packed_params]

        out_shape = (
            jax.ShapeDtypeStruct((B, T, D), x.dtype),
            jax.ShapeDtypeStruct((B, num_head, T, T), attn_dtype),
            jax.ShapeDtypeStruct((B, num_head, T, S), attn_dtype),
        )
        out_specs = (
            pl.BlockSpec((Bt, T, D), lambda b: (b, 0, 0)),
            pl.BlockSpec((Bt, num_head, T, T), lambda b: (b, 0, 0, 0)),
            pl.BlockSpec((Bt, num_head, T, S), lambda b: (b, 0, 0, 0)),
        )

        kernel = functools.partial(_decoder_layer_kernel, num_head, approx_recip)
        return pl.pallas_call(
            kernel,
            grid=(B // Bt,),
            in_specs=in_specs,
            out_specs=out_specs,
            out_shape=out_shape,
            compiler_params=pltpu.CompilerParams(
                dimension_semantics=("parallel",),
                vmem_limit_bytes=vmem_limit,
            ),
        )(x, memory, mask_bias, mem_bias, *packed_params)

    if _SINGLE_BUFFER_OK:
        try:
            return build_and_run(True)
        except Exception:
            _SINGLE_BUFFER_OK = False           # fall back to default double buffering
    return build_and_run(False)


def pack_layer_params(p, num_head, compute_dtype):
    """Pack raw per-layer params into the fused layout; fold 1/sqrt(dk) into Q weights."""
    (wq1, bq1, wk1, bk1, wv1, bv1, wo1, bo1, g1, be1,
     wq2, bq2, wk2, bk2, wv2, bv2, wo2, bo2, g2, be2,
     w1, b1, w2, b2, g3, be3) = p
    cd = compute_dtype
    D = wq1.shape[0]
    scale = 1.0 / float(np.sqrt(D // num_head))
    return [
        jnp.concatenate([wq1 * scale, wk1, wv1], axis=1).astype(cd),   # w_qkv1 (D, 3D)
        jnp.concatenate([bq1 * scale, bk1, bv1], axis=1),              # b_qkv1 (1, 3D)
        wo1.astype(cd), bo1, g1, be1,
        (wq2 * scale).astype(cd), bq2 * scale,
        jnp.concatenate([wk2, wv2], axis=1).astype(cd),                # w_kv2 (D, 2D)
        jnp.concatenate([bk2, bv2], axis=1),                           # b_kv2 (1, 2D)
        wo2.astype(cd), bo2, g2, be2,
        w1.astype(cd), b1, w2.astype(cd), b2, g3, be3,
    ]


def decoder_forward(x, memory, mask, memory_mask, params, num_head,
                    compute_dtype=jnp.bfloat16, attn_dtype=jnp.float32, batch_block=None):
    """Equivalent of Decoder.forward -> (out, attns, conn_attns)."""
    B, T, _D = x.shape
    S = memory.shape[1]

    # Additive mask bias in bf16 (half the DMA); masked_fill(mask == 0, -1e9) equivalent.
    def to_bias(m, kv):
        if m is None:
            return jnp.zeros((1, T, kv), jnp.bfloat16)
        m = jnp.asarray(m)
        if m.ndim == 2:
            m = m[None]
        return jnp.where(m > 0, 0.0, -1e9).astype(jnp.bfloat16)

    mask_bias = to_bias(mask, T)
    mem_bias = to_bias(memory_mask, S)

    d_ff = params[0][20].shape[1]
    vmem_limit = _vmem_limit_bytes()
    if batch_block is None:
        batch_block = _choose_batch_block(B, T, S, _D, d_ff, num_head,
                                          compute_dtype, attn_dtype, vmem_limit)

    approx = jnp.dtype(compute_dtype) == jnp.dtype(jnp.bfloat16)

    out = x
    attns, conn_attns = [], []
    for lp in params:
        packed = pack_layer_params(lp, num_head, compute_dtype)
        out, a, c = decoder_layer_pallas(out, memory, mask_bias, mem_bias, packed,
                                         num_head, batch_block, approx, attn_dtype,
                                         vmem_limit)
        attns.append(a)
        conn_attns.append(c)
    return out, attns, conn_attns


# ----------------------------- parameter init -----------------------------

def _init_layer_params(key, d_model, d_ff):
    """Raw (torch-like) per-layer parameter list; biases / LN params as (1, N) rows."""
    ks = jax.random.split(key, 12)
    std = 0.02

    def lin(k, din, dout):
        return jax.random.normal(k, (din, dout), jnp.float32) * std

    def zero(n):
        return jnp.zeros((1, n), jnp.float32)

    def ones(n):
        return jnp.ones((1, n), jnp.float32)

    D, F = d_model, d_ff
    return [
        # self-attention
        lin(ks[0], D, D), zero(D), lin(ks[1], D, D), zero(D),
        lin(ks[2], D, D), zero(D), lin(ks[3], D, D), zero(D),
        ones(D), zero(D),
        # src-attention
        lin(ks[4], D, D), zero(D), lin(ks[5], D, D), zero(D),
        lin(ks[6], D, D), zero(D), lin(ks[7], D, D), zero(D),
        ones(D), zero(D),
        # FFN
        lin(ks[8], D, F), zero(F), lin(ks[9], F, D), zero(D),
        ones(D), zero(D),
    ]


# ----------------------------- pure-JAX reference (f32) -----------------------------

def _ref_mha(q_in, kv_in, mask, wq, bq, wk, bk, wv, bv, wo, bo, g, be, num_head):
    B, T, D = q_in.shape
    S = kv_in.shape[1]
    dk = D // num_head
    Q = (q_in @ wq + bq).reshape(B, T, num_head, dk)
    K = (kv_in @ wk + bk).reshape(B, S, num_head, dk)
    V = (kv_in @ wv + bv).reshape(B, S, num_head, dk)
    scores = jnp.einsum('bthd,bshd->bhts', Q, K) / np.sqrt(dk)
    scores = jnp.where(mask[:, None] > 0, scores, -1e9)
    attn = jax.nn.softmax(scores, axis=-1)
    ctx = jnp.einsum('bhts,bshd->bthd', attn, V).reshape(B, T, D)
    o = ctx @ wo + bo
    return _layer_norm(q_in + o, g, be), attn


def _ref_layer(x, memory, mask, mmask, p, num_head):
    h1, slf = _ref_mha(x, x, mask, *p[0:10], num_head)
    h2, src = _ref_mha(h1, memory, mmask, *p[10:20], num_head)
    w1, b1, w2, b2, g3, be3 = p[20:26]
    u = jnp.maximum(h2 @ w1 + b1, 0.0)
    o = u @ w2 + b2
    return _layer_norm(h2 + o, g3, be3), slf, src


def _ref_decoder(x, memory, mask, mmask, params, num_head):
    out = x
    attns, conns = [], []
    for p in params:
        out, a, c = _ref_layer(out, memory, mask, mmask, p, num_head)
        attns.append(a)
        conns.append(c)
    return out, attns, conns


# ----------------------------- main -----------------------------

if __name__ == "__main__":
    key = jax.random.PRNGKey(0)

    B, T, S = 2, 8, 8
    num_layer, num_head, d_model, d_ff = 2, 4, 32, 64
    max_length = T  # stored-only attribute of the PyTorch module

    k_x, k_m, k_p = jax.random.split(key, 3)
    x = jax.random.normal(k_x, (B, T, d_model), jnp.float32)
    memory = jax.random.normal(k_m, (B, S, d_model), jnp.float32)

    # shared causal self-attention mask (1 = keep, 0 = masked), memory mask with the last
    # memory position masked out — batch dim 1 exercises the constant-index (no per-step
    # DMA) mask path; the reference broadcasts the same masks over the batch.
    mask = jnp.tril(jnp.ones((T, T), jnp.float32))[None]             # (1, T, T)
    memory_mask = jnp.ones((1, T, S), jnp.float32).at[:, :, -1].set(0.0)

    layer_keys = jax.random.split(k_p, num_layer)
    params = [_init_layer_params(layer_keys[i], d_model, d_ff) for i in range(num_layer)]

    # pure-JAX f32 reference (PyTorch module semantics, eval mode)
    ref_out, ref_attns, ref_conns = _ref_decoder(x, memory, mask, memory_mask,
                                                 params, num_head)

    # 1) exact-precision path (f32 matmul operands) — tight check
    out, attns, conns = decoder_forward(x, memory, mask, memory_mask, params, num_head,
                                        compute_dtype=jnp.float32)
    jax.block_until_ready(out)
    for a in attns + conns:
        jax.block_until_ready(a)
    np.testing.assert_allclose(np.asarray(out), np.asarray(ref_out), rtol=2e-3, atol=2e-3)
    for a, r in zip(attns + conns, ref_attns + ref_conns):
        np.testing.assert_allclose(np.asarray(a), np.asarray(r), rtol=2e-3, atol=2e-3)

    # 2) fast path: bf16 matmul operands, f32 accumulation / softmax / LayerNorm
    out_bf, attns_bf, conns_bf = decoder_forward(x, memory, mask, memory_mask, params,
                                                 num_head, compute_dtype=jnp.bfloat16)
    jax.block_until_ready(out_bf)
    for a in attns_bf + conns_bf:
        jax.block_until_ready(a)
    np.testing.assert_allclose(np.asarray(out_bf), np.asarray(ref_out), rtol=2e-2, atol=2e-2)
    for a, r in zip(attns_bf + conns_bf, ref_attns + ref_conns):
        np.testing.assert_allclose(np.asarray(a), np.asarray(r), rtol=2e-2, atol=2e-2)

    print("KERNEL_OK")
</pallas_src>

<mosaic_0001>
module attributes {stable_mosaic.version = 11 : i64} {
  func.func @_decoder_layer_kernel(%arg0: i32, %arg1: memref<1x8x32xf32, #tpu.memory_space<vmem>>, %arg2: memref<1x8x32xf32, #tpu.memory_space<vmem>>, %arg3: memref<1x8x8xbf16, #tpu.memory_space<vmem>>, %arg4: memref<1x8x8xbf16, #tpu.memory_space<vmem>>, %arg5: memref<32x96xf32, #tpu.memory_space<vmem>>, %arg6: memref<1x96xf32, #tpu.memory_space<vmem>>, %arg7: memref<32x32xf32, #tpu.memory_space<vmem>>, %arg8: memref<1x32xf32, #tpu.memory_space<vmem>>, %arg9: memref<1x32xf32, #tpu.memory_space<vmem>>, %arg10: memref<1x32xf32, #tpu.memory_space<vmem>>, %arg11: memref<32x32xf32, #tpu.memory_space<vmem>>, %arg12: memref<1x32xf32, #tpu.memory_space<vmem>>, %arg13: memref<32x64xf32, #tpu.memory_space<vmem>>, %arg14: memref<1x64xf32, #tpu.memory_space<vmem>>, %arg15: memref<32x32xf32, #tpu.memory_space<vmem>>, %arg16: memref<1x32xf32, #tpu.memory_space<vmem>>, %arg17: memref<1x32xf32, #tpu.memory_space<vmem>>, %arg18: memref<1x32xf32, #tpu.memory_space<vmem>>, %arg19: memref<32x64xf32, #tpu.memory_space<vmem>>, %arg20: memref<1x64xf32, #tpu.memory_space<vmem>>, %arg21: memref<64x32xf32, #tpu.memory_space<vmem>>, %arg22: memref<1x32xf32, #tpu.memory_space<vmem>>, %arg23: memref<1x32xf32, #tpu.memory_space<vmem>>, %arg24: memref<1x32xf32, #tpu.memory_space<vmem>>, %arg25: memref<1x8x32xf32, #tpu.memory_space<vmem>>, %arg26: memref<1x4x8x8xf32, #tpu.memory_space<vmem>>, %arg27: memref<1x4x8x8xf32, #tpu.memory_space<vmem>>) attributes {dimension_semantics = [#tpu.dimension_semantics<parallel>], iteration_bounds = array<i64: 2>, scalar_prefetch = 0 : i64, scratch_operands = 0 : i64, tpu.core_type = #tpu.core_type<tc>, window_params = [{transform_indices = @transform_0, window_bounds = array<i64: 1, 8, 32>}, {transform_indices = @transform_1, window_bounds = array<i64: 1, 8, 32>}, {pipeline_mode = #tpu.pipeline_mode<synchronous>, transform_indices = @transform_2, window_bounds = array<i64: 1, 8, 8>}, {pipeline_mode = #tpu.pipeline_mode<synchronous>, transform_indices = @transform_3, window_bounds = array<i64: 1, 8, 8>}, {pipeline_mode = #tpu.pipeline_mode<synchronous>, transform_indices = @transform_4, window_bounds = array<i64: 32, 96>}, {pipeline_mode = #tpu.pipeline_mode<synchronous>, transform_indices = @transform_5, window_bounds = array<i64: 1, 96>}, {pipeline_mode = #tpu.pipeline_mode<synchronous>, transform_indices = @transform_6, window_bounds = array<i64: 32, 32>}, {pipeline_mode = #tpu.pipeline_mode<synchronous>, transform_indices = @transform_7, window_bounds = array<i64: 1, 32>}, {pipeline_mode = #tpu.pipeline_mode<synchronous>, transform_indices = @transform_8, window_bounds = array<i64: 1, 32>}, {pipeline_mode = #tpu.pipeline_mode<synchronous>, transform_indices = @transform_9, window_bounds = array<i64: 1, 32>}, {pipeline_mode = #tpu.pipeline_mode<synchronous>, transform_indices = @transform_10, window_bounds = array<i64: 32, 32>}, {pipeline_mode = #tpu.pipeline_mode<synchronous>, transform_indices = @transform_11, window_bounds = array<i64: 1, 32>}, {pipeline_mode = #tpu.pipeline_mode<synchronous>, transform_indices = @transform_12, window_bounds = array<i64: 32, 64>}, {pipeline_mode = #tpu.pipeline_mode<synchronous>, transform_indices = @transform_13, window_bounds = array<i64: 1, 64>}, {pipeline_mode = #tpu.pipeline_mode<synchronous>, transform_indices = @transform_14, window_bounds = array<i64: 32, 32>}, {pipeline_mode = #tpu.pipeline_mode<synchronous>, transform_indices = @transform_15, window_bounds = array<i64: 1, 32>}, {pipeline_mode = #tpu.pipeline_mode<synchronous>, transform_indices = @transform_16, window_bounds = array<i64: 1, 32>}, {pipeline_mode = #tpu.pipeline_mode<synchronous>, transform_indices = @transform_17, window_bounds = array<i64: 1, 32>}, {pipeline_mode = #tpu.pipeline_mode<synchronous>, transform_indices = @transform_18, window_bounds = array<i64: 32, 64>}, {pipeline_mode = #tpu.pipeline_mode<synchronous>, transform_indices = @transform_19, window_bounds = array<i64: 1, 64>}, {pipeline_mode = #tpu.pipeline_mode<synchronous>, transform_indices = @transform_20, window_bounds = array<i64: 64, 32>}, {pipeline_mode = #tpu.pipeline_mode<synchronous>, transform_indices = @transform_21, window_bounds = array<i64: 1, 32>}, {pipeline_mode = #tpu.pipeline_mode<synchronous>, transform_indices = @transform_22, window_bounds = array<i64: 1, 32>}, {pipeline_mode = #tpu.pipeline_mode<synchronous>, transform_indices = @transform_23, window_bounds = array<i64: 1, 32>}, {transform_indices = @transform_24, window_bounds = array<i64: 1, 8, 32>}, {transform_indices = @transform_25, window_bounds = array<i64: 1, 4, 8, 8>}, {transform_indices = @transform_26, window_bounds = array<i64: 1, 4, 8, 8>}]} {
    %c0 = arith.constant 0 : index
    %c0_0 = arith.constant 0 : index
    %c0_1 = arith.constant 0 : index
    %0 = vector.load %arg1[%c0, %c0_0, %c0_1] : memref<1x8x32xf32, #tpu.memory_space<vmem>>, vector<1x8x32xf32>
    %1 = vector.shape_cast %0 : vector<1x8x32xf32> to vector<8x32xf32>
    %c0_2 = arith.constant 0 : index
    %c0_3 = arith.constant 0 : index
    %c0_4 = arith.constant 0 : index
    %2 = vector.load %arg2[%c0_2, %c0_3, %c0_4] : memref<1x8x32xf32, #tpu.memory_space<vmem>>, vector<1x8x32xf32>
    %3 = vector.shape_cast %2 : vector<1x8x32xf32> to vector<8x32xf32>
    %c0_5 = arith.constant 0 : index
    %c0_6 = arith.constant 0 : index
    %4 = vector.load %arg5[%c0_5, %c0_6] : memref<32x96xf32, #tpu.memory_space<vmem>>, vector<32x96xf32>
    %cst = arith.constant dense<0.000000e+00> : vector<8x96xf32>
    %5 = tpu.matmul %1, %4, %cst {dimension_numbers = #tpu.dot_dimension_numbers<[1], [0], [0], [1], [0, 0, 1, 1], [], []>} : vector<8x32xf32>, vector<32x96xf32>, vector<8x96xf32> -> vector<8x96xf32>
    %c0_7 = arith.constant 0 : index
    %c0_8 = arith.constant 0 : index
    %6 = vector.load %arg6[%c0_7, %c0_8] : memref<1x96xf32, #tpu.memory_space<vmem>>, vector<1x96xf32>
    %7 = vector.broadcast %6 : vector<1x96xf32> to vector<8x96xf32>
    %8 = arith.addf %5, %7 : vector<8x96xf32>
    %9 = vector.extract_strided_slice %8 {offsets = [0, 0], sizes = [8, 32], strides = [1, 1]} : vector<8x96xf32> to vector<8x32xf32>
    %10 = vector.extract_strided_slice %8 {offsets = [0, 32], sizes = [8, 32], strides = [1, 1]} : vector<8x96xf32> to vector<8x32xf32>
    %11 = vector.extract_strided_slice %8 {offsets = [0, 64], sizes = [8, 32], strides = [1, 1]} : vector<8x96xf32> to vector<8x32xf32>
    %12 = vector.shape_cast %9 : vector<8x32xf32> to vector<1x8x32xf32>
    %13 = vector.shape_cast %10 : vector<8x32xf32> to vector<1x8x32xf32>
    %14 = vector.shape_cast %11 : vector<8x32xf32> to vector<1x8x32xf32>
    %c0_9 = arith.constant 0 : index
    %c0_10 = arith.constant 0 : index
    %c0_11 = arith.constant 0 : index
    %15 = vector.load %arg3[%c0_9, %c0_10, %c0_11] : memref<1x8x8xbf16, #tpu.memory_space<vmem>>, vector<1x8x8xbf16>
    %16 = arith.extf %15 : vector<1x8x8xbf16> to vector<1x8x8xf32>
    %17 = vector.extract_strided_slice %12 {offsets = [0, 0, 0], sizes = [1, 8, 8], strides = [1, 1, 1]} : vector<1x8x32xf32> to vector<1x8x8xf32>
    %18 = vector.extract_strided_slice %13 {offsets = [0, 0, 0], sizes = [1, 8, 8], strides = [1, 1, 1]} : vector<1x8x32xf32> to vector<1x8x8xf32>
    %cst_12 = arith.constant dense<0.000000e+00> : vector<1x8x8xf32>
    %19 = tpu.matmul %17, %18, %cst_12 {dimension_numbers = #tpu.dot_dimension_numbers<[2], [2], [1], [1], [0, 0, 0, 1, 1, 1], [0], [0]>} : vector<1x8x8xf32>, vector<1x8x8xf32>, vector<1x8x8xf32> -> vector<1x8x8xf32>
    %20 = arith.addf %19, %16 : vector<1x8x8xf32>
    %cst_13 = arith.constant dense<0xFF800000> : vector<1x8xf32>
    %21 = vector.multi_reduction <maximumf>, %20, %cst_13 [2] : vector<1x8x8xf32> to vector<1x8xf32>
    %22 = vector.shape_cast %21 : vector<1x8xf32> to vector<1x8x1xf32>
    %23 = vector.broadcast %22 : vector<1x8x1xf32> to vector<1x8x8xf32>
    %24 = arith.subf %20, %23 : vector<1x8x8xf32>
    %25 = math.exp %24 : vector<1x8x8xf32>
    %cst_14 = arith.constant dense<0.000000e+00> : vector<1x8xf32>
    %26 = vector.multi_reduction <add>, %25, %cst_14 [2] : vector<1x8x8xf32> to vector<1x8xf32>
    %27 = vector.shape_cast %26 : vector<1x8xf32> to vector<1x8x1xf32>
    %28 = tpu.reciprocal %27 : vector<1x8x1xf32> -> vector<1x8x1xf32>
    %29 = vector.broadcast %28 : vector<1x8x1xf32> to vector<1x8x8xf32>
    %30 = arith.mulf %25, %29 : vector<1x8x8xf32>
    %c0_15 = arith.constant 0 : index
    %c0_16 = arith.constant 0 : index
    %c0_17 = arith.constant 0 : index
    %c0_18 = arith.constant 0 : index
    %31 = vector.load %arg26[%c0_15, %c0_16, %c0_17, %c0_18] : memref<1x4x8x8xf32, #tpu.memory_space<vmem>>, vector<1x1x8x8xf32>
    %32 = vector.shape_cast %31 : vector<1x1x8x8xf32> to vector<1x8x8xf32>
    %33 = vector.shape_cast %30 : vector<1x8x8xf32> to vector<1x1x8x8xf32>
    tpu.vector_store %arg26[%c0_15, %c0_16, %c0_17, %c0_18], %33 {strides = array<i32>} : memref<1x4x8x8xf32, #tpu.memory_space<vmem>>, vector<1x1x8x8xf32>,
    %34 = vector.extract_strided_slice %14 {offsets = [0, 0, 0], sizes = [1, 8, 8], strides = [1, 1, 1]} : vector<1x8x32xf32> to vector<1x8x8xf32>
    %cst_19 = arith.constant dense<0.000000e+00> : vector<1x8x8xf32>
    %35 = tpu.matmul %30, %34, %cst_19 {dimension_numbers = #tpu.dot_dimension_numbers<[2], [1], [1], [2], [0, 0, 0, 1, 1, 2], [0], [0]>} : vector<1x8x8xf32>, vector<1x8x8xf32>, vector<1x8x8xf32> -> vector<1x8x8xf32>
    %36 = vector.extract_strided_slice %12 {offsets = [0, 0, 8], sizes = [1, 8, 8], strides = [1, 1, 1]} : vector<1x8x32xf32> to vector<1x8x8xf32>
    %37 = vector.extract_strided_slice %13 {offsets = [0, 0, 8], sizes = [1, 8, 8], strides = [1, 1, 1]} : vector<1x8x32xf32> to vector<1x8x8xf32>
    %cst_20 = arith.constant dense<0.000000e+00> : vector<1x8x8xf32>
    %38 = tpu.matmul %36, %37, %cst_20 {dimension_numbers = #tpu.dot_dimension_numbers<[2], [2], [1], [1], [0, 0, 0, 1, 1, 1], [0], [0]>} : vector<1x8x8xf32>, vector<1x8x8xf32>, vector<1x8x8xf32> -> vector<1x8x8xf32>
    %39 = arith.addf %38, %16 : vector<1x8x8xf32>
    %cst_21 = arith.constant dense<0xFF800000> : vector<1x8xf32>
    %40 = vector.multi_reduction <maximumf>, %39, %cst_21 [2] : vector<1x8x8xf32> to vector<1x8xf32>
    %41 = vector.shape_cast %40 : vector<1x8xf32> to vector<1x8x1xf32>
    %42 = vector.broadcast %41 : vector<1x8x1xf32> to vector<1x8x8xf32>
    %43 = arith.subf %39, %42 : vector<1x8x8xf32>
    %44 = math.exp %43 : vector<1x8x8xf32>
    %cst_22 = arith.constant dense<0.000000e+00> : vector<1x8xf32>
    %45 = vector.multi_reduction <add>, %44, %cst_22 [2] : vector<1x8x8xf32> to vector<1x8xf32>
    %46 = vector.shape_cast %45 : vector<1x8xf32> to vector<1x8x1xf32>
    %47 = tpu.reciprocal %46 : vector<1x8x1xf32> -> vector<1x8x1xf32>
    %48 = vector.broadcast %47 : vector<1x8x1xf32> to vector<1x8x8xf32>
    %49 = arith.mulf %44, %48 : vector<1x8x8xf32>
    %c0_23 = arith.constant 0 : index
    %c1 = arith.constant 1 : index
    %c0_24 = arith.constant 0 : index
    %c0_25 = arith.constant 0 : index
    %50 = vector.load %arg26[%c0_23, %c1, %c0_24, %c0_25] : memref<1x4x8x8xf32, #tpu.memory_space<vmem>>, vector<1x1x8x8xf32>
    %51 = vector.shape_cast %50 : vector<1x1x8x8xf32> to vector<1x8x8xf32>
    %52 = vector.shape_cast %49 : vector<1x8x8xf32> to vector<1x1x8x8xf32>
    tpu.vector_store %arg26[%c0_23, %c1, %c0_24, %c0_25], %52 {strides = array<i32>} : memref<1x4x8x8xf32, #tpu.memory_space<vmem>>, vector<1x1x8x8xf32>,
    %53 = vector.extract_strided_slice %14 {offsets = [0, 0, 8], sizes = [1, 8, 8], strides = [1, 1, 1]} : vector<1x8x32xf32> to vector<1x8x8xf32>
    %cst_26 = arith.constant dense<0.000000e+00> : vector<1x8x8xf32>
    %54 = tpu.matmul %49, %53, %cst_26 {dimension_numbers = #tpu.dot_dimension_numbers<[2], [1], [1], [2], [0, 0, 0, 1, 1, 2], [0], [0]>} : vector<1x8x8xf32>, vector<1x8x8xf32>, vector<1x8x8xf32> -> vector<1x8x8xf32>
    %55 = vector.extract_strided_slice %12 {offsets = [0, 0, 16], sizes = [1, 8, 8], strides = [1, 1, 1]} : vector<1x8x32xf32> to vector<1x8x8xf32>
    %56 = vector.extract_strided_slice %13 {offsets = [0, 0, 16], sizes = [1, 8, 8], strides = [1, 1, 1]} : vector<1x8x32xf32> to vector<1x8x8xf32>
    %cst_27 = arith.constant dense<0.000000e+00> : vector<1x8x8xf32>
    %57 = tpu.matmul %55, %56, %cst_27 {dimension_numbers = #tpu.dot_dimension_numbers<[2], [2], [1], [1], [0, 0, 0, 1, 1, 1], [0], [0]>} : vector<1x8x8xf32>, vector<1x8x8xf32>, vector<1x8x8xf32> -> vector<1x8x8xf32>
    %58 = arith.addf %57, %16 : vector<1x8x8xf32>
    %cst_28 = arith.constant dense<0xFF800000> : vector<1x8xf32>
    %59 = vector.multi_reduction <maximumf>, %58, %cst_28 [2] : vector<1x8x8xf32> to vector<1x8xf32>
    %60 = vector.shape_cast %59 : vector<1x8xf32> to vector<1x8x1xf32>
    %61 = vector.broadcast %60 : vector<1x8x1xf32> to vector<1x8x8xf32>
    %62 = arith.subf %58, %61 : vector<1x8x8xf32>
    %63 = math.exp %62 : vector<1x8x8xf32>
    %cst_29 = arith.constant dense<0.000000e+00> : vector<1x8xf32>
    %64 = vector.multi_reduction <add>, %63, %cst_29 [2] : vector<1x8x8xf32> to vector<1x8xf32>
    %65 = vector.shape_cast %64 : vector<1x8xf32> to vector<1x8x1xf32>
    %66 = tpu.reciprocal %65 : vector<1x8x1xf32> -> vector<1x8x1xf32>
    %67 = vector.broadcast %66 : vector<1x8x1xf32> to vector<1x8x8xf32>
    %68 = arith.mulf %63, %67 : vector<1x8x8xf32>
    %c0_30 = arith.constant 0 : index
    %c2 = arith.constant 2 : index
    %c0_31 = arith.constant 0 : index
    %c0_32 = arith.constant 0 : index
    %69 = vector.load %arg26[%c0_30, %c2, %c0_31, %c0_32] : memref<1x4x8x8xf32, #tpu.memory_space<vmem>>, vector<1x1x8x8xf32>
    %70 = vector.shape_cast %69 : vector<1x1x8x8xf32> to vector<1x8x8xf32>
    %71 = vector.shape_cast %68 : vector<1x8x8xf32> to vector<1x1x8x8xf32>
    tpu.vector_store %arg26[%c0_30, %c2, %c0_31, %c0_32], %71 {strides = array<i32>} : memref<1x4x8x8xf32, #tpu.memory_space<vmem>>, vector<1x1x8x8xf32>,
    %72 = vector.extract_strided_slice %14 {offsets = [0, 0, 16], sizes = [1, 8, 8], strides = [1, 1, 1]} : vector<1x8x32xf32> to vector<1x8x8xf32>
    %cst_33 = arith.constant dense<0.000000e+00> : vector<1x8x8xf32>
    %73 = tpu.matmul %68, %72, %cst_33 {dimension_numbers = #tpu.dot_dimension_numbers<[2], [1], [1], [2], [0, 0, 0, 1, 1, 2], [0], [0]>} : vector<1x8x8xf32>, vector<1x8x8xf32>, vector<1x8x8xf32> -> vector<1x8x8xf32>
    %74 = vector.extract_strided_slice %12 {offsets = [0, 0, 24], sizes = [1, 8, 8], strides = [1, 1, 1]} : vector<1x8x32xf32> to vector<1x8x8xf32>
    %75 = vector.extract_strided_slice %13 {offsets = [0, 0, 24], sizes = [1, 8, 8], strides = [1, 1, 1]} : vector<1x8x32xf32> to vector<1x8x8xf32>
    %cst_34 = arith.constant dense<0.000000e+00> : vector<1x8x8xf32>
    %76 = tpu.matmul %74, %75, %cst_34 {dimension_numbers = #tpu.dot_dimension_numbers<[2], [2], [1], [1], [0, 0, 0, 1, 1, 1], [0], [0]>} : vector<1x8x8xf32>, vector<1x8x8xf32>, vector<1x8x8xf32> -> vector<1x8x8xf32>
    %77 = arith.addf %76, %16 : vector<1x8x8xf32>
    %cst_35 = arith.constant dense<0xFF800000> : vector<1x8xf32>
    %78 = vector.multi_reduction <maximumf>, %77, %cst_35 [2] : vector<1x8x8xf32> to vector<1x8xf32>
    %79 = vector.shape_cast %78 : vector<1x8xf32> to vector<1x8x1xf32>
    %80 = vector.broadcast %79 : vector<1x8x1xf32> to vector<1x8x8xf32>
    %81 = arith.subf %77, %80 : vector<1x8x8xf32>
    %82 = math.exp %81 : vector<1x8x8xf32>
    %cst_36 = arith.constant dense<0.000000e+00> : vector<1x8xf32>
    %83 = vector.multi_reduction <add>, %82, %cst_36 [2] : vector<1x8x8xf32> to vector<1x8xf32>
    %84 = vector.shape_cast %83 : vector<1x8xf32> to vector<1x8x1xf32>
    %85 = tpu.reciprocal %84 : vector<1x8x1xf32> -> vector<1x8x1xf32>
    %86 = vector.broadcast %85 : vector<1x8x1xf32> to vector<1x8x8xf32>
    %87 = arith.mulf %82, %86 : vector<1x8x8xf32>
    %c0_37 = arith.constant 0 : index
    %c3 = arith.constant 3 : index
    %c0_38 = arith.constant 0 : index
    %c0_39 = arith.constant 0 : index
    %88 = vector.load %arg26[%c0_37, %c3, %c0_38, %c0_39] : memref<1x4x8x8xf32, #tpu.memory_space<vmem>>, vector<1x1x8x8xf32>
    %89 = vector.shape_cast %88 : vector<1x1x8x8xf32> to vector<1x8x8xf32>
    %90 = vector.shape_cast %87 : vector<1x8x8xf32> to vector<1x1x8x8xf32>
    tpu.vector_store %arg26[%c0_37, %c3, %c0_38, %c0_39], %90 {strides = array<i32>} : memref<1x4x8x8xf32, #tpu.memory_space<vmem>>, vector<1x1x8x8xf32>,
    %91 = vector.extract_strided_slice %14 {offsets = [0, 0, 24], sizes = [1, 8, 8], strides = [1, 1, 1]} : vector<1x8x32xf32> to vector<1x8x8xf32>
    %cst_40 = arith.constant dense<0.000000e+00> : vector<1x8x8xf32>
    %92 = tpu.matmul %87, %91, %cst_40 {dimension_numbers = #tpu.dot_dimension_numbers<[2], [1], [1], [2], [0, 0, 0, 1, 1, 2], [0], [0]>} : vector<1x8x8xf32>, vector<1x8x8xf32>, vector<1x8x8xf32> -> vector<1x8x8xf32>
    %93 = tpu.concatenate %35, %54, %73, %92 in 2 : vector<1x8x8xf32>, vector<1x8x8xf32>, vector<1x8x8xf32>, vector<1x8x8xf32> -> vector<1x8x32xf32>
    %94 = vector.shape_cast %93 : vector<1x8x32xf32> to vector<8x32xf32>
    %c0_41 = arith.constant 0 : index
    %c0_42 = arith.constant 0 : index
    %95 = vector.load %arg7[%c0_41, %c0_42] : memref<32x32xf32, #tpu.memory_space<vmem>>, vector<32x32xf32>
    %cst_43 = arith.constant dense<0.000000e+00> : vector<8x32xf32>
    %96 = tpu.matmul %94, %95, %cst_43 {dimension_numbers = #tpu.dot_dimension_numbers<[1], [0], [0], [1], [0, 0, 1, 1], [], []>} : vector<8x32xf32>, vector<32x32xf32>, vector<8x32xf32> -> vector<8x32xf32>
    %c0_44 = arith.constant 0 : index
    %c0_45 = arith.constant 0 : index
    %97 = vector.load %arg8[%c0_44, %c0_45] : memref<1x32xf32, #tpu.memory_space<vmem>>, vector<1x32xf32>
    %98 = vector.broadcast %97 : vector<1x32xf32> to vector<8x32xf32>
    %99 = arith.addf %96, %98 : vector<8x32xf32>
    %100 = arith.addf %1, %99 : vector<8x32xf32>
    %c0_46 = arith.constant 0 : index
    %c0_47 = arith.constant 0 : index
    %101 = vector.load %arg9[%c0_46, %c0_47] : memref<1x32xf32, #tpu.memory_space<vmem>>, vector<1x32xf32>
    %c0_48 = arith.constant 0 : index
    %c0_49 = arith.constant 0 : index
    %102 = vector.load %arg10[%c0_48, %c0_49] : memref<1x32xf32, #tpu.memory_space<vmem>>, vector<1x32xf32>
    %cst_50 = arith.constant dense<0.000000e+00> : vector<8xf32>
    %103 = vector.multi_reduction <add>, %100, %cst_50 [1] : vector<8x32xf32> to vector<8xf32>
    %104 = vector.shape_cast %103 : vector<8xf32> to vector<8x1xf32>
    %cst_51 = arith.constant 3.200000e+01 : f32
    %105 = vector.broadcast %cst_51 : f32 to vector<8x1xf32>
    %106 = arith.divf %104, %105 : vector<8x1xf32>
    %107 = vector.broadcast %106 : vector<8x1xf32> to vector<8x32xf32>
    %108 = arith.subf %100, %107 : vector<8x32xf32>
    %109 = arith.mulf %108, %108 : vector<8x32xf32>
    %cst_52 = arith.constant dense<0.000000e+00> : vector<8xf32>
    %110 = vector.multi_reduction <add>, %109, %cst_52 [1] : vector<8x32xf32> to vector<8xf32>
    %111 = vector.shape_cast %110 : vector<8xf32> to vector<8x1xf32>
    %cst_53 = arith.constant 3.200000e+01 : f32
    %112 = vector.broadcast %cst_53 : f32 to vector<8x1xf32>
    %113 = arith.divf %111, %112 : vector<8x1xf32>
    %114 = vector.broadcast %106 : vector<8x1xf32> to vector<8x32xf32>
    %115 = arith.subf %100, %114 : vector<8x32xf32>
    %cst_54 = arith.constant 9.99999974E-6 : f32
    %116 = vector.broadcast %cst_54 : f32 to vector<8x1xf32>
    %117 = arith.addf %113, %116 : vector<8x1xf32>
    %118 = math.rsqrt %117 : vector<8x1xf32>
    %119 = vector.broadcast %118 : vector<8x1xf32> to vector<8x32xf32>
    %120 = arith.mulf %115, %119 : vector<8x32xf32>
    %121 = vector.broadcast %101 : vector<1x32xf32> to vector<8x32xf32>
    %122 = arith.mulf %120, %121 : vector<8x32xf32>
    %123 = vector.broadcast %102 : vector<1x32xf32> to vector<8x32xf32>
    %124 = arith.addf %122, %123 : vector<8x32xf32>
    %c0_55 = arith.constant 0 : index
    %c0_56 = arith.constant 0 : index
    %125 = vector.load %arg11[%c0_55, %c0_56] : memref<32x32xf32, #tpu.memory_space<vmem>>, vector<32x32xf32>
    %cst_57 = arith.constant dense<0.000000e+00> : vector<8x32xf32>
    %126 = tpu.matmul %124, %125, %cst_57 {dimension_numbers = #tpu.dot_dimension_numbers<[1], [0], [0], [1], [0, 0, 1, 1], [], []>} : vector<8x32xf32>, vector<32x32xf32>, vector<8x32xf32> -> vector<8x32xf32>
    %c0_58 = arith.constant 0 : index
    %c0_59 = arith.constant 0 : index
    %127 = vector.load %arg12[%c0_58, %c0_59] : memref<1x32xf32, #tpu.memory_space<vmem>>, vector<1x32xf32>
    %128 = vector.broadcast %127 : vector<1x32xf32> to vector<8x32xf32>
    %129 = arith.addf %126, %128 : vector<8x32xf32>
    %c0_60 = arith.constant 0 : index
    %c0_61 = arith.constant 0 : index
    %130 = vector.load %arg13[%c0_60, %c0_61] : memref<32x64xf32, #tpu.memory_space<vmem>>, vector<32x64xf32>
    %cst_62 = arith.constant dense<0.000000e+00> : vector<8x64xf32>
    %131 = tpu.matmul %3, %130, %cst_62 {dimension_numbers = #tpu.dot_dimension_numbers<[1], [0], [0], [1], [0, 0, 1, 1], [], []>} : vector<8x32xf32>, vector<32x64xf32>, vector<8x64xf32> -> vector<8x64xf32>
    %c0_63 = arith.constant 0 : index
    %c0_64 = arith.constant 0 : index
    %132 = vector.load %arg14[%c0_63, %c0_64] : memref<1x64xf32, #tpu.memory_space<vmem>>, vector<1x64xf32>
    %133 = vector.broadcast %132 : vector<1x64xf32> to vector<8x64xf32>
    %134 = arith.addf %131, %133 : vector<8x64xf32>
    %135 = vector.extract_strided_slice %134 {offsets = [0, 0], sizes = [8, 32], strides = [1, 1]} : vector<8x64xf32> to vector<8x32xf32>
    %136 = vector.extract_strided_slice %134 {offsets = [0, 32], sizes = [8, 32], strides = [1, 1]} : vector<8x64xf32> to vector<8x32xf32>
    %137 = vector.shape_cast %129 : vector<8x32xf32> to vector<1x8x32xf32>
    %138 = vector.shape_cast %135 : vector<8x32xf32> to vector<1x8x32xf32>
    %139 = vector.shape_cast %136 : vector<8x32xf32> to vector<1x8x32xf32>
    %c0_65 = arith.constant 0 : index
    %c0_66 = arith.constant 0 : index
    %c0_67 = arith.constant 0 : index
    %140 = vector.load %arg4[%c0_65, %c0_66, %c0_67] : memref<1x8x8xbf16, #tpu.memory_space<vmem>>, vector<1x8x8xbf16>
    %141 = arith.extf %140 : vector<1x8x8xbf16> to vector<1x8x8xf32>
    %142 = vector.extract_strided_slice %137 {offsets = [0, 0, 0], sizes = [1, 8, 8], strides = [1, 1, 1]} : vector<1x8x32xf32> to vector<1x8x8xf32>
    %143 = vector.extract_strided_slice %138 {offsets = [0, 0, 0], sizes = [1, 8, 8], strides = [1, 1, 1]} : vector<1x8x32xf32> to vector<1x8x8xf32>
    %cst_68 = arith.constant dense<0.000000e+00> : vector<1x8x8xf32>
    %144 = tpu.matmul %142, %143, %cst_68 {dimension_numbers = #tpu.dot_dimension_numbers<[2], [2], [1], [1], [0, 0, 0, 1, 1, 1], [0], [0]>} : vector<1x8x8xf32>, vector<1x8x8xf32>, vector<1x8x8xf32> -> vector<1x8x8xf32>
    %145 = arith.addf %144, %141 : vector<1x8x8xf32>
    %cst_69 = arith.constant dense<0xFF800000> : vector<1x8xf32>
    %146 = vector.multi_reduction <maximumf>, %145, %cst_69 [2] : vector<1x8x8xf32> to vector<1x8xf32>
    %147 = vector.shape_cast %146 : vector<1x8xf32> to vector<1x8x1xf32>
    %148 = vector.broadcast %147 : vector<1x8x1xf32> to vector<1x8x8xf32>
    %149 = arith.subf %145, %148 : vector<1x8x8xf32>
    %150 = math.exp %149 : vector<1x8x8xf32>
    %cst_70 = arith.constant dense<0.000000e+00> : vector<1x8xf32>
    %151 = vector.multi_reduction <add>, %150, %cst_70 [2] : vector<1x8x8xf32> to vector<1x8xf32>
    %152 = vector.shape_cast %151 : vector<1x8xf32> to vector<1x8x1xf32>
    %153 = tpu.reciprocal %152 : vector<1x8x1xf32> -> vector<1x8x1xf32>
    %154 = vector.broadcast %153 : vector<1x8x1xf32> to vector<1x8x8xf32>
    %155 = arith.mulf %150, %154 : vector<1x8x8xf32>
    %c0_71 = arith.constant 0 : index
    %c0_72 = arith.constant 0 : index
    %c0_73 = arith.constant 0 : index
    %c0_74 = arith.constant 0 : index
    %156 = vector.load %arg27[%c0_71, %c0_72, %c0_73, %c0_74] : memref<1x4x8x8xf32, #tpu.memory_space<vmem>>, vector<1x1x8x8xf32>
    %157 = vector.shape_cast %156 : vector<1x1x8x8xf32> to vector<1x8x8xf32>
    %158 = vector.shape_cast %155 : vector<1x8x8xf32> to vector<1x1x8x8xf32>
    tpu.vector_store %arg27[%c0_71, %c0_72, %c0_73, %c0_74], %158 {strides = array<i32>} : memref<1x4x8x8xf32, #tpu.memory_space<vmem>>, vector<1x1x8x8xf32>,
    %159 = vector.extract_strided_slice %139 {offsets = [0, 0, 0], sizes = [1, 8, 8], strides = [1, 1, 1]} : vector<1x8x32xf32> to vector<1x8x8xf32>
    %cst_75 = arith.constant dense<0.000000e+00> : vector<1x8x8xf32>
    %160 = tpu.matmul %155, %159, %cst_75 {dimension_numbers = #tpu.dot_dimension_numbers<[2], [1], [1], [2], [0, 0, 0, 1, 1, 2], [0], [0]>} : vector<1x8x8xf32>, vector<1x8x8xf32>, vector<1x8x8xf32> -> vector<1x8x8xf32>
    %161 = vector.extract_strided_slice %137 {offsets = [0, 0, 8], sizes = [1, 8, 8], strides = [1, 1, 1]} : vector<1x8x32xf32> to vector<1x8x8xf32>
    %162 = vector.extract_strided_slice %138 {offsets = [0, 0, 8], sizes = [1, 8, 8], strides = [1, 1, 1]} : vector<1x8x32xf32> to vector<1x8x8xf32>
    %cst_76 = arith.constant dense<0.000000e+00> : vector<1x8x8xf32>
    %163 = tpu.matmul %161, %162, %cst_76 {dimension_numbers = #tpu.dot_dimension_numbers<[2], [2], [1], [1], [0, 0, 0, 1, 1, 1], [0], [0]>} : vector<1x8x8xf32>, vector<1x8x8xf32>, vector<1x8x8xf32> -> vector<1x8x8xf32>
    %164 = arith.addf %163, %141 : vector<1x8x8xf32>
    %cst_77 = arith.constant dense<0xFF800000> : vector<1x8xf32>
    %165 = vector.multi_reduction <maximumf>, %164, %cst_77 [2] : vector<1x8x8xf32> to vector<1x8xf32>
    %166 = vector.shape_cast %165 : vector<1x8xf32> to vector<1x8x1xf32>
    %167 = vector.broadcast %166 : vector<1x8x1xf32> to vector<1x8x8xf32>
    %168 = arith.subf %164, %167 : vector<1x8x8xf32>
    %169 = math.exp %168 : vector<1x8x8xf32>
    %cst_78 = arith.constant dense<0.000000e+00> : vector<1x8xf32>
    %170 = vector.multi_reduction <add>, %169, %cst_78 [2] : vector<1x8x8xf32> to vector<1x8xf32>
    %171 = vector.shape_cast %170 : vector<1x8xf32> to vector<1x8x1xf32>
    %172 = tpu.reciprocal %171 : vector<1x8x1xf32> -> vector<1x8x1xf32>
    %173 = vector.broadcast %172 : vector<1x8x1xf32> to vector<1x8x8xf32>
    %174 = arith.mulf %169, %173 : vector<1x8x8xf32>
    %c0_79 = arith.constant 0 : index
    %c1_80 = arith.constant 1 : index
    %c0_81 = arith.constant 0 : index
    %c0_82 = arith.constant 0 : index
    %175 = vector.load %arg27[%c0_79, %c1_80, %c0_81, %c0_82] : memref<1x4x8x8xf32, #tpu.memory_space<vmem>>, vector<1x1x8x8xf32>
    %176 = vector.shape_cast %175 : vector<1x1x8x8xf32> to vector<1x8x8xf32>
    %177 = vector.shape_cast %174 : vector<1x8x8xf32> to vector<1x1x8x8xf32>
    tpu.vector_store %arg27[%c0_79, %c1_80, %c0_81, %c0_82], %177 {strides = array<i32>} : memref<1x4x8x8xf32, #tpu.memory_space<vmem>>, vector<1x1x8x8xf32>,
    %178 = vector.extract_strided_slice %139 {offsets = [0, 0, 8], sizes = [1, 8, 8], strides = [1, 1, 1]} : vector<1x8x32xf32> to vector<1x8x8xf32>
    %cst_83 = arith.constant dense<0.000000e+00> : vector<1x8x8xf32>
    %179 = tpu.matmul %174, %178, %cst_83 {dimension_numbers = #tpu.dot_dimension_numbers<[2], [1], [1], [2], [0, 0, 0, 1, 1, 2], [0], [0]>} : vector<1x8x8xf32>, vector<1x8x8xf32>, vector<1x8x8xf32> -> vector<1x8x8xf32>
    %180 = vector.extract_strided_slice %137 {offsets = [0, 0, 16], sizes = [1, 8, 8], strides = [1, 1, 1]} : vector<1x8x32xf32> to vector<1x8x8xf32>
    %181 = vector.extract_strided_slice %138 {offsets = [0, 0, 16], sizes = [1, 8, 8], strides = [1, 1, 1]} : vector<1x8x32xf32> to vector<1x8x8xf32>
    %cst_84 = arith.constant dense<0.000000e+00> : vector<1x8x8xf32>
    %182 = tpu.matmul %180, %181, %cst_84 {dimension_numbers = #tpu.dot_dimension_numbers<[2], [2], [1], [1], [0, 0, 0, 1, 1, 1], [0], [0]>} : vector<1x8x8xf32>, vector<1x8x8xf32>, vector<1x8x8xf32> -> vector<1x8x8xf32>
    %183 = arith.addf %182, %141 : vector<1x8x8xf32>
    %cst_85 = arith.constant dense<0xFF800000> : vector<1x8xf32>
    %184 = vector.multi_reduction <maximumf>, %183, %cst_85 [2] : vector<1x8x8xf32> to vector<1x8xf32>
    %185 = vector.shape_cast %184 : vector<1x8xf32> to vector<1x8x1xf32>
    %186 = vector.broadcast %185 : vector<1x8x1xf32> to vector<1x8x8xf32>
    %187 = arith.subf %183, %186 : vector<1x8x8xf32>
    %188 = math.exp %187 : vector<1x8x8xf32>
    %cst_86 = arith.constant dense<0.000000e+00> : vector<1x8xf32>
    %189 = vector.multi_reduction <add>, %188, %cst_86 [2] : vector<1x8x8xf32> to vector<1x8xf32>
    %190 = vector.shape_cast %189 : vector<1x8xf32> to vector<1x8x1xf32>
    %191 = tpu.reciprocal %190 : vector<1x8x1xf32> -> vector<1x8x1xf32>
    %192 = vector.broadcast %191 : vector<1x8x1xf32> to vector<1x8x8xf32>
    %193 = arith.mulf %188, %192 : vector<1x8x8xf32>
    %c0_87 = arith.constant 0 : index
    %c2_88 = arith.constant 2 : index
    %c0_89 = arith.constant 0 : index
    %c0_90 = arith.constant 0 : index
    %194 = vector.load %arg27[%c0_87, %c2_88, %c0_89, %c0_90] : memref<1x4x8x8xf32, #tpu.memory_space<vmem>>, vector<1x1x8x8xf32>
    %195 = vector.shape_cast %194 : vector<1x1x8x8xf32> to vector<1x8x8xf32>
    %196 = vector.shape_cast %193 : vector<1x8x8xf32> to vector<1x1x8x8xf32>
    tpu.vector_store %arg27[%c0_87, %c2_88, %c0_89, %c0_90], %196 {strides = array<i32>} : memref<1x4x8x8xf32, #tpu.memory_space<vmem>>, vector<1x1x8x8xf32>,
    %197 = vector.extract_strided_slice %139 {offsets = [0, 0, 16], sizes = [1, 8, 8], strides = [1, 1, 1]} : vector<1x8x32xf32> to vector<1x8x8xf32>
    %cst_91 = arith.constant dense<0.000000e+00> : vector<1x8x8xf32>
    %198 = tpu.matmul %193, %197, %cst_91 {dimension_numbers = #tpu.dot_dimension_numbers<[2], [1], [1], [2], [0, 0, 0, 1, 1, 2], [0], [0]>} : vector<1x8x8xf32>, vector<1x8x8xf32>, vector<1x8x8xf32> -> vector<1x8x8xf32>
    %199 = vector.extract_strided_slice %137 {offsets = [0, 0, 24], sizes = [1, 8, 8], strides = [1, 1, 1]} : vector<1x8x32xf32> to vector<1x8x8xf32>
    %200 = vector.extract_strided_slice %138 {offsets = [0, 0, 24], sizes = [1, 8, 8], strides = [1, 1, 1]} : vector<1x8x32xf32> to vector<1x8x8xf32>
    %cst_92 = arith.constant dense<0.000000e+00> : vector<1x8x8xf32>
    %201 = tpu.matmul %199, %200, %cst_92 {dimension_numbers = #tpu.dot_dimension_numbers<[2], [2], [1], [1], [0, 0, 0, 1, 1, 1], [0], [0]>} : vector<1x8x8xf32>, vector<1x8x8xf32>, vector<1x8x8xf32> -> vector<1x8x8xf32>
    %202 = arith.addf %201, %141 : vector<1x8x8xf32>
    %cst_93 = arith.constant dense<0xFF800000> : vector<1x8xf32>
    %203 = vector.multi_reduction <maximumf>, %202, %cst_93 [2] : vector<1x8x8xf32> to vector<1x8xf32>
    %204 = vector.shape_cast %203 : vector<1x8xf32> to vector<1x8x1xf32>
    %205 = vector.broadcast %204 : vector<1x8x1xf32> to vector<1x8x8xf32>
    %206 = arith.subf %202, %205 : vector<1x8x8xf32>
    %207 = math.exp %206 : vector<1x8x8xf32>
    %cst_94 = arith.constant dense<0.000000e+00> : vector<1x8xf32>
    %208 = vector.multi_reduction <add>, %207, %cst_94 [2] : vector<1x8x8xf32> to vector<1x8xf32>
    %209 = vector.shape_cast %208 : vector<1x8xf32> to vector<1x8x1xf32>
    %210 = tpu.reciprocal %209 : vector<1x8x1xf32> -> vector<1x8x1xf32>
    %211 = vector.broadcast %210 : vector<1x8x1xf32> to vector<1x8x8xf32>
    %212 = arith.mulf %207, %211 : vector<1x8x8xf32>
    %c0_95 = arith.constant 0 : index
    %c3_96 = arith.constant 3 : index
    %c0_97 = arith.constant 0 : index
    %c0_98 = arith.constant 0 : index
    %213 = vector.load %arg27[%c0_95, %c3_96, %c0_97, %c0_98] : memref<1x4x8x8xf32, #tpu.memory_space<vmem>>, vector<1x1x8x8xf32>
    %214 = vector.shape_cast %213 : vector<1x1x8x8xf32> to vector<1x8x8xf32>
    %215 = vector.shape_cast %212 : vector<1x8x8xf32> to vector<1x1x8x8xf32>
    tpu.vector_store %arg27[%c0_95, %c3_96, %c0_97, %c0_98], %215 {strides = array<i32>} : memref<1x4x8x8xf32, #tpu.memory_space<vmem>>, vector<1x1x8x8xf32>,
    %216 = vector.extract_strided_slice %139 {offsets = [0, 0, 24], sizes = [1, 8, 8], strides = [1, 1, 1]} : vector<1x8x32xf32> to vector<1x8x8xf32>
    %cst_99 = arith.constant dense<0.000000e+00> : vector<1x8x8xf32>
    %217 = tpu.matmul %212, %216, %cst_99 {dimension_numbers = #tpu.dot_dimension_numbers<[2], [1], [1], [2], [0, 0, 0, 1, 1, 2], [0], [0]>} : vector<1x8x8xf32>, vector<1x8x8xf32>, vector<1x8x8xf32> -> vector<1x8x8xf32>
    %218 = tpu.concatenate %160, %179, %198, %217 in 2 : vector<1x8x8xf32>, vector<1x8x8xf32>, vector<1x8x8xf32>, vector<1x8x8xf32> -> vector<1x8x32xf32>
    %219 = vector.shape_cast %218 : vector<1x8x32xf32> to vector<8x32xf32>
    %c0_100 = arith.constant 0 : index
    %c0_101 = arith.constant 0 : index
    %220 = vector.load %arg15[%c0_100, %c0_101] : memref<32x32xf32, #tpu.memory_space<vmem>>, vector<32x32xf32>
    %cst_102 = arith.constant dense<0.000000e+00> : vector<8x32xf32>
    %221 = tpu.matmul %219, %220, %cst_102 {dimension_numbers = #tpu.dot_dimension_numbers<[1], [0], [0], [1], [0, 0, 1, 1], [], []>} : vector<8x32xf32>, vector<32x32xf32>, vector<8x32xf32> -> vector<8x32xf32>
    %c0_103 = arith.constant 0 : index
    %c0_104 = arith.constant 0 : index
    %222 = vector.load %arg16[%c0_103, %c0_104] : memref<1x32xf32, #tpu.memory_space<vmem>>, vector<1x32xf32>
    %223 = vector.broadcast %222 : vector<1x32xf32> to vector<8x32xf32>
    %224 = arith.addf %221, %223 : vector<8x32xf32>
    %225 = arith.addf %124, %224 : vector<8x32xf32>
    %c0_105 = arith.constant 0 : index
    %c0_106 = arith.constant 0 : index
    %226 = vector.load %arg17[%c0_105, %c0_106] : memref<1x32xf32, #tpu.memory_space<vmem>>, vector<1x32xf32>
    %c0_107 = arith.constant 0 : index
    %c0_108 = arith.constant 0 : index
    %227 = vector.load %arg18[%c0_107, %c0_108] : memref<1x32xf32, #tpu.memory_space<vmem>>, vector<1x32xf32>
    %cst_109 = arith.constant dense<0.000000e+00> : vector<8xf32>
    %228 = vector.multi_reduction <add>, %225, %cst_109 [1] : vector<8x32xf32> to vector<8xf32>
    %229 = vector.shape_cast %228 : vector<8xf32> to vector<8x1xf32>
    %cst_110 = arith.constant 3.200000e+01 : f32
    %230 = vector.broadcast %cst_110 : f32 to vector<8x1xf32>
    %231 = arith.divf %229, %230 : vector<8x1xf32>
    %232 = vector.broadcast %231 : vector<8x1xf32> to vector<8x32xf32>
    %233 = arith.subf %225, %232 : vector<8x32xf32>
    %234 = arith.mulf %233, %233 : vector<8x32xf32>
    %cst_111 = arith.constant dense<0.000000e+00> : vector<8xf32>
    %235 = vector.multi_reduction <add>, %234, %cst_111 [1] : vector<8x32xf32> to vector<8xf32>
    %236 = vector.shape_cast %235 : vector<8xf32> to vector<8x1xf32>
    %cst_112 = arith.constant 3.200000e+01 : f32
    %237 = vector.broadcast %cst_112 : f32 to vector<8x1xf32>
    %238 = arith.divf %236, %237 : vector<8x1xf32>
    %239 = vector.broadcast %231 : vector<8x1xf32> to vector<8x32xf32>
    %240 = arith.subf %225, %239 : vector<8x32xf32>
    %cst_113 = arith.constant 9.99999974E-6 : f32
    %241 = vector.broadcast %cst_113 : f32 to vector<8x1xf32>
    %242 = arith.addf %238, %241 : vector<8x1xf32>
    %243 = math.rsqrt %242 : vector<8x1xf32>
    %244 = vector.broadcast %243 : vector<8x1xf32> to vector<8x32xf32>
    %245 = arith.mulf %240, %244 : vector<8x32xf32>
    %246 = vector.broadcast %226 : vector<1x32xf32> to vector<8x32xf32>
    %247 = arith.mulf %245, %246 : vector<8x32xf32>
    %248 = vector.broadcast %227 : vector<1x32xf32> to vector<8x32xf32>
    %249 = arith.addf %247, %248 : vector<8x32xf32>
    %c0_114 = arith.constant 0 : index
    %c0_115 = arith.constant 0 : index
    %250 = vector.load %arg19[%c0_114, %c0_115] : memref<32x64xf32, #tpu.memory_space<vmem>>, vector<32x64xf32>
    %cst_116 = arith.constant dense<0.000000e+00> : vector<8x64xf32>
    %251 = tpu.matmul %249, %250, %cst_116 {dimension_numbers = #tpu.dot_dimension_numbers<[1], [0], [0], [1], [0, 0, 1, 1], [], []>} : vector<8x32xf32>, vector<32x64xf32>, vector<8x64xf32> -> vector<8x64xf32>
    %c0_117 = arith.constant 0 : index
    %c0_118 = arith.constant 0 : index
    %252 = vector.load %arg20[%c0_117, %c0_118] : memref<1x64xf32, #tpu.memory_space<vmem>>, vector<1x64xf32>
    %253 = vector.broadcast %252 : vector<1x64xf32> to vector<8x64xf32>
    %254 = arith.addf %251, %253 : vector<8x64xf32>
    %cst_119 = arith.constant 0.000000e+00 : f32
    %255 = vector.broadcast %cst_119 : f32 to vector<8x64xf32>
    %256 = arith.maximumf %254, %255 : vector<8x64xf32>
    %c0_120 = arith.constant 0 : index
    %c0_121 = arith.constant 0 : index
    %257 = vector.load %arg21[%c0_120, %c0_121] : memref<64x32xf32, #tpu.memory_space<vmem>>, vector<64x32xf32>
    %cst_122 = arith.constant dense<0.000000e+00> : vector<8x32xf32>
    %258 = tpu.matmul %256, %257, %cst_122 {dimension_numbers = #tpu.dot_dimension_numbers<[1], [0], [0], [1], [0, 0, 1, 1], [], []>} : vector<8x64xf32>, vector<64x32xf32>, vector<8x32xf32> -> vector<8x32xf32>
    %c0_123 = arith.constant 0 : index
    %c0_124 = arith.constant 0 : index
    %259 = vector.load %arg22[%c0_123, %c0_124] : memref<1x32xf32, #tpu.memory_space<vmem>>, vector<1x32xf32>
    %260 = vector.broadcast %259 : vector<1x32xf32> to vector<8x32xf32>
    %261 = arith.addf %258, %260 : vector<8x32xf32>
    %262 = arith.addf %249, %261 : vector<8x32xf32>
    %c0_125 = arith.constant 0 : index
    %c0_126 = arith.constant 0 : index
    %263 = vector.load %arg23[%c0_125, %c0_126] : memref<1x32xf32, #tpu.memory_space<vmem>>, vector<1x32xf32>
    %c0_127 = arith.constant 0 : index
    %c0_128 = arith.constant 0 : index
    %264 = vector.load %arg24[%c0_127, %c0_128] : memref<1x32xf32, #tpu.memory_space<vmem>>, vector<1x32xf32>
    %cst_129 = arith.constant dense<0.000000e+00> : vector<8xf32>
    %265 = vector.multi_reduction <add>, %262, %cst_129 [1] : vector<8x32xf32> to vector<8xf32>
    %266 = vector.shape_cast %265 : vector<8xf32> to vector<8x1xf32>
    %cst_130 = arith.constant 3.200000e+01 : f32
    %267 = vector.broadcast %cst_130 : f32 to vector<8x1xf32>
    %268 = arith.divf %266, %267 : vector<8x1xf32>
    %269 = vector.broadcast %268 : vector<8x1xf32> to vector<8x32xf32>
    %270 = arith.subf %262, %269 : vector<8x32xf32>
    %271 = arith.mulf %270, %270 : vector<8x32xf32>
    %cst_131 = arith.constant dense<0.000000e+00> : vector<8xf32>
    %272 = vector.multi_reduction <add>, %271, %cst_131 [1] : vector<8x32xf32> to vector<8xf32>
    %273 = vector.shape_cast %272 : vector<8xf32> to vector<8x1xf32>
    %cst_132 = arith.constant 3.200000e+01 : f32
    %274 = vector.broadcast %cst_132 : f32 to vector<8x1xf32>
    %275 = arith.divf %273, %274 : vector<8x1xf32>
    %276 = vector.broadcast %268 : vector<8x1xf32> to vector<8x32xf32>
    %277 = arith.subf %262, %276 : vector<8x32xf32>
    %cst_133 = arith.constant 9.99999974E-6 : f32
    %278 = vector.broadcast %cst_133 : f32 to vector<8x1xf32>
    %279 = arith.addf %275, %278 : vector<8x1xf32>
    %280 = math.rsqrt %279 : vector<8x1xf32>
    %281 = vector.broadcast %280 : vector<8x1xf32> to vector<8x32xf32>
    %282 = arith.mulf %277, %281 : vector<8x32xf32>
    %283 = vector.broadcast %263 : vector<1x32xf32> to vector<8x32xf32>
    %284 = arith.mulf %282, %283 : vector<8x32xf32>
    %285 = vector.broadcast %264 : vector<1x32xf32> to vector<8x32xf32>
    %286 = arith.addf %284, %285 : vector<8x32xf32>
    %287 = vector.shape_cast %286 : vector<8x32xf32> to vector<1x8x32xf32>
    %c0_134 = arith.constant 0 : index
    %c0_135 = arith.constant 0 : index
    %c0_136 = arith.constant 0 : index
    %288 = vector.load %arg25[%c0_134, %c0_135, %c0_136] : memref<1x8x32xf32, #tpu.memory_space<vmem>>, vector<1x8x32xf32>
    tpu.vector_store %arg25[%c0_134, %c0_135, %c0_136], %287 {strides = array<i32>} : memref<1x8x32xf32, #tpu.memory_space<vmem>>, vector<1x8x32xf32>,
    return
  }
  func.func @transform_0(%arg0: i32) -> (i32, i32, i32) {
    %c0_i32 = arith.constant 0 : i32
    %c0_i32_0 = arith.constant 0 : i32
    %c0_i32_1 = arith.constant 0 : i32
    return %arg0, %c0_i32, %c0_i32_0 : i32, i32, i32
  }
  func.func @transform_1(%arg0: i32) -> (i32, i32, i32) {
    %c0_i32 = arith.constant 0 : i32
    %c0_i32_0 = arith.constant 0 : i32
    %c0_i32_1 = arith.constant 0 : i32
    return %arg0, %c0_i32, %c0_i32_0 : i32, i32, i32
  }
  func.func @transform_2(%arg0: i32) -> (i32, i32, i32) {
    %c0_i32 = arith.constant 0 : i32
    %c0_i32_0 = arith.constant 0 : i32
    %c0_i32_1 = arith.constant 0 : i32
    %c0_i32_2 = arith.constant 0 : i32
    return %c0_i32, %c0_i32_0, %c0_i32_1 : i32, i32, i32
  }
  func.func @transform_3(%arg0: i32) -> (i32, i32, i32) {
    %c0_i32 = arith.constant 0 : i32
    %c0_i32_0 = arith.constant 0 : i32
    %c0_i32_1 = arith.constant 0 : i32
    %c0_i32_2 = arith.constant 0 : i32
    return %c0_i32, %c0_i32_0, %c0_i32_1 : i32, i32, i32
  }
  func.func @transform_4(%arg0: i32) -> (i32, i32) {
    %c0_i32 = arith.constant 0 : i32
    %c0_i32_0 = arith.constant 0 : i32
    %c0_i32_1 = arith.constant 0 : i32
    return %c0_i32, %c0_i32_0 : i32, i32
  }
  func.func @transform_5(%arg0: i32) -> (i32, i32) {
    %c0_i32 = arith.constant 0 : i32
    %c0_i32_0 = arith.constant 0 : i32
    %c0_i32_1 = arith.constant 0 : i32
    return %c0_i32, %c0_i32_0 : i32, i32
  }
  func.func @transform_6(%arg0: i32) -> (i32, i32) {
    %c0_i32 = arith.constant 0 : i32
    %c0_i32_0 = arith.constant 0 : i32
    %c0_i32_1 = arith.constant 0 : i32
    return %c0_i32, %c0_i32_0 : i32, i32
  }
  func.func @transform_7(%arg0: i32) -> (i32, i32) {
    %c0_i32 = arith.constant 0 : i32
    %c0_i32_0 = arith.constant 0 : i32
    %c0_i32_1 = arith.constant 0 : i32
    return %c0_i32, %c0_i32_0 : i32, i32
  }
  func.func @transform_8(%arg0: i32) -> (i32, i32) {
    %c0_i32 = arith.constant 0 : i32
    %c0_i32_0 = arith.constant 0 : i32
    %c0_i32_1 = arith.constant 0 : i32
    return %c0_i32, %c0_i32_0 : i32, i32
  }
  func.func @transform_9(%arg0: i32) -> (i32, i32) {
    %c0_i32 = arith.constant 0 : i32
    %c0_i32_0 = arith.constant 0 : i32
    %c0_i32_1 = arith.constant 0 : i32
    return %c0_i32, %c0_i32_0 : i32, i32
  }
  func.func @transform_10(%arg0: i32) -> (i32, i32) {
    %c0_i32 = arith.constant 0 : i32
    %c0_i32_0 = arith.constant 0 : i32
    %c0_i32_1 = arith.constant 0 : i32
    return %c0_i32, %c0_i32_0 : i32, i32
  }
  func.func @transform_11(%arg0: i32) -> (i32, i32) {
    %c0_i32 = arith.constant 0 : i32
    %c0_i32_0 = arith.constant 0 : i32
    %c0_i32_1 = arith.constant 0 : i32
    return %c0_i32, %c0_i32_0 : i32, i32
  }
  func.func @transform_12(%arg0: i32) -> (i32, i32) {
    %c0_i32 = arith.constant 0 : i32
    %c0_i32_0 = arith.constant 0 : i32
    %c0_i32_1 = arith.constant 0 : i32
    return %c0_i32, %c0_i32_0 : i32, i32
  }
  func.func @transform_13(%arg0: i32) -> (i32, i32) {
    %c0_i32 = arith.constant 0 : i32
    %c0_i32_0 = arith.constant 0 : i32
    %c0_i32_1 = arith.constant 0 : i32
    return %c0_i32, %c0_i32_0 : i32, i32
  }
  func.func @transform_14(%arg0: i32) -> (i32, i32) {
    %c0_i32 = arith.constant 0 : i32
    %c0_i32_0 = arith.constant 0 : i32
    %c0_i32_1 = arith.constant 0 : i32
    return %c0_i32, %c0_i32_0 : i32, i32
  }
  func.func @transform_15(%arg0: i32) -> (i32, i32) {
    %c0_i32 = arith.constant 0 : i32
    %c0_i32_0 = arith.constant 0 : i32
    %c0_i32_1 = arith.constant 0 : i32
    return %c0_i32, %c0_i32_0 : i32, i32
  }
  func.func @transform_16(%arg0: i32) -> (i32, i32) {
    %c0_i32 = arith.constant 0 : i32
    %c0_i32_0 = arith.constant 0 : i32
    %c0_i32_1 = arith.constant 0 : i32
    return %c0_i32, %c0_i32_0 : i32, i32
  }
  func.func @transform_17(%arg0: i32) -> (i32, i32) {
    %c0_i32 = arith.constant 0 : i32
    %c0_i32_0 = arith.constant 0 : i32
    %c0_i32_1 = arith.constant 0 : i32
    return %c0_i32, %c0_i32_0 : i32, i32
  }
  func.func @transform_18(%arg0: i32) -> (i32, i32) {
    %c0_i32 = arith.constant 0 : i32
    %c0_i32_0 = arith.constant 0 : i32
    %c0_i32_1 = arith.constant 0 : i32
    return %c0_i32, %c0_i32_0 : i32, i32
  }
  func.func @transform_19(%arg0: i32) -> (i32, i32) {
    %c0_i32 = arith.constant 0 : i32
    %c0_i32_0 = arith.constant 0 : i32
    %c0_i32_1 = arith.constant 0 : i32
    return %c0_i32, %c0_i32_0 : i32, i32
  }
  func.func @transform_20(%arg0: i32) -> (i32, i32) {
    %c0_i32 = arith.constant 0 : i32
    %c0_i32_0 = arith.constant 0 : i32
    %c0_i32_1 = arith.constant 0 : i32
    return %c0_i32, %c0_i32_0 : i32, i32
  }
  func.func @transform_21(%arg0: i32) -> (i32, i32) {
    %c0_i32 = arith.constant 0 : i32
    %c0_i32_0 = arith.constant 0 : i32
    %c0_i32_1 = arith.constant 0 : i32
    return %c0_i32, %c0_i32_0 : i32, i32
  }
  func.func @transform_22(%arg0: i32) -> (i32, i32) {
    %c0_i32 = arith.constant 0 : i32
    %c0_i32_0 = arith.constant 0 : i32
    %c0_i32_1 = arith.constant 0 : i32
    return %c0_i32, %c0_i32_0 : i32, i32
  }
  func.func @transform_23(%arg0: i32) -> (i32, i32) {
    %c0_i32 = arith.constant 0 : i32
    %c0_i32_0 = arith.constant 0 : i32
    %c0_i32_1 = arith.constant 0 : i32
    return %c0_i32, %c0_i32_0 : i32, i32
  }
  func.func @transform_24(%arg0: i32) -> (i32, i32, i32) {
    %c0_i32 = arith.constant 0 : i32
    %c0_i32_0 = arith.constant 0 : i32
    %c0_i32_1 = arith.constant 0 : i32
    return %arg0, %c0_i32, %c0_i32_0 : i32, i32, i32
  }
  func.func @transform_25(%arg0: i32) -> (i32, i32, i32, i32) {
    %c0_i32 = arith.constant 0 : i32
    %c0_i32_0 = arith.constant 0 : i32
    %c0_i32_1 = arith.constant 0 : i32
    %c0_i32_2 = arith.constant 0 : i32
    return %arg0, %c0_i32, %c0_i32_0, %c0_i32_1 : i32, i32, i32, i32
  }
  func.func @transform_26(%arg0: i32) -> (i32, i32, i32, i32) {
    %c0_i32 = arith.constant 0 : i32
    %c0_i32_0 = arith.constant 0 : i32
    %c0_i32_1 = arith.constant 0 : i32
    %c0_i32_2 = arith.constant 0 : i32
    return %arg0, %c0_i32, %c0_i32_0, %c0_i32_1 : i32, i32, i32, i32
  }
}

module attributes {stable_mosaic.version = 11 : i64} {
  func.func @_decoder_layer_kernel(%arg0: i32, %arg1: memref<1x8x32xf32, #tpu.memory_space<vmem>>, %arg2: memref<1x8x32xf32, #tpu.memory_space<vmem>>, %arg3: memref<1x8x8xbf16, #tpu.memory_space<vmem>>, %arg4: memref<1x8x8xbf16, #tpu.memory_space<vmem>>, %arg5: memref<32x96xf32, #tpu.memory_space<vmem>>, %arg6: memref<1x96xf32, #tpu.memory_space<vmem>>, %arg7: memref<32x32xf32, #tpu.memory_space<vmem>>, %arg8: memref<1x32xf32, #tpu.memory_space<vmem>>, %arg9: memref<1x32xf32, #tpu.memory_space<vmem>>, %arg10: memref<1x32xf32, #tpu.memory_space<vmem>>, %arg11: memref<32x32xf32, #tpu.memory_space<vmem>>, %arg12: memref<1x32xf32, #tpu.memory_space<vmem>>, %arg13: memref<32x64xf32, #tpu.memory_space<vmem>>, %arg14: memref<1x64xf32, #tpu.memory_space<vmem>>, %arg15: memref<32x32xf32, #tpu.memory_space<vmem>>, %arg16: memref<1x32xf32, #tpu.memory_space<vmem>>, %arg17: memref<1x32xf32, #tpu.memory_space<vmem>>, %arg18: memref<1x32xf32, #tpu.memory_space<vmem>>, %arg19: memref<32x64xf32, #tpu.memory_space<vmem>>, %arg20: memref<1x64xf32, #tpu.memory_space<vmem>>, %arg21: memref<64x32xf32, #tpu.memory_space<vmem>>, %arg22: memref<1x32xf32, #tpu.memory_space<vmem>>, %arg23: memref<1x32xf32, #tpu.memory_space<vmem>>, %arg24: memref<1x32xf32, #tpu.memory_space<vmem>>, %arg25: memref<1x8x32xf32, #tpu.memory_space<vmem>>, %arg26: memref<1x4x8x8xf32, #tpu.memory_space<vmem>>, %arg27: memref<1x4x8x8xf32, #tpu.memory_space<vmem>>) attributes {dimension_semantics = [#tpu.dimension_semantics<parallel>], iteration_bounds = array<i64: 2>, scalar_prefetch = 0 : i64, scratch_operands = 0 : i64, tpu.core_type = #tpu.core_type<tc>, window_params = [{transform_indices = @transform_0, window_bounds = array<i64: 1, 8, 32>}, {transform_indices = @transform_1, window_bounds = array<i64: 1, 8, 32>}, {pipeline_mode = #tpu.pipeline_mode<synchronous>, transform_indices = @transform_2, window_bounds = array<i64: 1, 8, 8>}, {pipeline_mode = #tpu.pipeline_mode<synchronous>, transform_indices = @transform_3, window_bounds = array<i64: 1, 8, 8>}, {pipeline_mode = #tpu.pipeline_mode<synchronous>, transform_indices = @transform_4, window_bounds = array<i64: 32, 96>}, {pipeline_mode = #tpu.pipeline_mode<synchronous>, transform_indices = @transform_5, window_bounds = array<i64: 1, 96>}, {pipeline_mode = #tpu.pipeline_mode<synchronous>, transform_indices = @transform_6, window_bounds = array<i64: 32, 32>}, {pipeline_mode = #tpu.pipeline_mode<synchronous>, transform_indices = @transform_7, window_bounds = array<i64: 1, 32>}, {pipeline_mode = #tpu.pipeline_mode<synchronous>, transform_indices = @transform_8, window_bounds = array<i64: 1, 32>}, {pipeline_mode = #tpu.pipeline_mode<synchronous>, transform_indices = @transform_9, window_bounds = array<i64: 1, 32>}, {pipeline_mode = #tpu.pipeline_mode<synchronous>, transform_indices = @transform_10, window_bounds = array<i64: 32, 32>}, {pipeline_mode = #tpu.pipeline_mode<synchronous>, transform_indices = @transform_11, window_bounds = array<i64: 1, 32>}, {pipeline_mode = #tpu.pipeline_mode<synchronous>, transform_indices = @transform_12, window_bounds = array<i64: 32, 64>}, {pipeline_mode = #tpu.pipeline_mode<synchronous>, transform_indices = @transform_13, window_bounds = array<i64: 1, 64>}, {pipeline_mode = #tpu.pipeline_mode<synchronous>, transform_indices = @transform_14, window_bounds = array<i64: 32, 32>}, {pipeline_mode = #tpu.pipeline_mode<synchronous>, transform_indices = @transform_15, window_bounds = array<i64: 1, 32>}, {pipeline_mode = #tpu.pipeline_mode<synchronous>, transform_indices = @transform_16, window_bounds = array<i64: 1, 32>}, {pipeline_mode = #tpu.pipeline_mode<synchronous>, transform_indices = @transform_17, window_bounds = array<i64: 1, 32>}, {pipeline_mode = #tpu.pipeline_mode<synchronous>, transform_indices = @transform_18, window_bounds = array<i64: 32, 64>}, {pipeline_mode = #tpu.pipeline_mode<synchronous>, transform_indices = @transform_19, window_bounds = array<i64: 1, 64>}, {pipeline_mode = #tpu.pipeline_mode<synchronous>, transform_indices = @transform_20, window_bounds = array<i64: 64, 32>}, {pipeline_mode = #tpu.pipeline_mode<synchronous>, transform_indices = @transform_21, window_bounds = array<i64: 1, 32>}, {pipeline_mode = #tpu.pipeline_mode<synchronous>, transform_indices = @transform_22, window_bounds = array<i64: 1, 32>}, {pipeline_mode = #tpu.pipeline_mode<synchronous>, transform_indices = @transform_23, window_bounds = array<i64: 1, 32>}, {transform_indices = @transform_24, window_bounds = array<i64: 1, 8, 32>}, {transform_indices = @transform_25, window_bounds = array<i64: 1, 4, 8, 8>}, {transform_indices = @transform_26, window_bounds = array<i64: 1, 4, 8, 8>}]} {
    %c0 = arith.constant 0 : index
    %c0_0 = arith.constant 0 : index
    %c0_1 = arith.constant 0 : index
    %0 = vector.load %arg1[%c0, %c0_0, %c0_1] : memref<1x8x32xf32, #tpu.memory_space<vmem>>, vector<1x8x32xf32>
    %1 = vector.shape_cast %0 : vector<1x8x32xf32> to vector<8x32xf32>
    %c0_2 = arith.constant 0 : index
    %c0_3 = arith.constant 0 : index
    %c0_4 = arith.constant 0 : index
    %2 = vector.load %arg2[%c0_2, %c0_3, %c0_4] : memref<1x8x32xf32, #tpu.memory_space<vmem>>, vector<1x8x32xf32>
    %3 = vector.shape_cast %2 : vector<1x8x32xf32> to vector<8x32xf32>
    %c0_5 = arith.constant 0 : index
    %c0_6 = arith.constant 0 : index
    %4 = vector.load %arg5[%c0_5, %c0_6] : memref<32x96xf32, #tpu.memory_space<vmem>>, vector<32x96xf32>
    %cst = arith.constant dense<0.000000e+00> : vector<8x96xf32>
    %5 = tpu.matmul %1, %4, %cst {dimension_numbers = #tpu.dot_dimension_numbers<[1], [0], [0], [1], [0, 0, 1, 1], [], []>} : vector<8x32xf32>, vector<32x96xf32>, vector<8x96xf32> -> vector<8x96xf32>
    %c0_7 = arith.constant 0 : index
    %c0_8 = arith.constant 0 : index
    %6 = vector.load %arg6[%c0_7, %c0_8] : memref<1x96xf32, #tpu.memory_space<vmem>>, vector<1x96xf32>
    %7 = vector.broadcast %6 : vector<1x96xf32> to vector<8x96xf32>
    %8 = arith.addf %5, %7 : vector<8x96xf32>
    %9 = vector.extract_strided_slice %8 {offsets = [0, 0], sizes = [8, 32], strides = [1, 1]} : vector<8x96xf32> to vector<8x32xf32>
    %10 = vector.extract_strided_slice %8 {offsets = [0, 32], sizes = [8, 32], strides = [1, 1]} : vector<8x96xf32> to vector<8x32xf32>
    %11 = vector.extract_strided_slice %8 {offsets = [0, 64], sizes = [8, 32], strides = [1, 1]} : vector<8x96xf32> to vector<8x32xf32>
    %12 = vector.shape_cast %9 : vector<8x32xf32> to vector<1x8x32xf32>
    %13 = vector.shape_cast %10 : vector<8x32xf32> to vector<1x8x32xf32>
    %14 = vector.shape_cast %11 : vector<8x32xf32> to vector<1x8x32xf32>
    %c0_9 = arith.constant 0 : index
    %c0_10 = arith.constant 0 : index
    %c0_11 = arith.constant 0 : index
    %15 = vector.load %arg3[%c0_9, %c0_10, %c0_11] : memref<1x8x8xbf16, #tpu.memory_space<vmem>>, vector<1x8x8xbf16>
    %16 = arith.extf %15 : vector<1x8x8xbf16> to vector<1x8x8xf32>
    %17 = vector.extract_strided_slice %12 {offsets = [0, 0, 0], sizes = [1, 8, 8], strides = [1, 1, 1]} : vector<1x8x32xf32> to vector<1x8x8xf32>
    %18 = vector.extract_strided_slice %13 {offsets = [0, 0, 0], sizes = [1, 8, 8], strides = [1, 1, 1]} : vector<1x8x32xf32> to vector<1x8x8xf32>
    %cst_12 = arith.constant dense<0.000000e+00> : vector<1x8x8xf32>
    %19 = tpu.matmul %17, %18, %cst_12 {dimension_numbers = #tpu.dot_dimension_numbers<[2], [2], [1], [1], [0, 0, 0, 1, 1, 1], [0], [0]>} : vector<1x8x8xf32>, vector<1x8x8xf32>, vector<1x8x8xf32> -> vector<1x8x8xf32>
    %20 = arith.addf %19, %16 : vector<1x8x8xf32>
    %cst_13 = arith.constant dense<0xFF800000> : vector<1x8xf32>
    %21 = vector.multi_reduction <maximumf>, %20, %cst_13 [2] : vector<1x8x8xf32> to vector<1x8xf32>
    %22 = vector.shape_cast %21 : vector<1x8xf32> to vector<1x8x1xf32>
    %23 = vector.broadcast %22 : vector<1x8x1xf32> to vector<1x8x8xf32>
    %24 = arith.subf %20, %23 : vector<1x8x8xf32>
    %25 = math.exp %24 : vector<1x8x8xf32>
    %cst_14 = arith.constant dense<0.000000e+00> : vector<1x8xf32>
    %26 = vector.multi_reduction <add>, %25, %cst_14 [2] : vector<1x8x8xf32> to vector<1x8xf32>
    %27 = vector.shape_cast %26 : vector<1x8xf32> to vector<1x8x1xf32>
    %28 = tpu.reciprocal %27 : vector<1x8x1xf32> -> vector<1x8x1xf32>
    %29 = vector.broadcast %28 : vector<1x8x1xf32> to vector<1x8x8xf32>
    %30 = arith.mulf %25, %29 : vector<1x8x8xf32>
    %c0_15 = arith.constant 0 : index
    %c0_16 = arith.constant 0 : index
    %c0_17 = arith.constant 0 : index
    %c0_18 = arith.constant 0 : index
    %31 = vector.load %arg26[%c0_15, %c0_16, %c0_17, %c0_18] : memref<1x4x8x8xf32, #tpu.memory_space<vmem>>, vector<1x1x8x8xf32>
    %32 = vector.shape_cast %31 : vector<1x1x8x8xf32> to vector<1x8x8xf32>
    %33 = vector.shape_cast %30 : vector<1x8x8xf32> to vector<1x1x8x8xf32>
    tpu.vector_store %arg26[%c0_15, %c0_16, %c0_17, %c0_18], %33 {strides = array<i32>} : memref<1x4x8x8xf32, #tpu.memory_space<vmem>>, vector<1x1x8x8xf32>,
    %34 = vector.extract_strided_slice %14 {offsets = [0, 0, 0], sizes = [1, 8, 8], strides = [1, 1, 1]} : vector<1x8x32xf32> to vector<1x8x8xf32>
    %cst_19 = arith.constant dense<0.000000e+00> : vector<1x8x8xf32>
    %35 = tpu.matmul %30, %34, %cst_19 {dimension_numbers = #tpu.dot_dimension_numbers<[2], [1], [1], [2], [0, 0, 0, 1, 1, 2], [0], [0]>} : vector<1x8x8xf32>, vector<1x8x8xf32>, vector<1x8x8xf32> -> vector<1x8x8xf32>
    %36 = vector.extract_strided_slice %12 {offsets = [0, 0, 8], sizes = [1, 8, 8], strides = [1, 1, 1]} : vector<1x8x32xf32> to vector<1x8x8xf32>
    %37 = vector.extract_strided_slice %13 {offsets = [0, 0, 8], sizes = [1, 8, 8], strides = [1, 1, 1]} : vector<1x8x32xf32> to vector<1x8x8xf32>
    %cst_20 = arith.constant dense<0.000000e+00> : vector<1x8x8xf32>
    %38 = tpu.matmul %36, %37, %cst_20 {dimension_numbers = #tpu.dot_dimension_numbers<[2], [2], [1], [1], [0, 0, 0, 1, 1, 1], [0], [0]>} : vector<1x8x8xf32>, vector<1x8x8xf32>, vector<1x8x8xf32> -> vector<1x8x8xf32>
    %39 = arith.addf %38, %16 : vector<1x8x8xf32>
    %cst_21 = arith.constant dense<0xFF800000> : vector<1x8xf32>
    %40 = vector.multi_reduction <maximumf>, %39, %cst_21 [2] : vector<1x8x8xf32> to vector<1x8xf32>
    %41 = vector.shape_cast %40 : vector<1x8xf32> to vector<1x8x1xf32>
    %42 = vector.broadcast %41 : vector<1x8x1xf32> to vector<1x8x8xf32>
    %43 = arith.subf %39, %42 : vector<1x8x8xf32>
    %44 = math.exp %43 : vector<1x8x8xf32>
    %cst_22 = arith.constant dense<0.000000e+00> : vector<1x8xf32>
    %45 = vector.multi_reduction <add>, %44, %cst_22 [2] : vector<1x8x8xf32> to vector<1x8xf32>
    %46 = vector.shape_cast %45 : vector<1x8xf32> to vector<1x8x1xf32>
    %47 = tpu.reciprocal %46 : vector<1x8x1xf32> -> vector<1x8x1xf32>
    %48 = vector.broadcast %47 : vector<1x8x1xf32> to vector<1x8x8xf32>
    %49 = arith.mulf %44, %48 : vector<1x8x8xf32>
    %c0_23 = arith.constant 0 : index
    %c1 = arith.constant 1 : index
    %c0_24 = arith.constant 0 : index
    %c0_25 = arith.constant 0 : index
    %50 = vector.load %arg26[%c0_23, %c1, %c0_24, %c0_25] : memref<1x4x8x8xf32, #tpu.memory_space<vmem>>, vector<1x1x8x8xf32>
    %51 = vector.shape_cast %50 : vector<1x1x8x8xf32> to vector<1x8x8xf32>
    %52 = vector.shape_cast %49 : vector<1x8x8xf32> to vector<1x1x8x8xf32>
    tpu.vector_store %arg26[%c0_23, %c1, %c0_24, %c0_25], %52 {strides = array<i32>} : memref<1x4x8x8xf32, #tpu.memory_space<vmem>>, vector<1x1x8x8xf32>,
    %53 = vector.extract_strided_slice %14 {offsets = [0, 0, 8], sizes = [1, 8, 8], strides = [1, 1, 1]} : vector<1x8x32xf32> to vector<1x8x8xf32>
    %cst_26 = arith.constant dense<0.000000e+00> : vector<1x8x8xf32>
    %54 = tpu.matmul %49, %53, %cst_26 {dimension_numbers = #tpu.dot_dimension_numbers<[2], [1], [1], [2], [0, 0, 0, 1, 1, 2], [0], [0]>} : vector<1x8x8xf32>, vector<1x8x8xf32>, vector<1x8x8xf32> -> vector<1x8x8xf32>
    %55 = vector.extract_strided_slice %12 {offsets = [0, 0, 16], sizes = [1, 8, 8], strides = [1, 1, 1]} : vector<1x8x32xf32> to vector<1x8x8xf32>
    %56 = vector.extract_strided_slice %13 {offsets = [0, 0, 16], sizes = [1, 8, 8], strides = [1, 1, 1]} : vector<1x8x32xf32> to vector<1x8x8xf32>
    %cst_27 = arith.constant dense<0.000000e+00> : vector<1x8x8xf32>
    %57 = tpu.matmul %55, %56, %cst_27 {dimension_numbers = #tpu.dot_dimension_numbers<[2], [2], [1], [1], [0, 0, 0, 1, 1, 1], [0], [0]>} : vector<1x8x8xf32>, vector<1x8x8xf32>, vector<1x8x8xf32> -> vector<1x8x8xf32>
    %58 = arith.addf %57, %16 : vector<1x8x8xf32>
    %cst_28 = arith.constant dense<0xFF800000> : vector<1x8xf32>
    %59 = vector.multi_reduction <maximumf>, %58, %cst_28 [2] : vector<1x8x8xf32> to vector<1x8xf32>
    %60 = vector.shape_cast %59 : vector<1x8xf32> to vector<1x8x1xf32>
    %61 = vector.broadcast %60 : vector<1x8x1xf32> to vector<1x8x8xf32>
    %62 = arith.subf %58, %61 : vector<1x8x8xf32>
    %63 = math.exp %62 : vector<1x8x8xf32>
    %cst_29 = arith.constant dense<0.000000e+00> : vector<1x8xf32>
    %64 = vector.multi_reduction <add>, %63, %cst_29 [2] : vector<1x8x8xf32> to vector<1x8xf32>
    %65 = vector.shape_cast %64 : vector<1x8xf32> to vector<1x8x1xf32>
    %66 = tpu.reciprocal %65 : vector<1x8x1xf32> -> vector<1x8x1xf32>
    %67 = vector.broadcast %66 : vector<1x8x1xf32> to vector<1x8x8xf32>
    %68 = arith.mulf %63, %67 : vector<1x8x8xf32>
    %c0_30 = arith.constant 0 : index
    %c2 = arith.constant 2 : index
    %c0_31 = arith.constant 0 : index
    %c0_32 = arith.constant 0 : index
    %69 = vector.load %arg26[%c0_30, %c2, %c0_31, %c0_32] : memref<1x4x8x8xf32, #tpu.memory_space<vmem>>, vector<1x1x8x8xf32>
    %70 = vector.shape_cast %69 : vector<1x1x8x8xf32> to vector<1x8x8xf32>
    %71 = vector.shape_cast %68 : vector<1x8x8xf32> to vector<1x1x8x8xf32>
    tpu.vector_store %arg26[%c0_30, %c2, %c0_31, %c0_32], %71 {strides = array<i32>} : memref<1x4x8x8xf32, #tpu.memory_space<vmem>>, vector<1x1x8x8xf32>,
    %72 = vector.extract_strided_slice %14 {offsets = [0, 0, 16], sizes = [1, 8, 8], strides = [1, 1, 1]} : vector<1x8x32xf32> to vector<1x8x8xf32>
    %cst_33 = arith.constant dense<0.000000e+00> : vector<1x8x8xf32>
    %73 = tpu.matmul %68, %72, %cst_33 {dimension_numbers = #tpu.dot_dimension_numbers<[2], [1], [1], [2], [0, 0, 0, 1, 1, 2], [0], [0]>} : vector<1x8x8xf32>, vector<1x8x8xf32>, vector<1x8x8xf32> -> vector<1x8x8xf32>
    %74 = vector.extract_strided_slice %12 {offsets = [0, 0, 24], sizes = [1, 8, 8], strides = [1, 1, 1]} : vector<1x8x32xf32> to vector<1x8x8xf32>
    %75 = vector.extract_strided_slice %13 {offsets = [0, 0, 24], sizes = [1, 8, 8], strides = [1, 1, 1]} : vector<1x8x32xf32> to vector<1x8x8xf32>
    %cst_34 = arith.constant dense<0.000000e+00> : vector<1x8x8xf32>
    %76 = tpu.matmul %74, %75, %cst_34 {dimension_numbers = #tpu.dot_dimension_numbers<[2], [2], [1], [1], [0, 0, 0, 1, 1, 1], [0], [0]>} : vector<1x8x8xf32>, vector<1x8x8xf32>, vector<1x8x8xf32> -> vector<1x8x8xf32>
    %77 = arith.addf %76, %16 : vector<1x8x8xf32>
    %cst_35 = arith.constant dense<0xFF800000> : vector<1x8xf32>
    %78 = vector.multi_reduction <maximumf>, %77, %cst_35 [2] : vector<1x8x8xf32> to vector<1x8xf32>
    %79 = vector.shape_cast %78 : vector<1x8xf32> to vector<1x8x1xf32>
    %80 = vector.broadcast %79 : vector<1x8x1xf32> to vector<1x8x8xf32>
    %81 = arith.subf %77, %80 : vector<1x8x8xf32>
    %82 = math.exp %81 : vector<1x8x8xf32>
    %cst_36 = arith.constant dense<0.000000e+00> : vector<1x8xf32>
    %83 = vector.multi_reduction <add>, %82, %cst_36 [2] : vector<1x8x8xf32> to vector<1x8xf32>
    %84 = vector.shape_cast %83 : vector<1x8xf32> to vector<1x8x1xf32>
    %85 = tpu.reciprocal %84 : vector<1x8x1xf32> -> vector<1x8x1xf32>
    %86 = vector.broadcast %85 : vector<1x8x1xf32> to vector<1x8x8xf32>
    %87 = arith.mulf %82, %86 : vector<1x8x8xf32>
    %c0_37 = arith.constant 0 : index
    %c3 = arith.constant 3 : index
    %c0_38 = arith.constant 0 : index
    %c0_39 = arith.constant 0 : index
    %88 = vector.load %arg26[%c0_37, %c3, %c0_38, %c0_39] : memref<1x4x8x8xf32, #tpu.memory_space<vmem>>, vector<1x1x8x8xf32>
    %89 = vector.shape_cast %88 : vector<1x1x8x8xf32> to vector<1x8x8xf32>
    %90 = vector.shape_cast %87 : vector<1x8x8xf32> to vector<1x1x8x8xf32>
    tpu.vector_store %arg26[%c0_37, %c3, %c0_38, %c0_39], %90 {strides = array<i32>} : memref<1x4x8x8xf32, #tpu.memory_space<vmem>>, vector<1x1x8x8xf32>,
    %91 = vector.extract_strided_slice %14 {offsets = [0, 0, 24], sizes = [1, 8, 8], strides = [1, 1, 1]} : vector<1x8x32xf32> to vector<1x8x8xf32>
    %cst_40 = arith.constant dense<0.000000e+00> : vector<1x8x8xf32>
    %92 = tpu.matmul %87, %91, %cst_40 {dimension_numbers = #tpu.dot_dimension_numbers<[2], [1], [1], [2], [0, 0, 0, 1, 1, 2], [0], [0]>} : vector<1x8x8xf32>, vector<1x8x8xf32>, vector<1x8x8xf32> -> vector<1x8x8xf32>
    %93 = tpu.concatenate %35, %54, %73, %92 in 2 : vector<1x8x8xf32>, vector<1x8x8xf32>, vector<1x8x8xf32>, vector<1x8x8xf32> -> vector<1x8x32xf32>
    %94 = vector.shape_cast %93 : vector<1x8x32xf32> to vector<8x32xf32>
    %c0_41 = arith.constant 0 : index
    %c0_42 = arith.constant 0 : index
    %95 = vector.load %arg7[%c0_41, %c0_42] : memref<32x32xf32, #tpu.memory_space<vmem>>, vector<32x32xf32>
    %cst_43 = arith.constant dense<0.000000e+00> : vector<8x32xf32>
    %96 = tpu.matmul %94, %95, %cst_43 {dimension_numbers = #tpu.dot_dimension_numbers<[1], [0], [0], [1], [0, 0, 1, 1], [], []>} : vector<8x32xf32>, vector<32x32xf32>, vector<8x32xf32> -> vector<8x32xf32>
    %c0_44 = arith.constant 0 : index
    %c0_45 = arith.constant 0 : index
    %97 = vector.load %arg8[%c0_44, %c0_45] : memref<1x32xf32, #tpu.memory_space<vmem>>, vector<1x32xf32>
    %98 = vector.broadcast %97 : vector<1x32xf32> to vector<8x32xf32>
    %99 = arith.addf %96, %98 : vector<8x32xf32>
    %100 = arith.addf %1, %99 : vector<8x32xf32>
    %c0_46 = arith.constant 0 : index
    %c0_47 = arith.constant 0 : index
    %101 = vector.load %arg9[%c0_46, %c0_47] : memref<1x32xf32, #tpu.memory_space<vmem>>, vector<1x32xf32>
    %c0_48 = arith.constant 0 : index
    %c0_49 = arith.constant 0 : index
    %102 = vector.load %arg10[%c0_48, %c0_49] : memref<1x32xf32, #tpu.memory_space<vmem>>, vector<1x32xf32>
    %cst_50 = arith.constant dense<0.000000e+00> : vector<8xf32>
    %103 = vector.multi_reduction <add>, %100, %cst_50 [1] : vector<8x32xf32> to vector<8xf32>
    %104 = vector.shape_cast %103 : vector<8xf32> to vector<8x1xf32>
    %cst_51 = arith.constant 3.200000e+01 : f32
    %105 = vector.broadcast %cst_51 : f32 to vector<8x1xf32>
    %106 = arith.divf %104, %105 : vector<8x1xf32>
    %107 = vector.broadcast %106 : vector<8x1xf32> to vector<8x32xf32>
    %108 = arith.subf %100, %107 : vector<8x32xf32>
    %109 = arith.mulf %108, %108 : vector<8x32xf32>
    %cst_52 = arith.constant dense<0.000000e+00> : vector<8xf32>
    %110 = vector.multi_reduction <add>, %109, %cst_52 [1] : vector<8x32xf32> to vector<8xf32>
    %111 = vector.shape_cast %110 : vector<8xf32> to vector<8x1xf32>
    %cst_53 = arith.constant 3.200000e+01 : f32
    %112 = vector.broadcast %cst_53 : f32 to vector<8x1xf32>
    %113 = arith.divf %111, %112 : vector<8x1xf32>
    %114 = vector.broadcast %106 : vector<8x1xf32> to vector<8x32xf32>
    %115 = arith.subf %100, %114 : vector<8x32xf32>
    %cst_54 = arith.constant 9.99999974E-6 : f32
    %116 = vector.broadcast %cst_54 : f32 to vector<8x1xf32>
    %117 = arith.addf %113, %116 : vector<8x1xf32>
    %118 = math.rsqrt %117 : vector<8x1xf32>
    %119 = vector.broadcast %118 : vector<8x1xf32> to vector<8x32xf32>
    %120 = arith.mulf %115, %119 : vector<8x32xf32>
    %121 = vector.broadcast %101 : vector<1x32xf32> to vector<8x32xf32>
    %122 = arith.mulf %120, %121 : vector<8x32xf32>
    %123 = vector.broadcast %102 : vector<1x32xf32> to vector<8x32xf32>
    %124 = arith.addf %122, %123 : vector<8x32xf32>
    %c0_55 = arith.constant 0 : index
    %c0_56 = arith.constant 0 : index
    %125 = vector.load %arg11[%c0_55, %c0_56] : memref<32x32xf32, #tpu.memory_space<vmem>>, vector<32x32xf32>
    %cst_57 = arith.constant dense<0.000000e+00> : vector<8x32xf32>
    %126 = tpu.matmul %124, %125, %cst_57 {dimension_numbers = #tpu.dot_dimension_numbers<[1], [0], [0], [1], [0, 0, 1, 1], [], []>} : vector<8x32xf32>, vector<32x32xf32>, vector<8x32xf32> -> vector<8x32xf32>
    %c0_58 = arith.constant 0 : index
    %c0_59 = arith.constant 0 : index
    %127 = vector.load %arg12[%c0_58, %c0_59] : memref<1x32xf32, #tpu.memory_space<vmem>>, vector<1x32xf32>
    %128 = vector.broadcast %127 : vector<1x32xf32> to vector<8x32xf32>
    %129 = arith.addf %126, %128 : vector<8x32xf32>
    %c0_60 = arith.constant 0 : index
    %c0_61 = arith.constant 0 : index
    %130 = vector.load %arg13[%c0_60, %c0_61] : memref<32x64xf32, #tpu.memory_space<vmem>>, vector<32x64xf32>
    %cst_62 = arith.constant dense<0.000000e+00> : vector<8x64xf32>
    %131 = tpu.matmul %3, %130, %cst_62 {dimension_numbers = #tpu.dot_dimension_numbers<[1], [0], [0], [1], [0, 0, 1, 1], [], []>} : vector<8x32xf32>, vector<32x64xf32>, vector<8x64xf32> -> vector<8x64xf32>
    %c0_63 = arith.constant 0 : index
    %c0_64 = arith.constant 0 : index
    %132 = vector.load %arg14[%c0_63, %c0_64] : memref<1x64xf32, #tpu.memory_space<vmem>>, vector<1x64xf32>
    %133 = vector.broadcast %132 : vector<1x64xf32> to vector<8x64xf32>
    %134 = arith.addf %131, %133 : vector<8x64xf32>
    %135 = vector.extract_strided_slice %134 {offsets = [0, 0], sizes = [8, 32], strides = [1, 1]} : vector<8x64xf32> to vector<8x32xf32>
    %136 = vector.extract_strided_slice %134 {offsets = [0, 32], sizes = [8, 32], strides = [1, 1]} : vector<8x64xf32> to vector<8x32xf32>
    %137 = vector.shape_cast %129 : vector<8x32xf32> to vector<1x8x32xf32>
    %138 = vector.shape_cast %135 : vector<8x32xf32> to vector<1x8x32xf32>
    %139 = vector.shape_cast %136 : vector<8x32xf32> to vector<1x8x32xf32>
    %c0_65 = arith.constant 0 : index
    %c0_66 = arith.constant 0 : index
    %c0_67 = arith.constant 0 : index
    %140 = vector.load %arg4[%c0_65, %c0_66, %c0_67] : memref<1x8x8xbf16, #tpu.memory_space<vmem>>, vector<1x8x8xbf16>
    %141 = arith.extf %140 : vector<1x8x8xbf16> to vector<1x8x8xf32>
    %142 = vector.extract_strided_slice %137 {offsets = [0, 0, 0], sizes = [1, 8, 8], strides = [1, 1, 1]} : vector<1x8x32xf32> to vector<1x8x8xf32>
    %143 = vector.extract_strided_slice %138 {offsets = [0, 0, 0], sizes = [1, 8, 8], strides = [1, 1, 1]} : vector<1x8x32xf32> to vector<1x8x8xf32>
    %cst_68 = arith.constant dense<0.000000e+00> : vector<1x8x8xf32>
    %144 = tpu.matmul %142, %143, %cst_68 {dimension_numbers = #tpu.dot_dimension_numbers<[2], [2], [1], [1], [0, 0, 0, 1, 1, 1], [0], [0]>} : vector<1x8x8xf32>, vector<1x8x8xf32>, vector<1x8x8xf32> -> vector<1x8x8xf32>
    %145 = arith.addf %144, %141 : vector<1x8x8xf32>
    %cst_69 = arith.constant dense<0xFF800000> : vector<1x8xf32>
    %146 = vector.multi_reduction <maximumf>, %145, %cst_69 [2] : vector<1x8x8xf32> to vector<1x8xf32>
    %147 = vector.shape_cast %146 : vector<1x8xf32> to vector<1x8x1xf32>
    %148 = vector.broadcast %147 : vector<1x8x1xf32> to vector<1x8x8xf32>
    %149 = arith.subf %145, %148 : vector<1x8x8xf32>
    %150 = math.exp %149 : vector<1x8x8xf32>
    %cst_70 = arith.constant dense<0.000000e+00> : vector<1x8xf32>
    %151 = vector.multi_reduction <add>, %150, %cst_70 [2] : vector<1x8x8xf32> to vector<1x8xf32>
    %152 = vector.shape_cast %151 : vector<1x8xf32> to vector<1x8x1xf32>
    %153 = tpu.reciprocal %152 : vector<1x8x1xf32> -> vector<1x8x1xf32>
    %154 = vector.broadcast %153 : vector<1x8x1xf32> to vector<1x8x8xf32>
    %155 = arith.mulf %150, %154 : vector<1x8x8xf32>
    %c0_71 = arith.constant 0 : index
    %c0_72 = arith.constant 0 : index
    %c0_73 = arith.constant 0 : index
    %c0_74 = arith.constant 0 : index
    %156 = vector.load %arg27[%c0_71, %c0_72, %c0_73, %c0_74] : memref<1x4x8x8xf32, #tpu.memory_space<vmem>>, vector<1x1x8x8xf32>
    %157 = vector.shape_cast %156 : vector<1x1x8x8xf32> to vector<1x8x8xf32>
    %158 = vector.shape_cast %155 : vector<1x8x8xf32> to vector<1x1x8x8xf32>
    tpu.vector_store %arg27[%c0_71, %c0_72, %c0_73, %c0_74], %158 {strides = array<i32>} : memref<1x4x8x8xf32, #tpu.memory_space<vmem>>, vector<1x1x8x8xf32>,
    %159 = vector.extract_strided_slice %139 {offsets = [0, 0, 0], sizes = [1, 8, 8], strides = [1, 1, 1]} : vector<1x8x32xf32> to vector<1x8x8xf32>
    %cst_75 = arith.constant dense<0.000000e+00> : vector<1x8x8xf32>
    %160 = tpu.matmul %155, %159, %cst_75 {dimension_numbers = #tpu.dot_dimension_numbers<[2], [1], [1], [2], [0, 0, 0, 1, 1, 2], [0], [0]>} : vector<1x8x8xf32>, vector<1x8x8xf32>, vector<1x8x8xf32> -> vector<1x8x8xf32>
    %161 = vector.extract_strided_slice %137 {offsets = [0, 0, 8], sizes = [1, 8, 8], strides = [1, 1, 1]} : vector<1x8x32xf32> to vector<1x8x8xf32>
    %162 = vector.extract_strided_slice %138 {offsets = [0, 0, 8], sizes = [1, 8, 8], strides = [1, 1, 1]} : vector<1x8x32xf32> to vector<1x8x8xf32>
    %cst_76 = arith.constant dense<0.000000e+00> : vector<1x8x8xf32>
    %163 = tpu.matmul %161, %162, %cst_76 {dimension_numbers = #tpu.dot_dimension_numbers<[2], [2], [1], [1], [0, 0, 0, 1, 1, 1], [0], [0]>} : vector<1x8x8xf32>, vector<1x8x8xf32>, vector<1x8x8xf32> -> vector<1x8x8xf32>
    %164 = arith.addf %163, %141 : vector<1x8x8xf32>
    %cst_77 = arith.constant dense<0xFF800000> : vector<1x8xf32>
    %165 = vector.multi_reduction <maximumf>, %164, %cst_77 [2] : vector<1x8x8xf32> to vector<1x8xf32>
    %166 = vector.shape_cast %165 : vector<1x8xf32> to vector<1x8x1xf32>
    %167 = vector.broadcast %166 : vector<1x8x1xf32> to vector<1x8x8xf32>
    %168 = arith.subf %164, %167 : vector<1x8x8xf32>
    %169 = math.exp %168 : vector<1x8x8xf32>
    %cst_78 = arith.constant dense<0.000000e+00> : vector<1x8xf32>
    %170 = vector.multi_reduction <add>, %169, %cst_78 [2] : vector<1x8x8xf32> to vector<1x8xf32>
    %171 = vector.shape_cast %170 : vector<1x8xf32> to vector<1x8x1xf32>
    %172 = tpu.reciprocal %171 : vector<1x8x1xf32> -> vector<1x8x1xf32>
    %173 = vector.broadcast %172 : vector<1x8x1xf32> to vector<1x8x8xf32>
    %174 = arith.mulf %169, %173 : vector<1x8x8xf32>
    %c0_79 = arith.constant 0 : index
    %c1_80 = arith.constant 1 : index
    %c0_81 = arith.constant 0 : index
    %c0_82 = arith.constant 0 : index
    %175 = vector.load %arg27[%c0_79, %c1_80, %c0_81, %c0_82] : memref<1x4x8x8xf32, #tpu.memory_space<vmem>>, vector<1x1x8x8xf32>
    %176 = vector.shape_cast %175 : vector<1x1x8x8xf32> to vector<1x8x8xf32>
    %177 = vector.shape_cast %174 : vector<1x8x8xf32> to vector<1x1x8x8xf32>
    tpu.vector_store %arg27[%c0_79, %c1_80, %c0_81, %c0_82], %177 {strides = array<i32>} : memref<1x4x8x8xf32, #tpu.memory_space<vmem>>, vector<1x1x8x8xf32>,
    %178 = vector.extract_strided_slice %139 {offsets = [0, 0, 8], sizes = [1, 8, 8], strides = [1, 1, 1]} : vector<1x8x32xf32> to vector<1x8x8xf32>
    %cst_83 = arith.constant dense<0.000000e+00> : vector<1x8x8xf32>
    %179 = tpu.matmul %174, %178, %cst_83 {dimension_numbers = #tpu.dot_dimension_numbers<[2], [1], [1], [2], [0, 0, 0, 1, 1, 2], [0], [0]>} : vector<1x8x8xf32>, vector<1x8x8xf32>, vector<1x8x8xf32> -> vector<1x8x8xf32>
    %180 = vector.extract_strided_slice %137 {offsets = [0, 0, 16], sizes = [1, 8, 8], strides = [1, 1, 1]} : vector<1x8x32xf32> to vector<1x8x8xf32>
    %181 = vector.extract_strided_slice %138 {offsets = [0, 0, 16], sizes = [1, 8, 8], strides = [1, 1, 1]} : vector<1x8x32xf32> to vector<1x8x8xf32>
    %cst_84 = arith.constant dense<0.000000e+00> : vector<1x8x8xf32>
    %182 = tpu.matmul %180, %181, %cst_84 {dimension_numbers = #tpu.dot_dimension_numbers<[2], [2], [1], [1], [0, 0, 0, 1, 1, 1], [0], [0]>} : vector<1x8x8xf32>, vector<1x8x8xf32>, vector<1x8x8xf32> -> vector<1x8x8xf32>
    %183 = arith.addf %182, %141 : vector<1x8x8xf32>
    %cst_85 = arith.constant dense<0xFF800000> : vector<1x8xf32>
    %184 = vector.multi_reduction <maximumf>, %183, %cst_85 [2] : vector<1x8x8xf32> to vector<1x8xf32>
    %185 = vector.shape_cast %184 : vector<1x8xf32> to vector<1x8x1xf32>
    %186 = vector.broadcast %185 : vector<1x8x1xf32> to vector<1x8x8xf32>
    %187 = arith.subf %183, %186 : vector<1x8x8xf32>
    %188 = math.exp %187 : vector<1x8x8xf32>
    %cst_86 = arith.constant dense<0.000000e+00> : vector<1x8xf32>
    %189 = vector.multi_reduction <add>, %188, %cst_86 [2] : vector<1x8x8xf32> to vector<1x8xf32>
    %190 = vector.shape_cast %189 : vector<1x8xf32> to vector<1x8x1xf32>
    %191 = tpu.reciprocal %190 : vector<1x8x1xf32> -> vector<1x8x1xf32>
    %192 = vector.broadcast %191 : vector<1x8x1xf32> to vector<1x8x8xf32>
    %193 = arith.mulf %188, %192 : vector<1x8x8xf32>
    %c0_87 = arith.constant 0 : index
    %c2_88 = arith.constant 2 : index
    %c0_89 = arith.constant 0 : index
    %c0_90 = arith.constant 0 : index
    %194 = vector.load %arg27[%c0_87, %c2_88, %c0_89, %c0_90] : memref<1x4x8x8xf32, #tpu.memory_space<vmem>>, vector<1x1x8x8xf32>
    %195 = vector.shape_cast %194 : vector<1x1x8x8xf32> to vector<1x8x8xf32>
    %196 = vector.shape_cast %193 : vector<1x8x8xf32> to vector<1x1x8x8xf32>
    tpu.vector_store %arg27[%c0_87, %c2_88, %c0_89, %c0_90], %196 {strides = array<i32>} : memref<1x4x8x8xf32, #tpu.memory_space<vmem>>, vector<1x1x8x8xf32>,
    %197 = vector.extract_strided_slice %139 {offsets = [0, 0, 16], sizes = [1, 8, 8], strides = [1, 1, 1]} : vector<1x8x32xf32> to vector<1x8x8xf32>
    %cst_91 = arith.constant dense<0.000000e+00> : vector<1x8x8xf32>
    %198 = tpu.matmul %193, %197, %cst_91 {dimension_numbers = #tpu.dot_dimension_numbers<[2], [1], [1], [2], [0, 0, 0, 1, 1, 2], [0], [0]>} : vector<1x8x8xf32>, vector<1x8x8xf32>, vector<1x8x8xf32> -> vector<1x8x8xf32>
    %199 = vector.extract_strided_slice %137 {offsets = [0, 0, 24], sizes = [1, 8, 8], strides = [1, 1, 1]} : vector<1x8x32xf32> to vector<1x8x8xf32>
    %200 = vector.extract_strided_slice %138 {offsets = [0, 0, 24], sizes = [1, 8, 8], strides = [1, 1, 1]} : vector<1x8x32xf32> to vector<1x8x8xf32>
    %cst_92 = arith.constant dense<0.000000e+00> : vector<1x8x8xf32>
    %201 = tpu.matmul %199, %200, %cst_92 {dimension_numbers = #tpu.dot_dimension_numbers<[2], [2], [1], [1], [0, 0, 0, 1, 1, 1], [0], [0]>} : vector<1x8x8xf32>, vector<1x8x8xf32>, vector<1x8x8xf32> -> vector<1x8x8xf32>
    %202 = arith.addf %201, %141 : vector<1x8x8xf32>
    %cst_93 = arith.constant dense<0xFF800000> : vector<1x8xf32>
    %203 = vector.multi_reduction <maximumf>, %202, %cst_93 [2] : vector<1x8x8xf32> to vector<1x8xf32>
    %204 = vector.shape_cast %203 : vector<1x8xf32> to vector<1x8x1xf32>
    %205 = vector.broadcast %204 : vector<1x8x1xf32> to vector<1x8x8xf32>
    %206 = arith.subf %202, %205 : vector<1x8x8xf32>
    %207 = math.exp %206 : vector<1x8x8xf32>
    %cst_94 = arith.constant dense<0.000000e+00> : vector<1x8xf32>
    %208 = vector.multi_reduction <add>, %207, %cst_94 [2] : vector<1x8x8xf32> to vector<1x8xf32>
    %209 = vector.shape_cast %208 : vector<1x8xf32> to vector<1x8x1xf32>
    %210 = tpu.reciprocal %209 : vector<1x8x1xf32> -> vector<1x8x1xf32>
    %211 = vector.broadcast %210 : vector<1x8x1xf32> to vector<1x8x8xf32>
    %212 = arith.mulf %207, %211 : vector<1x8x8xf32>
    %c0_95 = arith.constant 0 : index
    %c3_96 = arith.constant 3 : index
    %c0_97 = arith.constant 0 : index
    %c0_98 = arith.constant 0 : index
    %213 = vector.load %arg27[%c0_95, %c3_96, %c0_97, %c0_98] : memref<1x4x8x8xf32, #tpu.memory_space<vmem>>, vector<1x1x8x8xf32>
    %214 = vector.shape_cast %213 : vector<1x1x8x8xf32> to vector<1x8x8xf32>
    %215 = vector.shape_cast %212 : vector<1x8x8xf32> to vector<1x1x8x8xf32>
    tpu.vector_store %arg27[%c0_95, %c3_96, %c0_97, %c0_98], %215 {strides = array<i32>} : memref<1x4x8x8xf32, #tpu.memory_space<vmem>>, vector<1x1x8x8xf32>,
    %216 = vector.extract_strided_slice %139 {offsets = [0, 0, 24], sizes = [1, 8, 8], strides = [1, 1, 1]} : vector<1x8x32xf32> to vector<1x8x8xf32>
    %cst_99 = arith.constant dense<0.000000e+00> : vector<1x8x8xf32>
    %217 = tpu.matmul %212, %216, %cst_99 {dimension_numbers = #tpu.dot_dimension_numbers<[2], [1], [1], [2], [0, 0, 0, 1, 1, 2], [0], [0]>} : vector<1x8x8xf32>, vector<1x8x8xf32>, vector<1x8x8xf32> -> vector<1x8x8xf32>
    %218 = tpu.concatenate %160, %179, %198, %217 in 2 : vector<1x8x8xf32>, vector<1x8x8xf32>, vector<1x8x8xf32>, vector<1x8x8xf32> -> vector<1x8x32xf32>
    %219 = vector.shape_cast %218 : vector<1x8x32xf32> to vector<8x32xf32>
    %c0_100 = arith.constant 0 : index
    %c0_101 = arith.constant 0 : index
    %220 = vector.load %arg15[%c0_100, %c0_101] : memref<32x32xf32, #tpu.memory_space<vmem>>, vector<32x32xf32>
    %cst_102 = arith.constant dense<0.000000e+00> : vector<8x32xf32>
    %221 = tpu.matmul %219, %220, %cst_102 {dimension_numbers = #tpu.dot_dimension_numbers<[1], [0], [0], [1], [0, 0, 1, 1], [], []>} : vector<8x32xf32>, vector<32x32xf32>, vector<8x32xf32> -> vector<8x32xf32>
    %c0_103 = arith.constant 0 : index
    %c0_104 = arith.constant 0 : index
    %222 = vector.load %arg16[%c0_103, %c0_104] : memref<1x32xf32, #tpu.memory_space<vmem>>, vector<1x32xf32>
    %223 = vector.broadcast %222 : vector<1x32xf32> to vector<8x32xf32>
    %224 = arith.addf %221, %223 : vector<8x32xf32>
    %225 = arith.addf %124, %224 : vector<8x32xf32>
    %c0_105 = arith.constant 0 : index
    %c0_106 = arith.constant 0 : index
    %226 = vector.load %arg17[%c0_105, %c0_106] : memref<1x32xf32, #tpu.memory_space<vmem>>, vector<1x32xf32>
    %c0_107 = arith.constant 0 : index
    %c0_108 = arith.constant 0 : index
    %227 = vector.load %arg18[%c0_107, %c0_108] : memref<1x32xf32, #tpu.memory_space<vmem>>, vector<1x32xf32>
    %cst_109 = arith.constant dense<0.000000e+00> : vector<8xf32>
    %228 = vector.multi_reduction <add>, %225, %cst_109 [1] : vector<8x32xf32> to vector<8xf32>
    %229 = vector.shape_cast %228 : vector<8xf32> to vector<8x1xf32>
    %cst_110 = arith.constant 3.200000e+01 : f32
    %230 = vector.broadcast %cst_110 : f32 to vector<8x1xf32>
    %231 = arith.divf %229, %230 : vector<8x1xf32>
    %232 = vector.broadcast %231 : vector<8x1xf32> to vector<8x32xf32>
    %233 = arith.subf %225, %232 : vector<8x32xf32>
    %234 = arith.mulf %233, %233 : vector<8x32xf32>
    %cst_111 = arith.constant dense<0.000000e+00> : vector<8xf32>
    %235 = vector.multi_reduction <add>, %234, %cst_111 [1] : vector<8x32xf32> to vector<8xf32>
    %236 = vector.shape_cast %235 : vector<8xf32> to vector<8x1xf32>
    %cst_112 = arith.constant 3.200000e+01 : f32
    %237 = vector.broadcast %cst_112 : f32 to vector<8x1xf32>
    %238 = arith.divf %236, %237 : vector<8x1xf32>
    %239 = vector.broadcast %231 : vector<8x1xf32> to vector<8x32xf32>
    %240 = arith.subf %225, %239 : vector<8x32xf32>
    %cst_113 = arith.constant 9.99999974E-6 : f32
    %241 = vector.broadcast %cst_113 : f32 to vector<8x1xf32>
    %242 = arith.addf %238, %241 : vector<8x1xf32>
    %243 = math.rsqrt %242 : vector<8x1xf32>
    %244 = vector.broadcast %243 : vector<8x1xf32> to vector<8x32xf32>
    %245 = arith.mulf %240, %244 : vector<8x32xf32>
    %246 = vector.broadcast %226 : vector<1x32xf32> to vector<8x32xf32>
    %247 = arith.mulf %245, %246 : vector<8x32xf32>
    %248 = vector.broadcast %227 : vector<1x32xf32> to vector<8x32xf32>
    %249 = arith.addf %247, %248 : vector<8x32xf32>
    %c0_114 = arith.constant 0 : index
    %c0_115 = arith.constant 0 : index
    %250 = vector.load %arg19[%c0_114, %c0_115] : memref<32x64xf32, #tpu.memory_space<vmem>>, vector<32x64xf32>
    %cst_116 = arith.constant dense<0.000000e+00> : vector<8x64xf32>
    %251 = tpu.matmul %249, %250, %cst_116 {dimension_numbers = #tpu.dot_dimension_numbers<[1], [0], [0], [1], [0, 0, 1, 1], [], []>} : vector<8x32xf32>, vector<32x64xf32>, vector<8x64xf32> -> vector<8x64xf32>
    %c0_117 = arith.constant 0 : index
    %c0_118 = arith.constant 0 : index
    %252 = vector.load %arg20[%c0_117, %c0_118] : memref<1x64xf32, #tpu.memory_space<vmem>>, vector<1x64xf32>
    %253 = vector.broadcast %252 : vector<1x64xf32> to vector<8x64xf32>
    %254 = arith.addf %251, %253 : vector<8x64xf32>
    %cst_119 = arith.constant 0.000000e+00 : f32
    %255 = vector.broadcast %cst_119 : f32 to vector<8x64xf32>
    %256 = arith.maximumf %254, %255 : vector<8x64xf32>
    %c0_120 = arith.constant 0 : index
    %c0_121 = arith.constant 0 : index
    %257 = vector.load %arg21[%c0_120, %c0_121] : memref<64x32xf32, #tpu.memory_space<vmem>>, vector<64x32xf32>
    %cst_122 = arith.constant dense<0.000000e+00> : vector<8x32xf32>
    %258 = tpu.matmul %256, %257, %cst_122 {dimension_numbers = #tpu.dot_dimension_numbers<[1], [0], [0], [1], [0, 0, 1, 1], [], []>} : vector<8x64xf32>, vector<64x32xf32>, vector<8x32xf32> -> vector<8x32xf32>
    %c0_123 = arith.constant 0 : index
    %c0_124 = arith.constant 0 : index
    %259 = vector.load %arg22[%c0_123, %c0_124] : memref<1x32xf32, #tpu.memory_space<vmem>>, vector<1x32xf32>
    %260 = vector.broadcast %259 : vector<1x32xf32> to vector<8x32xf32>
    %261 = arith.addf %258, %260 : vector<8x32xf32>
    %262 = arith.addf %249, %261 : vector<8x32xf32>
    %c0_125 = arith.constant 0 : index
    %c0_126 = arith.constant 0 : index
    %263 = vector.load %arg23[%c0_125, %c0_126] : memref<1x32xf32, #tpu.memory_space<vmem>>, vector<1x32xf32>
    %c0_127 = arith.constant 0 : index
    %c0_128 = arith.constant 0 : index
    %264 = vector.load %arg24[%c0_127, %c0_128] : memref<1x32xf32, #tpu.memory_space<vmem>>, vector<1x32xf32>
    %cst_129 = arith.constant dense<0.000000e+00> : vector<8xf32>
    %265 = vector.multi_reduction <add>, %262, %cst_129 [1] : vector<8x32xf32> to vector<8xf32>
    %266 = vector.shape_cast %265 : vector<8xf32> to vector<8x1xf32>
    %cst_130 = arith.constant 3.200000e+01 : f32
    %267 = vector.broadcast %cst_130 : f32 to vector<8x1xf32>
    %268 = arith.divf %266, %267 : vector<8x1xf32>
    %269 = vector.broadcast %268 : vector<8x1xf32> to vector<8x32xf32>
    %270 = arith.subf %262, %269 : vector<8x32xf32>
    %271 = arith.mulf %270, %270 : vector<8x32xf32>
    %cst_131 = arith.constant dense<0.000000e+00> : vector<8xf32>
    %272 = vector.multi_reduction <add>, %271, %cst_131 [1] : vector<8x32xf32> to vector<8xf32>
    %273 = vector.shape_cast %272 : vector<8xf32> to vector<8x1xf32>
    %cst_132 = arith.constant 3.200000e+01 : f32
    %274 = vector.broadcast %cst_132 : f32 to vector<8x1xf32>
    %275 = arith.divf %273, %274 : vector<8x1xf32>
    %276 = vector.broadcast %268 : vector<8x1xf32> to vector<8x32xf32>
    %277 = arith.subf %262, %276 : vector<8x32xf32>
    %cst_133 = arith.constant 9.99999974E-6 : f32
    %278 = vector.broadcast %cst_133 : f32 to vector<8x1xf32>
    %279 = arith.addf %275, %278 : vector<8x1xf32>
    %280 = math.rsqrt %279 : vector<8x1xf32>
    %281 = vector.broadcast %280 : vector<8x1xf32> to vector<8x32xf32>
    %282 = arith.mulf %277, %281 : vector<8x32xf32>
    %283 = vector.broadcast %263 : vector<1x32xf32> to vector<8x32xf32>
    %284 = arith.mulf %282, %283 : vector<8x32xf32>
    %285 = vector.broadcast %264 : vector<1x32xf32> to vector<8x32xf32>
    %286 = arith.addf %284, %285 : vector<8x32xf32>
    %287 = vector.shape_cast %286 : vector<8x32xf32> to vector<1x8x32xf32>
    %c0_134 = arith.constant 0 : index
    %c0_135 = arith.constant 0 : index
    %c0_136 = arith.constant 0 : index
    %288 = vector.load %arg25[%c0_134, %c0_135, %c0_136] : memref<1x8x32xf32, #tpu.memory_space<vmem>>, vector<1x8x32xf32>
    tpu.vector_store %arg25[%c0_134, %c0_135, %c0_136], %287 {strides = array<i32>} : memref<1x8x32xf32, #tpu.memory_space<vmem>>, vector<1x8x32xf32>,
    return
  }
  func.func @transform_0(%arg0: i32) -> (i32, i32, i32) {
    %c0_i32 = arith.constant 0 : i32
    %c0_i32_0 = arith.constant 0 : i32
    %c0_i32_1 = arith.constant 0 : i32
    return %arg0, %c0_i32, %c0_i32_0 : i32, i32, i32
  }
  func.func @transform_1(%arg0: i32) -> (i32, i32, i32) {
    %c0_i32 = arith.constant 0 : i32
    %c0_i32_0 = arith.constant 0 : i32
    %c0_i32_1 = arith.constant 0 : i32
    return %arg0, %c0_i32, %c0_i32_0 : i32, i32, i32
  }
  func.func @transform_2(%arg0: i32) -> (i32, i32, i32) {
    %c0_i32 = arith.constant 0 : i32
    %c0_i32_0 = arith.constant 0 : i32
    %c0_i32_1 = arith.constant 0 : i32
    %c0_i32_2 = arith.constant 0 : i32
    return %c0_i32, %c0_i32_0, %c0_i32_1 : i32, i32, i32
  }
  func.func @transform_3(%arg0: i32) -> (i32, i32, i32) {
    %c0_i32 = arith.constant 0 : i32
    %c0_i32_0 = arith.constant 0 : i32
    %c0_i32_1 = arith.constant 0 : i32
    %c0_i32_2 = arith.constant 0 : i32
    return %c0_i32, %c0_i32_0, %c0_i32_1 : i32, i32, i32
  }
  func.func @transform_4(%arg0: i32) -> (i32, i32) {
    %c0_i32 = arith.constant 0 : i32
    %c0_i32_0 = arith.constant 0 : i32
    %c0_i32_1 = arith.constant 0 : i32
    return %c0_i32, %c0_i32_0 : i32, i32
  }
  func.func @transform_5(%arg0: i32) -> (i32, i32) {
    %c0_i32 = arith.constant 0 : i32
    %c0_i32_0 = arith.constant 0 : i32
    %c0_i32_1 = arith.constant 0 : i32
    return %c0_i32, %c0_i32_0 : i32, i32
  }
  func.func @transform_6(%arg0: i32) -> (i32, i32) {
    %c0_i32 = arith.constant 0 : i32
    %c0_i32_0 = arith.constant 0 : i32
    %c0_i32_1 = arith.constant 0 : i32
    return %c0_i32, %c0_i32_0 : i32, i32
  }
  func.func @transform_7(%arg0: i32) -> (i32, i32) {
    %c0_i32 = arith.constant 0 : i32
    %c0_i32_0 = arith.constant 0 : i32
    %c0_i32_1 = arith.constant 0 : i32
    return %c0_i32, %c0_i32_0 : i32, i32
  }
  func.func @transform_8(%arg0: i32) -> (i32, i32) {
    %c0_i32 = arith.constant 0 : i32
    %c0_i32_0 = arith.constant 0 : i32
    %c0_i32_1 = arith.constant 0 : i32
    return %c0_i32, %c0_i32_0 : i32, i32
  }
  func.func @transform_9(%arg0: i32) -> (i32, i32) {
    %c0_i32 = arith.constant 0 : i32
    %c0_i32_0 = arith.constant 0 : i32
    %c0_i32_1 = arith.constant 0 : i32
    return %c0_i32, %c0_i32_0 : i32, i32
  }
  func.func @transform_10(%arg0: i32) -> (i32, i32) {
    %c0_i32 = arith.constant 0 : i32
    %c0_i32_0 = arith.constant 0 : i32
    %c0_i32_1 = arith.constant 0 : i32
    return %c0_i32, %c0_i32_0 : i32, i32
  }
  func.func @transform_11(%arg0: i32) -> (i32, i32) {
    %c0_i32 = arith.constant 0 : i32
    %c0_i32_0 = arith.constant 0 : i32
    %c0_i32_1 = arith.constant 0 : i32
    return %c0_i32, %c0_i32_0 : i32, i32
  }
  func.func @transform_12(%arg0: i32) -> (i32, i32) {
    %c0_i32 = arith.constant 0 : i32
    %c0_i32_0 = arith.constant 0 : i32
    %c0_i32_1 = arith.constant 0 : i32
    return %c0_i32, %c0_i32_0 : i32, i32
  }
  func.func @transform_13(%arg0: i32) -> (i32, i32) {
    %c0_i32 = arith.constant 0 : i32
    %c0_i32_0 = arith.constant 0 : i32
    %c0_i32_1 = arith.constant 0 : i32
    return %c0_i32, %c0_i32_0 : i32, i32
  }
  func.func @transform_14(%arg0: i32) -> (i32, i32) {
    %c0_i32 = arith.constant 0 : i32
    %c0_i32_0 = arith.constant 0 : i32
    %c0_i32_1 = arith.constant 0 : i32
    return %c0_i32, %c0_i32_0 : i32, i32
  }
  func.func @transform_15(%arg0: i32) -> (i32, i32) {
    %c0_i32 = arith.constant 0 : i32
    %c0_i32_0 = arith.constant 0 : i32
    %c0_i32_1 = arith.constant 0 : i32
    return %c0_i32, %c0_i32_0 : i32, i32
  }
  func.func @transform_16(%arg0: i32) -> (i32, i32) {
    %c0_i32 = arith.constant 0 : i32
    %c0_i32_0 = arith.constant 0 : i32
    %c0_i32_1 = arith.constant 0 : i32
    return %c0_i32, %c0_i32_0 : i32, i32
  }
  func.func @transform_17(%arg0: i32) -> (i32, i32) {
    %c0_i32 = arith.constant 0 : i32
    %c0_i32_0 = arith.constant 0 : i32
    %c0_i32_1 = arith.constant 0 : i32
    return %c0_i32, %c0_i32_0 : i32, i32
  }
  func.func @transform_18(%arg0: i32) -> (i32, i32) {
    %c0_i32 = arith.constant 0 : i32
    %c0_i32_0 = arith.constant 0 : i32
    %c0_i32_1 = arith.constant 0 : i32
    return %c0_i32, %c0_i32_0 : i32, i32
  }
  func.func @transform_19(%arg0: i32) -> (i32, i32) {
    %c0_i32 = arith.constant 0 : i32
    %c0_i32_0 = arith.constant 0 : i32
    %c0_i32_1 = arith.constant 0 : i32
    return %c0_i32, %c0_i32_0 : i32, i32
  }
  func.func @transform_20(%arg0: i32) -> (i32, i32) {
    %c0_i32 = arith.constant 0 : i32
    %c0_i32_0 = arith.constant 0 : i32
    %c0_i32_1 = arith.constant 0 : i32
    return %c0_i32, %c0_i32_0 : i32, i32
  }
  func.func @transform_21(%arg0: i32) -> (i32, i32) {
    %c0_i32 = arith.constant 0 : i32
    %c0_i32_0 = arith.constant 0 : i32
    %c0_i32_1 = arith.constant 0 : i32
    return %c0_i32, %c0_i32_0 : i32, i32
  }
  func.func @transform_22(%arg0: i32) -> (i32, i32) {
    %c0_i32 = arith.constant 0 : i32
    %c0_i32_0 = arith.constant 0 : i32
    %c0_i32_1 = arith.constant 0 : i32
    return %c0_i32, %c0_i32_0 : i32, i32
  }
  func.func @transform_23(%arg0: i32) -> (i32, i32) {
    %c0_i32 = arith.constant 0 : i32
    %c0_i32_0 = arith.constant 0 : i32
    %c0_i32_1 = arith.constant 0 : i32
    return %c0_i32, %c0_i32_0 : i32, i32
  }
  func.func @transform_24(%arg0: i32) -> (i32, i32, i32) {
    %c0_i32 = arith.constant 0 : i32
    %c0_i32_0 = arith.constant 0 : i32
    %c0_i32_1 = arith.constant 0 : i32
    return %arg0, %c0_i32, %c0_i32_0 : i32, i32, i32
  }
  func.func @transform_25(%arg0: i32) -> (i32, i32, i32, i32) {
    %c0_i32 = arith.constant 0 : i32
    %c0_i32_0 = arith.constant 0 : i32
    %c0_i32_1 = arith.constant 0 : i32
    %c0_i32_2 = arith.constant 0 : i32
    return %arg0, %c0_i32, %c0_i32_0, %c0_i32_1 : i32, i32, i32, i32
  }
  func.func @transform_26(%arg0: i32) -> (i32, i32, i32, i32) {
    %c0_i32 = arith.constant 0 : i32
    %c0_i32_0 = arith.constant 0 : i32
    %c0_i32_1 = arith.constant 0 : i32
    %c0_i32_2 = arith.constant 0 : i32
    return %arg0, %c0_i32, %c0_i32_0, %c0_i32_1 : i32, i32, i32, i32
  }
}

</mosaic_0001>

<llo_original>
// kernel: tpu_custom_call.1
$region0: #{tpu_custom_call.1}
  #allocation0 [shape = 'u32[]', space=smem, size = 0x4, offset = 0x4, fixed_abs, tag = 'smem constant byte address 0x4 - core index']
  #allocation1 [shape = 'u32[144,128]{1,0:T(1,128)}', space=vmem, size = 0x12000, scoped, tag = 'internal scratch']
  %s0 = inlined_call_operand.hbm [shape: f32[2,8,32], index: 0, kind: input, shape index: {}]
  %s1 = inlined_call_operand.hbm [shape: f32[2,8,32], index: 1, kind: input, shape index: {}]
  %s2 = inlined_call_operand.hbm [shape: bf16[1,8,8], index: 2, kind: input, shape index: {}]
  %s3 = inlined_call_operand.vmem [shape: bf16[1,8,8], index: 3, kind: input, shape index: {}]
  %s4 = inlined_call_operand.vmem [shape: f32[32,96], index: 4, kind: input, shape index: {}]
  %s5 = inlined_call_operand.hbm [shape: f32[1,96], index: 5, kind: input, shape index: {}]
  %s6 = inlined_call_operand.vmem [shape: f32[32,32], index: 6, kind: input, shape index: {}]
  %s7 = inlined_call_operand.hbm [shape: f32[1,32], index: 7, kind: input, shape index: {}]
  %s8 = inlined_call_operand.hbm [shape: f32[1,32], index: 8, kind: input, shape index: {}]
  %s9 = inlined_call_operand.hbm [shape: f32[1,32], index: 9, kind: input, shape index: {}]
  %s10 = inlined_call_operand.vmem [shape: f32[32,32], index: 10, kind: input, shape index: {}]
  %s11 = inlined_call_operand.hbm [shape: f32[1,32], index: 11, kind: input, shape index: {}]
  %s12 = inlined_call_operand.hbm [shape: f32[32,64], index: 12, kind: input, shape index: {}]
  %s13 = inlined_call_operand.hbm [shape: f32[1,64], index: 13, kind: input, shape index: {}]
  %s14 = inlined_call_operand.hbm [shape: f32[32,32], index: 14, kind: input, shape index: {}]
  %s15 = inlined_call_operand.hbm [shape: f32[1,32], index: 15, kind: input, shape index: {}]
  %s16 = inlined_call_operand.hbm [shape: f32[1,32], index: 16, kind: input, shape index: {}]
  %s17 = inlined_call_operand.hbm [shape: f32[1,32], index: 17, kind: input, shape index: {}]
  %s18 = inlined_call_operand.hbm [shape: f32[32,64], index: 18, kind: input, shape index: {}]
  %s19 = inlined_call_operand.hbm [shape: f32[1,64], index: 19, kind: input, shape index: {}]
  %s20 = inlined_call_operand.vmem [shape: f32[64,32], index: 20, kind: input, shape index: {}]
  %s21 = inlined_call_operand.vmem [shape: f32[1,32], index: 21, kind: input, shape index: {}]
  %s22 = inlined_call_operand.vmem [shape: f32[1,32], index: 22, kind: input, shape index: {}]
  %s23 = inlined_call_operand.vmem [shape: f32[1,32], index: 23, kind: input, shape index: {}]
  %s24 = inlined_call_operand.hbm [shape: f32[2,8,32], index: 24, kind: output, shape index: {0}]
  %s25 = inlined_call_operand.hbm [shape: f32[2,4,8,8], index: 25, kind: output, shape index: {1}]
  %s26 = inlined_call_operand.hbm [shape: f32[2,4,8,8], index: 26, kind: output, shape index: {2}]
  %27 = xla_tuple %s24, %s25, %s26
  %s28 = sld [smem:[#allocation0]]
  $region209: #{tpu_custom_call.1} parent=0
    _
  %s30 = ssub.s32 1, %s28
  %s31 = scalar_select 0, %s30, %s28
  $region1: #{tpu_custom_call.1} parent=0
    #allocation2 [shape = 'u8[8192]{0}', space=vmem, size = 0x2000, scoped, tag = 'input window, operand 0']
    #allocation3 [shape = 's32[2]{0}', space=sflag, size = 0x8, scoped, tag = 'scoped memory for tpu_custom_call.1']
    #allocation4 [shape = 's32[2]{0}', space=sflag, size = 0x8, scoped, tag = 'scoped memory for tpu_custom_call.1']
    #allocation5 [shape = 'u8[8192]{0}', space=vmem, size = 0x2000, scoped, tag = 'input window, operand 1']
    #allocation6 [shape = 's32[2]{0}', space=sflag, size = 0x8, scoped, tag = 'scoped memory for tpu_custom_call.1']
    #allocation7 [shape = 'u8[2048]{0}', space=vmem, size = 0x800, scoped, tag = 'input window, operand 2, single buffered']
    #allocation8 [shape = 'u8[512]{0}', space=vmem, size = 0x400, scoped, tag = 'input window, operand 5, single buffered']
    #allocation9 [shape = 's32[1]{0}', space=sflag, size = 0x4, scoped, tag = 'scoped memory for tpu_custom_call.1']
    #allocation10 [shape = 'u8[512]{0}', space=vmem, size = 0x400, scoped, tag = 'input window, operand 7, single buffered']
    #allocation11 [shape = 'u8[512]{0}', space=vmem, size = 0x400, scoped, tag = 'input window, operand 8, single buffered']
    #allocation12 [shape = 's32[1]{0}', space=sflag, size = 0x4, scoped, tag = 'scoped memory for tpu_custom_call.1']
    #allocation13 [shape = 'u8[512]{0}', space=vmem, size = 0x400, scoped, tag = 'input window, operand 9, single buffered']
    #allocation14 [shape = 'u8[512]{0}', space=vmem, size = 0x400, scoped, tag = 'input window, operand 11, single buffered']
    #allocation15 [shape = 's32[1]{0}', space=sflag, size = 0x4, scoped, tag = 'scoped memory for tpu_custom_call.1']
    #allocation16 [shape = 'u8[16384]{0}', space=vmem, size = 0x4000, scoped, tag = 'input window, operand 12, single buffered']
    #allocation17 [shape = 'u8[512]{0}', space=vmem, size = 0x400, scoped, tag = 'input window, operand 13, single buffered']
    #allocation18 [shape = 's32[1]{0}', space=sflag, size = 0x4, scoped, tag = 'scoped memory for tpu_custom_call.1']
    #allocation19 [shape = 'u8[16384]{0}', space=vmem, size = 0x4000, scoped, tag = 'input window, operand 14, single buffered']
    #allocation20 [shape = 'u8[512]{0}', space=vmem, size = 0x400, scoped, tag = 'input window, operand 15, single buffered']
    #allocation21 [shape = 's32[1]{0}', space=sflag, size = 0x4, scoped, tag = 'scoped memory for tpu_custom_call.1']
    #allocation22 [shape = 'u8[512]{0}', space=vmem, size = 0x400, scoped, tag = 'input window, operand 16, single buffered']
    #allocation23 [shape = 'u8[512]{0}', space=vmem, size = 0x400, scoped, tag = 'input window, operand 17, single buffered']
    #allocation24 [shape = 's32[1]{0}', space=sflag, size = 0x4, scoped, tag = 'scoped memory for tpu_custom_call.1']
    #allocation25 [shape = 'u8[16384]{0}', space=vmem, size = 0x4000, scoped, tag = 'input window, operand 18, single buffered']
    #allocation26 [shape = 'u8[512]{0}', space=vmem, size = 0x400, scoped, tag = 'input window, operand 19, single buffered']
    #allocation27 [shape = 's32[1]{0}', space=sflag, size = 0x4, scoped, tag = 'scoped memory for tpu_custom_call.1']
    #allocation28 [shape = 'u8[8192]{0}', space=vmem, size = 0x2000, scoped, tag = 'output window, operand 0']
    #allocation29 [shape = 'u8[32768]{0}', space=vmem, size = 0x8000, scoped, tag = 'output window, operand 1']
    #allocation30 [shape = 's32[2]{0}', space=sflag, size = 0x8, scoped, tag = 'scoped memory for tpu_custom_call.1']
    #allocation31 [shape = 'u8[32768]{0}', space=vmem, size = 0x8000, scoped, tag = 'output window, operand 2']
    %32 = vsyncpa [#allocation3], 0
    %s33 = scalar_lea.sflag [#allocation3], 1
    %34 = vsyncpa %s33, 0
    %35 = vsyncpa [#allocation6], 0
    %s36 = scalar_lea.sflag [#allocation6], 1
    %37 = vsyncpa %s36, 0
    %38 = vsyncpa [#allocation9], 0
    %39 = vsyncpa [#allocation12], 0
    %40 = vsyncpa [#allocation15], 0
    %41 = vsyncpa [#allocation18], 0
    %42 = vsyncpa [#allocation21], 0
    %43 = vsyncpa [#allocation24], 0
    %44 = vsyncpa [#allocation27], 0
    %45 = vsyncpa [#allocation4], 0
    %s46 = scalar_lea.sflag [#allocation4], 1
    %47 = vsyncpa %s46, 0
    %48 = vsyncpa [#allocation30], 0
    %s49 = scalar_lea.sflag [#allocation30], 1
    %50 = vsyncpa %s49, 0
    loop: start=0, step=1, limit=4
    $region2: #{tpu_custom_call.1} parent=1 // loop_pre_header
      _
    $region3: #{tpu_custom_call.1} parent=1 // loop_header
      %s52 = sphi 0, %s56
      %p53 = scmp.ge.s32.totalorder %s52, 4
      %s62 = sphi 0, %s64
      %s65 = sphi 0, %s62
      %s66 = sphi 0, %s65
      %s82 = sphi 0, %s66
      %s88 = sphi 0, %s90
      %s91 = sphi 0, %s88
      %s92 = sphi 0, %s91
      %s108 = sphi 0, %s92
      %s112 = sphi 0, %s112
      %s114 = sphi 0, %s112
      %s115 = sphi 0, %s114
      %s129 = sphi 0, %s115
      %s133 = sphi 0, %s133
      %s135 = sphi 0, %s133
      %s136 = sphi 0, %s135
      %s150 = sphi 0, %s136
      %s154 = sphi 0, %s154
      %s156 = sphi 0, %s154
      %s157 = sphi 0, %s156
      %s171 = sphi 0, %s157
      %s175 = sphi 0, %s175
      %s177 = sphi 0, %s175
      %s178 = sphi 0, %s177
      %s192 = sphi 0, %s178
      %s196 = sphi 0, %s196
      %s198 = sphi 0, %s196
      %s199 = sphi 0, %s198
      %s213 = sphi 0, %s199
      %s217 = sphi 0, %s217
      %s219 = sphi 0, %s217
      %s220 = sphi 0, %s219
      %s234 = sphi 0, %s220
      %s238 = sphi 0, %s238
      %s240 = sphi 0, %s238
      %s241 = sphi 0, %s240
      %s255 = sphi 0, %s241
      %s259 = sphi 0, %s259
      %s261 = sphi 0, %s259
      %s262 = sphi 0, %s261
      %s276 = sphi 0, %s262
      %s280 = sphi 0, %s280
      %s282 = sphi 0, %s280
      %s283 = sphi 0, %s282
      %s297 = sphi 0, %s283
      %s301 = sphi 0, %s301
      %s303 = sphi 0, %s301
      %s304 = sphi 0, %s303
      %s318 = sphi 0, %s304
      %s322 = sphi 0, %s322
      %s324 = sphi 0, %s322
      %s325 = sphi 0, %s324
      %s339 = sphi 0, %s325
      %s343 = sphi 0, %s343
      %s345 = sphi 0, %s343
      %s346 = sphi 0, %s345
      %s360 = sphi 0, %s346
      %s364 = sphi 0, %s364
      %s366 = sphi 0, %s364
      %s367 = sphi 0, %s366
      %s381 = sphi 0, %s367
      %s385 = sphi 0, %s385
      %s387 = sphi 0, %s385
      %s388 = sphi 0, %s387
      %s402 = sphi 0, %s388
      %s406 = sphi 0, %s406
      %s408 = sphi 0, %s406
      %s409 = sphi 0, %s408
      %s423 = sphi 0, %s409
      %s427 = sphi 0, %s427
      %s429 = sphi 0, %s427
      %s430 = sphi 0, %s429
      %s444 = sphi 0, %s430
      %s448 = sphi 0, %s448
      %s450 = sphi 0, %s448
      %s451 = sphi 0, %s450
      %s465 = sphi 0, %s451
      %s469 = sphi 0, %s469
      %s471 = sphi 0, %s469
      %s472 = sphi 0, %s471
      %s486 = sphi 0, %s472
      %s490 = sphi 0, %s490
      %s492 = sphi 0, %s490
      %s493 = sphi 0, %s492
      %s507 = sphi 0, %s493
      %s511 = sphi 0, %s511
      %s513 = sphi 0, %s511
      %s514 = sphi 0, %s513
      %s528 = sphi 0, %s514
      %s532 = sphi 0, %s532
      %s534 = sphi 0, %s532
      %s535 = sphi 0, %s534
      %s549 = sphi 0, %s535
      %s553 = sphi 0, %s553
      %s555 = sphi 0, %s553
      %s556 = sphi 0, %s555
      %s570 = sphi 0, %s556
      %s576 = sphi 0, %s578
      %s579 = sphi 0, %s576
      %s580 = sphi 0, %s579
      %s596 = sphi 0, %s580
      %s602 = sphi 0, %s604
      %s605 = sphi 0, %s602
      %s606 = sphi 0, %s605
      %s622 = sphi 0, %s606
      %s628 = sphi 0, %s630
      %s631 = sphi 0, %s628
      %s632 = sphi 0, %s631
      %s648 = sphi 0, %s632
    $region4: #{tpu_custom_call.1} parent=1 // loop_header_branch
      %55 = sbr.rel (%p53) target = $region8
    $region5: #{tpu_custom_call.1} parent=1 // loop_body
      %s57 = ssub.s32 %s52, 1
      %s58 = ssub.s32 %s52, 2
      %s59 = sadd.s32 %s52, 1
      %s60 = ssub.s32 %s52, %s59
      %p61 = scmp.eq.s32.totalorder %s60, 0
      %s63 = sadd.s32 %s62, 1
      %s64 = scalar_select %p61, %s62, %s63
      %p67 = pneg %p61
      %p68 = scmp.eq.s32.totalorder %s52, 1
      %p69 = por %p67, %p68
      %p70 = scmp.ne.s32.totalorder %s62, %s65
      %p71 = scmp.eq.s32.totalorder %s52, 0
      %p72 = por %p70, %p71
      %p73 = scmp.ne.s32.totalorder %s62, %s65
      %p74 = scmp.eq.s32.totalorder %s57, 1
      %p75 = por %p73, %p74
      %p76 = scmp.ne.s32.totalorder %s65, %s66
      %p77 = scmp.eq.s32.totalorder %s57, 0
      %p78 = por %p76, %p77
      %p79 = scmp.ne.s32.totalorder %s65, %s66
      %p80 = scmp.eq.s32.totalorder %s58, 1
      %p81 = por %p79, %p80
      %p83 = scmp.ne.s32.totalorder %s66, %s82
      %p84 = scmp.eq.s32.totalorder %s58, 0
      %p85 = por %p83, %p84
      %s86 = ssub.s32 %s52, %s59
      %p87 = scmp.eq.s32.totalorder %s86, 0
      %s89 = sadd.s32 %s88, 1
      %s90 = scalar_select %p87, %s88, %s89
      %p93 = pneg %p87
      %p94 = scmp.eq.s32.totalorder %s52, 1
      %p95 = por %p93, %p94
      %p96 = scmp.ne.s32.totalorder %s88, %s91
      %p97 = scmp.eq.s32.totalorder %s52, 0
      %p98 = por %p96, %p97
      %p99 = scmp.ne.s32.totalorder %s88, %s91
      %p100 = scmp.eq.s32.totalorder %s57, 1
      %p101 = por %p99, %p100
      %p102 = scmp.ne.s32.totalorder %s91, %s92
      %p103 = scmp.eq.s32.totalorder %s57, 0
      %p104 = por %p102, %p103
      %p105 = scmp.ne.s32.totalorder %s91, %s92
      %p106 = scmp.eq.s32.totalorder %s58, 1
      %p107 = por %p105, %p106
      %p109 = scmp.ne.s32.totalorder %s92, %s108
      %p110 = scmp.eq.s32.totalorder %s58, 0
      %p111 = por %p109, %p110
      %s113 = sadd.s32 %s112, 1
      %p116 = scmp.eq.s32.totalorder %s52, 1
      %p117 = scmp.ne.s32.totalorder %s112, %s114
      %p118 = scmp.eq.s32.totalorder %s52, 0
      %p119 = por %p117, %p118
      %p120 = scmp.ne.s32.totalorder %s112, %s114
      %p121 = scmp.eq.s32.totalorder %s57, 1
      %p122 = por %p120, %p121
      %p123 = scmp.ne.s32.totalorder %s114, %s115
      %p124 = scmp.eq.s32.totalorder %s57, 0
      %p125 = por %p123, %p124
      %p126 = scmp.ne.s32.totalorder %s114, %s115
      %p127 = scmp.eq.s32.totalorder %s58, 1
      %p128 = por %p126, %p127
      %p130 = scmp.ne.s32.totalorder %s115, %s129
      %p131 = scmp.eq.s32.totalorder %s58, 0
      %p132 = por %p130, %p131
      %s134 = sadd.s32 %s133, 1
      %p137 = scmp.eq.s32.totalorder %s52, 1
      %p138 = scmp.ne.s32.totalorder %s133, %s135
      %p139 = scmp.eq.s32.totalorder %s52, 0
      %p140 = por %p138, %p139
      %p141 = scmp.ne.s32.totalorder %s133, %s135
      %p142 = scmp.eq.s32.totalorder %s57, 1
      %p143 = por %p141, %p142
      %p144 = scmp.ne.s32.totalorder %s135, %s136
      %p145 = scmp.eq.s32.totalorder %s57, 0
      %p146 = por %p144, %p145
      %p147 = scmp.ne.s32.totalorder %s135, %s136
      %p148 = scmp.eq.s32.totalorder %s58, 1
      %p149 = por %p147, %p148
      %p151 = scmp.ne.s32.totalorder %s136, %s150
      %p152 = scmp.eq.s32.totalorder %s58, 0
      %p153 = por %p151, %p152
      %s155 = sadd.s32 %s154, 1
      %p158 = scmp.eq.s32.totalorder %s52, 1
      %p159 = scmp.ne.s32.totalorder %s154, %s156
      %p160 = scmp.eq.s32.totalorder %s52, 0
      %p161 = por %p159, %p160
      %p162 = scmp.ne.s32.totalorder %s154, %s156
      %p163 = scmp.eq.s32.totalorder %s57, 1
      %p164 = por %p162, %p163
      %p165 = scmp.ne.s32.totalorder %s156, %s157
      %p166 = scmp.eq.s32.totalorder %s57, 0
      %p167 = por %p165, %p166
      %p168 = scmp.ne.s32.totalorder %s156, %s157
      %p169 = scmp.eq.s32.totalorder %s58, 1
      %p170 = por %p168, %p169
      %p172 = scmp.ne.s32.totalorder %s157, %s171
      %p173 = scmp.eq.s32.totalorder %s58, 0
      %p174 = por %p172, %p173
      %s176 = sadd.s32 %s175, 1
      %p179 = scmp.eq.s32.totalorder %s52, 1
      %p180 = scmp.ne.s32.totalorder %s175, %s177
      %p181 = scmp.eq.s32.totalorder %s52, 0
      %p182 = por %p180, %p181
      %p183 = scmp.ne.s32.totalorder %s175, %s177
      %p184 = scmp.eq.s32.totalorder %s57, 1
      %p185 = por %p183, %p184
      %p186 = scmp.ne.s32.totalorder %s177, %s178
      %p187 = scmp.eq.s32.totalorder %s57, 0
      %p188 = por %p186, %p187
      %p189 = scmp.ne.s32.totalorder %s177, %s178
      %p190 = scmp.eq.s32.totalorder %s58, 1
      %p191 = por %p189, %p190
      %p193 = scmp.ne.s32.totalorder %s178, %s192
      %p194 = scmp.eq.s32.totalorder %s58, 0
      %p195 = por %p193, %p194
      %s197 = sadd.s32 %s196, 1
      %p200 = scmp.eq.s32.totalorder %s52, 1
      %p201 = scmp.ne.s32.totalorder %s196, %s198
      %p202 = scmp.eq.s32.totalorder %s52, 0
      %p203 = por %p201, %p202
      %p204 = scmp.ne.s32.totalorder %s196, %s198
      %p205 = scmp.eq.s32.totalorder %s57, 1
      %p206 = por %p204, %p205
      %p207 = scmp.ne.s32.totalorder %s198, %s199
      %p208 = scmp.eq.s32.totalorder %s57, 0
      %p209 = por %p207, %p208
      %p210 = scmp.ne.s32.totalorder %s198, %s199
      %p211 = scmp.eq.s32.totalorder %s58, 1
      %p212 = por %p210, %p211
      %p214 = scmp.ne.s32.totalorder %s199, %s213
      %p215 = scmp.eq.s32.totalorder %s58, 0
      %p216 = por %p214, %p215
      %s218 = sadd.s32 %s217, 1
      %p221 = scmp.eq.s32.totalorder %s52, 1
      %p222 = scmp.ne.s32.totalorder %s217, %s219
      %p223 = scmp.eq.s32.totalorder %s52, 0
      %p224 = por %p222, %p223
      %p225 = scmp.ne.s32.totalorder %s217, %s219
      %p226 = scmp.eq.s32.totalorder %s57, 1
      %p227 = por %p225, %p226
      %p228 = scmp.ne.s32.totalorder %s219, %s220
      %p229 = scmp.eq.s32.totalorder %s57, 0
      %p230 = por %p228, %p229
      %p231 = scmp.ne.s32.totalorder %s219, %s220
      %p232 = scmp.eq.s32.totalorder %s58, 1
      %p233 = por %p231, %p232
      %p235 = scmp.ne.s32.totalorder %s220, %s234
      %p236 = scmp.eq.s32.totalorder %s58, 0
      %p237 = por %p235, %p236
      %s239 = sadd.s32 %s238, 1
      %p242 = scmp.eq.s32.totalorder %s52, 1
      %p243 = scmp.ne.s32.totalorder %s238, %s240
      %p244 = scmp.eq.s32.totalorder %s52, 0
      %p245 = por %p243, %p244
      %p246 = scmp.ne.s32.totalorder %s238, %s240
      %p247 = scmp.eq.s32.totalorder %s57, 1
      %p248 = por %p246, %p247
      %p249 = scmp.ne.s32.totalorder %s240, %s241
      %p250 = scmp.eq.s32.totalorder %s57, 0
      %p251 = por %p249, %p250
      %p252 = scmp.ne.s32.totalorder %s240, %s241
      %p253 = scmp.eq.s32.totalorder %s58, 1
      %p254 = por %p252, %p253
      %p256 = scmp.ne.s32.totalorder %s241, %s255
      %p257 = scmp.eq.s32.totalorder %s58, 0
      %p258 = por %p256, %p257
      %s260 = sadd.s32 %s259, 1
      %p263 = scmp.eq.s32.totalorder %s52, 1
      %p264 = scmp.ne.s32.totalorder %s259, %s261
      %p265 = scmp.eq.s32.totalorder %s52, 0
      %p266 = por %p264, %p265
      %p267 = scmp.ne.s32.totalorder %s259, %s261
      %p268 = scmp.eq.s32.totalorder %s57, 1
      %p269 = por %p267, %p268
      %p270 = scmp.ne.s32.totalorder %s261, %s262
      %p271 = scmp.eq.s32.totalorder %s57, 0
      %p272 = por %p270, %p271
      %p273 = scmp.ne.s32.totalorder %s261, %s262
      %p274 = scmp.eq.s32.totalorder %s58, 1
      %p275 = por %p273, %p274
      %p277 = scmp.ne.s32.totalorder %s262, %s276
      %p278 = scmp.eq.s32.totalorder %s58, 0
      %p279 = por %p277, %p278
      %s281 = sadd.s32 %s280, 1
      %p284 = scmp.eq.s32.totalorder %s52, 1
      %p285 = scmp.ne.s32.totalorder %s280, %s282
      %p286 = scmp.eq.s32.totalorder %s52, 0
      %p287 = por %p285, %p286
      %p288 = scmp.ne.s32.totalorder %s280, %s282
      %p289 = scmp.eq.s32.totalorder %s57, 1
      %p290 = por %p288, %p289
      %p291 = scmp.ne.s32.totalorder %s282, %s283
      %p292 = scmp.eq.s32.totalorder %s57, 0
      %p293 = por %p291, %p292
      %p294 = scmp.ne.s32.totalorder %s282, %s283
      %p295 = scmp.eq.s32.totalorder %s58, 1
      %p296 = por %p294, %p295
      %p298 = scmp.ne.s32.totalorder %s283, %s297
      %p299 = scmp.eq.s32.totalorder %s58, 0
      %p300 = por %p298, %p299
      %s302 = sadd.s32 %s301, 1
      %p305 = scmp.eq.s32.totalorder %s52, 1
      %p306 = scmp.ne.s32.totalorder %s301, %s303
      %p307 = scmp.eq.s32.totalorder %s52, 0
      %p308 = por %p306, %p307
      %p309 = scmp.ne.s32.totalorder %s301, %s303
      %p310 = scmp.eq.s32.totalorder %s57, 1
      %p311 = por %p309, %p310
      %p312 = scmp.ne.s32.totalorder %s303, %s304
      %p313 = scmp.eq.s32.totalorder %s57, 0
      %p314 = por %p312, %p313
      %p315 = scmp.ne.s32.totalorder %s303, %s304
      %p316 = scmp.eq.s32.totalorder %s58, 1
      %p317 = por %p315, %p316
      %p319 = scmp.ne.s32.totalorder %s304, %s318
      %p320 = scmp.eq.s32.totalorder %s58, 0
      %p321 = por %p319, %p320
      %s323 = sadd.s32 %s322, 1
      %p326 = scmp.eq.s32.totalorder %s52, 1
      %p327 = scmp.ne.s32.totalorder %s322, %s324
      %p328 = scmp.eq.s32.totalorder %s52, 0
      %p329 = por %p327, %p328
      %p330 = scmp.ne.s32.totalorder %s322, %s324
      %p331 = scmp.eq.s32.totalorder %s57, 1
      %p332 = por %p330, %p331
      %p333 = scmp.ne.s32.totalorder %s324, %s325
      %p334 = scmp.eq.s32.totalorder %s57, 0
      %p335 = por %p333, %p334
      %p336 = scmp.ne.s32.totalorder %s324, %s325
      %p337 = scmp.eq.s32.totalorder %s58, 1
      %p338 = por %p336, %p337
      %p340 = scmp.ne.s32.totalorder %s325, %s339
      %p341 = scmp.eq.s32.totalorder %s58, 0
      %p342 = por %p340, %p341
      %s344 = sadd.s32 %s343, 1
      %p347 = scmp.eq.s32.totalorder %s52, 1
      %p348 = scmp.ne.s32.totalorder %s343, %s345
      %p349 = scmp.eq.s32.totalorder %s52, 0
      %p350 = por %p348, %p349
      %p351 = scmp.ne.s32.totalorder %s343, %s345
      %p352 = scmp.eq.s32.totalorder %s57, 1
      %p353 = por %p351, %p352
      %p354 = scmp.ne.s32.totalorder %s345, %s346
      %p355 = scmp.eq.s32.totalorder %s57, 0
      %p356 = por %p354, %p355
      %p357 = scmp.ne.s32.totalorder %s345, %s346
      %p358 = scmp.eq.s32.totalorder %s58, 1
      %p359 = por %p357, %p358
      %p361 = scmp.ne.s32.totalorder %s346, %s360
      %p362 = scmp.eq.s32.totalorder %s58, 0
      %p363 = por %p361, %p362
      %s365 = sadd.s32 %s364, 1
      %p368 = scmp.eq.s32.totalorder %s52, 1
      %p369 = scmp.ne.s32.totalorder %s364, %s366
      %p370 = scmp.eq.s32.totalorder %s52, 0
      %p371 = por %p369, %p370
      %p372 = scmp.ne.s32.totalorder %s364, %s366
      %p373 = scmp.eq.s32.totalorder %s57, 1
      %p374 = por %p372, %p373
      %p375 = scmp.ne.s32.totalorder %s366, %s367
      %p376 = scmp.eq.s32.totalorder %s57, 0
      %p377 = por %p375, %p376
      %p378 = scmp.ne.s32.totalorder %s366, %s367
      %p379 = scmp.eq.s32.totalorder %s58, 1
      %p380 = por %p378, %p379
      %p382 = scmp.ne.s32.totalorder %s367, %s381
      %p383 = scmp.eq.s32.totalorder %s58, 0
      %p384 = por %p382, %p383
      %s386 = sadd.s32 %s385, 1
      %p389 = scmp.eq.s32.totalorder %s52, 1
      %p390 = scmp.ne.s32.totalorder %s385, %s387
      %p391 = scmp.eq.s32.totalorder %s52, 0
      %p392 = por %p390, %p391
      %p393 = scmp.ne.s32.totalorder %s385, %s387
      %p394 = scmp.eq.s32.totalorder %s57, 1
      %p395 = por %p393, %p394
      %p396 = scmp.ne.s32.totalorder %s387, %s388
      %p397 = scmp.eq.s32.totalorder %s57, 0
      %p398 = por %p396, %p397
      %p399 = scmp.ne.s32.totalorder %s387, %s388
      %p400 = scmp.eq.s32.totalorder %s58, 1
      %p401 = por %p399, %p400
      %p403 = scmp.ne.s32.totalorder %s388, %s402
      %p404 = scmp.eq.s32.totalorder %s58, 0
      %p405 = por %p403, %p404
      %s407 = sadd.s32 %s406, 1
      %p410 = scmp.eq.s32.totalorder %s52, 1
      %p411 = scmp.ne.s32.totalorder %s406, %s408
      %p412 = scmp.eq.s32.totalorder %s52, 0
      %p413 = por %p411, %p412
      %p414 = scmp.ne.s32.totalorder %s406, %s408
      %p415 = scmp.eq.s32.totalorder %s57, 1
      %p416 = por %p414, %p415
      %p417 = scmp.ne.s32.totalorder %s408, %s409
      %p418 = scmp.eq.s32.totalorder %s57, 0
      %p419 = por %p417, %p418
      %p420 = scmp.ne.s32.totalorder %s408, %s409
      %p421 = scmp.eq.s32.totalorder %s58, 1
      %p422 = por %p420, %p421
      %p424 = scmp.ne.s32.totalorder %s409, %s423
      %p425 = scmp.eq.s32.totalorder %s58, 0
      %p426 = por %p424, %p425
      %s428 = sadd.s32 %s427, 1
      %p431 = scmp.eq.s32.totalorder %s52, 1
      %p432 = scmp.ne.s32.totalorder %s427, %s429
      %p433 = scmp.eq.s32.totalorder %s52, 0
      %p434 = por %p432, %p433
      %p435 = scmp.ne.s32.totalorder %s427, %s429
      %p436 = scmp.eq.s32.totalorder %s57, 1
      %p437 = por %p435, %p436
      %p438 = scmp.ne.s32.totalorder %s429, %s430
      %p439 = scmp.eq.s32.totalorder %s57, 0
      %p440 = por %p438, %p439
      %p441 = scmp.ne.s32.totalorder %s429, %s430
      %p442 = scmp.eq.s32.totalorder %s58, 1
      %p443 = por %p441, %p442
      %p445 = scmp.ne.s32.totalorder %s430, %s444
      %p446 = scmp.eq.s32.totalorder %s58, 0
      %p447 = por %p445, %p446
      %s449 = sadd.s32 %s448, 1
      %p452 = scmp.eq.s32.totalorder %s52, 1
      %p453 = scmp.ne.s32.totalorder %s448, %s450
      %p454 = scmp.eq.s32.totalorder %s52, 0
      %p455 = por %p453, %p454
      %p456 = scmp.ne.s32.totalorder %s448, %s450
      %p457 = scmp.eq.s32.totalorder %s57, 1
      %p458 = por %p456, %p457
      %p459 = scmp.ne.s32.totalorder %s450, %s451
      %p460 = scmp.eq.s32.totalorder %s57, 0
      %p461 = por %p459, %p460
      %p462 = scmp.ne.s32.totalorder %s450, %s451
      %p463 = scmp.eq.s32.totalorder %s58, 1
      %p464 = por %p462, %p463
      %p466 = scmp.ne.s32.totalorder %s451, %s465
      %p467 = scmp.eq.s32.totalorder %s58, 0
      %p468 = por %p466, %p467
      %s470 = sadd.s32 %s469, 1
      %p473 = scmp.eq.s32.totalorder %s52, 1
      %p474 = scmp.ne.s32.totalorder %s469, %s471
      %p475 = scmp.eq.s32.totalorder %s52, 0
      %p476 = por %p474, %p475
      %p477 = scmp.ne.s32.totalorder %s469, %s471
      %p478 = scmp.eq.s32.totalorder %s57, 1
      %p479 = por %p477, %p478
      %p480 = scmp.ne.s32.totalorder %s471, %s472
      %p481 = scmp.eq.s32.totalorder %s57, 0
      %p482 = por %p480, %p481
      %p483 = scmp.ne.s32.totalorder %s471, %s472
      %p484 = scmp.eq.s32.totalorder %s58, 1
      %p485 = por %p483, %p484
      %p487 = scmp.ne.s32.totalorder %s472, %s486
      %p488 = scmp.eq.s32.totalorder %s58, 0
      %p489 = por %p487, %p488
      %s491 = sadd.s32 %s490, 1
      %p494 = scmp.eq.s32.totalorder %s52, 1
      %p495 = scmp.ne.s32.totalorder %s490, %s492
      %p496 = scmp.eq.s32.totalorder %s52, 0
      %p497 = por %p495, %p496
      %p498 = scmp.ne.s32.totalorder %s490, %s492
      %p499 = scmp.eq.s32.totalorder %s57, 1
      %p500 = por %p498, %p499
      %p501 = scmp.ne.s32.totalorder %s492, %s493
      %p502 = scmp.eq.s32.totalorder %s57, 0
      %p503 = por %p501, %p502
      %p504 = scmp.ne.s32.totalorder %s492, %s493
      %p505 = scmp.eq.s32.totalorder %s58, 1
      %p506 = por %p504, %p505
      %p508 = scmp.ne.s32.totalorder %s493, %s507
      %p509 = scmp.eq.s32.totalorder %s58, 0
      %p510 = por %p508, %p509
      %s512 = sadd.s32 %s511, 1
      %p515 = scmp.eq.s32.totalorder %s52, 1
      %p516 = scmp.ne.s32.totalorder %s511, %s513
      %p517 = scmp.eq.s32.totalorder %s52, 0
      %p518 = por %p516, %p517
      %p519 = scmp.ne.s32.totalorder %s511, %s513
      %p520 = scmp.eq.s32.totalorder %s57, 1
      %p521 = por %p519, %p520
      %p522 = scmp.ne.s32.totalorder %s513, %s514
      %p523 = scmp.eq.s32.totalorder %s57, 0
      %p524 = por %p522, %p523
      %p525 = scmp.ne.s32.totalorder %s513, %s514
      %p526 = scmp.eq.s32.totalorder %s58, 1
      %p527 = por %p525, %p526
      %p529 = scmp.ne.s32.totalorder %s514, %s528
      %p530 = scmp.eq.s32.totalorder %s58, 0
      %p531 = por %p529, %p530
      %s533 = sadd.s32 %s532, 1
      %p536 = scmp.eq.s32.totalorder %s52, 1
      %p537 = scmp.ne.s32.totalorder %s532, %s534
      %p538 = scmp.eq.s32.totalorder %s52, 0
      %p539 = por %p537, %p538
      %p540 = scmp.ne.s32.totalorder %s532, %s534
      %p541 = scmp.eq.s32.totalorder %s57, 1
      %p542 = por %p540, %p541
      %p543 = scmp.ne.s32.totalorder %s534, %s535
      %p544 = scmp.eq.s32.totalorder %s57, 0
      %p545 = por %p543, %p544
      %p546 = scmp.ne.s32.totalorder %s534, %s535
      %p547 = scmp.eq.s32.totalorder %s58, 1
      %p548 = por %p546, %p547
      %p550 = scmp.ne.s32.totalorder %s535, %s549
      %p551 = scmp.eq.s32.totalorder %s58, 0
      %p552 = por %p550, %p551
      %s554 = sadd.s32 %s553, 1
      %p557 = scmp.eq.s32.totalorder %s52, 1
      %p558 = scmp.ne.s32.totalorder %s553, %s555
      %p559 = scmp.eq.s32.totalorder %s52, 0
      %p560 = por %p558, %p559
      %p561 = scmp.ne.s32.totalorder %s553, %s555
      %p562 = scmp.eq.s32.totalorder %s57, 1
      %p563 = por %p561, %p562
      %p564 = scmp.ne.s32.totalorder %s555, %s556
      %p565 = scmp.eq.s32.totalorder %s57, 0
      %p566 = por %p564, %p565
      %p567 = scmp.ne.s32.totalorder %s555, %s556
      %p568 = scmp.eq.s32.totalorder %s58, 1
      %p569 = por %p567, %p568
      %p571 = scmp.ne.s32.totalorder %s556, %s570
      %p572 = scmp.eq.s32.totalorder %s58, 0
      %p573 = por %p571, %p572
      %s574 = ssub.s32 %s52, %s59
      %p575 = scmp.eq.s32.totalorder %s574, 0
      %s577 = sadd.s32 %s576, 1
      %s578 = scalar_select %p575, %s576, %s577
      %p581 = pneg %p575
      %p582 = scmp.eq.s32.totalorder %s52, 1
      %p583 = por %p581, %p582
      %p584 = scmp.ne.s32.totalorder %s576, %s579
      %p585 = scmp.eq.s32.totalorder %s52, 0
      %p586 = por %p584, %p585
      %p587 = scmp.ne.s32.totalorder %s576, %s579
      %p588 = scmp.eq.s32.totalorder %s57, 1
      %p589 = por %p587, %p588
      %p590 = scmp.ne.s32.totalorder %s579, %s580
      %p591 = scmp.eq.s32.totalorder %s57, 0
      %p592 = por %p590, %p591
      %p593 = scmp.ne.s32.totalorder %s579, %s580
      %p594 = scmp.eq.s32.totalorder %s58, 1
      %p595 = por %p593, %p594
      %p597 = scmp.ne.s32.totalorder %s580, %s596
      %p598 = scmp.eq.s32.totalorder %s58, 0
      %p599 = por %p597, %p598
      %s600 = ssub.s32 %s52, %s59
      %p601 = scmp.eq.s32.totalorder %s600, 0
      %s603 = sadd.s32 %s602, 1
      %s604 = scalar_select %p601, %s602, %s603
      %p607 = pneg %p601
      %p608 = scmp.eq.s32.totalorder %s52, 1
      %p609 = por %p607, %p608
      %p610 = scmp.ne.s32.totalorder %s602, %s605
      %p611 = scmp.eq.s32.totalorder %s52, 0
      %p612 = por %p610, %p611
      %p613 = scmp.ne.s32.totalorder %s602, %s605
      %p614 = scmp.eq.s32.totalorder %s57, 1
      %p615 = por %p613, %p614
      %p616 = scmp.ne.s32.totalorder %s605, %s606
      %p617 = scmp.eq.s32.totalorder %s57, 0
      %p618 = por %p616, %p617
      %p619 = scmp.ne.s32.totalorder %s605, %s606
      %p620 = scmp.eq.s32.totalorder %s58, 1
      %p621 = por %p619, %p620
      %p623 = scmp.ne.s32.totalorder %s606, %s622
      %p624 = scmp.eq.s32.totalorder %s58, 0
      %p625 = por %p623, %p624
      %s626 = ssub.s32 %s52, %s59
      %p627 = scmp.eq.s32.totalorder %s626, 0
      %s629 = sadd.s32 %s628, 1
      %s630 = scalar_select %p627, %s628, %s629
      %p633 = pneg %p627
      %p634 = scmp.eq.s32.totalorder %s52, 1
      %p635 = por %p633, %p634
      %p636 = scmp.ne.s32.totalorder %s628, %s631
      %p637 = scmp.eq.s32.totalorder %s52, 0
      %p638 = por %p636, %p637
      %p639 = scmp.ne.s32.totalorder %s628, %s631
      %p640 = scmp.eq.s32.totalorder %s57, 1
      %p641 = por %p639, %p640
      %p642 = scmp.ne.s32.totalorder %s631, %s632
      %p643 = scmp.eq.s32.totalorder %s57, 0
      %p644 = por %p642, %p643
      %p645 = scmp.ne.s32.totalorder %s631, %s632
      %p646 = scmp.eq.s32.totalorder %s58, 1
      %p647 = por %p645, %p646
      %p649 = scmp.ne.s32.totalorder %s632, %s648
      %p650 = scmp.eq.s32.totalorder %s58, 0
      %p651 = por %p649, %p650
      %p652 = scmp.le.s32.totalorder 1, %s52
      %p653 = scmp.lt.s32.totalorder %s52, 3
      %p654 = pnand %p652, %p653
      %p655 = pneg %p654
      // Predicated region
      $region9: #{tpu_custom_call.1} parent=5 // pred_check
        _
      $region10: #{tpu_custom_call.1} parent=5 // pred_check_branch
        %657 = sbr.rel (%p654) target = $region12
      $region11: #{tpu_custom_call.1} parent=5 // pred_region
        %s658 = ssub.s32 %s52, 1
        // Predicated region
        $region13: #{tpu_custom_call.1} parent=11 // pred_check
          %p659 = pneg %p125
        $region14: #{tpu_custom_call.1} parent=11 // pred_check_branch
          %661 = sbr.rel (%p659) target = $region16
        $region15: #{tpu_custom_call.1} parent=11 // pred_region
          %s663 = ssub.s32 64, 64
          %664 = vsyncadd [#allocation6], %s663
          %s666 = sshll.u32 [#allocation7], 4
          %s667 = int_to_ptr.vmem [resolvable:$true] %s666
          %669 = dma.hbm_to_vmem [thread:$0]  %s2, 64, %s667, [#allocation6]
        $region16: #{tpu_custom_call.1} parent=11 // pred_fallthru
          _
        // Predicated region
        $region17: #{tpu_custom_call.1} parent=11 // pred_check
          %p670 = pneg %p146
        $region18: #{tpu_custom_call.1} parent=11 // pred_check_branch
          %672 = sbr.rel (%p670) target = $region20
        $region19: #{tpu_custom_call.1} parent=11 // pred_region
          _
        $region20: #{tpu_custom_call.1} parent=11 // pred_fallthru
          _
        // Predicated region
        $region21: #{tpu_custom_call.1} parent=11 // pred_check
          %p673 = pneg %p167
        $region22: #{tpu_custom_call.1} parent=11 // pred_check_branch
          %675 = sbr.rel (%p673) target = $region24
        $region23: #{tpu_custom_call.1} parent=11 // pred_region
          _
        $region24: #{tpu_custom_call.1} parent=11 // pred_fallthru
          _
        // Predicated region
        $region25: #{tpu_custom_call.1} parent=11 // pred_check
          %p676 = pneg %p188
        $region26: #{tpu_custom_call.1} parent=11 // pred_check_branch
          %678 = sbr.rel (%p676) target = $region28
        $region27: #{tpu_custom_call.1} parent=11 // pred_region
          %s680 = ssub.s32 16, 16
          %681 = vsyncadd [#allocation9], %s680
          %s683 = sshll.u32 [#allocation8], 4
          %s684 = int_to_ptr.vmem [resolvable:$true] %s683
          %686 = dma.hbm_to_vmem [thread:$0]  %s5, 16, %s684, [#allocation9]
        $region28: #{tpu_custom_call.1} parent=11 // pred_fallthru
          _
        // Predicated region
        $region29: #{tpu_custom_call.1} parent=11 // pred_check
          %p687 = pneg %p209
        $region30: #{tpu_custom_call.1} parent=11 // pred_check_branch
          %689 = sbr.rel (%p687) target = $region32
        $region31: #{tpu_custom_call.1} parent=11 // pred_region
          _
        $region32: #{tpu_custom_call.1} parent=11 // pred_fallthru
          _
        // Predicated region
        $region33: #{tpu_custom_call.1} parent=11 // pred_check
          %p690 = pneg %p230
        $region34: #{tpu_custom_call.1} parent=11 // pred_check_branch
          %692 = sbr.rel (%p690) target = $region36
        $region35: #{tpu_custom_call.1} parent=11 // pred_region
          %s694 = ssub.s32 16, 16
          %695 = vsyncadd [#allocation9], %s694
          %s697 = sshll.u32 [#allocation10], 4
          %s698 = int_to_ptr.vmem [resolvable:$true] %s697
          %700 = dma.hbm_to_vmem [thread:$0]  %s7, 16, %s698, [#allocation9]
        $region36: #{tpu_custom_call.1} parent=11 // pred_fallthru
          _
        // Predicated region
        $region37: #{tpu_custom_call.1} parent=11 // pred_check
          %p701 = pneg %p251
        $region38: #{tpu_custom_call.1} parent=11 // pred_check_branch
          %703 = sbr.rel (%p701) target = $region40
        $region39: #{tpu_custom_call.1} parent=11 // pred_region
          %s705 = ssub.s32 16, 16
          %706 = vsyncadd [#allocation12], %s705
          %s708 = sshll.u32 [#allocation11], 4
          %s709 = int_to_ptr.vmem [resolvable:$true] %s708
          %711 = dma.hbm_to_vmem [thread:$0]  %s8, 16, %s709, [#allocation12]
        $region40: #{tpu_custom_call.1} parent=11 // pred_fallthru
          _
        // Predicated region
        $region41: #{tpu_custom_call.1} parent=11 // pred_check
          %p712 = pneg %p272
        $region42: #{tpu_custom_call.1} parent=11 // pred_check_branch
          %714 = sbr.rel (%p712) target = $region44
        $region43: #{tpu_custom_call.1} parent=11 // pred_region
          %s716 = ssub.s32 16, 16
          %717 = vsyncadd [#allocation12], %s716
          %s719 = sshll.u32 [#allocation13], 4
          %s720 = int_to_ptr.vmem [resolvable:$true] %s719
          %722 = dma.hbm_to_vmem [thread:$0]  %s9, 16, %s720, [#allocation12]
        $region44: #{tpu_custom_call.1} parent=11 // pred_fallthru
          _
        // Predicated region
        $region45: #{tpu_custom_call.1} parent=11 // pred_check
          %p723 = pneg %p293
        $region46: #{tpu_custom_call.1} parent=11 // pred_check_branch
          %725 = sbr.rel (%p723) target = $region48
        $region47: #{tpu_custom_call.1} parent=11 // pred_region
          _
        $region48: #{tpu_custom_call.1} parent=11 // pred_fallthru
          _
        // Predicated region
        $region49: #{tpu_custom_call.1} parent=11 // pred_check
          %p726 = pneg %p314
        $region50: #{tpu_custom_call.1} parent=11 // pred_check_branch
          %728 = sbr.rel (%p726) target = $region52
        $region51: #{tpu_custom_call.1} parent=11 // pred_region
          %s730 = ssub.s32 16, 16
          %731 = vsyncadd [#allocation15], %s730
          %s733 = sshll.u32 [#allocation14], 4
          %s734 = int_to_ptr.vmem [resolvable:$true] %s733
          %736 = dma.hbm_to_vmem [thread:$0]  %s11, 16, %s734, [#allocation15]
        $region52: #{tpu_custom_call.1} parent=11 // pred_fallthru
          _
        // Predicated region
        $region53: #{tpu_custom_call.1} parent=11 // pred_check
          %p737 = pneg %p335
        $region54: #{tpu_custom_call.1} parent=11 // pred_check_branch
          %739 = sbr.rel (%p737) target = $region56
        $region55: #{tpu_custom_call.1} parent=11 // pred_region
          %s741 = ssub.s32 512, 512
          %742 = vsyncadd [#allocation15], %s741
          %s743 = sshll.u32 [#allocation16], 4
          %s744 = int_to_ptr.vmem [resolvable:$true] %s743
          %749 = dma.hbm_to_vmem [thread:$0]  %s12, 512, %s744, [#allocation15], 128, 128, 8
        $region56: #{tpu_custom_call.1} parent=11 // pred_fallthru
          _
        // Predicated region
        $region57: #{tpu_custom_call.1} parent=11 // pred_check
          %p750 = pneg %p356
        $region58: #{tpu_custom_call.1} parent=11 // pred_check_branch
          %752 = sbr.rel (%p750) target = $region60
        $region59: #{tpu_custom_call.1} parent=11 // pred_region
          %s754 = ssub.s32 16, 16
          %755 = vsyncadd [#allocation18], %s754
          %s757 = sshll.u32 [#allocation17], 4
          %s758 = int_to_ptr.vmem [resolvable:$true] %s757
          %760 = dma.hbm_to_vmem [thread:$0]  %s13, 16, %s758, [#allocation18]
        $region60: #{tpu_custom_call.1} parent=11 // pred_fallthru
          _
        // Predicated region
        $region61: #{tpu_custom_call.1} parent=11 // pred_check
          %p761 = pneg %p377
        $region62: #{tpu_custom_call.1} parent=11 // pred_check_branch
          %763 = sbr.rel (%p761) target = $region64
        $region63: #{tpu_custom_call.1} parent=11 // pred_region
          %s765 = ssub.s32 512, 512
          %766 = vsyncadd [#allocation18], %s765
          %s767 = sshll.u32 [#allocation19], 4
          %s768 = int_to_ptr.vmem [resolvable:$true] %s767
          %773 = dma.hbm_to_vmem [thread:$0]  %s14, 512, %s768, [#allocation18], 128, 128, 8
        $region64: #{tpu_custom_call.1} parent=11 // pred_fallthru
          _
        // Predicated region
        $region65: #{tpu_custom_call.1} parent=11 // pred_check
          %p774 = pneg %p398
        $region66: #{tpu_custom_call.1} parent=11 // pred_check_branch
          %776 = sbr.rel (%p774) target = $region68
        $region67: #{tpu_custom_call.1} parent=11 // pred_region
          %s778 = ssub.s32 16, 16
          %779 = vsyncadd [#allocation21], %s778
          %s781 = sshll.u32 [#allocation20], 4
          %s782 = int_to_ptr.vmem [resolvable:$true] %s781
          %784 = dma.hbm_to_vmem [thread:$0]  %s15, 16, %s782, [#allocation21]
        $region68: #{tpu_custom_call.1} parent=11 // pred_fallthru
          _
        // Predicated region
        $region69: #{tpu_custom_call.1} parent=11 // pred_check
          %p785 = pneg %p419
        $region70: #{tpu_custom_call.1} parent=11 // pred_check_branch
          %787 = sbr.rel (%p785) target = $region72
        $region71: #{tpu_custom_call.1} parent=11 // pred_region
          %s789 = ssub.s32 16, 16
          %790 = vsyncadd [#allocation21], %s789
          %s792 = sshll.u32 [#allocation22], 4
          %s793 = int_to_ptr.vmem [resolvable:$true] %s792
          %795 = dma.hbm_to_vmem [thread:$0]  %s16, 16, %s793, [#allocation21]
        $region72: #{tpu_custom_call.1} parent=11 // pred_fallthru
          _
        // Predicated region
        $region73: #{tpu_custom_call.1} parent=11 // pred_check
          %p796 = pneg %p440
        $region74: #{tpu_custom_call.1} parent=11 // pred_check_branch
          %798 = sbr.rel (%p796) target = $region76
        $region75: #{tpu_custom_call.1} parent=11 // pred_region
          %s800 = ssub.s32 16, 16
          %801 = vsyncadd [#allocation24], %s800
          %s803 = sshll.u32 [#allocation23], 4
          %s804 = int_to_ptr.vmem [resolvable:$true] %s803
          %806 = dma.hbm_to_vmem [thread:$0]  %s17, 16, %s804, [#allocation24]
        $region76: #{tpu_custom_call.1} parent=11 // pred_fallthru
          _
        // Predicated region
        $region77: #{tpu_custom_call.1} parent=11 // pred_check
          %p807 = pneg %p461
        $region78: #{tpu_custom_call.1} parent=11 // pred_check_branch
          %809 = sbr.rel (%p807) target = $region80
        $region79: #{tpu_custom_call.1} parent=11 // pred_region
          %s811 = ssub.s32 512, 512
          %812 = vsyncadd [#allocation24], %s811
          %s813 = sshll.u32 [#allocation25], 4
          %s814 = int_to_ptr.vmem [resolvable:$true] %s813
          %819 = dma.hbm_to_vmem [thread:$0]  %s18, 512, %s814, [#allocation24], 128, 128, 8
        $region80: #{tpu_custom_call.1} parent=11 // pred_fallthru
          _
        // Predicated region
        $region81: #{tpu_custom_call.1} parent=11 // pred_check
          %p820 = pneg %p482
        $region82: #{tpu_custom_call.1} parent=11 // pred_check_branch
          %822 = sbr.rel (%p820) target = $region84
        $region83: #{tpu_custom_call.1} parent=11 // pred_region
          %s824 = ssub.s32 16, 16
          %825 = vsyncadd [#allocation27], %s824
          %s827 = sshll.u32 [#allocation26], 4
          %s828 = int_to_ptr.vmem [resolvable:$true] %s827
          %830 = dma.hbm_to_vmem [thread:$0]  %s19, 16, %s828, [#allocation27]
        $region84: #{tpu_custom_call.1} parent=11 // pred_fallthru
          _
        // Predicated region
        $region85: #{tpu_custom_call.1} parent=11 // pred_check
          %p831 = pneg %p503
        $region86: #{tpu_custom_call.1} parent=11 // pred_check_branch
          %833 = sbr.rel (%p831) target = $region88
        $region87: #{tpu_custom_call.1} parent=11 // pred_region
          _
        $region88: #{tpu_custom_call.1} parent=11 // pred_fallthru
          _
        // Predicated region
        $region89: #{tpu_custom_call.1} parent=11 // pred_check
          %p834 = pneg %p524
        $region90: #{tpu_custom_call.1} parent=11 // pred_check_branch
          %836 = sbr.rel (%p834) target = $region92
        $region91: #{tpu_custom_call.1} parent=11 // pred_region
          _
        $region92: #{tpu_custom_call.1} parent=11 // pred_fallthru
          _
        // Predicated region
        $region93: #{tpu_custom_call.1} parent=11 // pred_check
          %p837 = pneg %p545
        $region94: #{tpu_custom_call.1} parent=11 // pred_check_branch
          %839 = sbr.rel (%p837) target = $region96
        $region95: #{tpu_custom_call.1} parent=11 // pred_region
          _
        $region96: #{tpu_custom_call.1} parent=11 // pred_fallthru
          _
        // Predicated region
        $region97: #{tpu_custom_call.1} parent=11 // pred_check
          %p840 = pneg %p566
        $region98: #{tpu_custom_call.1} parent=11 // pred_check_branch
          %842 = sbr.rel (%p840) target = $region100
        $region99: #{tpu_custom_call.1} parent=11 // pred_region
          _
        $region100: #{tpu_custom_call.1} parent=11 // pred_fallthru
          _
      $region12: #{tpu_custom_call.1} parent=5 // pred_fallthru
        _
      %p843 = scmp.lt.s32.totalorder %s52, 2
      // Predicated region
      $region101: #{tpu_custom_call.1} parent=5 // pred_check
        %p844 = pneg %p843
      $region102: #{tpu_custom_call.1} parent=5 // pred_check_branch
        %846 = sbr.rel (%p844) target = $region104
      $region103: #{tpu_custom_call.1} parent=5 // pred_region
        // Predicated region
        $region105: #{tpu_custom_call.1} parent=103 // pred_check
          %p847 = pneg %p72
        $region106: #{tpu_custom_call.1} parent=103 // pred_check_branch
          %849 = sbr.rel (%p847) target = $region108
        $region107: #{tpu_custom_call.1} parent=103 // pred_region
          %s850 = sand.u32 %s62, 1
          %s851 = scalar_lea.sflag [#allocation3], %s850
          %s852 = sand.u32 %s62, 1
          %s853 = smul.addr %s852, 8
          %s854 = scalar_lea.vmem [#allocation2], %s853
          %s856 = ssub.s32 128, 128
          %857 = vsyncadd %s851, %s856
          %s858 = smul.addr %s52, 128
          %s859 = scalar_lea.hbm %s0, %s858
          %s861 = sshll.u32 %s854, 4
          %s862 = int_to_ptr.vmem [resolvable:$true] %s861
          %864 = dma.hbm_to_vmem [thread:$0]  %s859, 128, %s862, %s851
        $region108: #{tpu_custom_call.1} parent=103 // pred_fallthru
          _
        // Predicated region
        $region109: #{tpu_custom_call.1} parent=103 // pred_check
          %p865 = pneg %p98
        $region110: #{tpu_custom_call.1} parent=103 // pred_check_branch
          %867 = sbr.rel (%p865) target = $region112
        $region111: #{tpu_custom_call.1} parent=103 // pred_region
          %s868 = sand.u32 %s52, 1
          %s869 = scalar_lea.sflag [#allocation6], %s868
          %s870 = sand.u32 %s88, 1
          %s871 = smul.addr %s870, 8
          %s872 = scalar_lea.vmem [#allocation5], %s871
          %s874 = ssub.s32 128, 128
          %875 = vsyncadd %s869, %s874
          %s876 = smul.addr %s52, 128
          %s877 = scalar_lea.hbm %s1, %s876
          %s879 = sshll.u32 %s872, 4
          %s880 = int_to_ptr.vmem [resolvable:$true] %s879
          %882 = dma.hbm_to_vmem [thread:$0]  %s877, 128, %s880, %s869
        $region112: #{tpu_custom_call.1} parent=103 // pred_fallthru
          _
      $region104: #{tpu_custom_call.1} parent=5 // pred_fallthru
        _
      %p883 = scmp.le.s32.totalorder 1, %s52
      %p884 = scmp.lt.s32.totalorder %s52, 3
      %p885 = pnand %p883, %p884
      %p886 = pneg %p885
      // Predicated region
      $region113: #{tpu_custom_call.1} parent=5 // pred_check
        _
      $region114: #{tpu_custom_call.1} parent=5 // pred_check_branch
        %888 = sbr.rel (%p885) target = $region116
      $region115: #{tpu_custom_call.1} parent=5 // pred_region
        %s889 = ssub.s32 %s52, 1
        %s890 = sand.u32 %s65, 1
        %s891 = scalar_lea.sflag [#allocation3], %s890
        %s892 = sand.u32 %s65, 1
        %s893 = smul.addr %s892, 8
        %s894 = scalar_lea.vmem [#allocation2], %s893
        // Predicated region
        $region117: #{tpu_custom_call.1} parent=115 // pred_check
          %p895 = pneg %p78
        $region118: #{tpu_custom_call.1} parent=115 // pred_check_branch
          %897 = sbr.rel (%p895) target = $region120
        $region119: #{tpu_custom_call.1} parent=115 // pred_region
          %898 = dma.done %s891, 128
        $region120: #{tpu_custom_call.1} parent=115 // pred_fallthru
          _
        %s899 = sand.u32 %s57, 1
        %s900 = scalar_lea.sflag [#allocation6], %s899
        %s901 = sand.u32 %s91, 1
        %s902 = smul.addr %s901, 8
        %s903 = scalar_lea.vmem [#allocation5], %s902
        // Predicated region
        $region121: #{tpu_custom_call.1} parent=115 // pred_check
          %p904 = pneg %p104
        $region122: #{tpu_custom_call.1} parent=115 // pred_check_branch
          %906 = sbr.rel (%p904) target = $region124
        $region123: #{tpu_custom_call.1} parent=115 // pred_region
          %907 = dma.done %s900, 128
        $region124: #{tpu_custom_call.1} parent=115 // pred_fallthru
          _
        // Predicated region
        $region125: #{tpu_custom_call.1} parent=115 // pred_check
          %p908 = pneg %p125
        $region126: #{tpu_custom_call.1} parent=115 // pred_check_branch
          %910 = sbr.rel (%p908) target = $region128
        $region127: #{tpu_custom_call.1} parent=115 // pred_region
          %911 = dma.done [#allocation6], 64
        $region128: #{tpu_custom_call.1} parent=115 // pred_fallthru
          _
        // Predicated region
        $region129: #{tpu_custom_call.1} parent=115 // pred_check
          %p912 = pneg %p188
        $region130: #{tpu_custom_call.1} parent=115 // pred_check_branch
          %914 = sbr.rel (%p912) target = $region132
        $region131: #{tpu_custom_call.1} parent=115 // pred_region
          %915 = dma.done [#allocation9], 16
        $region132: #{tpu_custom_call.1} parent=115 // pred_fallthru
          _
        // Predicated region
        $region133: #{tpu_custom_call.1} parent=115 // pred_check
          %p916 = pneg %p230
        $region134: #{tpu_custom_call.1} parent=115 // pred_check_branch
          %918 = sbr.rel (%p916) target = $region136
        $region135: #{tpu_custom_call.1} parent=115 // pred_region
          %919 = dma.done [#allocation9], 16
        $region136: #{tpu_custom_call.1} parent=115 // pred_fallthru
          _
        // Predicated region
        $region137: #{tpu_custom_call.1} parent=115 // pred_check
          %p920 = pneg %p251
        $region138: #{tpu_custom_call.1} parent=115 // pred_check_branch
          %922 = sbr.rel (%p920) target = $region140
        $region139: #{tpu_custom_call.1} parent=115 // pred_region
          %923 = dma.done [#allocation12], 16
        $region140: #{tpu_custom_call.1} parent=115 // pred_fallthru
          _
        // Predicated region
        $region141: #{tpu_custom_call.1} parent=115 // pred_check
          %p924 = pneg %p272
        $region142: #{tpu_custom_call.1} parent=115 // pred_check_branch
          %926 = sbr.rel (%p924) target = $region144
        $region143: #{tpu_custom_call.1} parent=115 // pred_region
          %927 = dma.done [#allocation12], 16
        $region144: #{tpu_custom_call.1} parent=115 // pred_fallthru
          _
        // Predicated region
        $region145: #{tpu_custom_call.1} parent=115 // pred_check
          %p928 = pneg %p314
        $region146: #{tpu_custom_call.1} parent=115 // pred_check_branch
          %930 = sbr.rel (%p928) target = $region148
        $region147: #{tpu_custom_call.1} parent=115 // pred_region
          %931 = dma.done [#allocation15], 16
        $region148: #{tpu_custom_call.1} parent=115 // pred_fallthru
          _
        // Predicated region
        $region149: #{tpu_custom_call.1} parent=115 // pred_check
          %p932 = pneg %p335
        $region150: #{tpu_custom_call.1} parent=115 // pred_check_branch
          %934 = sbr.rel (%p932) target = $region152
        $region151: #{tpu_custom_call.1} parent=115 // pred_region
          %935 = dma.done [#allocation15], 512
        $region152: #{tpu_custom_call.1} parent=115 // pred_fallthru
          _
        // Predicated region
        $region153: #{tpu_custom_call.1} parent=115 // pred_check
          %p936 = pneg %p356
        $region154: #{tpu_custom_call.1} parent=115 // pred_check_branch
          %938 = sbr.rel (%p936) target = $region156
        $region155: #{tpu_custom_call.1} parent=115 // pred_region
          %939 = dma.done [#allocation18], 16
        $region156: #{tpu_custom_call.1} parent=115 // pred_fallthru
          _
        // Predicated region
        $region157: #{tpu_custom_call.1} parent=115 // pred_check
          %p940 = pneg %p377
        $region158: #{tpu_custom_call.1} parent=115 // pred_check_branch
          %942 = sbr.rel (%p940) target = $region160
        $region159: #{tpu_custom_call.1} parent=115 // pred_region
          %943 = dma.done [#allocation18], 512
        $region160: #{tpu_custom_call.1} parent=115 // pred_fallthru
          _
        // Predicated region
        $region161: #{tpu_custom_call.1} parent=115 // pred_check
          %p944 = pneg %p398
        $region162: #{tpu_custom_call.1} parent=115 // pred_check_branch
          %946 = sbr.rel (%p944) target = $region164
        $region163: #{tpu_custom_call.1} parent=115 // pred_region
          %947 = dma.done [#allocation21], 16
        $region164: #{tpu_custom_call.1} parent=115 // pred_fallthru
          _
        // Predicated region
        $region165: #{tpu_custom_call.1} parent=115 // pred_check
          %p948 = pneg %p419
        $region166: #{tpu_custom_call.1} parent=115 // pred_check_branch
          %950 = sbr.rel (%p948) target = $region168
        $region167: #{tpu_custom_call.1} parent=115 // pred_region
          %951 = dma.done [#allocation21], 16
        $region168: #{tpu_custom_call.1} parent=115 // pred_fallthru
          _
        // Predicated region
        $region169: #{tpu_custom_call.1} parent=115 // pred_check
          %p952 = pneg %p440
        $region170: #{tpu_custom_call.1} parent=115 // pred_check_branch
          %954 = sbr.rel (%p952) target = $region172
        $region171: #{tpu_custom_call.1} parent=115 // pred_region
          %955 = dma.done [#allocation24], 16
        $region172: #{tpu_custom_call.1} parent=115 // pred_fallthru
          _
        // Predicated region
        $region173: #{tpu_custom_call.1} parent=115 // pred_check
          %p956 = pneg %p461
        $region174: #{tpu_custom_call.1} parent=115 // pred_check_branch
          %958 = sbr.rel (%p956) target = $region176
        $region175: #{tpu_custom_call.1} parent=115 // pred_region
          %959 = dma.done [#allocation24], 512
        $region176: #{tpu_custom_call.1} parent=115 // pred_fallthru
          _
        // Predicated region
        $region177: #{tpu_custom_call.1} parent=115 // pred_check
          %p960 = pneg %p482
        $region178: #{tpu_custom_call.1} parent=115 // pred_check_branch
          %962 = sbr.rel (%p960) target = $region180
        $region179: #{tpu_custom_call.1} parent=115 // pred_region
          %963 = dma.done [#allocation27], 16
        $region180: #{tpu_custom_call.1} parent=115 // pred_fallthru
          _
        %s964 = sand.u32 %s65, 1
        %s965 = scalar_lea.sflag [#allocation3], %s964
        %s966 = sand.u32 %s65, 1
        %s967 = smul.addr %s966, 8
        %s968 = scalar_lea.vmem [#allocation2], %s967
        %p969 = pneg %p78
        %p970 = pneg %p75
        %s971 = sand.u32 %s57, 1
        %s972 = scalar_lea.sflag [#allocation6], %s971
        %s973 = sand.u32 %s91, 1
        %s974 = smul.addr %s973, 8
        %s975 = scalar_lea.vmem [#allocation5], %s974
        %p976 = pneg %p104
        %p977 = pneg %p101
        %p978 = pneg %p125
        %p979 = pneg %p122
        %p980 = pneg %p146
        %p981 = pneg %p143
        %p982 = pneg %p167
        %p983 = pneg %p164
        %p984 = pneg %p188
        %p985 = pneg %p185
        %p986 = pneg %p209
        %p987 = pneg %p206
        %p988 = pneg %p230
        %p989 = pneg %p227
        %p990 = pneg %p251
        %p991 = pneg %p248
        %p992 = pneg %p272
        %p993 = pneg %p269
        %p994 = pneg %p293
        %p995 = pneg %p290
        %p996 = pneg %p314
        %p997 = pneg %p311
        %p998 = pneg %p335
        %p999 = pneg %p332
        %p1000 = pneg %p356
        %p1001 = pneg %p353
        %p1002 = pneg %p377
        %p1003 = pneg %p374
        %p1004 = pneg %p398
        %p1005 = pneg %p395
        %p1006 = pneg %p419
        %p1007 = pneg %p416
        %p1008 = pneg %p440
        %p1009 = pneg %p437
        %p1010 = pneg %p461
        %p1011 = pneg %p458
        %p1012 = pneg %p482
        %p1013 = pneg %p479
        %p1014 = pneg %p503
        %p1015 = pneg %p500
        %p1016 = pneg %p524
        %p1017 = pneg %p521
        %p1018 = pneg %p545
        %p1019 = pneg %p542
        %p1020 = pneg %p566
        %p1021 = pneg %p563
        %p1022 = pneg %p592
        %p1023 = pneg %p589
        %s1024 = sand.u32 %s579, 1
        %s1025 = scalar_lea.sflag [#allocation4], %s1024
        %s1026 = sand.u32 %s579, 1
        %s1027 = smul.addr %s1026, 8
        %s1028 = scalar_lea.vmem [#allocation28], %s1027
        %p1029 = pneg %p618
        %p1030 = pneg %p615
        %s1031 = sand.u32 %s57, 1
        %s1032 = scalar_lea.sflag [#allocation30], %s1031
        %s1033 = sand.u32 %s605, 1
        %s1034 = smul.addr %s1033, 32
        %s1035 = scalar_lea.vmem [#allocation29], %s1034
        %p1036 = pneg %p644
        %p1037 = pneg %p641
        %s1038 = sand.u32 %s57, 1
        %s1039 = scalar_lea.sflag [#allocation30], %s1038
        %s1040 = sand.u32 %s631, 1
        %s1041 = smul.addr %s1040, 32
        %s1042 = scalar_lea.vmem [#allocation31], %s1041
        %v1043 = vld [vmem:[%s894] sm:$0xff]
        %v1044 = vld [vmem:[%s903] sm:$0xff]
        %v1045 = vld [vmem:[%s4] sm:$0xff]
        %v1046 = vld [vmem:[%s4 + $0x8] sm:$0xff]
        %v1047 = vld [vmem:[%s4 + $0x10] sm:$0xff]
        %v1048 = vld [vmem:[%s4 + $0x18] sm:$0xff]
        %v1049 = vld [vmem:[#allocation8] sm:$0x1]
        %v1051 = vlaneseq
        %v1052 = vshrl.u32 %v1051, 7
        %v1053 = vsub.s32 0, %v1052
        %v1054 = vrot.slane %v1049, %v1053
        %vm1056 = vcmask 261120
        %v1058 = vsel %vm1056, %v1043, 0
        %1060 = vmatprep.subr.mxu0 0.0
        %1061 = vmatpush1.msra.mxu0 0.0
        %1062 = vmatprep.subr.mxu0 0.0
        %1063 = vmatpush1.msra.mxu0 0.0
        %1064 = vmatprep.subr.mxu0 0.0
        %1065 = vmatpush1.msra.mxu0 0.0
        %1066 = vmatprep.subr.mxu0 0.0
        %1067 = vmatpush1.msra.mxu0 0.0
        %1068 = vmatprep.subr.mxu0 0.0
        %1069 = vmatpush1.msra.mxu0 0.0
        %1070 = vmatprep.subr.mxu0 0.0
        %1071 = vmatpush1.msra.mxu0 0.0
        %1072 = vmatprep.subr.mxu0 0.0
        %1073 = vmatpush1.msra.mxu0 0.0
        %1074 = vmatprep.subr.mxu0 0.0
        %1075 = vmatpush1.msra.mxu0 0.0
        %1076 = vmatprep.subr.mxu0 0.0
        %1077 = vmatpush1.msra.mxu0 0.0
        %1078 = vmatprep.subr.mxu0 0.0
        %1079 = vmatpush1.msra.mxu0 0.0
        %1080 = vmatprep.subr.mxu0 0.0
        %1081 = vmatpush1.msra.mxu0 0.0
        %1082 = vmatprep.subr.mxu0 0.0
        %1083 = vmatpush1.msra.mxu0 0.0
        %1084 = vmatprep.subr.mxu0 0.0
        %1085 = vmatpush1.msra.mxu0 %v1048
        %1086 = vmatprep.subr.mxu0 0.0
        %1087 = vmatpush1.msra.mxu0 %v1047
        %1088 = vmatprep.subr.mxu0 0.0
        %1089 = vmatpush1.msra.mxu0 %v1046
        %1090 = vmatprep.subr.mxu0 0.0
        %1091 = vmatpush1.msra.mxu0 %v1045
        %1092 = vmatprep.subr.mxu0 0.0
        %1093 = vmatpush2.msra.mxu0 0.0
        %1094 = vmatprep.subr.mxu0 0.0
        %1095 = vmatpush2.msra.mxu0 0.0
        %1096 = vmatprep.subr.mxu0 0.0
        %1097 = vmatpush2.msra.mxu0 0.0
        %1098 = vmatprep.subr.mxu0 0.0
        %1099 = vmatpush2.msra.mxu0 0.0
        %1100 = vmatprep.subr.mxu0 0.0
        %1101 = vmatpush2.msra.mxu0 0.0
        %1102 = vmatprep.subr.mxu0 0.0
        %1103 = vmatpush2.msra.mxu0 0.0
        %1104 = vmatprep.subr.mxu0 0.0
        %1105 = vmatpush2.msra.mxu0 0.0
        %1106 = vmatprep.subr.mxu0 0.0
        %1107 = vmatpush2.msra.mxu0 0.0
        %1108 = vmatprep.subr.mxu0 0.0
        %1109 = vmatpush2.msra.mxu0 0.0
        %1110 = vmatprep.subr.mxu0 0.0
        %1111 = vmatpush2.msra.mxu0 0.0
        %1112 = vmatprep.subr.mxu0 0.0
        %1113 = vmatpush2.msra.mxu0 0.0
        %1114 = vmatprep.subr.mxu0 0.0
        %1115 = vmatpush2.msra.mxu0 0.0
        %1116 = vmatprep.subr.mxu0 0.0
        %1117 = vmatpush2.msra.mxu0 0.0
        %1118 = vmatprep.subr.mxu0 0.0
        %1119 = vmatpush2.msra.mxu0 0.0
        %1120 = vmatprep.subr.mxu0 0.0
        %1121 = vmatpush2.msra.mxu0 0.0
        %1122 = vmatprep.subr.mxu0 0.0
        %1123 = vmatpush2.msra.mxu0 0.0
        %1124 = vmatprep.mubr.f32.mxu0 0.0
        %1125 = vmatmul.mubr.f32.gmra.mxu0 %v1058
        %v1126 = vpop.f32.mrf.mxu0
        %v1127 = vadd.f32 %v1054, %v1126
        %v1128 = vpop.f32.mrf.mxu0
        %1129 = vdwg.mxu0
        %v1130 = vld [vmem:[#allocation7] sm:$0xf]
        %v1131 = vunpack.c.l.bf16 %v1130
        %1133 = vrot.lane.b32.xlu0 %v1127, 96
        %v1134 = vpop.permute.xlu0 %1133
        %vm1135 = vcmask 64512
        %v1136 = vsel %vm1135, %v1127, 0
        %v1138 = vsel %vm1135, %v1134, 0
        %1140 = vmatprep.subr.mxu0 0.0
        %1141 = vmatpush1.xpose.msra.mxu0 0.0
        %1142 = vmatprep.subr.mxu0 0.0
        %1143 = vmatpush1.xpose.msra.mxu0 0.0
        %1144 = vmatprep.subr.mxu0 0.0
        %1145 = vmatpush1.xpose.msra.mxu0 0.0
        %1146 = vmatprep.subr.mxu0 0.0
        %1147 = vmatpush1.xpose.msra.mxu0 0.0
        %1148 = vmatprep.subr.mxu0 0.0
        %1149 = vmatpush1.xpose.msra.mxu0 0.0
        %1150 = vmatprep.subr.mxu0 0.0
        %1151 = vmatpush1.xpose.msra.mxu0 0.0
        %1152 = vmatprep.subr.mxu0 0.0
        %1153 = vmatpush1.xpose.msra.mxu0 0.0
        %1154 = vmatprep.subr.mxu0 0.0
        %1155 = vmatpush1.xpose.msra.mxu0 0.0
        %1156 = vmatprep.subr.mxu0 0.0
        %1157 = vmatpush1.xpose.msra.mxu0 0.0
        %1158 = vmatprep.subr.mxu0 0.0
        %1159 = vmatpush1.xpose.msra.mxu0 0.0
        %1160 = vmatprep.subr.mxu0 0.0
        %1161 = vmatpush1.xpose.msra.mxu0 0.0
        %1162 = vmatprep.subr.mxu0 0.0
        %1163 = vmatpush1.xpose.msra.mxu0 0.0
        %1164 = vmatprep.subr.mxu0 0.0
        %1165 = vmatpush1.xpose.msra.mxu0 0.0
        %1166 = vmatprep.subr.mxu0 0.0
        %1167 = vmatpush1.xpose.msra.mxu0 0.0
        %1168 = vmatprep.subr.mxu0 0.0
        %1169 = vmatpush1.xpose.msra.mxu0 0.0
        %1170 = vmatprep.subr.mxu0 0.0
        %1171 = vmatpush1.xpose.msra.mxu0 %v1138
        %1172 = vmatprep.subr.mxu0 0.0
        %1173 = vmatpush2.xpose.msra.mxu0 0.0
        %1174 = vmatprep.subr.mxu0 0.0
        %1175 = vmatpush2.xpose.msra.mxu0 0.0
        %1176 = vmatprep.subr.mxu0 0.0
        %1177 = vmatpush2.xpose.msra.mxu0 0.0
        %1178 = vmatprep.subr.mxu0 0.0
        %1179 = vmatpush2.xpose.msra.mxu0 0.0
        %1180 = vmatprep.subr.mxu0 0.0
        %1181 = vmatpush2.xpose.msra.mxu0 0.0
        %1182 = vmatprep.subr.mxu0 0.0
        %1183 = vmatpush2.xpose.msra.mxu0 0.0
        %1184 = vmatprep.subr.mxu0 0.0
        %1185 = vmatpush2.xpose.msra.mxu0 0.0
        %1186 = vmatprep.subr.mxu0 0.0
        %1187 = vmatpush2.xpose.msra.mxu0 0.0
        %1188 = vmatprep.subr.mxu0 0.0
        %1189 = vmatpush2.xpose.msra.mxu0 0.0
        %1190 = vmatprep.subr.mxu0 0.0
        %1191 = vmatpush2.xpose.msra.mxu0 0.0
        %1192 = vmatprep.subr.mxu0 0.0
        %1193 = vmatpush2.xpose.msra.mxu0 0.0
        %1194 = vmatprep.subr.mxu0 0.0
        %1195 = vmatpush2.xpose.msra.mxu0 0.0
        %1196 = vmatprep.subr.mxu0 0.0
        %1197 = vmatpush2.xpose.msra.mxu0 0.0
        %1198 = vmatprep.subr.mxu0 0.0
        %1199 = vmatpush2.xpose.msra.mxu0 0.0
        %1200 = vmatprep.subr.mxu0 0.0
        %1201 = vmatpush2.xpose.msra.mxu0 0.0
        %1202 = vmatprep.subr.mxu0 0.0
        %1203 = vmatpush2.xpose.msra.mxu0 0.0
        %1204 = vmatprep.mubr.f32.mxu0 0.0
        %1205 = vmatmul.mubr.f32.gmra.mxu0 %v1136
        %v1206 = vpop.f32.mrf.mxu0
        %v1207 = vadd.f32 %v1131, %v1206
        %v1208 = vpop.f32.mrf.mxu0
        %1209 = vdwg.mxu0
        %v1210 = vsel %vm1135, %v1207, -inf
        %1211 = vmax.xlane.f32.xlu0 %v1210
        %v1212 = vpop.xlane.xlu0 %1211
        %v1213 = vsub.f32 %v1207, %v1212
        %v1214 = vmul.f32 %v1213, 1.442695
        %v1215 = vpow.pop %v1214
        %v1216 = vsel %vm1135, %v1215, 0.0
        %1217 = vadd.xlane.f32.xlu0 %v1216
        %v1218 = vpop.xlane.xlu0 %1217
        %v1219 = vrcp.pop %v1218
        %v1220 = vmul.f32 %v1215, %v1219
        %1221 = vst.msk [vmem:[%s1035] sm:$0xff] %vm1135, %v1220
        %1222 = vrot.lane.b32.xlu0 %v1127, 64
        %v1223 = vpop.permute.xlu0 %1222
        %v1226 = vsel %vm1135, %v1220, 0
        %1228 = vmatprep.subr.mxu0 0.0
        %1229 = vmatpush1.msra.mxu0 0.0
        %1230 = vmatprep.subr.mxu0 0.0
        %1231 = vmatpush1.msra.mxu0 0.0
        %1232 = vmatprep.subr.mxu0 0.0
        %1233 = vmatpush1.msra.mxu0 0.0
        %1234 = vmatprep.subr.mxu0 0.0
        %1235 = vmatpush1.msra.mxu0 0.0
        %1236 = vmatprep.subr.mxu0 0.0
        %1237 = vmatpush1.msra.mxu0 0.0
        %1238 = vmatprep.subr.mxu0 0.0
        %1239 = vmatpush1.msra.mxu0 0.0
        %1240 = vmatprep.subr.mxu0 0.0
        %1241 = vmatpush1.msra.mxu0 0.0
        %1242 = vmatprep.subr.mxu0 0.0
        %1243 = vmatpush1.msra.mxu0 0.0
        %1244 = vmatprep.subr.mxu0 0.0
        %1245 = vmatpush1.msra.mxu0 0.0
        %1246 = vmatprep.subr.mxu0 0.0
        %1247 = vmatpush1.msra.mxu0 0.0
        %1248 = vmatprep.subr.mxu0 0.0
        %1249 = vmatpush1.msra.mxu0 0.0
        %1250 = vmatprep.subr.mxu0 0.0
        %1251 = vmatpush1.msra.mxu0 0.0
        %1252 = vmatprep.subr.mxu0 0.0
        %1253 = vmatpush1.msra.mxu0 0.0
        %1254 = vmatprep.subr.mxu0 0.0
        %1255 = vmatpush1.msra.mxu0 0.0
        %1256 = vmatprep.subr.mxu0 0.0
        %1257 = vmatpush1.msra.mxu0 0.0
        %1258 = vmatprep.subr.mxu0 0.0
        %1259 = vmatpush1.msra.mxu0 %v1223
        %1260 = vmatprep.subr.mxu0 0.0
        %1261 = vmatpush2.msra.mxu0 0.0
        %1262 = vmatprep.subr.mxu0 0.0
        %1263 = vmatpush2.msra.mxu0 0.0
        %1264 = vmatprep.subr.mxu0 0.0
        %1265 = vmatpush2.msra.mxu0 0.0
        %1266 = vmatprep.subr.mxu0 0.0
        %1267 = vmatpush2.msra.mxu0 0.0
        %1268 = vmatprep.subr.mxu0 0.0
        %1269 = vmatpush2.msra.mxu0 0.0
        %1270 = vmatprep.subr.mxu0 0.0
        %1271 = vmatpush2.msra.mxu0 0.0
        %1272 = vmatprep.subr.mxu0 0.0
        %1273 = vmatpush2.msra.mxu0 0.0
        %1274 = vmatprep.subr.mxu0 0.0
        %1275 = vmatpush2.msra.mxu0 0.0
        %1276 = vmatprep.subr.mxu0 0.0
        %1277 = vmatpush2.msra.mxu0 0.0
        %1278 = vmatprep.subr.mxu0 0.0
        %1279 = vmatpush2.msra.mxu0 0.0
        %1280 = vmatprep.subr.mxu0 0.0
        %1281 = vmatpush2.msra.mxu0 0.0
        %1282 = vmatprep.subr.mxu0 0.0
        %1283 = vmatpush2.msra.mxu0 0.0
        %1284 = vmatprep.subr.mxu0 0.0
        %1285 = vmatpush2.msra.mxu0 0.0
        %1286 = vmatprep.subr.mxu0 0.0
        %1287 = vmatpush2.msra.mxu0 0.0
        %1288 = vmatprep.subr.mxu0 0.0
        %1289 = vmatpush2.msra.mxu0 0.0
        %1290 = vmatprep.subr.mxu0 0.0
        %1291 = vmatpush2.msra.mxu0 0.0
        %1292 = vmatprep.mubr.f32.mxu0 0.0
        %1293 = vmatmul.mubr.f32.gmra.mxu0 %v1226
        %v1294 = vpop.f32.mrf.mxu0
        %v1295 = vadd.f32 0.0, %v1294
        %v1296 = vpop.f32.mrf.mxu0
        %1297 = vdwg.mxu0
        %1298 = vrot.lane.b32.xlu0 %v1127, 120
        %v1299 = vpop.permute.xlu0 %1298
        %1300 = vrot.lane.b32.xlu0 %v1127, 88
        %v1301 = vpop.permute.xlu0 %1300
        %v1302 = vsel %vm1135, %v1299, 0
        %v1304 = vsel %vm1135, %v1301, 0
        %1306 = vmatprep.subr.mxu0 0.0
        %1307 = vmatpush1.xpose.msra.mxu0 0.0
        %1308 = vmatprep.subr.mxu0 0.0
        %1309 = vmatpush1.xpose.msra.mxu0 0.0
        %1310 = vmatprep.subr.mxu0 0.0
        %1311 = vmatpush1.xpose.msra.mxu0 0.0
        %1312 = vmatprep.subr.mxu0 0.0
        %1313 = vmatpush1.xpose.msra.mxu0 0.0
        %1314 = vmatprep.subr.mxu0 0.0
        %1315 = vmatpush1.xpose.msra.mxu0 0.0
        %1316 = vmatprep.subr.mxu0 0.0
        %1317 = vmatpush1.xpose.msra.mxu0 0.0
        %1318 = vmatprep.subr.mxu0 0.0
        %1319 = vmatpush1.xpose.msra.mxu0 0.0
        %1320 = vmatprep.subr.mxu0 0.0
        %1321 = vmatpush1.xpose.msra.mxu0 0.0
        %1322 = vmatprep.subr.mxu0 0.0
        %1323 = vmatpush1.xpose.msra.mxu0 0.0
        %1324 = vmatprep.subr.mxu0 0.0
        %1325 = vmatpush1.xpose.msra.mxu0 0.0
        %1326 = vmatprep.subr.mxu0 0.0
        %1327 = vmatpush1.xpose.msra.mxu0 0.0
        %1328 = vmatprep.subr.mxu0 0.0
        %1329 = vmatpush1.xpose.msra.mxu0 0.0
        %1330 = vmatprep.subr.mxu0 0.0
        %1331 = vmatpush1.xpose.msra.mxu0 0.0
        %1332 = vmatprep.subr.mxu0 0.0
        %1333 = vmatpush1.xpose.msra.mxu0 0.0
        %1334 = vmatprep.subr.mxu0 0.0
        %1335 = vmatpush1.xpose.msra.mxu0 0.0
        %1336 = vmatprep.subr.mxu0 0.0
        %1337 = vmatpush1.xpose.msra.mxu0 %v1304
        %1338 = vmatprep.subr.mxu0 0.0
        %1339 = vmatpush2.xpose.msra.mxu0 0.0
        %1340 = vmatprep.subr.mxu0 0.0
        %1341 = vmatpush2.xpose.msra.mxu0 0.0
        %1342 = vmatprep.subr.mxu0 0.0
        %1343 = vmatpush2.xpose.msra.mxu0 0.0
        %1344 = vmatprep.subr.mxu0 0.0
        %1345 = vmatpush2.xpose.msra.mxu0 0.0
        %1346 = vmatprep.subr.mxu0 0.0
        %1347 = vmatpush2.xpose.msra.mxu0 0.0
        %1348 = vmatprep.subr.mxu0 0.0
        %1349 = vmatpush2.xpose.msra.mxu0 0.0
        %1350 = vmatprep.subr.mxu0 0.0
        %1351 = vmatpush2.xpose.msra.mxu0 0.0
        %1352 = vmatprep.subr.mxu0 0.0
        %1353 = vmatpush2.xpose.msra.mxu0 0.0
        %1354 = vmatprep.subr.mxu0 0.0
        %1355 = vmatpush2.xpose.msra.mxu0 0.0
        %1356 = vmatprep.subr.mxu0 0.0
        %1357 = vmatpush2.xpose.msra.mxu0 0.0
        %1358 = vmatprep.subr.mxu0 0.0
        %1359 = vmatpush2.xpose.msra.mxu0 0.0
        %1360 = vmatprep.subr.mxu0 0.0
        %1361 = vmatpush2.xpose.msra.mxu0 0.0
        %1362 = vmatprep.subr.mxu0 0.0
        %1363 = vmatpush2.xpose.msra.mxu0 0.0
        %1364 = vmatprep.subr.mxu0 0.0
        %1365 = vmatpush2.xpose.msra.mxu0 0.0
        %1366 = vmatprep.subr.mxu0 0.0
        %1367 = vmatpush2.xpose.msra.mxu0 0.0
        %1368 = vmatprep.subr.mxu0 0.0
        %1369 = vmatpush2.xpose.msra.mxu0 0.0
        %1370 = vmatprep.mubr.f32.mxu0 0.0
        %1371 = vmatmul.mubr.f32.gmra.mxu0 %v1302
        %v1372 = vpop.f32.mrf.mxu0
        %v1373 = vadd.f32 %v1131, %v1372
        %v1374 = vpop.f32.mrf.mxu0
        %1375 = vdwg.mxu0
        %v1376 = vsel %vm1135, %v1373, -inf
        %1377 = vmax.xlane.f32.xlu0 %v1376
        %v1378 = vpop.xlane.xlu0 %1377
        %v1379 = vsub.f32 %v1373, %v1378
        %v1380 = vmul.f32 %v1379, 1.442695
        %v1381 = vpow.pop %v1380
        %v1382 = vsel %vm1135, %v1381, 0.0
        %1383 = vadd.xlane.f32.xlu0 %v1382
        %v1384 = vpop.xlane.xlu0 %1383
        %v1385 = vrcp.pop %v1384
        %v1386 = vmul.f32 %v1381, %v1385
        %s1387 = scalar_lea.vmem %s1035, 8 [#allocation29]
        %1388 = vst.msk [vmem:[%s1387] sm:$0xff] %vm1135, %v1386
        %1389 = vrot.lane.b32.xlu0 %v1127, 56
        %v1390 = vpop.permute.xlu0 %1389
        %v1393 = vsel %vm1135, %v1386, 0
        %1395 = vmatprep.subr.mxu0 0.0
        %1396 = vmatpush1.msra.mxu0 0.0
        %1397 = vmatprep.subr.mxu0 0.0
        %1398 = vmatpush1.msra.mxu0 0.0
        %1399 = vmatprep.subr.mxu0 0.0
        %1400 = vmatpush1.msra.mxu0 0.0
        %1401 = vmatprep.subr.mxu0 0.0
        %1402 = vmatpush1.msra.mxu0 0.0
        %1403 = vmatprep.subr.mxu0 0.0
        %1404 = vmatpush1.msra.mxu0 0.0
        %1405 = vmatprep.subr.mxu0 0.0
        %1406 = vmatpush1.msra.mxu0 0.0
        %1407 = vmatprep.subr.mxu0 0.0
        %1408 = vmatpush1.msra.mxu0 0.0
        %1409 = vmatprep.subr.mxu0 0.0
        %1410 = vmatpush1.msra.mxu0 0.0
        %1411 = vmatprep.subr.mxu0 0.0
        %1412 = vmatpush1.msra.mxu0 0.0
        %1413 = vmatprep.subr.mxu0 0.0
        %1414 = vmatpush1.msra.mxu0 0.0
        %1415 = vmatprep.subr.mxu0 0.0
        %1416 = vmatpush1.msra.mxu0 0.0
        %1417 = vmatprep.subr.mxu0 0.0
        %1418 = vmatpush1.msra.mxu0 0.0
        %1419 = vmatprep.subr.mxu0 0.0
        %1420 = vmatpush1.msra.mxu0 0.0
        %1421 = vmatprep.subr.mxu0 0.0
        %1422 = vmatpush1.msra.mxu0 0.0
        %1423 = vmatprep.subr.mxu0 0.0
        %1424 = vmatpush1.msra.mxu0 0.0
        %1425 = vmatprep.subr.mxu0 0.0
        %1426 = vmatpush1.msra.mxu0 %v1390
        %1427 = vmatprep.subr.mxu0 0.0
        %1428 = vmatpush2.msra.mxu0 0.0
        %1429 = vmatprep.subr.mxu0 0.0
        %1430 = vmatpush2.msra.mxu0 0.0
        %1431 = vmatprep.subr.mxu0 0.0
        %1432 = vmatpush2.msra.mxu0 0.0
        %1433 = vmatprep.subr.mxu0 0.0
        %1434 = vmatpush2.msra.mxu0 0.0
        %1435 = vmatprep.subr.mxu0 0.0
        %1436 = vmatpush2.msra.mxu0 0.0
        %1437 = vmatprep.subr.mxu0 0.0
        %1438 = vmatpush2.msra.mxu0 0.0
        %1439 = vmatprep.subr.mxu0 0.0
        %1440 = vmatpush2.msra.mxu0 0.0
        %1441 = vmatprep.subr.mxu0 0.0
        %1442 = vmatpush2.msra.mxu0 0.0
        %1443 = vmatprep.subr.mxu0 0.0
        %1444 = vmatpush2.msra.mxu0 0.0
        %1445 = vmatprep.subr.mxu0 0.0
        %1446 = vmatpush2.msra.mxu0 0.0
        %1447 = vmatprep.subr.mxu0 0.0
        %1448 = vmatpush2.msra.mxu0 0.0
        %1449 = vmatprep.subr.mxu0 0.0
        %1450 = vmatpush2.msra.mxu0 0.0
        %1451 = vmatprep.subr.mxu0 0.0
        %1452 = vmatpush2.msra.mxu0 0.0
        %1453 = vmatprep.subr.mxu0 0.0
        %1454 = vmatpush2.msra.mxu0 0.0
        %1455 = vmatprep.subr.mxu0 0.0
        %1456 = vmatpush2.msra.mxu0 0.0
        %1457 = vmatprep.subr.mxu0 0.0
        %1458 = vmatpush2.msra.mxu0 0.0
        %1459 = vmatprep.mubr.f32.mxu0 0.0
        %1460 = vmatmul.mubr.f32.gmra.mxu0 %v1393
        %v1461 = vpop.f32.mrf.mxu0
        %v1462 = vadd.f32 0.0, %v1461
        %v1463 = vpop.f32.mrf.mxu0
        %1464 = vdwg.mxu0
        %1465 = vrot.lane.b32.xlu0 %v1127, 112
        %v1466 = vpop.permute.xlu0 %1465
        %1467 = vrot.lane.b32.xlu0 %v1127, 80
        %v1468 = vpop.permute.xlu0 %1467
        %v1469 = vsel %vm1135, %v1466, 0
        %v1471 = vsel %vm1135, %v1468, 0
        %1473 = vmatprep.subr.mxu0 0.0
        %1474 = vmatpush1.xpose.msra.mxu0 0.0
        %1475 = vmatprep.subr.mxu0 0.0
        %1476 = vmatpush1.xpose.msra.mxu0 0.0
        %1477 = vmatprep.subr.mxu0 0.0
        %1478 = vmatpush1.xpose.msra.mxu0 0.0
        %1479 = vmatprep.subr.mxu0 0.0
        %1480 = vmatpush1.xpose.msra.mxu0 0.0
        %1481 = vmatprep.subr.mxu0 0.0
        %1482 = vmatpush1.xpose.msra.mxu0 0.0
        %1483 = vmatprep.subr.mxu0 0.0
        %1484 = vmatpush1.xpose.msra.mxu0 0.0
        %1485 = vmatprep.subr.mxu0 0.0
        %1486 = vmatpush1.xpose.msra.mxu0 0.0
        %1487 = vmatprep.subr.mxu0 0.0
        %1488 = vmatpush1.xpose.msra.mxu0 0.0
        %1489 = vmatprep.subr.mxu0 0.0
        %1490 = vmatpush1.xpose.msra.mxu0 0.0
        %1491 = vmatprep.subr.mxu0 0.0
        %1492 = vmatpush1.xpose.msra.mxu0 0.0
        %1493 = vmatprep.subr.mxu0 0.0
        %1494 = vmatpush1.xpose.msra.mxu0 0.0
        %1495 = vmatprep.subr.mxu0 0.0
        %1496 = vmatpush1.xpose.msra.mxu0 0.0
        %1497 = vmatprep.subr.mxu0 0.0
        %1498 = vmatpush1.xpose.msra.mxu0 0.0
        %1499 = vmatprep.subr.mxu0 0.0
        %1500 = vmatpush1.xpose.msra.mxu0 0.0
        %1501 = vmatprep.subr.mxu0 0.0
        %1502 = vmatpush1.xpose.msra.mxu0 0.0
        %1503 = vmatprep.subr.mxu0 0.0
        %1504 = vmatpush1.xpose.msra.mxu0 %v1471
        %1505 = vmatprep.subr.mxu0 0.0
        %1506 = vmatpush2.xpose.msra.mxu0 0.0
        %1507 = vmatprep.subr.mxu0 0.0
        %1508 = vmatpush2.xpose.msra.mxu0 0.0
        %1509 = vmatprep.subr.mxu0 0.0
        %1510 = vmatpush2.xpose.msra.mxu0 0.0
        %1511 = vmatprep.subr.mxu0 0.0
        %1512 = vmatpush2.xpose.msra.mxu0 0.0
        %1513 = vmatprep.subr.mxu0 0.0
        %1514 = vmatpush2.xpose.msra.mxu0 0.0
        %1515 = vmatprep.subr.mxu0 0.0
        %1516 = vmatpush2.xpose.msra.mxu0 0.0
        %1517 = vmatprep.subr.mxu0 0.0
        %1518 = vmatpush2.xpose.msra.mxu0 0.0
        %1519 = vmatprep.subr.mxu0 0.0
        %1520 = vmatpush2.xpose.msra.mxu0 0.0
        %1521 = vmatprep.subr.mxu0 0.0
        %1522 = vmatpush2.xpose.msra.mxu0 0.0
        %1523 = vmatprep.subr.mxu0 0.0
        %1524 = vmatpush2.xpose.msra.mxu0 0.0
        %1525 = vmatprep.subr.mxu0 0.0
        %1526 = vmatpush2.xpose.msra.mxu0 0.0
        %1527 = vmatprep.subr.mxu0 0.0
        %1528 = vmatpush2.xpose.msra.mxu0 0.0
        %1529 = vmatprep.subr.mxu0 0.0
        %1530 = vmatpush2.xpose.msra.mxu0 0.0
        %1531 = vmatprep.subr.mxu0 0.0
        %1532 = vmatpush2.xpose.msra.mxu0 0.0
        %1533 = vmatprep.subr.mxu0 0.0
        %1534 = vmatpush2.xpose.msra.mxu0 0.0
        %1535 = vmatprep.subr.mxu0 0.0
        %1536 = vmatpush2.xpose.msra.mxu0 0.0
        %1537 = vmatprep.mubr.f32.mxu0 0.0
        %1538 = vmatmul.mubr.f32.gmra.mxu0 %v1469
        %v1539 = vpop.f32.mrf.mxu0
        %v1540 = vadd.f32 %v1131, %v1539
        %v1541 = vpop.f32.mrf.mxu0
        %1542 = vdwg.mxu0
        %v1543 = vsel %vm1135, %v1540, -inf
        %1544 = vmax.xlane.f32.xlu0 %v1543
        %v1545 = vpop.xlane.xlu0 %1544
        %v1546 = vsub.f32 %v1540, %v1545
        %v1547 = vmul.f32 %v1546, 1.442695
        %v1548 = vpow.pop %v1547
        %v1549 = vsel %vm1135, %v1548, 0.0
        %1550 = vadd.xlane.f32.xlu0 %v1549
        %v1551 = vpop.xlane.xlu0 %1550
        %v1552 = vrcp.pop %v1551
        %v1553 = vmul.f32 %v1548, %v1552
        %s1554 = scalar_lea.vmem %s1035, 16 [#allocation29]
        %1555 = vst.msk [vmem:[%s1554] sm:$0xff] %vm1135, %v1553
        %1556 = vrot.lane.b32.xlu0 %v1127, 48
        %v1557 = vpop.permute.xlu0 %1556
        %v1560 = vsel %vm1135, %v1553, 0
        %1562 = vmatprep.subr.mxu0 0.0
        %1563 = vmatpush1.msra.mxu0 0.0
        %1564 = vmatprep.subr.mxu0 0.0
        %1565 = vmatpush1.msra.mxu0 0.0
        %1566 = vmatprep.subr.mxu0 0.0
        %1567 = vmatpush1.msra.mxu0 0.0
        %1568 = vmatprep.subr.mxu0 0.0
        %1569 = vmatpush1.msra.mxu0 0.0
        %1570 = vmatprep.subr.mxu0 0.0
        %1571 = vmatpush1.msra.mxu0 0.0
        %1572 = vmatprep.subr.mxu0 0.0
        %1573 = vmatpush1.msra.mxu0 0.0
        %1574 = vmatprep.subr.mxu0 0.0
        %1575 = vmatpush1.msra.mxu0 0.0
        %1576 = vmatprep.subr.mxu0 0.0
        %1577 = vmatpush1.msra.mxu0 0.0
        %1578 = vmatprep.subr.mxu0 0.0
        %1579 = vmatpush1.msra.mxu0 0.0
        %1580 = vmatprep.subr.mxu0 0.0
        %1581 = vmatpush1.msra.mxu0 0.0
        %1582 = vmatprep.subr.mxu0 0.0
        %1583 = vmatpush1.msra.mxu0 0.0
        %1584 = vmatprep.subr.mxu0 0.0
        %1585 = vmatpush1.msra.mxu0 0.0
        %1586 = vmatprep.subr.mxu0 0.0
        %1587 = vmatpush1.msra.mxu0 0.0
        %1588 = vmatprep.subr.mxu0 0.0
        %1589 = vmatpush1.msra.mxu0 0.0
        %1590 = vmatprep.subr.mxu0 0.0
        %1591 = vmatpush1.msra.mxu0 0.0
        %1592 = vmatprep.subr.mxu0 0.0
        %1593 = vmatpush1.msra.mxu0 %v1557
        %1594 = vmatprep.subr.mxu0 0.0
        %1595 = vmatpush2.msra.mxu0 0.0
        %1596 = vmatprep.subr.mxu0 0.0
        %1597 = vmatpush2.msra.mxu0 0.0
        %1598 = vmatprep.subr.mxu0 0.0
        %1599 = vmatpush2.msra.mxu0 0.0
        %1600 = vmatprep.subr.mxu0 0.0
        %1601 = vmatpush2.msra.mxu0 0.0
        %1602 = vmatprep.subr.mxu0 0.0
        %1603 = vmatpush2.msra.mxu0 0.0
        %1604 = vmatprep.subr.mxu0 0.0
        %1605 = vmatpush2.msra.mxu0 0.0
        %1606 = vmatprep.subr.mxu0 0.0
        %1607 = vmatpush2.msra.mxu0 0.0
        %1608 = vmatprep.subr.mxu0 0.0
        %1609 = vmatpush2.msra.mxu0 0.0
        %1610 = vmatprep.subr.mxu0 0.0
        %1611 = vmatpush2.msra.mxu0 0.0
        %1612 = vmatprep.subr.mxu0 0.0
        %1613 = vmatpush2.msra.mxu0 0.0
        %1614 = vmatprep.subr.mxu0 0.0
        %1615 = vmatpush2.msra.mxu0 0.0
        %1616 = vmatprep.subr.mxu0 0.0
        %1617 = vmatpush2.msra.mxu0 0.0
        %1618 = vmatprep.subr.mxu0 0.0
        %1619 = vmatpush2.msra.mxu0 0.0
        %1620 = vmatprep.subr.mxu0 0.0
        %1621 = vmatpush2.msra.mxu0 0.0
        %1622 = vmatprep.subr.mxu0 0.0
        %1623 = vmatpush2.msra.mxu0 0.0
        %1624 = vmatprep.subr.mxu0 0.0
        %1625 = vmatpush2.msra.mxu0 0.0
        %1626 = vmatprep.mubr.f32.mxu0 0.0
        %1627 = vmatmul.mubr.f32.gmra.mxu0 %v1560
        %v1628 = vpop.f32.mrf.mxu0
        %v1629 = vadd.f32 0.0, %v1628
        %v1630 = vpop.f32.mrf.mxu0
        %1631 = vdwg.mxu0
        %1632 = vrot.lane.b32.xlu0 %v1127, 104
        %v1633 = vpop.permute.xlu0 %1632
        %1634 = vrot.lane.b32.xlu0 %v1127, 72
        %v1635 = vpop.permute.xlu0 %1634
        %v1636 = vsel %vm1135, %v1633, 0
        %v1638 = vsel %vm1135, %v1635, 0
        %1640 = vmatprep.subr.mxu0 0.0
        %1641 = vmatpush1.xpose.msra.mxu0 0.0
        %1642 = vmatprep.subr.mxu0 0.0
        %1643 = vmatpush1.xpose.msra.mxu0 0.0
        %1644 = vmatprep.subr.mxu0 0.0
        %1645 = vmatpush1.xpose.msra.mxu0 0.0
        %1646 = vmatprep.subr.mxu0 0.0
        %1647 = vmatpush1.xpose.msra.mxu0 0.0
        %1648 = vmatprep.subr.mxu0 0.0
        %1649 = vmatpush1.xpose.msra.mxu0 0.0
        %1650 = vmatprep.subr.mxu0 0.0
        %1651 = vmatpush1.xpose.msra.mxu0 0.0
        %1652 = vmatprep.subr.mxu0 0.0
        %1653 = vmatpush1.xpose.msra.mxu0 0.0
        %1654 = vmatprep.subr.mxu0 0.0
        %1655 = vmatpush1.xpose.msra.mxu0 0.0
        %1656 = vmatprep.subr.mxu0 0.0
        %1657 = vmatpush1.xpose.msra.mxu0 0.0
        %1658 = vmatprep.subr.mxu0 0.0
        %1659 = vmatpush1.xpose.msra.mxu0 0.0
        %1660 = vmatprep.subr.mxu0 0.0
        %1661 = vmatpush1.xpose.msra.mxu0 0.0
        %1662 = vmatprep.subr.mxu0 0.0
        %1663 = vmatpush1.xpose.msra.mxu0 0.0
        %1664 = vmatprep.subr.mxu0 0.0
        %1665 = vmatpush1.xpose.msra.mxu0 0.0
        %1666 = vmatprep.subr.mxu0 0.0
        %1667 = vmatpush1.xpose.msra.mxu0 0.0
        %1668 = vmatprep.subr.mxu0 0.0
        %1669 = vmatpush1.xpose.msra.mxu0 0.0
        %1670 = vmatprep.subr.mxu0 0.0
        %1671 = vmatpush1.xpose.msra.mxu0 %v1638
        %1672 = vmatprep.subr.mxu0 0.0
        %1673 = vmatpush2.xpose.msra.mxu0 0.0
        %1674 = vmatprep.subr.mxu0 0.0
        %1675 = vmatpush2.xpose.msra.mxu0 0.0
        %1676 = vmatprep.subr.mxu0 0.0
        %1677 = vmatpush2.xpose.msra.mxu0 0.0
        %1678 = vmatprep.subr.mxu0 0.0
        %1679 = vmatpush2.xpose.msra.mxu0 0.0
        %1680 = vmatprep.subr.mxu0 0.0
        %1681 = vmatpush2.xpose.msra.mxu0 0.0
        %1682 = vmatprep.subr.mxu0 0.0
        %1683 = vmatpush2.xpose.msra.mxu0 0.0
        %1684 = vmatprep.subr.mxu0 0.0
        %1685 = vmatpush2.xpose.msra.mxu0 0.0
        %1686 = vmatprep.subr.mxu0 0.0
        %1687 = vmatpush2.xpose.msra.mxu0 0.0
        %1688 = vmatprep.subr.mxu0 0.0
        %1689 = vmatpush2.xpose.msra.mxu0 0.0
        %1690 = vmatprep.subr.mxu0 0.0
        %1691 = vmatpush2.xpose.msra.mxu0 0.0
        %1692 = vmatprep.subr.mxu0 0.0
        %1693 = vmatpush2.xpose.msra.mxu0 0.0
        %1694 = vmatprep.subr.mxu0 0.0
        %1695 = vmatpush2.xpose.msra.mxu0 0.0
        %1696 = vmatprep.subr.mxu0 0.0
        %1697 = vmatpush2.xpose.msra.mxu0 0.0
        %1698 = vmatprep.subr.mxu0 0.0
        %1699 = vmatpush2.xpose.msra.mxu0 0.0
        %1700 = vmatprep.subr.mxu0 0.0
        %1701 = vmatpush2.xpose.msra.mxu0 0.0
        %1702 = vmatprep.subr.mxu0 0.0
        %1703 = vmatpush2.xpose.msra.mxu0 0.0
        %1704 = vmatprep.mubr.f32.mxu0 0.0
        %1705 = vmatmul.mubr.f32.gmra.mxu0 %v1636
        %v1706 = vpop.f32.mrf.mxu0
        %v1707 = vadd.f32 %v1131, %v1706
        %v1708 = vpop.f32.mrf.mxu0
        %1709 = vdwg.mxu0
        %v1710 = vsel %vm1135, %v1707, -inf
        %1711 = vmax.xlane.f32.xlu0 %v1710
        %v1712 = vpop.xlane.xlu0 %1711
        %v1713 = vsub.f32 %v1707, %v1712
        %v1714 = vmul.f32 %v1713, 1.442695
        %v1715 = vpow.pop %v1714
        %v1716 = vsel %vm1135, %v1715, 0.0
        %1717 = vadd.xlane.f32.xlu0 %v1716
        %v1718 = vpop.xlane.xlu0 %1717
        %v1719 = vrcp.pop %v1718
        %v1720 = vmul.f32 %v1715, %v1719
        %s1721 = scalar_lea.vmem %s1035, 24 [#allocation29]
        %1722 = vst.msk [vmem:[%s1721] sm:$0xff] %vm1135, %v1720
        %1723 = vrot.lane.b32.xlu0 %v1127, 40
        %v1724 = vpop.permute.xlu0 %1723
        %v1727 = vsel %vm1135, %v1720, 0
        %1729 = vmatprep.subr.mxu0 0.0
        %1730 = vmatpush1.msra.mxu0 0.0
        %1731 = vmatprep.subr.mxu0 0.0
        %1732 = vmatpush1.msra.mxu0 0.0
        %1733 = vmatprep.subr.mxu0 0.0
        %1734 = vmatpush1.msra.mxu0 0.0
        %1735 = vmatprep.subr.mxu0 0.0
        %1736 = vmatpush1.msra.mxu0 0.0
        %1737 = vmatprep.subr.mxu0 0.0
        %1738 = vmatpush1.msra.mxu0 0.0
        %1739 = vmatprep.subr.mxu0 0.0
        %1740 = vmatpush1.msra.mxu0 0.0
        %1741 = vmatprep.subr.mxu0 0.0
        %1742 = vmatpush1.msra.mxu0 0.0
        %1743 = vmatprep.subr.mxu0 0.0
        %1744 = vmatpush1.msra.mxu0 0.0
        %1745 = vmatprep.subr.mxu0 0.0
        %1746 = vmatpush1.msra.mxu0 0.0
        %1747 = vmatprep.subr.mxu0 0.0
        %1748 = vmatpush1.msra.mxu0 0.0
        %1749 = vmatprep.subr.mxu0 0.0
        %1750 = vmatpush1.msra.mxu0 0.0
        %1751 = vmatprep.subr.mxu0 0.0
        %1752 = vmatpush1.msra.mxu0 0.0
        %1753 = vmatprep.subr.mxu0 0.0
        %1754 = vmatpush1.msra.mxu0 0.0
        %1755 = vmatprep.subr.mxu0 0.0
        %1756 = vmatpush1.msra.mxu0 0.0
        %1757 = vmatprep.subr.mxu0 0.0
        %1758 = vmatpush1.msra.mxu0 0.0
        %1759 = vmatprep.subr.mxu0 0.0
        %1760 = vmatpush1.msra.mxu0 %v1724
        %1761 = vmatprep.subr.mxu0 0.0
        %1762 = vmatpush2.msra.mxu0 0.0
        %1763 = vmatprep.subr.mxu0 0.0
        %1764 = vmatpush2.msra.mxu0 0.0
        %1765 = vmatprep.subr.mxu0 0.0
        %1766 = vmatpush2.msra.mxu0 0.0
        %1767 = vmatprep.subr.mxu0 0.0
        %1768 = vmatpush2.msra.mxu0 0.0
        %1769 = vmatprep.subr.mxu0 0.0
        %1770 = vmatpush2.msra.mxu0 0.0
        %1771 = vmatprep.subr.mxu0 0.0
        %1772 = vmatpush2.msra.mxu0 0.0
        %1773 = vmatprep.subr.mxu0 0.0
        %1774 = vmatpush2.msra.mxu0 0.0
        %1775 = vmatprep.subr.mxu0 0.0
        %1776 = vmatpush2.msra.mxu0 0.0
        %1777 = vmatprep.subr.mxu0 0.0
        %1778 = vmatpush2.msra.mxu0 0.0
        %1779 = vmatprep.subr.mxu0 0.0
        %1780 = vmatpush2.msra.mxu0 0.0
        %1781 = vmatprep.subr.mxu0 0.0
        %1782 = vmatpush2.msra.mxu0 0.0
        %1783 = vmatprep.subr.mxu0 0.0
        %1784 = vmatpush2.msra.mxu0 0.0
        %1785 = vmatprep.subr.mxu0 0.0
        %1786 = vmatpush2.msra.mxu0 0.0
        %1787 = vmatprep.subr.mxu0 0.0
        %1788 = vmatpush2.msra.mxu0 0.0
        %1789 = vmatprep.subr.mxu0 0.0
        %1790 = vmatpush2.msra.mxu0 0.0
        %1791 = vmatprep.subr.mxu0 0.0
        %1792 = vmatpush2.msra.mxu0 0.0
        %1793 = vmatprep.mubr.f32.mxu0 0.0
        %1794 = vmatmul.mubr.f32.gmra.mxu0 %v1727
        %v1795 = vpop.f32.mrf.mxu0
        %v1796 = vadd.f32 0.0, %v1795
        %v1797 = vpop.f32.mrf.mxu0
        %1798 = vdwg.mxu0
        %1800 = vrot.lane.b32.xlu0 %v1462, 8
        %v1801 = vpop.permute.xlu0 %1800
        %1804 = vrot.lane.b32.xlu0 %v1629, 16
        %v1805 = vpop.permute.xlu0 %1804
        %1808 = vrot.lane.b32.xlu0 %v1796, 24
        %v1809 = vpop.permute.xlu0 %1808
        %v1811 = vsel %vm1135, %v1295, %v1801
        %vm1812 = vcmask 130048
        %v1813 = vsel %vm1812, %v1811, %v1805
        %vm1814 = vcmask 195584
        %v1815 = vsel %vm1814, %v1813, %v1809
        %v1816 = vld [vmem:[%s6] sm:$0xff]
        %v1817 = vld [vmem:[%s6 + $0x8] sm:$0xff]
        %v1818 = vld [vmem:[%s6 + $0x10] sm:$0xff]
        %v1819 = vld [vmem:[%s6 + $0x18] sm:$0xff]
        %v1820 = vld [vmem:[#allocation10] sm:$0x1]
        %v1822 = vlaneseq
        %v1823 = vshrl.u32 %v1822, 7
        %v1824 = vsub.s32 0, %v1823
        %v1825 = vrot.slane %v1820, %v1824
        %v1828 = vsel %vm1056, %v1815, 0
        %1830 = vmatprep.subr.mxu0 0.0
        %1831 = vmatpush1.msra.mxu0 0.0
        %1832 = vmatprep.subr.mxu0 0.0
        %1833 = vmatpush1.msra.mxu0 0.0
        %1834 = vmatprep.subr.mxu0 0.0
        %1835 = vmatpush1.msra.mxu0 0.0
        %1836 = vmatprep.subr.mxu0 0.0
        %1837 = vmatpush1.msra.mxu0 0.0
        %1838 = vmatprep.subr.mxu0 0.0
        %1839 = vmatpush1.msra.mxu0 0.0
        %1840 = vmatprep.subr.mxu0 0.0
        %1841 = vmatpush1.msra.mxu0 0.0
        %1842 = vmatprep.subr.mxu0 0.0
        %1843 = vmatpush1.msra.mxu0 0.0
        %1844 = vmatprep.subr.mxu0 0.0
        %1845 = vmatpush1.msra.mxu0 0.0
        %1846 = vmatprep.subr.mxu0 0.0
        %1847 = vmatpush1.msra.mxu0 0.0
        %1848 = vmatprep.subr.mxu0 0.0
        %1849 = vmatpush1.msra.mxu0 0.0
        %1850 = vmatprep.subr.mxu0 0.0
        %1851 = vmatpush1.msra.mxu0 0.0
        %1852 = vmatprep.subr.mxu0 0.0
        %1853 = vmatpush1.msra.mxu0 0.0
        %1854 = vmatprep.subr.mxu0 0.0
        %1855 = vmatpush1.msra.mxu0 %v1819
        %1856 = vmatprep.subr.mxu0 0.0
        %1857 = vmatpush1.msra.mxu0 %v1818
        %1858 = vmatprep.subr.mxu0 0.0
        %1859 = vmatpush1.msra.mxu0 %v1817
        %1860 = vmatprep.subr.mxu0 0.0
        %1861 = vmatpush1.msra.mxu0 %v1816
        %1862 = vmatprep.subr.mxu0 0.0
        %1863 = vmatpush2.msra.mxu0 0.0
        %1864 = vmatprep.subr.mxu0 0.0
        %1865 = vmatpush2.msra.mxu0 0.0
        %1866 = vmatprep.subr.mxu0 0.0
        %1867 = vmatpush2.msra.mxu0 0.0
        %1868 = vmatprep.subr.mxu0 0.0
        %1869 = vmatpush2.msra.mxu0 0.0
        %1870 = vmatprep.subr.mxu0 0.0
        %1871 = vmatpush2.msra.mxu0 0.0
        %1872 = vmatprep.subr.mxu0 0.0
        %1873 = vmatpush2.msra.mxu0 0.0
        %1874 = vmatprep.subr.mxu0 0.0
        %1875 = vmatpush2.msra.mxu0 0.0
        %1876 = vmatprep.subr.mxu0 0.0
        %1877 = vmatpush2.msra.mxu0 0.0
        %1878 = vmatprep.subr.mxu0 0.0
        %1879 = vmatpush2.msra.mxu0 0.0
        %1880 = vmatprep.subr.mxu0 0.0
        %1881 = vmatpush2.msra.mxu0 0.0
        %1882 = vmatprep.subr.mxu0 0.0
        %1883 = vmatpush2.msra.mxu0 0.0
        %1884 = vmatprep.subr.mxu0 0.0
        %1885 = vmatpush2.msra.mxu0 0.0
        %1886 = vmatprep.subr.mxu0 0.0
        %1887 = vmatpush2.msra.mxu0 0.0
        %1888 = vmatprep.subr.mxu0 0.0
        %1889 = vmatpush2.msra.mxu0 0.0
        %1890 = vmatprep.subr.mxu0 0.0
        %1891 = vmatpush2.msra.mxu0 0.0
        %1892 = vmatprep.subr.mxu0 0.0
        %1893 = vmatpush2.msra.mxu0 0.0
        %1894 = vmatprep.mubr.f32.mxu0 0.0
        %1895 = vmatmul.mubr.f32.gmra.mxu0 %v1828
        %v1896 = vpop.f32.mrf.mxu0
        %v1897 = vadd.f32 %v1825, %v1896
        %v1898 = vpop.f32.mrf.mxu0
        %1899 = vdwg.mxu0
        %v1900 = vadd.f32 %v1043, %v1897
        %v1901 = vld [vmem:[#allocation11] sm:$0x1]
        %v1902 = vld [vmem:[#allocation13] sm:$0x1]
        %v1903 = vsel %vm1056, %v1900, 0.0
        %1904 = vadd.xlane.f32.xlu0 %v1903
        %v1905 = vpop.xlane.xlu0 %1904
        %v1906 = vrcp.pop 32.0
        %v1907 = vmul.f32 %v1905, %v1906
        %v1908 = vsub.f32 %v1900, %v1907
        %v1909 = vmul.f32 %v1908, %v1908
        %v1910 = vsel %vm1056, %v1909, 0.0
        %1911 = vadd.xlane.f32.xlu0 %v1910
        %v1912 = vpop.xlane.xlu0 %1911
        %v1913 = vmul.f32 %v1912, %v1906
        %v1914 = vadd.f32 %v1913, 1e-05
        %v1915 = vrsqrt.pop %v1914
        %v1916 = vmul.f32 %v1908, %v1915
        %v1918 = vlaneseq
        %v1919 = vshrl.u32 %v1918, 7
        %v1920 = vsub.s32 0, %v1919
        %v1921 = vrot.slane %v1901, %v1920
        %v1923 = vmul.f32 %v1916, %v1921
        %v1925 = vlaneseq
        %v1926 = vshrl.u32 %v1925, 7
        %v1927 = vsub.s32 0, %v1926
        %v1928 = vrot.slane %v1902, %v1927
        %v1930 = vadd.f32 %v1923, %v1928
        %v1931 = vld [vmem:[%s10] sm:$0xff]
        %v1932 = vld [vmem:[%s10 + $0x8] sm:$0xff]
        %v1933 = vld [vmem:[%s10 + $0x10] sm:$0xff]
        %v1934 = vld [vmem:[%s10 + $0x18] sm:$0xff]
        %v1935 = vld [vmem:[#allocation14] sm:$0x1]
        %v1937 = vlaneseq
        %v1938 = vshrl.u32 %v1937, 7
        %v1939 = vsub.s32 0, %v1938
        %v1940 = vrot.slane %v1935, %v1939
        %v1943 = vsel %vm1056, %v1930, 0
        %1945 = vmatprep.subr.mxu0 0.0
        %1946 = vmatpush1.msra.mxu0 0.0
        %1947 = vmatprep.subr.mxu0 0.0
        %1948 = vmatpush1.msra.mxu0 0.0
        %1949 = vmatprep.subr.mxu0 0.0
        %1950 = vmatpush1.msra.mxu0 0.0
        %1951 = vmatprep.subr.mxu0 0.0
        %1952 = vmatpush1.msra.mxu0 0.0
        %1953 = vmatprep.subr.mxu0 0.0
        %1954 = vmatpush1.msra.mxu0 0.0
        %1955 = vmatprep.subr.mxu0 0.0
        %1956 = vmatpush1.msra.mxu0 0.0
        %1957 = vmatprep.subr.mxu0 0.0
        %1958 = vmatpush1.msra.mxu0 0.0
        %1959 = vmatprep.subr.mxu0 0.0
        %1960 = vmatpush1.msra.mxu0 0.0
        %1961 = vmatprep.subr.mxu0 0.0
        %1962 = vmatpush1.msra.mxu0 0.0
        %1963 = vmatprep.subr.mxu0 0.0
        %1964 = vmatpush1.msra.mxu0 0.0
        %1965 = vmatprep.subr.mxu0 0.0
        %1966 = vmatpush1.msra.mxu0 0.0
        %1967 = vmatprep.subr.mxu0 0.0
        %1968 = vmatpush1.msra.mxu0 0.0
        %1969 = vmatprep.subr.mxu0 0.0
        %1970 = vmatpush1.msra.mxu0 %v1934
        %1971 = vmatprep.subr.mxu0 0.0
        %1972 = vmatpush1.msra.mxu0 %v1933
        %1973 = vmatprep.subr.mxu0 0.0
        %1974 = vmatpush1.msra.mxu0 %v1932
        %1975 = vmatprep.subr.mxu0 0.0
        %1976 = vmatpush1.msra.mxu0 %v1931
        %1977 = vmatprep.subr.mxu0 0.0
        %1978 = vmatpush2.msra.mxu0 0.0
        %1979 = vmatprep.subr.mxu0 0.0
        %1980 = vmatpush2.msra.mxu0 0.0
        %1981 = vmatprep.subr.mxu0 0.0
        %1982 = vmatpush2.msra.mxu0 0.0
        %1983 = vmatprep.subr.mxu0 0.0
        %1984 = vmatpush2.msra.mxu0 0.0
        %1985 = vmatprep.subr.mxu0 0.0
        %1986 = vmatpush2.msra.mxu0 0.0
        %1987 = vmatprep.subr.mxu0 0.0
        %1988 = vmatpush2.msra.mxu0 0.0
        %1989 = vmatprep.subr.mxu0 0.0
        %1990 = vmatpush2.msra.mxu0 0.0
        %1991 = vmatprep.subr.mxu0 0.0
        %1992 = vmatpush2.msra.mxu0 0.0
        %1993 = vmatprep.subr.mxu0 0.0
        %1994 = vmatpush2.msra.mxu0 0.0
        %1995 = vmatprep.subr.mxu0 0.0
        %1996 = vmatpush2.msra.mxu0 0.0
        %1997 = vmatprep.subr.mxu0 0.0
        %1998 = vmatpush2.msra.mxu0 0.0
        %1999 = vmatprep.subr.mxu0 0.0
        %2000 = vmatpush2.msra.mxu0 0.0
        %2001 = vmatprep.subr.mxu0 0.0
        %2002 = vmatpush2.msra.mxu0 0.0
        %2003 = vmatprep.subr.mxu0 0.0
        %2004 = vmatpush2.msra.mxu0 0.0
        %2005 = vmatprep.subr.mxu0 0.0
        %2006 = vmatpush2.msra.mxu0 0.0
        %2007 = vmatprep.subr.mxu0 0.0
        %2008 = vmatpush2.msra.mxu0 0.0
        %2009 = vmatprep.mubr.f32.mxu0 0.0
        %2010 = vmatmul.mubr.f32.gmra.mxu0 %v1943
        %v2011 = vpop.f32.mrf.mxu0
        %v2012 = vadd.f32 %v1940, %v2011
        %v2013 = vpop.f32.mrf.mxu0
        %2014 = vdwg.mxu0
        %v2015 = vld [vmem:[#allocation16] sm:$0xff]
        %v2016 = vld [vmem:[#allocation16 + $0x8] sm:$0xff]
        %v2017 = vld [vmem:[#allocation16 + $0x10] sm:$0xff]
        %v2018 = vld [vmem:[#allocation16 + $0x18] sm:$0xff]
        %v2019 = vld [vmem:[#allocation17] sm:$0x1]
        %v2021 = vlaneseq
        %v2022 = vshrl.u32 %v2021, 7
        %v2023 = vsub.s32 0, %v2022
        %v2024 = vrot.slane %v2019, %v2023
        %v2027 = vsel %vm1056, %v1044, 0
        %2029 = vmatprep.subr.mxu0 0.0
        %2030 = vmatpush1.msra.mxu0 0.0
        %2031 = vmatprep.subr.mxu0 0.0
        %2032 = vmatpush1.msra.mxu0 0.0
        %2033 = vmatprep.subr.mxu0 0.0
        %2034 = vmatpush1.msra.mxu0 0.0
        %2035 = vmatprep.subr.mxu0 0.0
        %2036 = vmatpush1.msra.mxu0 0.0
        %2037 = vmatprep.subr.mxu0 0.0
        %2038 = vmatpush1.msra.mxu0 0.0
        %2039 = vmatprep.subr.mxu0 0.0
        %2040 = vmatpush1.msra.mxu0 0.0
        %2041 = vmatprep.subr.mxu0 0.0
        %2042 = vmatpush1.msra.mxu0 0.0
        %2043 = vmatprep.subr.mxu0 0.0
        %2044 = vmatpush1.msra.mxu0 0.0
        %2045 = vmatprep.subr.mxu0 0.0
        %2046 = vmatpush1.msra.mxu0 0.0
        %2047 = vmatprep.subr.mxu0 0.0
        %2048 = vmatpush1.msra.mxu0 0.0
        %2049 = vmatprep.subr.mxu0 0.0
        %2050 = vmatpush1.msra.mxu0 0.0
        %2051 = vmatprep.subr.mxu0 0.0
        %2052 = vmatpush1.msra.mxu0 0.0
        %2053 = vmatprep.subr.mxu0 0.0
        %2054 = vmatpush1.msra.mxu0 %v2018
        %2055 = vmatprep.subr.mxu0 0.0
        %2056 = vmatpush1.msra.mxu0 %v2017
        %2057 = vmatprep.subr.mxu0 0.0
        %2058 = vmatpush1.msra.mxu0 %v2016
        %2059 = vmatprep.subr.mxu0 0.0
        %2060 = vmatpush1.msra.mxu0 %v2015
        %2061 = vmatprep.subr.mxu0 0.0
        %2062 = vmatpush2.msra.mxu0 0.0
        %2063 = vmatprep.subr.mxu0 0.0
        %2064 = vmatpush2.msra.mxu0 0.0
        %2065 = vmatprep.subr.mxu0 0.0
        %2066 = vmatpush2.msra.mxu0 0.0
        %2067 = vmatprep.subr.mxu0 0.0
        %2068 = vmatpush2.msra.mxu0 0.0
        %2069 = vmatprep.subr.mxu0 0.0
        %2070 = vmatpush2.msra.mxu0 0.0
        %2071 = vmatprep.subr.mxu0 0.0
        %2072 = vmatpush2.msra.mxu0 0.0
        %2073 = vmatprep.subr.mxu0 0.0
        %2074 = vmatpush2.msra.mxu0 0.0
        %2075 = vmatprep.subr.mxu0 0.0
        %2076 = vmatpush2.msra.mxu0 0.0
        %2077 = vmatprep.subr.mxu0 0.0
        %2078 = vmatpush2.msra.mxu0 0.0
        %2079 = vmatprep.subr.mxu0 0.0
        %2080 = vmatpush2.msra.mxu0 0.0
        %2081 = vmatprep.subr.mxu0 0.0
        %2082 = vmatpush2.msra.mxu0 0.0
        %2083 = vmatprep.subr.mxu0 0.0
        %2084 = vmatpush2.msra.mxu0 0.0
        %2085 = vmatprep.subr.mxu0 0.0
        %2086 = vmatpush2.msra.mxu0 0.0
        %2087 = vmatprep.subr.mxu0 0.0
        %2088 = vmatpush2.msra.mxu0 0.0
        %2089 = vmatprep.subr.mxu0 0.0
        %2090 = vmatpush2.msra.mxu0 0.0
        %2091 = vmatprep.subr.mxu0 0.0
        %2092 = vmatpush2.msra.mxu0 0.0
        %2093 = vmatprep.mubr.f32.mxu0 0.0
        %2094 = vmatmul.mubr.f32.gmra.mxu0 %v2027
        %v2095 = vpop.f32.mrf.mxu0
        %v2096 = vadd.f32 %v2024, %v2095
        %v2097 = vpop.f32.mrf.mxu0
        %2098 = vdwg.mxu0
        %v2099 = vld [vmem:[%s3] sm:$0xf]
        %v2100 = vunpack.c.l.bf16 %v2099
        %v2102 = vsel %vm1135, %v2012, 0
        %v2105 = vsel %vm1135, %v2096, 0
        %2107 = vmatprep.subr.mxu0 0.0
        %2108 = vmatpush1.xpose.msra.mxu0 0.0
        %2109 = vmatprep.subr.mxu0 0.0
        %2110 = vmatpush1.xpose.msra.mxu0 0.0
        %2111 = vmatprep.subr.mxu0 0.0
        %2112 = vmatpush1.xpose.msra.mxu0 0.0
        %2113 = vmatprep.subr.mxu0 0.0
        %2114 = vmatpush1.xpose.msra.mxu0 0.0
        %2115 = vmatprep.subr.mxu0 0.0
        %2116 = vmatpush1.xpose.msra.mxu0 0.0
        %2117 = vmatprep.subr.mxu0 0.0
        %2118 = vmatpush1.xpose.msra.mxu0 0.0
        %2119 = vmatprep.subr.mxu0 0.0
        %2120 = vmatpush1.xpose.msra.mxu0 0.0
        %2121 = vmatprep.subr.mxu0 0.0
        %2122 = vmatpush1.xpose.msra.mxu0 0.0
        %2123 = vmatprep.subr.mxu0 0.0
        %2124 = vmatpush1.xpose.msra.mxu0 0.0
        %2125 = vmatprep.subr.mxu0 0.0
        %2126 = vmatpush1.xpose.msra.mxu0 0.0
        %2127 = vmatprep.subr.mxu0 0.0
        %2128 = vmatpush1.xpose.msra.mxu0 0.0
        %2129 = vmatprep.subr.mxu0 0.0
        %2130 = vmatpush1.xpose.msra.mxu0 0.0
        %2131 = vmatprep.subr.mxu0 0.0
        %2132 = vmatpush1.xpose.msra.mxu0 0.0
        %2133 = vmatprep.subr.mxu0 0.0
        %2134 = vmatpush1.xpose.msra.mxu0 0.0
        %2135 = vmatprep.subr.mxu0 0.0
        %2136 = vmatpush1.xpose.msra.mxu0 0.0
        %2137 = vmatprep.subr.mxu0 0.0
        %2138 = vmatpush1.xpose.msra.mxu0 %v2105
        %2139 = vmatprep.subr.mxu0 0.0
        %2140 = vmatpush2.xpose.msra.mxu0 0.0
        %2141 = vmatprep.subr.mxu0 0.0
        %2142 = vmatpush2.xpose.msra.mxu0 0.0
        %2143 = vmatprep.subr.mxu0 0.0
        %2144 = vmatpush2.xpose.msra.mxu0 0.0
        %2145 = vmatprep.subr.mxu0 0.0
        %2146 = vmatpush2.xpose.msra.mxu0 0.0
        %2147 = vmatprep.subr.mxu0 0.0
        %2148 = vmatpush2.xpose.msra.mxu0 0.0
        %2149 = vmatprep.subr.mxu0 0.0
        %2150 = vmatpush2.xpose.msra.mxu0 0.0
        %2151 = vmatprep.subr.mxu0 0.0
        %2152 = vmatpush2.xpose.msra.mxu0 0.0
        %2153 = vmatprep.subr.mxu0 0.0
        %2154 = vmatpush2.xpose.msra.mxu0 0.0
        %2155 = vmatprep.subr.mxu0 0.0
        %2156 = vmatpush2.xpose.msra.mxu0 0.0
        %2157 = vmatprep.subr.mxu0 0.0
        %2158 = vmatpush2.xpose.msra.mxu0 0.0
        %2159 = vmatprep.subr.mxu0 0.0
        %2160 = vmatpush2.xpose.msra.mxu0 0.0
        %2161 = vmatprep.subr.mxu0 0.0
        %2162 = vmatpush2.xpose.msra.mxu0 0.0
        %2163 = vmatprep.subr.mxu0 0.0
        %2164 = vmatpush2.xpose.msra.mxu0 0.0
        %2165 = vmatprep.subr.mxu0 0.0
        %2166 = vmatpush2.xpose.msra.mxu0 0.0
        %2167 = vmatprep.subr.mxu0 0.0
        %2168 = vmatpush2.xpose.msra.mxu0 0.0
        %2169 = vmatprep.subr.mxu0 0.0
        %2170 = vmatpush2.xpose.msra.mxu0 0.0
        %2171 = vmatprep.mubr.f32.mxu0 0.0
        %2172 = vmatmul.mubr.f32.gmra.mxu0 %v2102
        %v2173 = vpop.f32.mrf.mxu0
        %v2174 = vadd.f32 %v2100, %v2173
        %v2175 = vpop.f32.mrf.mxu0
        %2176 = vdwg.mxu0
        %v2177 = vsel %vm1135, %v2174, -inf
        %2178 = vmax.xlane.f32.xlu0 %v2177
        %v2179 = vpop.xlane.xlu0 %2178
        %v2180 = vsub.f32 %v2174, %v2179
        %v2181 = vmul.f32 %v2180, 1.442695
        %v2182 = vpow.pop %v2181
        %v2183 = vsel %vm1135, %v2182, 0.0
        %2184 = vadd.xlane.f32.xlu0 %v2183
        %v2185 = vpop.xlane.xlu0 %2184
        %v2186 = vrcp.pop %v2185
        %v2187 = vmul.f32 %v2182, %v2186
        %2188 = vst.msk [vmem:[%s1042] sm:$0xff] %vm1135, %v2187
        %2189 = vrot.lane.b32.xlu0 %v2096, 96
        %v2190 = vpop.permute.xlu0 %2189
        %v2193 = vsel %vm1135, %v2187, 0
        %2195 = vmatprep.subr.mxu0 0.0
        %2196 = vmatpush1.msra.mxu0 0.0
        %2197 = vmatprep.subr.mxu0 0.0
        %2198 = vmatpush1.msra.mxu0 0.0
        %2199 = vmatprep.subr.mxu0 0.0
        %2200 = vmatpush1.msra.mxu0 0.0
        %2201 = vmatprep.subr.mxu0 0.0
        %2202 = vmatpush1.msra.mxu0 0.0
        %2203 = vmatprep.subr.mxu0 0.0
        %2204 = vmatpush1.msra.mxu0 0.0
        %2205 = vmatprep.subr.mxu0 0.0
        %2206 = vmatpush1.msra.mxu0 0.0
        %2207 = vmatprep.subr.mxu0 0.0
        %2208 = vmatpush1.msra.mxu0 0.0
        %2209 = vmatprep.subr.mxu0 0.0
        %2210 = vmatpush1.msra.mxu0 0.0
        %2211 = vmatprep.subr.mxu0 0.0
        %2212 = vmatpush1.msra.mxu0 0.0
        %2213 = vmatprep.subr.mxu0 0.0
        %2214 = vmatpush1.msra.mxu0 0.0
        %2215 = vmatprep.subr.mxu0 0.0
        %2216 = vmatpush1.msra.mxu0 0.0
        %2217 = vmatprep.subr.mxu0 0.0
        %2218 = vmatpush1.msra.mxu0 0.0
        %2219 = vmatprep.subr.mxu0 0.0
        %2220 = vmatpush1.msra.mxu0 0.0
        %2221 = vmatprep.subr.mxu0 0.0
        %2222 = vmatpush1.msra.mxu0 0.0
        %2223 = vmatprep.subr.mxu0 0.0
        %2224 = vmatpush1.msra.mxu0 0.0
        %2225 = vmatprep.subr.mxu0 0.0
        %2226 = vmatpush1.msra.mxu0 %v2190
        %2227 = vmatprep.subr.mxu0 0.0
        %2228 = vmatpush2.msra.mxu0 0.0
        %2229 = vmatprep.subr.mxu0 0.0
        %2230 = vmatpush2.msra.mxu0 0.0
        %2231 = vmatprep.subr.mxu0 0.0
        %2232 = vmatpush2.msra.mxu0 0.0
        %2233 = vmatprep.subr.mxu0 0.0
        %2234 = vmatpush2.msra.mxu0 0.0
        %2235 = vmatprep.subr.mxu0 0.0
        %2236 = vmatpush2.msra.mxu0 0.0
        %2237 = vmatprep.subr.mxu0 0.0
        %2238 = vmatpush2.msra.mxu0 0.0
        %2239 = vmatprep.subr.mxu0 0.0
        %2240 = vmatpush2.msra.mxu0 0.0
        %2241 = vmatprep.subr.mxu0 0.0
        %2242 = vmatpush2.msra.mxu0 0.0
        %2243 = vmatprep.subr.mxu0 0.0
        %2244 = vmatpush2.msra.mxu0 0.0
        %2245 = vmatprep.subr.mxu0 0.0
        %2246 = vmatpush2.msra.mxu0 0.0
        %2247 = vmatprep.subr.mxu0 0.0
        %2248 = vmatpush2.msra.mxu0 0.0
        %2249 = vmatprep.subr.mxu0 0.0
        %2250 = vmatpush2.msra.mxu0 0.0
        %2251 = vmatprep.subr.mxu0 0.0
        %2252 = vmatpush2.msra.mxu0 0.0
        %2253 = vmatprep.subr.mxu0 0.0
        %2254 = vmatpush2.msra.mxu0 0.0
        %2255 = vmatprep.subr.mxu0 0.0
        %2256 = vmatpush2.msra.mxu0 0.0
        %2257 = vmatprep.subr.mxu0 0.0
        %2258 = vmatpush2.msra.mxu0 0.0
        %2259 = vmatprep.mubr.f32.mxu0 0.0
        %2260 = vmatmul.mubr.f32.gmra.mxu0 %v2193
        %v2261 = vpop.f32.mrf.mxu0
        %v2262 = vadd.f32 0.0, %v2261
        %v2263 = vpop.f32.mrf.mxu0
        %2264 = vdwg.mxu0
        %2265 = vrot.lane.b32.xlu0 %v2012, 120
        %v2266 = vpop.permute.xlu0 %2265
        %2267 = vrot.lane.b32.xlu0 %v2096, 120
        %v2268 = vpop.permute.xlu0 %2267
        %v2269 = vsel %vm1135, %v2266, 0
        %v2271 = vsel %vm1135, %v2268, 0
        %2273 = vmatprep.subr.mxu0 0.0
        %2274 = vmatpush1.xpose.msra.mxu0 0.0
        %2275 = vmatprep.subr.mxu0 0.0
        %2276 = vmatpush1.xpose.msra.mxu0 0.0
        %2277 = vmatprep.subr.mxu0 0.0
        %2278 = vmatpush1.xpose.msra.mxu0 0.0
        %2279 = vmatprep.subr.mxu0 0.0
        %2280 = vmatpush1.xpose.msra.mxu0 0.0
        %2281 = vmatprep.subr.mxu0 0.0
        %2282 = vmatpush1.xpose.msra.mxu0 0.0
        %2283 = vmatprep.subr.mxu0 0.0
        %2284 = vmatpush1.xpose.msra.mxu0 0.0
        %2285 = vmatprep.subr.mxu0 0.0
        %2286 = vmatpush1.xpose.msra.mxu0 0.0
        %2287 = vmatprep.subr.mxu0 0.0
        %2288 = vmatpush1.xpose.msra.mxu0 0.0
        %2289 = vmatprep.subr.mxu0 0.0
        %2290 = vmatpush1.xpose.msra.mxu0 0.0
        %2291 = vmatprep.subr.mxu0 0.0
        %2292 = vmatpush1.xpose.msra.mxu0 0.0
        %2293 = vmatprep.subr.mxu0 0.0
        %2294 = vmatpush1.xpose.msra.mxu0 0.0
        %2295 = vmatprep.subr.mxu0 0.0
        %2296 = vmatpush1.xpose.msra.mxu0 0.0
        %2297 = vmatprep.subr.mxu0 0.0
        %2298 = vmatpush1.xpose.msra.mxu0 0.0
        %2299 = vmatprep.subr.mxu0 0.0
        %2300 = vmatpush1.xpose.msra.mxu0 0.0
        %2301 = vmatprep.subr.mxu0 0.0
        %2302 = vmatpush1.xpose.msra.mxu0 0.0
        %2303 = vmatprep.subr.mxu0 0.0
        %2304 = vmatpush1.xpose.msra.mxu0 %v2271
        %2305 = vmatprep.subr.mxu0 0.0
        %2306 = vmatpush2.xpose.msra.mxu0 0.0
        %2307 = vmatprep.subr.mxu0 0.0
        %2308 = vmatpush2.xpose.msra.mxu0 0.0
        %2309 = vmatprep.subr.mxu0 0.0
        %2310 = vmatpush2.xpose.msra.mxu0 0.0
        %2311 = vmatprep.subr.mxu0 0.0
        %2312 = vmatpush2.xpose.msra.mxu0 0.0
        %2313 = vmatprep.subr.mxu0 0.0
        %2314 = vmatpush2.xpose.msra.mxu0 0.0
        %2315 = vmatprep.subr.mxu0 0.0
        %2316 = vmatpush2.xpose.msra.mxu0 0.0
        %2317 = vmatprep.subr.mxu0 0.0
        %2318 = vmatpush2.xpose.msra.mxu0 0.0
        %2319 = vmatprep.subr.mxu0 0.0
        %2320 = vmatpush2.xpose.msra.mxu0 0.0
        %2321 = vmatprep.subr.mxu0 0.0
        %2322 = vmatpush2.xpose.msra.mxu0 0.0
        %2323 = vmatprep.subr.mxu0 0.0
        %2324 = vmatpush2.xpose.msra.mxu0 0.0
        %2325 = vmatprep.subr.mxu0 0.0
        %2326 = vmatpush2.xpose.msra.mxu0 0.0
        %2327 = vmatprep.subr.mxu0 0.0
        %2328 = vmatpush2.xpose.msra.mxu0 0.0
        %2329 = vmatprep.subr.mxu0 0.0
        %2330 = vmatpush2.xpose.msra.mxu0 0.0
        %2331 = vmatprep.subr.mxu0 0.0
        %2332 = vmatpush2.xpose.msra.mxu0 0.0
        %2333 = vmatprep.subr.mxu0 0.0
        %2334 = vmatpush2.xpose.msra.mxu0 0.0
        %2335 = vmatprep.subr.mxu0 0.0
        %2336 = vmatpush2.xpose.msra.mxu0 0.0
        %2337 = vmatprep.mubr.f32.mxu0 0.0
        %2338 = vmatmul.mubr.f32.gmra.mxu0 %v2269
        %v2339 = vpop.f32.mrf.mxu0
        %v2340 = vadd.f32 %v2100, %v2339
        %v2341 = vpop.f32.mrf.mxu0
        %2342 = vdwg.mxu0
        %v2343 = vsel %vm1135, %v2340, -inf
        %2344 = vmax.xlane.f32.xlu0 %v2343
        %v2345 = vpop.xlane.xlu0 %2344
        %v2346 = vsub.f32 %v2340, %v2345
        %v2347 = vmul.f32 %v2346, 1.442695
        %v2348 = vpow.pop %v2347
        %v2349 = vsel %vm1135, %v2348, 0.0
        %2350 = vadd.xlane.f32.xlu0 %v2349
        %v2351 = vpop.xlane.xlu0 %2350
        %v2352 = vrcp.pop %v2351
        %v2353 = vmul.f32 %v2348, %v2352
        %s2354 = scalar_lea.vmem %s1042, 8 [#allocation31]
        %2355 = vst.msk [vmem:[%s2354] sm:$0xff] %vm1135, %v2353
        %2356 = vrot.lane.b32.xlu0 %v2096, 88
        %v2357 = vpop.permute.xlu0 %2356
        %v2360 = vsel %vm1135, %v2353, 0
        %2362 = vmatprep.subr.mxu0 0.0
        %2363 = vmatpush1.msra.mxu0 0.0
        %2364 = vmatprep.subr.mxu0 0.0
        %2365 = vmatpush1.msra.mxu0 0.0
        %2366 = vmatprep.subr.mxu0 0.0
        %2367 = vmatpush1.msra.mxu0 0.0
        %2368 = vmatprep.subr.mxu0 0.0
        %2369 = vmatpush1.msra.mxu0 0.0
        %2370 = vmatprep.subr.mxu0 0.0
        %2371 = vmatpush1.msra.mxu0 0.0
        %2372 = vmatprep.subr.mxu0 0.0
        %2373 = vmatpush1.msra.mxu0 0.0
        %2374 = vmatprep.subr.mxu0 0.0
        %2375 = vmatpush1.msra.mxu0 0.0
        %2376 = vmatprep.subr.mxu0 0.0
        %2377 = vmatpush1.msra.mxu0 0.0
        %2378 = vmatprep.subr.mxu0 0.0
        %2379 = vmatpush1.msra.mxu0 0.0
        %2380 = vmatprep.subr.mxu0 0.0
        %2381 = vmatpush1.msra.mxu0 0.0
        %2382 = vmatprep.subr.mxu0 0.0
        %2383 = vmatpush1.msra.mxu0 0.0
        %2384 = vmatprep.subr.mxu0 0.0
        %2385 = vmatpush1.msra.mxu0 0.0
        %2386 = vmatprep.subr.mxu0 0.0
        %2387 = vmatpush1.msra.mxu0 0.0
        %2388 = vmatprep.subr.mxu0 0.0
        %2389 = vmatpush1.msra.mxu0 0.0
        %2390 = vmatprep.subr.mxu0 0.0
        %2391 = vmatpush1.msra.mxu0 0.0
        %2392 = vmatprep.subr.mxu0 0.0
        %2393 = vmatpush1.msra.mxu0 %v2357
        %2394 = vmatprep.subr.mxu0 0.0
        %2395 = vmatpush2.msra.mxu0 0.0
        %2396 = vmatprep.subr.mxu0 0.0
        %2397 = vmatpush2.msra.mxu0 0.0
        %2398 = vmatprep.subr.mxu0 0.0
        %2399 = vmatpush2.msra.mxu0 0.0
        %2400 = vmatprep.subr.mxu0 0.0
        %2401 = vmatpush2.msra.mxu0 0.0
        %2402 = vmatprep.subr.mxu0 0.0
        %2403 = vmatpush2.msra.mxu0 0.0
        %2404 = vmatprep.subr.mxu0 0.0
        %2405 = vmatpush2.msra.mxu0 0.0
        %2406 = vmatprep.subr.mxu0 0.0
        %2407 = vmatpush2.msra.mxu0 0.0
        %2408 = vmatprep.subr.mxu0 0.0
        %2409 = vmatpush2.msra.mxu0 0.0
        %2410 = vmatprep.subr.mxu0 0.0
        %2411 = vmatpush2.msra.mxu0 0.0
        %2412 = vmatprep.subr.mxu0 0.0
        %2413 = vmatpush2.msra.mxu0 0.0
        %2414 = vmatprep.subr.mxu0 0.0
        %2415 = vmatpush2.msra.mxu0 0.0
        %2416 = vmatprep.subr.mxu0 0.0
        %2417 = vmatpush2.msra.mxu0 0.0
        %2418 = vmatprep.subr.mxu0 0.0
        %2419 = vmatpush2.msra.mxu0 0.0
        %2420 = vmatprep.subr.mxu0 0.0
        %2421 = vmatpush2.msra.mxu0 0.0
        %2422 = vmatprep.subr.mxu0 0.0
        %2423 = vmatpush2.msra.mxu0 0.0
        %2424 = vmatprep.subr.mxu0 0.0
        %2425 = vmatpush2.msra.mxu0 0.0
        %2426 = vmatprep.mubr.f32.mxu0 0.0
        %2427 = vmatmul.mubr.f32.gmra.mxu0 %v2360
        %v2428 = vpop.f32.mrf.mxu0
        %v2429 = vadd.f32 0.0, %v2428
        %v2430 = vpop.f32.mrf.mxu0
        %2431 = vdwg.mxu0
        %2432 = vrot.lane.b32.xlu0 %v2012, 112
        %v2433 = vpop.permute.xlu0 %2432
        %2434 = vrot.lane.b32.xlu0 %v2096, 112
        %v2435 = vpop.permute.xlu0 %2434
        %v2436 = vsel %vm1135, %v2433, 0
        %v2438 = vsel %vm1135, %v2435, 0
        %2440 = vmatprep.subr.mxu0 0.0
        %2441 = vmatpush1.xpose.msra.mxu0 0.0
        %2442 = vmatprep.subr.mxu0 0.0
        %2443 = vmatpush1.xpose.msra.mxu0 0.0
        %2444 = vmatprep.subr.mxu0 0.0
        %2445 = vmatpush1.xpose.msra.mxu0 0.0
        %2446 = vmatprep.subr.mxu0 0.0
        %2447 = vmatpush1.xpose.msra.mxu0 0.0
        %2448 = vmatprep.subr.mxu0 0.0
        %2449 = vmatpush1.xpose.msra.mxu0 0.0
        %2450 = vmatprep.subr.mxu0 0.0
        %2451 = vmatpush1.xpose.msra.mxu0 0.0
        %2452 = vmatprep.subr.mxu0 0.0
        %2453 = vmatpush1.xpose.msra.mxu0 0.0
        %2454 = vmatprep.subr.mxu0 0.0
        %2455 = vmatpush1.xpose.msra.mxu0 0.0
        %2456 = vmatprep.subr.mxu0 0.0
        %2457 = vmatpush1.xpose.msra.mxu0 0.0
        %2458 = vmatprep.subr.mxu0 0.0
        %2459 = vmatpush1.xpose.msra.mxu0 0.0
        %2460 = vmatprep.subr.mxu0 0.0
        %2461 = vmatpush1.xpose.msra.mxu0 0.0
        %2462 = vmatprep.subr.mxu0 0.0
        %2463 = vmatpush1.xpose.msra.mxu0 0.0
        %2464 = vmatprep.subr.mxu0 0.0
        %2465 = vmatpush1.xpose.msra.mxu0 0.0
        %2466 = vmatprep.subr.mxu0 0.0
        %2467 = vmatpush1.xpose.msra.mxu0 0.0
        %2468 = vmatprep.subr.mxu0 0.0
        %2469 = vmatpush1.xpose.msra.mxu0 0.0
        %2470 = vmatprep.subr.mxu0 0.0
        %2471 = vmatpush1.xpose.msra.mxu0 %v2438
        %2472 = vmatprep.subr.mxu0 0.0
        %2473 = vmatpush2.xpose.msra.mxu0 0.0
        %2474 = vmatprep.subr.mxu0 0.0
        %2475 = vmatpush2.xpose.msra.mxu0 0.0
        %2476 = vmatprep.subr.mxu0 0.0
        %2477 = vmatpush2.xpose.msra.mxu0 0.0
        %2478 = vmatprep.subr.mxu0 0.0
        %2479 = vmatpush2.xpose.msra.mxu0 0.0
        %2480 = vmatprep.subr.mxu0 0.0
        %2481 = vmatpush2.xpose.msra.mxu0 0.0
        %2482 = vmatprep.subr.mxu0 0.0
        %2483 = vmatpush2.xpose.msra.mxu0 0.0
        %2484 = vmatprep.subr.mxu0 0.0
        %2485 = vmatpush2.xpose.msra.mxu0 0.0
        %2486 = vmatprep.subr.mxu0 0.0
        %2487 = vmatpush2.xpose.msra.mxu0 0.0
        %2488 = vmatprep.subr.mxu0 0.0
        %2489 = vmatpush2.xpose.msra.mxu0 0.0
        %2490 = vmatprep.subr.mxu0 0.0
        %2491 = vmatpush2.xpose.msra.mxu0 0.0
        %2492 = vmatprep.subr.mxu0 0.0
        %2493 = vmatpush2.xpose.msra.mxu0 0.0
        %2494 = vmatprep.subr.mxu0 0.0
        %2495 = vmatpush2.xpose.msra.mxu0 0.0
        %2496 = vmatprep.subr.mxu0 0.0
        %2497 = vmatpush2.xpose.msra.mxu0 0.0
        %2498 = vmatprep.subr.mxu0 0.0
        %2499 = vmatpush2.xpose.msra.mxu0 0.0
        %2500 = vmatprep.subr.mxu0 0.0
        %2501 = vmatpush2.xpose.msra.mxu0 0.0
        %2502 = vmatprep.subr.mxu0 0.0
        %2503 = vmatpush2.xpose.msra.mxu0 0.0
        %2504 = vmatprep.mubr.f32.mxu0 0.0
        %2505 = vmatmul.mubr.f32.gmra.mxu0 %v2436
        %v2506 = vpop.f32.mrf.mxu0
        %v2507 = vadd.f32 %v2100, %v2506
        %v2508 = vpop.f32.mrf.mxu0
        %2509 = vdwg.mxu0
        %v2510 = vsel %vm1135, %v2507, -inf
        %2511 = vmax.xlane.f32.xlu0 %v2510
        %v2512 = vpop.xlane.xlu0 %2511
        %v2513 = vsub.f32 %v2507, %v2512
        %v2514 = vmul.f32 %v2513, 1.442695
        %v2515 = vpow.pop %v2514
        %v2516 = vsel %vm1135, %v2515, 0.0
        %2517 = vadd.xlane.f32.xlu0 %v2516
        %v2518 = vpop.xlane.xlu0 %2517
        %v2519 = vrcp.pop %v2518
        %v2520 = vmul.f32 %v2515, %v2519
        %s2521 = scalar_lea.vmem %s1042, 16 [#allocation31]
        %2522 = vst.msk [vmem:[%s2521] sm:$0xff] %vm1135, %v2520
        %2523 = vrot.lane.b32.xlu0 %v2096, 80
        %v2524 = vpop.permute.xlu0 %2523
        %v2527 = vsel %vm1135, %v2520, 0
        %2529 = vmatprep.subr.mxu0 0.0
        %2530 = vmatpush1.msra.mxu0 0.0
        %2531 = vmatprep.subr.mxu0 0.0
        %2532 = vmatpush1.msra.mxu0 0.0
        %2533 = vmatprep.subr.mxu0 0.0
        %2534 = vmatpush1.msra.mxu0 0.0
        %2535 = vmatprep.subr.mxu0 0.0
        %2536 = vmatpush1.msra.mxu0 0.0
        %2537 = vmatprep.subr.mxu0 0.0
        %2538 = vmatpush1.msra.mxu0 0.0
        %2539 = vmatprep.subr.mxu0 0.0
        %2540 = vmatpush1.msra.mxu0 0.0
        %2541 = vmatprep.subr.mxu0 0.0
        %2542 = vmatpush1.msra.mxu0 0.0
        %2543 = vmatprep.subr.mxu0 0.0
        %2544 = vmatpush1.msra.mxu0 0.0
        %2545 = vmatprep.subr.mxu0 0.0
        %2546 = vmatpush1.msra.mxu0 0.0
        %2547 = vmatprep.subr.mxu0 0.0
        %2548 = vmatpush1.msra.mxu0 0.0
        %2549 = vmatprep.subr.mxu0 0.0
        %2550 = vmatpush1.msra.mxu0 0.0
        %2551 = vmatprep.subr.mxu0 0.0
        %2552 = vmatpush1.msra.mxu0 0.0
        %2553 = vmatprep.subr.mxu0 0.0
        %2554 = vmatpush1.msra.mxu0 0.0
        %2555 = vmatprep.subr.mxu0 0.0
        %2556 = vmatpush1.msra.mxu0 0.0
        %2557 = vmatprep.subr.mxu0 0.0
        %2558 = vmatpush1.msra.mxu0 0.0
        %2559 = vmatprep.subr.mxu0 0.0
        %2560 = vmatpush1.msra.mxu0 %v2524
        %2561 = vmatprep.subr.mxu0 0.0
        %2562 = vmatpush2.msra.mxu0 0.0
        %2563 = vmatprep.subr.mxu0 0.0
        %2564 = vmatpush2.msra.mxu0 0.0
        %2565 = vmatprep.subr.mxu0 0.0
        %2566 = vmatpush2.msra.mxu0 0.0
        %2567 = vmatprep.subr.mxu0 0.0
        %2568 = vmatpush2.msra.mxu0 0.0
        %2569 = vmatprep.subr.mxu0 0.0
        %2570 = vmatpush2.msra.mxu0 0.0
        %2571 = vmatprep.subr.mxu0 0.0
        %2572 = vmatpush2.msra.mxu0 0.0
        %2573 = vmatprep.subr.mxu0 0.0
        %2574 = vmatpush2.msra.mxu0 0.0
        %2575 = vmatprep.subr.mxu0 0.0
        %2576 = vmatpush2.msra.mxu0 0.0
        %2577 = vmatprep.subr.mxu0 0.0
        %2578 = vmatpush2.msra.mxu0 0.0
        %2579 = vmatprep.subr.mxu0 0.0
        %2580 = vmatpush2.msra.mxu0 0.0
        %2581 = vmatprep.subr.mxu0 0.0
        %2582 = vmatpush2.msra.mxu0 0.0
        %2583 = vmatprep.subr.mxu0 0.0
        %2584 = vmatpush2.msra.mxu0 0.0
        %2585 = vmatprep.subr.mxu0 0.0
        %2586 = vmatpush2.msra.mxu0 0.0
        %2587 = vmatprep.subr.mxu0 0.0
        %2588 = vmatpush2.msra.mxu0 0.0
        %2589 = vmatprep.subr.mxu0 0.0
        %2590 = vmatpush2.msra.mxu0 0.0
        %2591 = vmatprep.subr.mxu0 0.0
        %2592 = vmatpush2.msra.mxu0 0.0
        %2593 = vmatprep.mubr.f32.mxu0 0.0
        %2594 = vmatmul.mubr.f32.gmra.mxu0 %v2527
        %v2595 = vpop.f32.mrf.mxu0
        %v2596 = vadd.f32 0.0, %v2595
        %v2597 = vpop.f32.mrf.mxu0
        %2598 = vdwg.mxu0
        %2599 = vrot.lane.b32.xlu0 %v2012, 104
        %v2600 = vpop.permute.xlu0 %2599
        %2601 = vrot.lane.b32.xlu0 %v2096, 104
        %v2602 = vpop.permute.xlu0 %2601
        %v2603 = vsel %vm1135, %v2600, 0
        %v2605 = vsel %vm1135, %v2602, 0
        %2607 = vmatprep.subr.mxu0 0.0
        %2608 = vmatpush1.xpose.msra.mxu0 0.0
        %2609 = vmatprep.subr.mxu0 0.0
        %2610 = vmatpush1.xpose.msra.mxu0 0.0
        %2611 = vmatprep.subr.mxu0 0.0
        %2612 = vmatpush1.xpose.msra.mxu0 0.0
        %2613 = vmatprep.subr.mxu0 0.0
        %2614 = vmatpush1.xpose.msra.mxu0 0.0
        %2615 = vmatprep.subr.mxu0 0.0
        %2616 = vmatpush1.xpose.msra.mxu0 0.0
        %2617 = vmatprep.subr.mxu0 0.0
        %2618 = vmatpush1.xpose.msra.mxu0 0.0
        %2619 = vmatprep.subr.mxu0 0.0
        %2620 = vmatpush1.xpose.msra.mxu0 0.0
        %2621 = vmatprep.subr.mxu0 0.0
        %2622 = vmatpush1.xpose.msra.mxu0 0.0
        %2623 = vmatprep.subr.mxu0 0.0
        %2624 = vmatpush1.xpose.msra.mxu0 0.0
        %2625 = vmatprep.subr.mxu0 0.0
        %2626 = vmatpush1.xpose.msra.mxu0 0.0
        %2627 = vmatprep.subr.mxu0 0.0
        %2628 = vmatpush1.xpose.msra.mxu0 0.0
        %2629 = vmatprep.subr.mxu0 0.0
        %2630 = vmatpush1.xpose.msra.mxu0 0.0
        %2631 = vmatprep.subr.mxu0 0.0
        %2632 = vmatpush1.xpose.msra.mxu0 0.0
        %2633 = vmatprep.subr.mxu0 0.0
        %2634 = vmatpush1.xpose.msra.mxu0 0.0
        %2635 = vmatprep.subr.mxu0 0.0
        %2636 = vmatpush1.xpose.msra.mxu0 0.0
        %2637 = vmatprep.subr.mxu0 0.0
        %2638 = vmatpush1.xpose.msra.mxu0 %v2605
        %2639 = vmatprep.subr.mxu0 0.0
        %2640 = vmatpush2.xpose.msra.mxu0 0.0
        %2641 = vmatprep.subr.mxu0 0.0
        %2642 = vmatpush2.xpose.msra.mxu0 0.0
        %2643 = vmatprep.subr.mxu0 0.0
        %2644 = vmatpush2.xpose.msra.mxu0 0.0
        %2645 = vmatprep.subr.mxu0 0.0
        %2646 = vmatpush2.xpose.msra.mxu0 0.0
        %2647 = vmatprep.subr.mxu0 0.0
        %2648 = vmatpush2.xpose.msra.mxu0 0.0
        %2649 = vmatprep.subr.mxu0 0.0
        %2650 = vmatpush2.xpose.msra.mxu0 0.0
        %2651 = vmatprep.subr.mxu0 0.0
        %2652 = vmatpush2.xpose.msra.mxu0 0.0
        %2653 = vmatprep.subr.mxu0 0.0
        %2654 = vmatpush2.xpose.msra.mxu0 0.0
        %2655 = vmatprep.subr.mxu0 0.0
        %2656 = vmatpush2.xpose.msra.mxu0 0.0
        %2657 = vmatprep.subr.mxu0 0.0
        %2658 = vmatpush2.xpose.msra.mxu0 0.0
        %2659 = vmatprep.subr.mxu0 0.0
        %2660 = vmatpush2.xpose.msra.mxu0 0.0
        %2661 = vmatprep.subr.mxu0 0.0
        %2662 = vmatpush2.xpose.msra.mxu0 0.0
        %2663 = vmatprep.subr.mxu0 0.0
        %2664 = vmatpush2.xpose.msra.mxu0 0.0
        %2665 = vmatprep.subr.mxu0 0.0
        %2666 = vmatpush2.xpose.msra.mxu0 0.0
        %2667 = vmatprep.subr.mxu0 0.0
        %2668 = vmatpush2.xpose.msra.mxu0 0.0
        %2669 = vmatprep.subr.mxu0 0.0
        %2670 = vmatpush2.xpose.msra.mxu0 0.0
        %2671 = vmatprep.mubr.f32.mxu0 0.0
        %2672 = vmatmul.mubr.f32.gmra.mxu0 %v2603
        %v2673 = vpop.f32.mrf.mxu0
        %v2674 = vadd.f32 %v2100, %v2673
        %v2675 = vpop.f32.mrf.mxu0
        %2676 = vdwg.mxu0
        %v2677 = vsel %vm1135, %v2674, -inf
        %2678 = vmax.xlane.f32.xlu0 %v2677
        %v2679 = vpop.xlane.xlu0 %2678
        %v2680 = vsub.f32 %v2674, %v2679
        %v2681 = vmul.f32 %v2680, 1.442695
        %v2682 = vpow.pop %v2681
        %v2683 = vsel %vm1135, %v2682, 0.0
        %2684 = vadd.xlane.f32.xlu0 %v2683
        %v2685 = vpop.xlane.xlu0 %2684
        %v2686 = vrcp.pop %v2685
        %v2687 = vmul.f32 %v2682, %v2686
        %s2688 = scalar_lea.vmem %s1042, 24 [#allocation31]
        %2689 = vst.msk [vmem:[%s2688] sm:$0xff] %vm1135, %v2687
        %2690 = vrot.lane.b32.xlu0 %v2096, 72
        %v2691 = vpop.permute.xlu0 %2690
        %v2694 = vsel %vm1135, %v2687, 0
        %2696 = vmatprep.subr.mxu0 0.0
        %2697 = vmatpush1.msra.mxu0 0.0
        %2698 = vmatprep.subr.mxu0 0.0
        %2699 = vmatpush1.msra.mxu0 0.0
        %2700 = vmatprep.subr.mxu0 0.0
        %2701 = vmatpush1.msra.mxu0 0.0
        %2702 = vmatprep.subr.mxu0 0.0
        %2703 = vmatpush1.msra.mxu0 0.0
        %2704 = vmatprep.subr.mxu0 0.0
        %2705 = vmatpush1.msra.mxu0 0.0
        %2706 = vmatprep.subr.mxu0 0.0
        %2707 = vmatpush1.msra.mxu0 0.0
        %2708 = vmatprep.subr.mxu0 0.0
        %2709 = vmatpush1.msra.mxu0 0.0
        %2710 = vmatprep.subr.mxu0 0.0
        %2711 = vmatpush1.msra.mxu0 0.0
        %2712 = vmatprep.subr.mxu0 0.0
        %2713 = vmatpush1.msra.mxu0 0.0
        %2714 = vmatprep.subr.mxu0 0.0
        %2715 = vmatpush1.msra.mxu0 0.0
        %2716 = vmatprep.subr.mxu0 0.0
        %2717 = vmatpush1.msra.mxu0 0.0
        %2718 = vmatprep.subr.mxu0 0.0
        %2719 = vmatpush1.msra.mxu0 0.0
        %2720 = vmatprep.subr.mxu0 0.0
        %2721 = vmatpush1.msra.mxu0 0.0
        %2722 = vmatprep.subr.mxu0 0.0
        %2723 = vmatpush1.msra.mxu0 0.0
        %2724 = vmatprep.subr.mxu0 0.0
        %2725 = vmatpush1.msra.mxu0 0.0
        %2726 = vmatprep.subr.mxu0 0.0
        %2727 = vmatpush1.msra.mxu0 %v2691
        %2728 = vmatprep.subr.mxu0 0.0
        %2729 = vmatpush2.msra.mxu0 0.0
        %2730 = vmatprep.subr.mxu0 0.0
        %2731 = vmatpush2.msra.mxu0 0.0
        %2732 = vmatprep.subr.mxu0 0.0
        %2733 = vmatpush2.msra.mxu0 0.0
        %2734 = vmatprep.subr.mxu0 0.0
        %2735 = vmatpush2.msra.mxu0 0.0
        %2736 = vmatprep.subr.mxu0 0.0
        %2737 = vmatpush2.msra.mxu0 0.0
        %2738 = vmatprep.subr.mxu0 0.0
        %2739 = vmatpush2.msra.mxu0 0.0
        %2740 = vmatprep.subr.mxu0 0.0
        %2741 = vmatpush2.msra.mxu0 0.0
        %2742 = vmatprep.subr.mxu0 0.0
        %2743 = vmatpush2.msra.mxu0 0.0
        %2744 = vmatprep.subr.mxu0 0.0
        %2745 = vmatpush2.msra.mxu0 0.0
        %2746 = vmatprep.subr.mxu0 0.0
        %2747 = vmatpush2.msra.mxu0 0.0
        %2748 = vmatprep.subr.mxu0 0.0
        %2749 = vmatpush2.msra.mxu0 0.0
        %2750 = vmatprep.subr.mxu0 0.0
        %2751 = vmatpush2.msra.mxu0 0.0
        %2752 = vmatprep.subr.mxu0 0.0
        %2753 = vmatpush2.msra.mxu0 0.0
        %2754 = vmatprep.subr.mxu0 0.0
        %2755 = vmatpush2.msra.mxu0 0.0
        %2756 = vmatprep.subr.mxu0 0.0
        %2757 = vmatpush2.msra.mxu0 0.0
        %2758 = vmatprep.subr.mxu0 0.0
        %2759 = vmatpush2.msra.mxu0 0.0
        %2760 = vmatprep.mubr.f32.mxu0 0.0
        %2761 = vmatmul.mubr.f32.gmra.mxu0 %v2694
        %v2762 = vpop.f32.mrf.mxu0
        %v2763 = vadd.f32 0.0, %v2762
        %v2764 = vpop.f32.mrf.mxu0
        %2765 = vdwg.mxu0
        %2767 = vrot.lane.b32.xlu0 %v2429, 8
        %v2768 = vpop.permute.xlu0 %2767
        %2771 = vrot.lane.b32.xlu0 %v2596, 16
        %v2772 = vpop.permute.xlu0 %2771
        %2775 = vrot.lane.b32.xlu0 %v2763, 24
        %v2776 = vpop.permute.xlu0 %2775
        %v2778 = vsel %vm1135, %v2262, %v2768
        %v2779 = vsel %vm1812, %v2778, %v2772
        %v2780 = vsel %vm1814, %v2779, %v2776
        %v2781 = vld [vmem:[#allocation19] sm:$0xff]
        %v2782 = vld [vmem:[#allocation19 + $0x8] sm:$0xff]
        %v2783 = vld [vmem:[#allocation19 + $0x10] sm:$0xff]
        %v2784 = vld [vmem:[#allocation19 + $0x18] sm:$0xff]
        %v2785 = vld [vmem:[#allocation20] sm:$0x1]
        %v2787 = vlaneseq
        %v2788 = vshrl.u32 %v2787, 7
        %v2789 = vsub.s32 0, %v2788
        %v2790 = vrot.slane %v2785, %v2789
        %v2793 = vsel %vm1056, %v2780, 0
        %2795 = vmatprep.subr.mxu0 0.0
        %2796 = vmatpush1.msra.mxu0 0.0
        %2797 = vmatprep.subr.mxu0 0.0
        %2798 = vmatpush1.msra.mxu0 0.0
        %2799 = vmatprep.subr.mxu0 0.0
        %2800 = vmatpush1.msra.mxu0 0.0
        %2801 = vmatprep.subr.mxu0 0.0
        %2802 = vmatpush1.msra.mxu0 0.0
        %2803 = vmatprep.subr.mxu0 0.0
        %2804 = vmatpush1.msra.mxu0 0.0
        %2805 = vmatprep.subr.mxu0 0.0
        %2806 = vmatpush1.msra.mxu0 0.0
        %2807 = vmatprep.subr.mxu0 0.0
        %2808 = vmatpush1.msra.mxu0 0.0
        %2809 = vmatprep.subr.mxu0 0.0
        %2810 = vmatpush1.msra.mxu0 0.0
        %2811 = vmatprep.subr.mxu0 0.0
        %2812 = vmatpush1.msra.mxu0 0.0
        %2813 = vmatprep.subr.mxu0 0.0
        %2814 = vmatpush1.msra.mxu0 0.0
        %2815 = vmatprep.subr.mxu0 0.0
        %2816 = vmatpush1.msra.mxu0 0.0
        %2817 = vmatprep.subr.mxu0 0.0
        %2818 = vmatpush1.msra.mxu0 0.0
        %2819 = vmatprep.subr.mxu0 0.0
        %2820 = vmatpush1.msra.mxu0 %v2784
        %2821 = vmatprep.subr.mxu0 0.0
        %2822 = vmatpush1.msra.mxu0 %v2783
        %2823 = vmatprep.subr.mxu0 0.0
        %2824 = vmatpush1.msra.mxu0 %v2782
        %2825 = vmatprep.subr.mxu0 0.0
        %2826 = vmatpush1.msra.mxu0 %v2781
        %2827 = vmatprep.subr.mxu0 0.0
        %2828 = vmatpush2.msra.mxu0 0.0
        %2829 = vmatprep.subr.mxu0 0.0
        %2830 = vmatpush2.msra.mxu0 0.0
        %2831 = vmatprep.subr.mxu0 0.0
        %2832 = vmatpush2.msra.mxu0 0.0
        %2833 = vmatprep.subr.mxu0 0.0
        %2834 = vmatpush2.msra.mxu0 0.0
        %2835 = vmatprep.subr.mxu0 0.0
        %2836 = vmatpush2.msra.mxu0 0.0
        %2837 = vmatprep.subr.mxu0 0.0
        %2838 = vmatpush2.msra.mxu0 0.0
        %2839 = vmatprep.subr.mxu0 0.0
        %2840 = vmatpush2.msra.mxu0 0.0
        %2841 = vmatprep.subr.mxu0 0.0
        %2842 = vmatpush2.msra.mxu0 0.0
        %2843 = vmatprep.subr.mxu0 0.0
        %2844 = vmatpush2.msra.mxu0 0.0
        %2845 = vmatprep.subr.mxu0 0.0
        %2846 = vmatpush2.msra.mxu0 0.0
        %2847 = vmatprep.subr.mxu0 0.0
        %2848 = vmatpush2.msra.mxu0 0.0
        %2849 = vmatprep.subr.mxu0 0.0
        %2850 = vmatpush2.msra.mxu0 0.0
        %2851 = vmatprep.subr.mxu0 0.0
        %2852 = vmatpush2.msra.mxu0 0.0
        %2853 = vmatprep.subr.mxu0 0.0
        %2854 = vmatpush2.msra.mxu0 0.0
        %2855 = vmatprep.subr.mxu0 0.0
        %2856 = vmatpush2.msra.mxu0 0.0
        %2857 = vmatprep.subr.mxu0 0.0
        %2858 = vmatpush2.msra.mxu0 0.0
        %2859 = vmatprep.mubr.f32.mxu0 0.0
        %2860 = vmatmul.mubr.f32.gmra.mxu0 %v2793
        %v2861 = vpop.f32.mrf.mxu0
        %v2862 = vadd.f32 %v2790, %v2861
        %v2863 = vpop.f32.mrf.mxu0
        %2864 = vdwg.mxu0
        %v2865 = vadd.f32 %v1930, %v2862
        %v2866 = vld [vmem:[#allocation22] sm:$0x1]
        %v2867 = vld [vmem:[#allocation23] sm:$0x1]
        %v2868 = vsel %vm1056, %v2865, 0.0
        %2869 = vadd.xlane.f32.xlu0 %v2868
        %v2870 = vpop.xlane.xlu0 %2869
        %v2871 = vmul.f32 %v2870, %v1906
        %v2872 = vsub.f32 %v2865, %v2871
        %v2873 = vmul.f32 %v2872, %v2872
        %v2874 = vsel %vm1056, %v2873, 0.0
        %2875 = vadd.xlane.f32.xlu0 %v2874
        %v2876 = vpop.xlane.xlu0 %2875
        %v2877 = vmul.f32 %v2876, %v1906
        %v2878 = vadd.f32 %v2877, 1e-05
        %v2879 = vrsqrt.pop %v2878
        %v2880 = vmul.f32 %v2872, %v2879
        %v2882 = vlaneseq
        %v2883 = vshrl.u32 %v2882, 7
        %v2884 = vsub.s32 0, %v2883
        %v2885 = vrot.slane %v2866, %v2884
        %v2887 = vmul.f32 %v2880, %v2885
        %v2889 = vlaneseq
        %v2890 = vshrl.u32 %v2889, 7
        %v2891 = vsub.s32 0, %v2890
        %v2892 = vrot.slane %v2867, %v2891
        %v2894 = vadd.f32 %v2887, %v2892
        %v2895 = vld [vmem:[#allocation25] sm:$0xff]
        %v2896 = vld [vmem:[#allocation25 + $0x8] sm:$0xff]
        %v2897 = vld [vmem:[#allocation25 + $0x10] sm:$0xff]
        %v2898 = vld [vmem:[#allocation25 + $0x18] sm:$0xff]
        %v2899 = vld [vmem:[#allocation26] sm:$0x1]
        %v2901 = vlaneseq
        %v2902 = vshrl.u32 %v2901, 7
        %v2903 = vsub.s32 0, %v2902
        %v2904 = vrot.slane %v2899, %v2903
        %v2907 = vsel %vm1056, %v2894, 0
        %2909 = vmatprep.subr.mxu0 0.0
        %2910 = vmatpush1.msra.mxu0 0.0
        %2911 = vmatprep.subr.mxu0 0.0
        %2912 = vmatpush1.msra.mxu0 0.0
        %2913 = vmatprep.subr.mxu0 0.0
        %2914 = vmatpush1.msra.mxu0 0.0
        %2915 = vmatprep.subr.mxu0 0.0
        %2916 = vmatpush1.msra.mxu0 0.0
        %2917 = vmatprep.subr.mxu0 0.0
        %2918 = vmatpush1.msra.mxu0 0.0
        %2919 = vmatprep.subr.mxu0 0.0
        %2920 = vmatpush1.msra.mxu0 0.0
        %2921 = vmatprep.subr.mxu0 0.0
        %2922 = vmatpush1.msra.mxu0 0.0
        %2923 = vmatprep.subr.mxu0 0.0
        %2924 = vmatpush1.msra.mxu0 0.0
        %2925 = vmatprep.subr.mxu0 0.0
        %2926 = vmatpush1.msra.mxu0 0.0
        %2927 = vmatprep.subr.mxu0 0.0
        %2928 = vmatpush1.msra.mxu0 0.0
        %2929 = vmatprep.subr.mxu0 0.0
        %2930 = vmatpush1.msra.mxu0 0.0
        %2931 = vmatprep.subr.mxu0 0.0
        %2932 = vmatpush1.msra.mxu0 0.0
        %2933 = vmatprep.subr.mxu0 0.0
        %2934 = vmatpush1.msra.mxu0 %v2898
        %2935 = vmatprep.subr.mxu0 0.0
        %2936 = vmatpush1.msra.mxu0 %v2897
        %2937 = vmatprep.subr.mxu0 0.0
        %2938 = vmatpush1.msra.mxu0 %v2896
        %2939 = vmatprep.subr.mxu0 0.0
        %2940 = vmatpush1.msra.mxu0 %v2895
        %2941 = vmatprep.subr.mxu0 0.0
        %2942 = vmatpush2.msra.mxu0 0.0
        %2943 = vmatprep.subr.mxu0 0.0
        %2944 = vmatpush2.msra.mxu0 0.0
        %2945 = vmatprep.subr.mxu0 0.0
        %2946 = vmatpush2.msra.mxu0 0.0
        %2947 = vmatprep.subr.mxu0 0.0
        %2948 = vmatpush2.msra.mxu0 0.0
        %2949 = vmatprep.subr.mxu0 0.0
        %2950 = vmatpush2.msra.mxu0 0.0
        %2951 = vmatprep.subr.mxu0 0.0
        %2952 = vmatpush2.msra.mxu0 0.0
        %2953 = vmatprep.subr.mxu0 0.0
        %2954 = vmatpush2.msra.mxu0 0.0
        %2955 = vmatprep.subr.mxu0 0.0
        %2956 = vmatpush2.msra.mxu0 0.0
        %2957 = vmatprep.subr.mxu0 0.0
        %2958 = vmatpush2.msra.mxu0 0.0
        %2959 = vmatprep.subr.mxu0 0.0
        %2960 = vmatpush2.msra.mxu0 0.0
        %2961 = vmatprep.subr.mxu0 0.0
        %2962 = vmatpush2.msra.mxu0 0.0
        %2963 = vmatprep.subr.mxu0 0.0
        %2964 = vmatpush2.msra.mxu0 0.0
        %2965 = vmatprep.subr.mxu0 0.0
        %2966 = vmatpush2.msra.mxu0 0.0
        %2967 = vmatprep.subr.mxu0 0.0
        %2968 = vmatpush2.msra.mxu0 0.0
        %2969 = vmatprep.subr.mxu0 0.0
        %2970 = vmatpush2.msra.mxu0 0.0
        %2971 = vmatprep.subr.mxu0 0.0
        %2972 = vmatpush2.msra.mxu0 0.0
        %2973 = vmatprep.mubr.f32.mxu0 0.0
        %2974 = vmatmul.mubr.f32.gmra.mxu0 %v2907
        %v2975 = vpop.f32.mrf.mxu0
        %v2976 = vadd.f32 %v2904, %v2975
        %v2977 = vpop.f32.mrf.mxu0
        %2978 = vdwg.mxu0
        %v2979 = vmax.f32 %v2976, 0.0
        %v2980 = vld [vmem:[%s20] sm:$0xff]
        %v2981 = vld [vmem:[%s20 + $0x8] sm:$0xff]
        %v2982 = vld [vmem:[%s20 + $0x10] sm:$0xff]
        %v2983 = vld [vmem:[%s20 + $0x18] sm:$0xff]
        %v2984 = vld [vmem:[%s20 + $0x20] sm:$0xff]
        %v2985 = vld [vmem:[%s20 + $0x28] sm:$0xff]
        %v2986 = vld [vmem:[%s20 + $0x30] sm:$0xff]
        %v2987 = vld [vmem:[%s20 + $0x38] sm:$0xff]
        %v2988 = vld [vmem:[%s21] sm:$0x1]
        %v2990 = vlaneseq
        %v2991 = vshrl.u32 %v2990, 7
        %v2992 = vsub.s32 0, %v2991
        %v2993 = vrot.slane %v2988, %v2992
        %vm2995 = vcmask 523264
        %v2997 = vsel %vm2995, %v2979, 0
        %2999 = vmatprep.subr.mxu0 0.0
        %3000 = vmatpush1.msra.mxu0 0.0
        %3001 = vmatprep.subr.mxu0 0.0
        %3002 = vmatpush1.msra.mxu0 0.0
        %3003 = vmatprep.subr.mxu0 0.0
        %3004 = vmatpush1.msra.mxu0 0.0
        %3005 = vmatprep.subr.mxu0 0.0
        %3006 = vmatpush1.msra.mxu0 0.0
        %3007 = vmatprep.subr.mxu0 0.0
        %3008 = vmatpush1.msra.mxu0 0.0
        %3009 = vmatprep.subr.mxu0 0.0
        %3010 = vmatpush1.msra.mxu0 0.0
        %3011 = vmatprep.subr.mxu0 0.0
        %3012 = vmatpush1.msra.mxu0 0.0
        %3013 = vmatprep.subr.mxu0 0.0
        %3014 = vmatpush1.msra.mxu0 0.0
        %3015 = vmatprep.subr.mxu0 0.0
        %3016 = vmatpush1.msra.mxu0 %v2987
        %3017 = vmatprep.subr.mxu0 0.0
        %3018 = vmatpush1.msra.mxu0 %v2986
        %3019 = vmatprep.subr.mxu0 0.0
        %3020 = vmatpush1.msra.mxu0 %v2985
        %3021 = vmatprep.subr.mxu0 0.0
        %3022 = vmatpush1.msra.mxu0 %v2984
        %3023 = vmatprep.subr.mxu0 0.0
        %3024 = vmatpush1.msra.mxu0 %v2983
        %3025 = vmatprep.subr.mxu0 0.0
        %3026 = vmatpush1.msra.mxu0 %v2982
        %3027 = vmatprep.subr.mxu0 0.0
        %3028 = vmatpush1.msra.mxu0 %v2981
        %3029 = vmatprep.subr.mxu0 0.0
        %3030 = vmatpush1.msra.mxu0 %v2980
        %3031 = vmatprep.subr.mxu0 0.0
        %3032 = vmatpush2.msra.mxu0 0.0
        %3033 = vmatprep.subr.mxu0 0.0
        %3034 = vmatpush2.msra.mxu0 0.0
        %3035 = vmatprep.subr.mxu0 0.0
        %3036 = vmatpush2.msra.mxu0 0.0
        %3037 = vmatprep.subr.mxu0 0.0
        %3038 = vmatpush2.msra.mxu0 0.0
        %3039 = vmatprep.subr.mxu0 0.0
        %3040 = vmatpush2.msra.mxu0 0.0
        %3041 = vmatprep.subr.mxu0 0.0
        %3042 = vmatpush2.msra.mxu0 0.0
        %3043 = vmatprep.subr.mxu0 0.0
        %3044 = vmatpush2.msra.mxu0 0.0
        %3045 = vmatprep.subr.mxu0 0.0
        %3046 = vmatpush2.msra.mxu0 0.0
        %3047 = vmatprep.subr.mxu0 0.0
        %3048 = vmatpush2.msra.mxu0 0.0
        %3049 = vmatprep.subr.mxu0 0.0
        %3050 = vmatpush2.msra.mxu0 0.0
        %3051 = vmatprep.subr.mxu0 0.0
        %3052 = vmatpush2.msra.mxu0 0.0
        %3053 = vmatprep.subr.mxu0 0.0
        %3054 = vmatpush2.msra.mxu0 0.0
        %3055 = vmatprep.subr.mxu0 0.0
        %3056 = vmatpush2.msra.mxu0 0.0
        %3057 = vmatprep.subr.mxu0 0.0
        %3058 = vmatpush2.msra.mxu0 0.0
        %3059 = vmatprep.subr.mxu0 0.0
        %3060 = vmatpush2.msra.mxu0 0.0
        %3061 = vmatprep.subr.mxu0 0.0
        %3062 = vmatpush2.msra.mxu0 0.0
        %3063 = vmatprep.mubr.f32.mxu0 0.0
        %3064 = vmatmul.mubr.f32.gmra.mxu0 %v2997
        %v3065 = vpop.f32.mrf.mxu0
        %v3066 = vadd.f32 %v2993, %v3065
        %v3067 = vpop.f32.mrf.mxu0
        %3068 = vdwg.mxu0
        %v3069 = vadd.f32 %v2894, %v3066
        %v3070 = vld [vmem:[%s22] sm:$0x1]
        %v3071 = vld [vmem:[%s23] sm:$0x1]
        %v3072 = vsel %vm1056, %v3069, 0.0
        %3073 = vadd.xlane.f32.xlu0 %v3072
        %v3074 = vpop.xlane.xlu0 %3073
        %v3075 = vmul.f32 %v3074, %v1906
        %v3076 = vsub.f32 %v3069, %v3075
        %v3077 = vmul.f32 %v3076, %v3076
        %v3078 = vsel %vm1056, %v3077, 0.0
        %3079 = vadd.xlane.f32.xlu0 %v3078
        %v3080 = vpop.xlane.xlu0 %3079
        %v3081 = vmul.f32 %v3080, %v1906
        %v3082 = vadd.f32 %v3081, 1e-05
        %v3083 = vrsqrt.pop %v3082
        %v3084 = vmul.f32 %v3076, %v3083
        %v3086 = vlaneseq
        %v3087 = vshrl.u32 %v3086, 7
        %v3088 = vsub.s32 0, %v3087
        %v3089 = vrot.slane %v3070, %v3088
        %v3091 = vmul.f32 %v3084, %v3089
        %v3093 = vlaneseq
        %v3094 = vshrl.u32 %v3093, 7
        %v3095 = vsub.s32 0, %v3094
        %v3096 = vrot.slane %v3071, %v3095
        %v3098 = vadd.f32 %v3091, %v3096
        %3099 = vst.msk [vmem:[%s1028] sm:$0xff] %vm1056, %v3098
        %s3100 = sand.u32 %s579, 1
        %s3101 = scalar_lea.sflag [#allocation4], %s3100
        %s3102 = sand.u32 %s579, 1
        %s3103 = smul.addr %s3102, 8
        %s3104 = scalar_lea.vmem [#allocation28], %s3103
        %s3105 = sand.u32 %s57, 1
        %s3106 = scalar_lea.sflag [#allocation30], %s3105
        %s3107 = sand.u32 %s605, 1
        %s3108 = smul.addr %s3107, 32
        %s3109 = scalar_lea.vmem [#allocation29], %s3108
        %s3110 = sand.u32 %s57, 1
        %s3111 = scalar_lea.sflag [#allocation30], %s3110
        %s3112 = sand.u32 %s631, 1
        %s3113 = smul.addr %s3112, 32
        %s3114 = scalar_lea.vmem [#allocation31], %s3113
        // Predicated region
        $region181: #{tpu_custom_call.1} parent=115 // pred_check
          %p3115 = pneg %p589
        $region182: #{tpu_custom_call.1} parent=115 // pred_check_branch
          %3117 = sbr.rel (%p3115) target = $region184
        $region183: #{tpu_custom_call.1} parent=115 // pred_region
          %s3119 = ssub.s32 128, 128
          %3120 = vsyncadd %s3101, %s3119
          %s3121 = smul.addr %s57, 128
          %s3122 = scalar_lea.hbm %s24, %s3121
          %s3124 = sshll.u32 %s3104, 4
          %s3125 = int_to_ptr.vmem [resolvable:$true] %s3124
          %3127 = dma.vmem_to_hbm [thread:$0]  %s3125, 128, %s3122, %s3101
        $region184: #{tpu_custom_call.1} parent=115 // pred_fallthru
          _
        // Predicated region
        $region185: #{tpu_custom_call.1} parent=115 // pred_check
          %p3128 = pneg %p615
        $region186: #{tpu_custom_call.1} parent=115 // pred_check_branch
          %3130 = sbr.rel (%p3128) target = $region188
        $region187: #{tpu_custom_call.1} parent=115 // pred_region
          %s3132 = ssub.s32 512, 512
          %3133 = vsyncadd %s3106, %s3132
          %s3134 = smul.addr %s57, 4
          %s3135 = smul.addr %s3134, 128
          %s3136 = scalar_lea.hbm %s25, %s3135
          %s3137 = sshll.u32 %s3109, 4
          %s3138 = int_to_ptr.vmem [resolvable:$true] %s3137
          %3143 = dma.vmem_to_hbm [thread:$0]  %s3138, 512, %s3136, %s3106, 128, 128, 8
        $region188: #{tpu_custom_call.1} parent=115 // pred_fallthru
          _
        // Predicated region
        $region189: #{tpu_custom_call.1} parent=115 // pred_check
          %p3144 = pneg %p641
        $region190: #{tpu_custom_call.1} parent=115 // pred_check_branch
          %3146 = sbr.rel (%p3144) target = $region192
        $region191: #{tpu_custom_call.1} parent=115 // pred_region
          %s3148 = ssub.s32 512, 512
          %3149 = vsyncadd %s3111, %s3148
          %s3150 = smul.addr %s57, 4
          %s3151 = smul.addr %s3150, 128
          %s3152 = scalar_lea.hbm %s26, %s3151
          %s3153 = sshll.u32 %s3114, 4
          %s3154 = int_to_ptr.vmem [resolvable:$true] %s3153
          %3159 = dma.vmem_to_hbm [thread:$0]  %s3154, 512, %s3152, %s3111, 128, 128, 8
        $region192: #{tpu_custom_call.1} parent=115 // pred_fallthru
          _
      $region116: #{tpu_custom_call.1} parent=5 // pred_fallthru
        _
      %p3160 = scmp.le.s32.totalorder 2, %s52
      // Predicated region
      $region193: #{tpu_custom_call.1} parent=5 // pred_check
        %p3161 = pneg %p3160
      $region194: #{tpu_custom_call.1} parent=5 // pred_check_branch
        %3163 = sbr.rel (%p3161) target = $region196
      $region195: #{tpu_custom_call.1} parent=5 // pred_region
        %s3164 = ssub.s32 %s52, 2
        // Predicated region
        $region197: #{tpu_custom_call.1} parent=195 // pred_check
          %p3165 = pneg %p595
        $region198: #{tpu_custom_call.1} parent=195 // pred_check_branch
          %3167 = sbr.rel (%p3165) target = $region200
        $region199: #{tpu_custom_call.1} parent=195 // pred_region
          %s3168 = sand.u32 %s580, 1
          %s3169 = scalar_lea.sflag [#allocation4], %s3168
          %s3170 = sand.u32 %s580, 1
          %s3171 = smul.addr %s3170, 8
          %s3172 = scalar_lea.vmem [#allocation28], %s3171
          %3173 = dma.done %s3169, 128
        $region200: #{tpu_custom_call.1} parent=195 // pred_fallthru
          _
        // Predicated region
        $region201: #{tpu_custom_call.1} parent=195 // pred_check
          %p3174 = pneg %p621
        $region202: #{tpu_custom_call.1} parent=195 // pred_check_branch
          %3176 = sbr.rel (%p3174) target = $region204
        $region203: #{tpu_custom_call.1} parent=195 // pred_region
          %s3177 = sand.u32 %s58, 1
          %s3178 = scalar_lea.sflag [#allocation30], %s3177
          %s3179 = sand.u32 %s606, 1
          %s3180 = smul.addr %s3179, 32
          %s3181 = scalar_lea.vmem [#allocation29], %s3180
          %3182 = dma.done %s3178, 512
        $region204: #{tpu_custom_call.1} parent=195 // pred_fallthru
          _
        // Predicated region
        $region205: #{tpu_custom_call.1} parent=195 // pred_check
          %p3183 = pneg %p647
        $region206: #{tpu_custom_call.1} parent=195 // pred_check_branch
          %3185 = sbr.rel (%p3183) target = $region208
        $region207: #{tpu_custom_call.1} parent=195 // pred_region
          %s3186 = sand.u32 %s58, 1
          %s3187 = scalar_lea.sflag [#allocation30], %s3186
          %s3188 = sand.u32 %s632, 1
          %s3189 = smul.addr %s3188, 32
          %s3190 = scalar_lea.vmem [#allocation31], %s3189
          %3191 = dma.done %s3187, 512
        $region208: #{tpu_custom_call.1} parent=195 // pred_fallthru
          _
      $region196: #{tpu_custom_call.1} parent=5 // pred_fallthru
        _
    $region6: #{tpu_custom_call.1} parent=1 // loop_footer
      %s56 = sadd.s32 1, %s52
    $region7: #{tpu_custom_call.1} parent=1 // loop_footer_branch
      %51 = sbr.rel target = $region3
    $region8: #{tpu_custom_call.1} parent=1 // loop_exit
      _
    %3192 = vsyncpa [#allocation3], 1
    %s3193 = scalar_lea.sflag [#allocation3], 1
    %3194 = vsyncpa %s3193, 1
    %3195 = vsyncpa [#allocation6], 1
    %s3196 = scalar_lea.sflag [#allocation6], 1
    %3197 = vsyncpa %s3196, 1
    %3198 = vsyncpa [#allocation9], 1
    %3199 = vsyncpa [#allocation12], 1
    %3200 = vsyncpa [#allocation15], 1
    %3201 = vsyncpa [#allocation18], 1
    %3202 = vsyncpa [#allocation21], 1
    %3203 = vsyncpa [#allocation24], 1
    %3204 = vsyncpa [#allocation27], 1
    %3205 = vsyncpa [#allocation4], 1
    %s3206 = scalar_lea.sflag [#allocation4], 1
    %3207 = vsyncpa %s3206, 1
    %3208 = vsyncpa [#allocation30], 1
    %s3209 = scalar_lea.sflag [#allocation30], 1
    %3210 = vsyncpa %s3209, 1

// kernel: tpu_custom_call.1
$region0: #{tpu_custom_call.1}
  #allocation0 [shape = 'u32[]', space=smem, size = 0x4, offset = 0x4, fixed_abs, tag = 'smem constant byte address 0x4 - core index']
  #allocation1 [shape = 'u32[144,128]{1,0:T(1,128)}', space=vmem, size = 0x12000, scoped, tag = 'internal scratch']
  %s0 = inlined_call_operand.hbm [shape: f32[2,8,32], index: 0, kind: input, shape index: {}]
  %s1 = inlined_call_operand.hbm [shape: f32[2,8,32], index: 1, kind: input, shape index: {}]
  %s2 = inlined_call_operand.hbm [shape: bf16[1,8,8], index: 2, kind: input, shape index: {}]
  %s3 = inlined_call_operand.vmem [shape: bf16[1,8,8], index: 3, kind: input, shape index: {}]
  %s4 = inlined_call_operand.vmem [shape: f32[32,96], index: 4, kind: input, shape index: {}]
  %s5 = inlined_call_operand.hbm [shape: f32[1,96], index: 5, kind: input, shape index: {}]
  %s6 = inlined_call_operand.vmem [shape: f32[32,32], index: 6, kind: input, shape index: {}]
  %s7 = inlined_call_operand.hbm [shape: f32[1,32], index: 7, kind: input, shape index: {}]
  %s8 = inlined_call_operand.hbm [shape: f32[1,32], index: 8, kind: input, shape index: {}]
  %s9 = inlined_call_operand.hbm [shape: f32[1,32], index: 9, kind: input, shape index: {}]
  %s10 = inlined_call_operand.vmem [shape: f32[32,32], index: 10, kind: input, shape index: {}]
  %s11 = inlined_call_operand.hbm [shape: f32[1,32], index: 11, kind: input, shape index: {}]
  %s12 = inlined_call_operand.hbm [shape: f32[32,64], index: 12, kind: input, shape index: {}]
  %s13 = inlined_call_operand.hbm [shape: f32[1,64], index: 13, kind: input, shape index: {}]
  %s14 = inlined_call_operand.hbm [shape: f32[32,32], index: 14, kind: input, shape index: {}]
  %s15 = inlined_call_operand.hbm [shape: f32[1,32], index: 15, kind: input, shape index: {}]
  %s16 = inlined_call_operand.hbm [shape: f32[1,32], index: 16, kind: input, shape index: {}]
  %s17 = inlined_call_operand.hbm [shape: f32[1,32], index: 17, kind: input, shape index: {}]
  %s18 = inlined_call_operand.hbm [shape: f32[32,64], index: 18, kind: input, shape index: {}]
  %s19 = inlined_call_operand.hbm [shape: f32[1,64], index: 19, kind: input, shape index: {}]
  %s20 = inlined_call_operand.vmem [shape: f32[64,32], index: 20, kind: input, shape index: {}]
  %s21 = inlined_call_operand.vmem [shape: f32[1,32], index: 21, kind: input, shape index: {}]
  %s22 = inlined_call_operand.vmem [shape: f32[1,32], index: 22, kind: input, shape index: {}]
  %s23 = inlined_call_operand.vmem [shape: f32[1,32], index: 23, kind: input, shape index: {}]
  %s24 = inlined_call_operand.hbm [shape: f32[2,8,32], index: 24, kind: output, shape index: {0}]
  %s25 = inlined_call_operand.hbm [shape: f32[2,4,8,8], index: 25, kind: output, shape index: {1}]
  %s26 = inlined_call_operand.hbm [shape: f32[2,4,8,8], index: 26, kind: output, shape index: {2}]
  %27 = xla_tuple %s24, %s25, %s26
  %s28 = sld [smem:[#allocation0]]
  $region209: #{tpu_custom_call.1} parent=0
    _
  %s30 = ssub.s32 1, %s28
  %s31 = scalar_select 0, %s30, %s28
  $region1: #{tpu_custom_call.1} parent=0
    #allocation2 [shape = 'u8[8192]{0}', space=vmem, size = 0x2000, scoped, tag = 'input window, operand 0']
    #allocation3 [shape = 's32[2]{0}', space=sflag, size = 0x8, scoped, tag = 'scoped memory for tpu_custom_call.1']
    #allocation4 [shape = 's32[2]{0}', space=sflag, size = 0x8, scoped, tag = 'scoped memory for tpu_custom_call.1']
    #allocation5 [shape = 'u8[8192]{0}', space=vmem, size = 0x2000, scoped, tag = 'input window, operand 1']
    #allocation6 [shape = 's32[2]{0}', space=sflag, size = 0x8, scoped, tag = 'scoped memory for tpu_custom_call.1']
    #allocation7 [shape = 'u8[2048]{0}', space=vmem, size = 0x800, scoped, tag = 'input window, operand 2, single buffered']
    #allocation8 [shape = 'u8[512]{0}', space=vmem, size = 0x400, scoped, tag = 'input window, operand 5, single buffered']
    #allocation9 [shape = 's32[1]{0}', space=sflag, size = 0x4, scoped, tag = 'scoped memory for tpu_custom_call.1']
    #allocation10 [shape = 'u8[512]{0}', space=vmem, size = 0x400, scoped, tag = 'input window, operand 7, single buffered']
    #allocation11 [shape = 'u8[512]{0}', space=vmem, size = 0x400, scoped, tag = 'input window, operand 8, single buffered']
    #allocation12 [shape = 's32[1]{0}', space=sflag, size = 0x4, scoped, tag = 'scoped memory for tpu_custom_call.1']
    #allocation13 [shape = 'u8[512]{0}', space=vmem, size = 0x400, scoped, tag = 'input window, operand 9, single buffered']
    #allocation14 [shape = 'u8[512]{0}', space=vmem, size = 0x400, scoped, tag = 'input window, operand 11, single buffered']
    #allocation15 [shape = 's32[1]{0}', space=sflag, size = 0x4, scoped, tag = 'scoped memory for tpu_custom_call.1']
    #allocation16 [shape = 'u8[16384]{0}', space=vmem, size = 0x4000, scoped, tag = 'input window, operand 12, single buffered']
    #allocation17 [shape = 'u8[512]{0}', space=vmem, size = 0x400, scoped, tag = 'input window, operand 13, single buffered']
    #allocation18 [shape = 's32[1]{0}', space=sflag, size = 0x4, scoped, tag = 'scoped memory for tpu_custom_call.1']
    #allocation19 [shape = 'u8[16384]{0}', space=vmem, size = 0x4000, scoped, tag = 'input window, operand 14, single buffered']
    #allocation20 [shape = 'u8[512]{0}', space=vmem, size = 0x400, scoped, tag = 'input window, operand 15, single buffered']
    #allocation21 [shape = 's32[1]{0}', space=sflag, size = 0x4, scoped, tag = 'scoped memory for tpu_custom_call.1']
    #allocation22 [shape = 'u8[512]{0}', space=vmem, size = 0x400, scoped, tag = 'input window, operand 16, single buffered']
    #allocation23 [shape = 'u8[512]{0}', space=vmem, size = 0x400, scoped, tag = 'input window, operand 17, single buffered']
    #allocation24 [shape = 's32[1]{0}', space=sflag, size = 0x4, scoped, tag = 'scoped memory for tpu_custom_call.1']
    #allocation25 [shape = 'u8[16384]{0}', space=vmem, size = 0x4000, scoped, tag = 'input window, operand 18, single buffered']
    #allocation26 [shape = 'u8[512]{0}', space=vmem, size = 0x400, scoped, tag = 'input window, operand 19, single buffered']
    #allocation27 [shape = 's32[1]{0}', space=sflag, size = 0x4, scoped, tag = 'scoped memory for tpu_custom_call.1']
    #allocation28 [shape = 'u8[8192]{0}', space=vmem, size = 0x2000, scoped, tag = 'output window, operand 0']
    #allocation29 [shape = 'u8[32768]{0}', space=vmem, size = 0x8000, scoped, tag = 'output window, operand 1']
    #allocation30 [shape = 's32[2]{0}', space=sflag, size = 0x8, scoped, tag = 'scoped memory for tpu_custom_call.1']
    #allocation31 [shape = 'u8[32768]{0}', space=vmem, size = 0x8000, scoped, tag = 'output window, operand 2']
    %32 = vsyncpa [#allocation3], 0
    %s33 = scalar_lea.sflag [#allocation3], 1
    %34 = vsyncpa %s33, 0
    %35 = vsyncpa [#allocation6], 0
    %s36 = scalar_lea.sflag [#allocation6], 1
    %37 = vsyncpa %s36, 0
    %38 = vsyncpa [#allocation9], 0
    %39 = vsyncpa [#allocation12], 0
    %40 = vsyncpa [#allocation15], 0
    %41 = vsyncpa [#allocation18], 0
    %42 = vsyncpa [#allocation21], 0
    %43 = vsyncpa [#allocation24], 0
    %44 = vsyncpa [#allocation27], 0
    %45 = vsyncpa [#allocation4], 0
    %s46 = scalar_lea.sflag [#allocation4], 1
    %47 = vsyncpa %s46, 0
    %48 = vsyncpa [#allocation30], 0
    %s49 = scalar_lea.sflag [#allocation30], 1
    %50 = vsyncpa %s49, 0
    loop: start=0, step=1, limit=4
    $region2: #{tpu_custom_call.1} parent=1 // loop_pre_header
      _
    $region3: #{tpu_custom_call.1} parent=1 // loop_header
      %s52 = sphi 0, %s56
      %p53 = scmp.ge.s32.totalorder %s52, 4
      %s62 = sphi 0, %s64
      %s65 = sphi 0, %s62
      %s66 = sphi 0, %s65
      %s82 = sphi 0, %s66
      %s88 = sphi 0, %s90
      %s91 = sphi 0, %s88
      %s92 = sphi 0, %s91
      %s108 = sphi 0, %s92
      %s112 = sphi 0, %s112
      %s114 = sphi 0, %s112
      %s115 = sphi 0, %s114
      %s129 = sphi 0, %s115
      %s133 = sphi 0, %s133
      %s135 = sphi 0, %s133
      %s136 = sphi 0, %s135
      %s150 = sphi 0, %s136
      %s154 = sphi 0, %s154
      %s156 = sphi 0, %s154
      %s157 = sphi 0, %s156
      %s171 = sphi 0, %s157
      %s175 = sphi 0, %s175
      %s177 = sphi 0, %s175
      %s178 = sphi 0, %s177
      %s192 = sphi 0, %s178
      %s196 = sphi 0, %s196
      %s198 = sphi 0, %s196
      %s199 = sphi 0, %s198
      %s213 = sphi 0, %s199
      %s217 = sphi 0, %s217
      %s219 = sphi 0, %s217
      %s220 = sphi 0, %s219
      %s234 = sphi 0, %s220
      %s238 = sphi 0, %s238
      %s240 = sphi 0, %s238
      %s241 = sphi 0, %s240
      %s255 = sphi 0, %s241
      %s259 = sphi 0, %s259
      %s261 = sphi 0, %s259
      %s262 = sphi 0, %s261
      %s276 = sphi 0, %s262
      %s280 = sphi 0, %s280
      %s282 = sphi 0, %s280
      %s283 = sphi 0, %s282
      %s297 = sphi 0, %s283
      %s301 = sphi 0, %s301
      %s303 = sphi 0, %s301
      %s304 = sphi 0, %s303
      %s318 = sphi 0, %s304
      %s322 = sphi 0, %s322
      %s324 = sphi 0, %s322
      %s325 = sphi 0, %s324
      %s339 = sphi 0, %s325
      %s343 = sphi 0, %s343
      %s345 = sphi 0, %s343
      %s346 = sphi 0, %s345
      %s360 = sphi 0, %s346
      %s364 = sphi 0, %s364
      %s366 = sphi 0, %s364
      %s367 = sphi 0, %s366
      %s381 = sphi 0, %s367
      %s385 = sphi 0, %s385
      %s387 = sphi 0, %s385
      %s388 = sphi 0, %s387
      %s402 = sphi 0, %s388
      %s406 = sphi 0, %s406
      %s408 = sphi 0, %s406
      %s409 = sphi 0, %s408
      %s423 = sphi 0, %s409
      %s427 = sphi 0, %s427
      %s429 = sphi 0, %s427
      %s430 = sphi 0, %s429
      %s444 = sphi 0, %s430
      %s448 = sphi 0, %s448
      %s450 = sphi 0, %s448
      %s451 = sphi 0, %s450
      %s465 = sphi 0, %s451
      %s469 = sphi 0, %s469
      %s471 = sphi 0, %s469
      %s472 = sphi 0, %s471
      %s486 = sphi 0, %s472
      %s490 = sphi 0, %s490
      %s492 = sphi 0, %s490
      %s493 = sphi 0, %s492
      %s507 = sphi 0, %s493
      %s511 = sphi 0, %s511
      %s513 = sphi 0, %s511
      %s514 = sphi 0, %s513
      %s528 = sphi 0, %s514
      %s532 = sphi 0, %s532
      %s534 = sphi 0, %s532
      %s535 = sphi 0, %s534
      %s549 = sphi 0, %s535
      %s553 = sphi 0, %s553
      %s555 = sphi 0, %s553
      %s556 = sphi 0, %s555
      %s570 = sphi 0, %s556
      %s576 = sphi 0, %s578
      %s579 = sphi 0, %s576
      %s580 = sphi 0, %s579
      %s596 = sphi 0, %s580
      %s602 = sphi 0, %s604
      %s605 = sphi 0, %s602
      %s606 = sphi 0, %s605
      %s622 = sphi 0, %s606
      %s628 = sphi 0, %s630
      %s631 = sphi 0, %s628
      %s632 = sphi 0, %s631
      %s648 = sphi 0, %s632
    $region4: #{tpu_custom_call.1} parent=1 // loop_header_branch
      %55 = sbr.rel (%p53) target = $region8
    $region5: #{tpu_custom_call.1} parent=1 // loop_body
      %s57 = ssub.s32 %s52, 1
      %s58 = ssub.s32 %s52, 2
      %s59 = sadd.s32 %s52, 1
      %s60 = ssub.s32 %s52, %s59
      %p61 = scmp.eq.s32.totalorder %s60, 0
      %s63 = sadd.s32 %s62, 1
      %s64 = scalar_select %p61, %s62, %s63
      %p67 = pneg %p61
      %p68 = scmp.eq.s32.totalorder %s52, 1
      %p69 = por %p67, %p68
      %p70 = scmp.ne.s32.totalorder %s62, %s65
      %p71 = scmp.eq.s32.totalorder %s52, 0
      %p72 = por %p70, %p71
      %p73 = scmp.ne.s32.totalorder %s62, %s65
      %p74 = scmp.eq.s32.totalorder %s57, 1
      %p75 = por %p73, %p74
      %p76 = scmp.ne.s32.totalorder %s65, %s66
      %p77 = scmp.eq.s32.totalorder %s57, 0
      %p78 = por %p76, %p77
      %p79 = scmp.ne.s32.totalorder %s65, %s66
      %p80 = scmp.eq.s32.totalorder %s58, 1
      %p81 = por %p79, %p80
      %p83 = scmp.ne.s32.totalorder %s66, %s82
      %p84 = scmp.eq.s32.totalorder %s58, 0
      %p85 = por %p83, %p84
      %s86 = ssub.s32 %s52, %s59
      %p87 = scmp.eq.s32.totalorder %s86, 0
      %s89 = sadd.s32 %s88, 1
      %s90 = scalar_select %p87, %s88, %s89
      %p93 = pneg %p87
      %p94 = scmp.eq.s32.totalorder %s52, 1
      %p95 = por %p93, %p94
      %p96 = scmp.ne.s32.totalorder %s88, %s91
      %p97 = scmp.eq.s32.totalorder %s52, 0
      %p98 = por %p96, %p97
      %p99 = scmp.ne.s32.totalorder %s88, %s91
      %p100 = scmp.eq.s32.totalorder %s57, 1
      %p101 = por %p99, %p100
      %p102 = scmp.ne.s32.totalorder %s91, %s92
      %p103 = scmp.eq.s32.totalorder %s57, 0
      %p104 = por %p102, %p103
      %p105 = scmp.ne.s32.totalorder %s91, %s92
      %p106 = scmp.eq.s32.totalorder %s58, 1
      %p107 = por %p105, %p106
      %p109 = scmp.ne.s32.totalorder %s92, %s108
      %p110 = scmp.eq.s32.totalorder %s58, 0
      %p111 = por %p109, %p110
      %s113 = sadd.s32 %s112, 1
      %p116 = scmp.eq.s32.totalorder %s52, 1
      %p117 = scmp.ne.s32.totalorder %s112, %s114
      %p118 = scmp.eq.s32.totalorder %s52, 0
      %p119 = por %p117, %p118
      %p120 = scmp.ne.s32.totalorder %s112, %s114
      %p121 = scmp.eq.s32.totalorder %s57, 1
      %p122 = por %p120, %p121
      %p123 = scmp.ne.s32.totalorder %s114, %s115
      %p124 = scmp.eq.s32.totalorder %s57, 0
      %p125 = por %p123, %p124
      %p126 = scmp.ne.s32.totalorder %s114, %s115
      %p127 = scmp.eq.s32.totalorder %s58, 1
      %p128 = por %p126, %p127
      %p130 = scmp.ne.s32.totalorder %s115, %s129
      %p131 = scmp.eq.s32.totalorder %s58, 0
      %p132 = por %p130, %p131
      %s134 = sadd.s32 %s133, 1
      %p137 = scmp.eq.s32.totalorder %s52, 1
      %p138 = scmp.ne.s32.totalorder %s133, %s135
      %p139 = scmp.eq.s32.totalorder %s52, 0
      %p140 = por %p138, %p139
      %p141 = scmp.ne.s32.totalorder %s133, %s135
      %p142 = scmp.eq.s32.totalorder %s57, 1
      %p143 = por %p141, %p142
      %p144 = scmp.ne.s32.totalorder %s135, %s136
      %p145 = scmp.eq.s32.totalorder %s57, 0
      %p146 = por %p144, %p145
      %p147 = scmp.ne.s32.totalorder %s135, %s136
      %p148 = scmp.eq.s32.totalorder %s58, 1
      %p149 = por %p147, %p148
      %p151 = scmp.ne.s32.totalorder %s136, %s150
      %p152 = scmp.eq.s32.totalorder %s58, 0
      %p153 = por %p151, %p152
      %s155 = sadd.s32 %s154, 1
      %p158 = scmp.eq.s32.totalorder %s52, 1
      %p159 = scmp.ne.s32.totalorder %s154, %s156
      %p160 = scmp.eq.s32.totalorder %s52, 0
      %p161 = por %p159, %p160
      %p162 = scmp.ne.s32.totalorder %s154, %s156
      %p163 = scmp.eq.s32.totalorder %s57, 1
      %p164 = por %p162, %p163
      %p165 = scmp.ne.s32.totalorder %s156, %s157
      %p166 = scmp.eq.s32.totalorder %s57, 0
      %p167 = por %p165, %p166
      %p168 = scmp.ne.s32.totalorder %s156, %s157
      %p169 = scmp.eq.s32.totalorder %s58, 1
      %p170 = por %p168, %p169
      %p172 = scmp.ne.s32.totalorder %s157, %s171
      %p173 = scmp.eq.s32.totalorder %s58, 0
      %p174 = por %p172, %p173
      %s176 = sadd.s32 %s175, 1
      %p179 = scmp.eq.s32.totalorder %s52, 1
      %p180 = scmp.ne.s32.totalorder %s175, %s177
      %p181 = scmp.eq.s32.totalorder %s52, 0
      %p182 = por %p180, %p181
      %p183 = scmp.ne.s32.totalorder %s175, %s177
      %p184 = scmp.eq.s32.totalorder %s57, 1
      %p185 = por %p183, %p184
      %p186 = scmp.ne.s32.totalorder %s177, %s178
      %p187 = scmp.eq.s32.totalorder %s57, 0
      %p188 = por %p186, %p187
      %p189 = scmp.ne.s32.totalorder %s177, %s178
      %p190 = scmp.eq.s32.totalorder %s58, 1
      %p191 = por %p189, %p190
      %p193 = scmp.ne.s32.totalorder %s178, %s192
      %p194 = scmp.eq.s32.totalorder %s58, 0
      %p195 = por %p193, %p194
      %s197 = sadd.s32 %s196, 1
      %p200 = scmp.eq.s32.totalorder %s52, 1
      %p201 = scmp.ne.s32.totalorder %s196, %s198
      %p202 = scmp.eq.s32.totalorder %s52, 0
      %p203 = por %p201, %p202
      %p204 = scmp.ne.s32.totalorder %s196, %s198
      %p205 = scmp.eq.s32.totalorder %s57, 1
      %p206 = por %p204, %p205
      %p207 = scmp.ne.s32.totalorder %s198, %s199
      %p208 = scmp.eq.s32.totalorder %s57, 0
      %p209 = por %p207, %p208
      %p210 = scmp.ne.s32.totalorder %s198, %s199
      %p211 = scmp.eq.s32.totalorder %s58, 1
      %p212 = por %p210, %p211
      %p214 = scmp.ne.s32.totalorder %s199, %s213
      %p215 = scmp.eq.s32.totalorder %s58, 0
      %p216 = por %p214, %p215
      %s218 = sadd.s32 %s217, 1
      %p221 = scmp.eq.s32.totalorder %s52, 1
      %p222 = scmp.ne.s32.totalorder %s217, %s219
      %p223 = scmp.eq.s32.totalorder %s52, 0
      %p224 = por %p222, %p223
      %p225 = scmp.ne.s32.totalorder %s217, %s219
      %p226 = scmp.eq.s32.totalorder %s57, 1
      %p227 = por %p225, %p226
      %p228 = scmp.ne.s32.totalorder %s219, %s220
      %p229 = scmp.eq.s32.totalorder %s57, 0
      %p230 = por %p228, %p229
      %p231 = scmp.ne.s32.totalorder %s219, %s220
      %p232 = scmp.eq.s32.totalorder %s58, 1
      %p233 = por %p231, %p232
      %p235 = scmp.ne.s32.totalorder %s220, %s234
      %p236 = scmp.eq.s32.totalorder %s58, 0
      %p237 = por %p235, %p236
      %s239 = sadd.s32 %s238, 1
      %p242 = scmp.eq.s32.totalorder %s52, 1
      %p243 = scmp.ne.s32.totalorder %s238, %s240
      %p244 = scmp.eq.s32.totalorder %s52, 0
      %p245 = por %p243, %p244
      %p246 = scmp.ne.s32.totalorder %s238, %s240
      %p247 = scmp.eq.s32.totalorder %s57, 1
      %p248 = por %p246, %p247
      %p249 = scmp.ne.s32.totalorder %s240, %s241
      %p250 = scmp.eq.s32.totalorder %s57, 0
      %p251 = por %p249, %p250
      %p252 = scmp.ne.s32.totalorder %s240, %s241
      %p253 = scmp.eq.s32.totalorder %s58, 1
      %p254 = por %p252, %p253
      %p256 = scmp.ne.s32.totalorder %s241, %s255
      %p257 = scmp.eq.s32.totalorder %s58, 0
      %p258 = por %p256, %p257
      %s260 = sadd.s32 %s259, 1
      %p263 = scmp.eq.s32.totalorder %s52, 1
      %p264 = scmp.ne.s32.totalorder %s259, %s261
      %p265 = scmp.eq.s32.totalorder %s52, 0
      %p266 = por %p264, %p265
      %p267 = scmp.ne.s32.totalorder %s259, %s261
      %p268 = scmp.eq.s32.totalorder %s57, 1
      %p269 = por %p267, %p268
      %p270 = scmp.ne.s32.totalorder %s261, %s262
      %p271 = scmp.eq.s32.totalorder %s57, 0
      %p272 = por %p270, %p271
      %p273 = scmp.ne.s32.totalorder %s261, %s262
      %p274 = scmp.eq.s32.totalorder %s58, 1
      %p275 = por %p273, %p274
      %p277 = scmp.ne.s32.totalorder %s262, %s276
      %p278 = scmp.eq.s32.totalorder %s58, 0
      %p279 = por %p277, %p278
      %s281 = sadd.s32 %s280, 1
      %p284 = scmp.eq.s32.totalorder %s52, 1
      %p285 = scmp.ne.s32.totalorder %s280, %s282
      %p286 = scmp.eq.s32.totalorder %s52, 0
      %p287 = por %p285, %p286
      %p288 = scmp.ne.s32.totalorder %s280, %s282
      %p289 = scmp.eq.s32.totalorder %s57, 1
      %p290 = por %p288, %p289
      %p291 = scmp.ne.s32.totalorder %s282, %s283
      %p292 = scmp.eq.s32.totalorder %s57, 0
      %p293 = por %p291, %p292
      %p294 = scmp.ne.s32.totalorder %s282, %s283
      %p295 = scmp.eq.s32.totalorder %s58, 1
      %p296 = por %p294, %p295
      %p298 = scmp.ne.s32.totalorder %s283, %s297
      %p299 = scmp.eq.s32.totalorder %s58, 0
      %p300 = por %p298, %p299
      %s302 = sadd.s32 %s301, 1
      %p305 = scmp.eq.s32.totalorder %s52, 1
      %p306 = scmp.ne.s32.totalorder %s301, %s303
      %p307 = scmp.eq.s32.totalorder %s52, 0
      %p308 = por %p306, %p307
      %p309 = scmp.ne.s32.totalorder %s301, %s303
      %p310 = scmp.eq.s32.totalorder %s57, 1
      %p311 = por %p309, %p310
      %p312 = scmp.ne.s32.totalorder %s303, %s304
      %p313 = scmp.eq.s32.totalorder %s57, 0
      %p314 = por %p312, %p313
      %p315 = scmp.ne.s32.totalorder %s303, %s304
      %p316 = scmp.eq.s32.totalorder %s58, 1
      %p317 = por %p315, %p316
      %p319 = scmp.ne.s32.totalorder %s304, %s318
      %p320 = scmp.eq.s32.totalorder %s58, 0
      %p321 = por %p319, %p320
      %s323 = sadd.s32 %s322, 1
      %p326 = scmp.eq.s32.totalorder %s52, 1
      %p327 = scmp.ne.s32.totalorder %s322, %s324
      %p328 = scmp.eq.s32.totalorder %s52, 0
      %p329 = por %p327, %p328
      %p330 = scmp.ne.s32.totalorder %s322, %s324
      %p331 = scmp.eq.s32.totalorder %s57, 1
      %p332 = por %p330, %p331
      %p333 = scmp.ne.s32.totalorder %s324, %s325
      %p334 = scmp.eq.s32.totalorder %s57, 0
      %p335 = por %p333, %p334
      %p336 = scmp.ne.s32.totalorder %s324, %s325
      %p337 = scmp.eq.s32.totalorder %s58, 1
      %p338 = por %p336, %p337
      %p340 = scmp.ne.s32.totalorder %s325, %s339
      %p341 = scmp.eq.s32.totalorder %s58, 0
      %p342 = por %p340, %p341
      %s344 = sadd.s32 %s343, 1
      %p347 = scmp.eq.s32.totalorder %s52, 1
      %p348 = scmp.ne.s32.totalorder %s343, %s345
      %p349 = scmp.eq.s32.totalorder %s52, 0
      %p350 = por %p348, %p349
      %p351 = scmp.ne.s32.totalorder %s343, %s345
      %p352 = scmp.eq.s32.totalorder %s57, 1
      %p353 = por %p351, %p352
      %p354 = scmp.ne.s32.totalorder %s345, %s346
      %p355 = scmp.eq.s32.totalorder %s57, 0
      %p356 = por %p354, %p355
      %p357 = scmp.ne.s32.totalorder %s345, %s346
      %p358 = scmp.eq.s32.totalorder %s58, 1
      %p359 = por %p357, %p358
      %p361 = scmp.ne.s32.totalorder %s346, %s360
      %p362 = scmp.eq.s32.totalorder %s58, 0
      %p363 = por %p361, %p362
      %s365 = sadd.s32 %s364, 1
      %p368 = scmp.eq.s32.totalorder %s52, 1
      %p369 = scmp.ne.s32.totalorder %s364, %s366
      %p370 = scmp.eq.s32.totalorder %s52, 0
      %p371 = por %p369, %p370
      %p372 = scmp.ne.s32.totalorder %s364, %s366
      %p373 = scmp.eq.s32.totalorder %s57, 1
      %p374 = por %p372, %p373
      %p375 = scmp.ne.s32.totalorder %s366, %s367
      %p376 = scmp.eq.s32.totalorder %s57, 0
      %p377 = por %p375, %p376
      %p378 = scmp.ne.s32.totalorder %s366, %s367
      %p379 = scmp.eq.s32.totalorder %s58, 1
      %p380 = por %p378, %p379
      %p382 = scmp.ne.s32.totalorder %s367, %s381
      %p383 = scmp.eq.s32.totalorder %s58, 0
      %p384 = por %p382, %p383
      %s386 = sadd.s32 %s385, 1
      %p389 = scmp.eq.s32.totalorder %s52, 1
      %p390 = scmp.ne.s32.totalorder %s385, %s387
      %p391 = scmp.eq.s32.totalorder %s52, 0
      %p392 = por %p390, %p391
      %p393 = scmp.ne.s32.totalorder %s385, %s387
      %p394 = scmp.eq.s32.totalorder %s57, 1
      %p395 = por %p393, %p394
      %p396 = scmp.ne.s32.totalorder %s387, %s388
      %p397 = scmp.eq.s32.totalorder %s57, 0
      %p398 = por %p396, %p397
      %p399 = scmp.ne.s32.totalorder %s387, %s388
      %p400 = scmp.eq.s32.totalorder %s58, 1
      %p401 = por %p399, %p400
      %p403 = scmp.ne.s32.totalorder %s388, %s402
      %p404 = scmp.eq.s32.totalorder %s58, 0
      %p405 = por %p403, %p404
      %s407 = sadd.s32 %s406, 1
      %p410 = scmp.eq.s32.totalorder %s52, 1
      %p411 = scmp.ne.s32.totalorder %s406, %s408
      %p412 = scmp.eq.s32.totalorder %s52, 0
      %p413 = por %p411, %p412
      %p414 = scmp.ne.s32.totalorder %s406, %s408
      %p415 = scmp.eq.s32.totalorder %s57, 1
      %p416 = por %p414, %p415
      %p417 = scmp.ne.s32.totalorder %s408, %s409
      %p418 = scmp.eq.s32.totalorder %s57, 0
      %p419 = por %p417, %p418
      %p420 = scmp.ne.s32.totalorder %s408, %s409
      %p421 = scmp.eq.s32.totalorder %s58, 1
      %p422 = por %p420, %p421
      %p424 = scmp.ne.s32.totalorder %s409, %s423
      %p425 = scmp.eq.s32.totalorder %s58, 0
      %p426 = por %p424, %p425
      %s428 = sadd.s32 %s427, 1
      %p431 = scmp.eq.s32.totalorder %s52, 1
      %p432 = scmp.ne.s32.totalorder %s427, %s429
      %p433 = scmp.eq.s32.totalorder %s52, 0
      %p434 = por %p432, %p433
      %p435 = scmp.ne.s32.totalorder %s427, %s429
      %p436 = scmp.eq.s32.totalorder %s57, 1
      %p437 = por %p435, %p436
      %p438 = scmp.ne.s32.totalorder %s429, %s430
      %p439 = scmp.eq.s32.totalorder %s57, 0
      %p440 = por %p438, %p439
      %p441 = scmp.ne.s32.totalorder %s429, %s430
      %p442 = scmp.eq.s32.totalorder %s58, 1
      %p443 = por %p441, %p442
      %p445 = scmp.ne.s32.totalorder %s430, %s444
      %p446 = scmp.eq.s32.totalorder %s58, 0
      %p447 = por %p445, %p446
      %s449 = sadd.s32 %s448, 1
      %p452 = scmp.eq.s32.totalorder %s52, 1
      %p453 = scmp.ne.s32.totalorder %s448, %s450
      %p454 = scmp.eq.s32.totalorder %s52, 0
      %p455 = por %p453, %p454
      %p456 = scmp.ne.s32.totalorder %s448, %s450
      %p457 = scmp.eq.s32.totalorder %s57, 1
      %p458 = por %p456, %p457
      %p459 = scmp.ne.s32.totalorder %s450, %s451
      %p460 = scmp.eq.s32.totalorder %s57, 0
      %p461 = por %p459, %p460
      %p462 = scmp.ne.s32.totalorder %s450, %s451
      %p463 = scmp.eq.s32.totalorder %s58, 1
      %p464 = por %p462, %p463
      %p466 = scmp.ne.s32.totalorder %s451, %s465
      %p467 = scmp.eq.s32.totalorder %s58, 0
      %p468 = por %p466, %p467
      %s470 = sadd.s32 %s469, 1
      %p473 = scmp.eq.s32.totalorder %s52, 1
      %p474 = scmp.ne.s32.totalorder %s469, %s471
      %p475 = scmp.eq.s32.totalorder %s52, 0
      %p476 = por %p474, %p475
      %p477 = scmp.ne.s32.totalorder %s469, %s471
      %p478 = scmp.eq.s32.totalorder %s57, 1
      %p479 = por %p477, %p478
      %p480 = scmp.ne.s32.totalorder %s471, %s472
      %p481 = scmp.eq.s32.totalorder %s57, 0
      %p482 = por %p480, %p481
      %p483 = scmp.ne.s32.totalorder %s471, %s472
      %p484 = scmp.eq.s32.totalorder %s58, 1
      %p485 = por %p483, %p484
      %p487 = scmp.ne.s32.totalorder %s472, %s486
      %p488 = scmp.eq.s32.totalorder %s58, 0
      %p489 = por %p487, %p488
      %s491 = sadd.s32 %s490, 1
      %p494 = scmp.eq.s32.totalorder %s52, 1
      %p495 = scmp.ne.s32.totalorder %s490, %s492
      %p496 = scmp.eq.s32.totalorder %s52, 0
      %p497 = por %p495, %p496
      %p498 = scmp.ne.s32.totalorder %s490, %s492
      %p499 = scmp.eq.s32.totalorder %s57, 1
      %p500 = por %p498, %p499
      %p501 = scmp.ne.s32.totalorder %s492, %s493
      %p502 = scmp.eq.s32.totalorder %s57, 0
      %p503 = por %p501, %p502
      %p504 = scmp.ne.s32.totalorder %s492, %s493
      %p505 = scmp.eq.s32.totalorder %s58, 1
      %p506 = por %p504, %p505
      %p508 = scmp.ne.s32.totalorder %s493, %s507
      %p509 = scmp.eq.s32.totalorder %s58, 0
      %p510 = por %p508, %p509
      %s512 = sadd.s32 %s511, 1
      %p515 = scmp.eq.s32.totalorder %s52, 1
      %p516 = scmp.ne.s32.totalorder %s511, %s513
      %p517 = scmp.eq.s32.totalorder %s52, 0
      %p518 = por %p516, %p517
      %p519 = scmp.ne.s32.totalorder %s511, %s513
      %p520 = scmp.eq.s32.totalorder %s57, 1
      %p521 = por %p519, %p520
      %p522 = scmp.ne.s32.totalorder %s513, %s514
      %p523 = scmp.eq.s32.totalorder %s57, 0
      %p524 = por %p522, %p523
      %p525 = scmp.ne.s32.totalorder %s513, %s514
      %p526 = scmp.eq.s32.totalorder %s58, 1
      %p527 = por %p525, %p526
      %p529 = scmp.ne.s32.totalorder %s514, %s528
      %p530 = scmp.eq.s32.totalorder %s58, 0
      %p531 = por %p529, %p530
      %s533 = sadd.s32 %s532, 1
      %p536 = scmp.eq.s32.totalorder %s52, 1
      %p537 = scmp.ne.s32.totalorder %s532, %s534
      %p538 = scmp.eq.s32.totalorder %s52, 0
      %p539 = por %p537, %p538
      %p540 = scmp.ne.s32.totalorder %s532, %s534
      %p541 = scmp.eq.s32.totalorder %s57, 1
      %p542 = por %p540, %p541
      %p543 = scmp.ne.s32.totalorder %s534, %s535
      %p544 = scmp.eq.s32.totalorder %s57, 0
      %p545 = por %p543, %p544
      %p546 = scmp.ne.s32.totalorder %s534, %s535
      %p547 = scmp.eq.s32.totalorder %s58, 1
      %p548 = por %p546, %p547
      %p550 = scmp.ne.s32.totalorder %s535, %s549
      %p551 = scmp.eq.s32.totalorder %s58, 0
      %p552 = por %p550, %p551
      %s554 = sadd.s32 %s553, 1
      %p557 = scmp.eq.s32.totalorder %s52, 1
      %p558 = scmp.ne.s32.totalorder %s553, %s555
      %p559 = scmp.eq.s32.totalorder %s52, 0
      %p560 = por %p558, %p559
      %p561 = scmp.ne.s32.totalorder %s553, %s555
      %p562 = scmp.eq.s32.totalorder %s57, 1
      %p563 = por %p561, %p562
      %p564 = scmp.ne.s32.totalorder %s555, %s556
      %p565 = scmp.eq.s32.totalorder %s57, 0
      %p566 = por %p564, %p565
      %p567 = scmp.ne.s32.totalorder %s555, %s556
      %p568 = scmp.eq.s32.totalorder %s58, 1
      %p569 = por %p567, %p568
      %p571 = scmp.ne.s32.totalorder %s556, %s570
      %p572 = scmp.eq.s32.totalorder %s58, 0
      %p573 = por %p571, %p572
      %s574 = ssub.s32 %s52, %s59
      %p575 = scmp.eq.s32.totalorder %s574, 0
      %s577 = sadd.s32 %s576, 1
      %s578 = scalar_select %p575, %s576, %s577
      %p581 = pneg %p575
      %p582 = scmp.eq.s32.totalorder %s52, 1
      %p583 = por %p581, %p582
      %p584 = scmp.ne.s32.totalorder %s576, %s579
      %p585 = scmp.eq.s32.totalorder %s52, 0
      %p586 = por %p584, %p585
      %p587 = scmp.ne.s32.totalorder %s576, %s579
      %p588 = scmp.eq.s32.totalorder %s57, 1
      %p589 = por %p587, %p588
      %p590 = scmp.ne.s32.totalorder %s579, %s580
      %p591 = scmp.eq.s32.totalorder %s57, 0
      %p592 = por %p590, %p591
      %p593 = scmp.ne.s32.totalorder %s579, %s580
      %p594 = scmp.eq.s32.totalorder %s58, 1
      %p595 = por %p593, %p594
      %p597 = scmp.ne.s32.totalorder %s580, %s596
      %p598 = scmp.eq.s32.totalorder %s58, 0
      %p599 = por %p597, %p598
      %s600 = ssub.s32 %s52, %s59
      %p601 = scmp.eq.s32.totalorder %s600, 0
      %s603 = sadd.s32 %s602, 1
      %s604 = scalar_select %p601, %s602, %s603
      %p607 = pneg %p601
      %p608 = scmp.eq.s32.totalorder %s52, 1
      %p609 = por %p607, %p608
      %p610 = scmp.ne.s32.totalorder %s602, %s605
      %p611 = scmp.eq.s32.totalorder %s52, 0
      %p612 = por %p610, %p611
      %p613 = scmp.ne.s32.totalorder %s602, %s605
      %p614 = scmp.eq.s32.totalorder %s57, 1
      %p615 = por %p613, %p614
      %p616 = scmp.ne.s32.totalorder %s605, %s606
      %p617 = scmp.eq.s32.totalorder %s57, 0
      %p618 = por %p616, %p617
      %p619 = scmp.ne.s32.totalorder %s605, %s606
      %p620 = scmp.eq.s32.totalorder %s58, 1
      %p621 = por %p619, %p620
      %p623 = scmp.ne.s32.totalorder %s606, %s622
      %p624 = scmp.eq.s32.totalorder %s58, 0
      %p625 = por %p623, %p624
      %s626 = ssub.s32 %s52, %s59
      %p627 = scmp.eq.s32.totalorder %s626, 0
      %s629 = sadd.s32 %s628, 1
      %s630 = scalar_select %p627, %s628, %s629
      %p633 = pneg %p627
      %p634 = scmp.eq.s32.totalorder %s52, 1
      %p635 = por %p633, %p634
      %p636 = scmp.ne.s32.totalorder %s628, %s631
      %p637 = scmp.eq.s32.totalorder %s52, 0
      %p638 = por %p636, %p637
      %p639 = scmp.ne.s32.totalorder %s628, %s631
      %p640 = scmp.eq.s32.totalorder %s57, 1
      %p641 = por %p639, %p640
      %p642 = scmp.ne.s32.totalorder %s631, %s632
      %p643 = scmp.eq.s32.totalorder %s57, 0
      %p644 = por %p642, %p643
      %p645 = scmp.ne.s32.totalorder %s631, %s632
      %p646 = scmp.eq.s32.totalorder %s58, 1
      %p647 = por %p645, %p646
      %p649 = scmp.ne.s32.totalorder %s632, %s648
      %p650 = scmp.eq.s32.totalorder %s58, 0
      %p651 = por %p649, %p650
      %p652 = scmp.le.s32.totalorder 1, %s52
      %p653 = scmp.lt.s32.totalorder %s52, 3
      %p654 = pnand %p652, %p653
      %p655 = pneg %p654
      // Predicated region
      $region9: #{tpu_custom_call.1} parent=5 // pred_check
        _
      $region10: #{tpu_custom_call.1} parent=5 // pred_check_branch
        %657 = sbr.rel (%p654) target = $region12
      $region11: #{tpu_custom_call.1} parent=5 // pred_region
        %s658 = ssub.s32 %s52, 1
        // Predicated region
        $region13: #{tpu_custom_call.1} parent=11 // pred_check
          %p659 = pneg %p125
        $region14: #{tpu_custom_call.1} parent=11 // pred_check_branch
          %661 = sbr.rel (%p659) target = $region16
        $region15: #{tpu_custom_call.1} parent=11 // pred_region
          %s663 = ssub.s32 64, 64
          %664 = vsyncadd [#allocation6], %s663
          %s666 = sshll.u32 [#allocation7], 4
          %s667 = int_to_ptr.vmem [resolvable:$true] %s666
          %669 = dma.hbm_to_vmem [thread:$0]  %s2, 64, %s667, [#allocation6]
        $region16: #{tpu_custom_call.1} parent=11 // pred_fallthru
          _
        // Predicated region
        $region17: #{tpu_custom_call.1} parent=11 // pred_check
          %p670 = pneg %p146
        $region18: #{tpu_custom_call.1} parent=11 // pred_check_branch
          %672 = sbr.rel (%p670) target = $region20
        $region19: #{tpu_custom_call.1} parent=11 // pred_region
          _
        $region20: #{tpu_custom_call.1} parent=11 // pred_fallthru
          _
        // Predicated region
        $region21: #{tpu_custom_call.1} parent=11 // pred_check
          %p673 = pneg %p167
        $region22: #{tpu_custom_call.1} parent=11 // pred_check_branch
          %675 = sbr.rel (%p673) target = $region24
        $region23: #{tpu_custom_call.1} parent=11 // pred_region
          _
        $region24: #{tpu_custom_call.1} parent=11 // pred_fallthru
          _
        // Predicated region
        $region25: #{tpu_custom_call.1} parent=11 // pred_check
          %p676 = pneg %p188
        $region26: #{tpu_custom_call.1} parent=11 // pred_check_branch
          %678 = sbr.rel (%p676) target = $region28
        $region27: #{tpu_custom_call.1} parent=11 // pred_region
          %s680 = ssub.s32 16, 16
          %681 = vsyncadd [#allocation9], %s680
          %s683 = sshll.u32 [#allocation8], 4
          %s684 = int_to_ptr.vmem [resolvable:$true] %s683
          %686 = dma.hbm_to_vmem [thread:$0]  %s5, 16, %s684, [#allocation9]
        $region28: #{tpu_custom_call.1} parent=11 // pred_fallthru
          _
        // Predicated region
        $region29: #{tpu_custom_call.1} parent=11 // pred_check
          %p687 = pneg %p209
        $region30: #{tpu_custom_call.1} parent=11 // pred_check_branch
          %689 = sbr.rel (%p687) target = $region32
        $region31: #{tpu_custom_call.1} parent=11 // pred_region
          _
        $region32: #{tpu_custom_call.1} parent=11 // pred_fallthru
          _
        // Predicated region
        $region33: #{tpu_custom_call.1} parent=11 // pred_check
          %p690 = pneg %p230
        $region34: #{tpu_custom_call.1} parent=11 // pred_check_branch
          %692 = sbr.rel (%p690) target = $region36
        $region35: #{tpu_custom_call.1} parent=11 // pred_region
          %s694 = ssub.s32 16, 16
          %695 = vsyncadd [#allocation9], %s694
          %s697 = sshll.u32 [#allocation10], 4
          %s698 = int_to_ptr.vmem [resolvable:$true] %s697
          %700 = dma.hbm_to_vmem [thread:$0]  %s7, 16, %s698, [#allocation9]
        $region36: #{tpu_custom_call.1} parent=11 // pred_fallthru
          _
        // Predicated region
        $region37: #{tpu_custom_call.1} parent=11 // pred_check
          %p701 = pneg %p251
        $region38: #{tpu_custom_call.1} parent=11 // pred_check_branch
          %703 = sbr.rel (%p701) target = $region40
        $region39: #{tpu_custom_call.1} parent=11 // pred_region
          %s705 = ssub.s32 16, 16
          %706 = vsyncadd [#allocation12], %s705
          %s708 = sshll.u32 [#allocation11], 4
          %s709 = int_to_ptr.vmem [resolvable:$true] %s708
          %711 = dma.hbm_to_vmem [thread:$0]  %s8, 16, %s709, [#allocation12]
        $region40: #{tpu_custom_call.1} parent=11 // pred_fallthru
          _
        // Predicated region
        $region41: #{tpu_custom_call.1} parent=11 // pred_check
          %p712 = pneg %p272
        $region42: #{tpu_custom_call.1} parent=11 // pred_check_branch
          %714 = sbr.rel (%p712) target = $region44
        $region43: #{tpu_custom_call.1} parent=11 // pred_region
          %s716 = ssub.s32 16, 16
          %717 = vsyncadd [#allocation12], %s716
          %s719 = sshll.u32 [#allocation13], 4
          %s720 = int_to_ptr.vmem [resolvable:$true] %s719
          %722 = dma.hbm_to_vmem [thread:$0]  %s9, 16, %s720, [#allocation12]
        $region44: #{tpu_custom_call.1} parent=11 // pred_fallthru
          _
        // Predicated region
        $region45: #{tpu_custom_call.1} parent=11 // pred_check
          %p723 = pneg %p293
        $region46: #{tpu_custom_call.1} parent=11 // pred_check_branch
          %725 = sbr.rel (%p723) target = $region48
        $region47: #{tpu_custom_call.1} parent=11 // pred_region
          _
        $region48: #{tpu_custom_call.1} parent=11 // pred_fallthru
          _
        // Predicated region
        $region49: #{tpu_custom_call.1} parent=11 // pred_check
          %p726 = pneg %p314
        $region50: #{tpu_custom_call.1} parent=11 // pred_check_branch
          %728 = sbr.rel (%p726) target = $region52
        $region51: #{tpu_custom_call.1} parent=11 // pred_region
          %s730 = ssub.s32 16, 16
          %731 = vsyncadd [#allocation15], %s730
          %s733 = sshll.u32 [#allocation14], 4
          %s734 = int_to_ptr.vmem [resolvable:$true] %s733
          %736 = dma.hbm_to_vmem [thread:$0]  %s11, 16, %s734, [#allocation15]
        $region52: #{tpu_custom_call.1} parent=11 // pred_fallthru
          _
        // Predicated region
        $region53: #{tpu_custom_call.1} parent=11 // pred_check
          %p737 = pneg %p335
        $region54: #{tpu_custom_call.1} parent=11 // pred_check_branch
          %739 = sbr.rel (%p737) target = $region56
        $region55: #{tpu_custom_call.1} parent=11 // pred_region
          %s741 = ssub.s32 512, 512
          %742 = vsyncadd [#allocation15], %s741
          %s743 = sshll.u32 [#allocation16], 4
          %s744 = int_to_ptr.vmem [resolvable:$true] %s743
          %749 = dma.hbm_to_vmem [thread:$0]  %s12, 512, %s744, [#allocation15], 128, 128, 8
        $region56: #{tpu_custom_call.1} parent=11 // pred_fallthru
          _
        // Predicated region
        $region57: #{tpu_custom_call.1} parent=11 // pred_check
          %p750 = pneg %p356
        $region58: #{tpu_custom_call.1} parent=11 // pred_check_branch
          %752 = sbr.rel (%p750) target = $region60
        $region59: #{tpu_custom_call.1} parent=11 // pred_region
          %s754 = ssub.s32 16, 16
          %755 = vsyncadd [#allocation18], %s754
          %s757 = sshll.u32 [#allocation17], 4
          %s758 = int_to_ptr.vmem [resolvable:$true] %s757
          %760 = dma.hbm_to_vmem [thread:$0]  %s13, 16, %s758, [#allocation18]
        $region60: #{tpu_custom_call.1} parent=11 // pred_fallthru
          _
        // Predicated region
        $region61: #{tpu_custom_call.1} parent=11 // pred_check
          %p761 = pneg %p377
        $region62: #{tpu_custom_call.1} parent=11 // pred_check_branch
          %763 = sbr.rel (%p761) target = $region64
        $region63: #{tpu_custom_call.1} parent=11 // pred_region
          %s765 = ssub.s32 512, 512
          %766 = vsyncadd [#allocation18], %s765
          %s767 = sshll.u32 [#allocation19], 4
          %s768 = int_to_ptr.vmem [resolvable:$true] %s767
          %773 = dma.hbm_to_vmem [thread:$0]  %s14, 512, %s768, [#allocation18], 128, 128, 8
        $region64: #{tpu_custom_call.1} parent=11 // pred_fallthru
          _
        // Predicated region
        $region65: #{tpu_custom_call.1} parent=11 // pred_check
          %p774 = pneg %p398
        $region66: #{tpu_custom_call.1} parent=11 // pred_check_branch
          %776 = sbr.rel (%p774) target = $region68
        $region67: #{tpu_custom_call.1} parent=11 // pred_region
          %s778 = ssub.s32 16, 16
          %779 = vsyncadd [#allocation21], %s778
          %s781 = sshll.u32 [#allocation20], 4
          %s782 = int_to_ptr.vmem [resolvable:$true] %s781
          %784 = dma.hbm_to_vmem [thread:$0]  %s15, 16, %s782, [#allocation21]
        $region68: #{tpu_custom_call.1} parent=11 // pred_fallthru
          _
        // Predicated region
        $region69: #{tpu_custom_call.1} parent=11 // pred_check
          %p785 = pneg %p419
        $region70: #{tpu_custom_call.1} parent=11 // pred_check_branch
          %787 = sbr.rel (%p785) target = $region72
        $region71: #{tpu_custom_call.1} parent=11 // pred_region
          %s789 = ssub.s32 16, 16
          %790 = vsyncadd [#allocation21], %s789
          %s792 = sshll.u32 [#allocation22], 4
          %s793 = int_to_ptr.vmem [resolvable:$true] %s792
          %795 = dma.hbm_to_vmem [thread:$0]  %s16, 16, %s793, [#allocation21]
        $region72: #{tpu_custom_call.1} parent=11 // pred_fallthru
          _
        // Predicated region
        $region73: #{tpu_custom_call.1} parent=11 // pred_check
          %p796 = pneg %p440
        $region74: #{tpu_custom_call.1} parent=11 // pred_check_branch
          %798 = sbr.rel (%p796) target = $region76
        $region75: #{tpu_custom_call.1} parent=11 // pred_region
          %s800 = ssub.s32 16, 16
          %801 = vsyncadd [#allocation24], %s800
          %s803 = sshll.u32 [#allocation23], 4
          %s804 = int_to_ptr.vmem [resolvable:$true] %s803
          %806 = dma.hbm_to_vmem [thread:$0]  %s17, 16, %s804, [#allocation24]
        $region76: #{tpu_custom_call.1} parent=11 // pred_fallthru
          _
        // Predicated region
        $region77: #{tpu_custom_call.1} parent=11 // pred_check
          %p807 = pneg %p461
        $region78: #{tpu_custom_call.1} parent=11 // pred_check_branch
          %809 = sbr.rel (%p807) target = $region80
        $region79: #{tpu_custom_call.1} parent=11 // pred_region
          %s811 = ssub.s32 512, 512
          %812 = vsyncadd [#allocation24], %s811
          %s813 = sshll.u32 [#allocation25], 4
          %s814 = int_to_ptr.vmem [resolvable:$true] %s813
          %819 = dma.hbm_to_vmem [thread:$0]  %s18, 512, %s814, [#allocation24], 128, 128, 8
        $region80: #{tpu_custom_call.1} parent=11 // pred_fallthru
          _
        // Predicated region
        $region81: #{tpu_custom_call.1} parent=11 // pred_check
          %p820 = pneg %p482
        $region82: #{tpu_custom_call.1} parent=11 // pred_check_branch
          %822 = sbr.rel (%p820) target = $region84
        $region83: #{tpu_custom_call.1} parent=11 // pred_region
          %s824 = ssub.s32 16, 16
          %825 = vsyncadd [#allocation27], %s824
          %s827 = sshll.u32 [#allocation26], 4
          %s828 = int_to_ptr.vmem [resolvable:$true] %s827
          %830 = dma.hbm_to_vmem [thread:$0]  %s19, 16, %s828, [#allocation27]
        $region84: #{tpu_custom_call.1} parent=11 // pred_fallthru
          _
        // Predicated region
        $region85: #{tpu_custom_call.1} parent=11 // pred_check
          %p831 = pneg %p503
        $region86: #{tpu_custom_call.1} parent=11 // pred_check_branch
          %833 = sbr.rel (%p831) target = $region88
        $region87: #{tpu_custom_call.1} parent=11 // pred_region
          _
        $region88: #{tpu_custom_call.1} parent=11 // pred_fallthru
          _
        // Predicated region
        $region89: #{tpu_custom_call.1} parent=11 // pred_check
          %p834 = pneg %p524
        $region90: #{tpu_custom_call.1} parent=11 // pred_check_branch
          %836 = sbr.rel (%p834) target = $region92
        $region91: #{tpu_custom_call.1} parent=11 // pred_region
          _
        $region92: #{tpu_custom_call.1} parent=11 // pred_fallthru
          _
        // Predicated region
        $region93: #{tpu_custom_call.1} parent=11 // pred_check
          %p837 = pneg %p545
        $region94: #{tpu_custom_call.1} parent=11 // pred_check_branch
          %839 = sbr.rel (%p837) target = $region96
        $region95: #{tpu_custom_call.1} parent=11 // pred_region
          _
        $region96: #{tpu_custom_call.1} parent=11 // pred_fallthru
          _
        // Predicated region
        $region97: #{tpu_custom_call.1} parent=11 // pred_check
          %p840 = pneg %p566
        $region98: #{tpu_custom_call.1} parent=11 // pred_check_branch
          %842 = sbr.rel (%p840) target = $region100
        $region99: #{tpu_custom_call.1} parent=11 // pred_region
          _
        $region100: #{tpu_custom_call.1} parent=11 // pred_fallthru
          _
      $region12: #{tpu_custom_call.1} parent=5 // pred_fallthru
        _
      %p843 = scmp.lt.s32.totalorder %s52, 2
      // Predicated region
      $region101: #{tpu_custom_call.1} parent=5 // pred_check
        %p844 = pneg %p843
      $region102: #{tpu_custom_call.1} parent=5 // pred_check_branch
        %846 = sbr.rel (%p844) target = $region104
      $region103: #{tpu_custom_call.1} parent=5 // pred_region
        // Predicated region
        $region105: #{tpu_custom_call.1} parent=103 // pred_check
          %p847 = pneg %p72
        $region106: #{tpu_custom_call.1} parent=103 // pred_check_branch
          %849 = sbr.rel (%p847) target = $region108
        $region107: #{tpu_custom_call.1} parent=103 // pred_region
          %s850 = sand.u32 %s62, 1
          %s851 = scalar_lea.sflag [#allocation3], %s850
          %s852 = sand.u32 %s62, 1
          %s853 = smul.addr %s852, 8
          %s854 = scalar_lea.vmem [#allocation2], %s853
          %s856 = ssub.s32 128, 128
          %857 = vsyncadd %s851, %s856
          %s858 = smul.addr %s52, 128
          %s859 = scalar_lea.hbm %s0, %s858
          %s861 = sshll.u32 %s854, 4
          %s862 = int_to_ptr.vmem [resolvable:$true] %s861
          %864 = dma.hbm_to_vmem [thread:$0]  %s859, 128, %s862, %s851
        $region108: #{tpu_custom_call.1} parent=103 // pred_fallthru
          _
        // Predicated region
        $region109: #{tpu_custom_call.1} parent=103 // pred_check
          %p865 = pneg %p98
        $region110: #{tpu_custom_call.1} parent=103 // pred_check_branch
          %867 = sbr.rel (%p865) target = $region112
        $region111: #{tpu_custom_call.1} parent=103 // pred_region
          %s868 = sand.u32 %s52, 1
          %s869 = scalar_lea.sflag [#allocation6], %s868
          %s870 = sand.u32 %s88, 1
          %s871 = smul.addr %s870, 8
          %s872 = scalar_lea.vmem [#allocation5], %s871
          %s874 = ssub.s32 128, 128
          %875 = vsyncadd %s869, %s874
          %s876 = smul.addr %s52, 128
          %s877 = scalar_lea.hbm %s1, %s876
          %s879 = sshll.u32 %s872, 4
          %s880 = int_to_ptr.vmem [resolvable:$true] %s879
          %882 = dma.hbm_to_vmem [thread:$0]  %s877, 128, %s880, %s869
        $region112: #{tpu_custom_call.1} parent=103 // pred_fallthru
          _
      $region104: #{tpu_custom_call.1} parent=5 // pred_fallthru
        _
      %p883 = scmp.le.s32.totalorder 1, %s52
      %p884 = scmp.lt.s32.totalorder %s52, 3
      %p885 = pnand %p883, %p884
      %p886 = pneg %p885
      // Predicated region
      $region113: #{tpu_custom_call.1} parent=5 // pred_check
        _
      $region114: #{tpu_custom_call.1} parent=5 // pred_check_branch
        %888 = sbr.rel (%p885) target = $region116
      $region115: #{tpu_custom_call.1} parent=5 // pred_region
        %s889 = ssub.s32 %s52, 1
        %s890 = sand.u32 %s65, 1
        %s891 = scalar_lea.sflag [#allocation3], %s890
        %s892 = sand.u32 %s65, 1
        %s893 = smul.addr %s892, 8
        %s894 = scalar_lea.vmem [#allocation2], %s893
        // Predicated region
        $region117: #{tpu_custom_call.1} parent=115 // pred_check
          %p895 = pneg %p78
        $region118: #{tpu_custom_call.1} parent=115 // pred_check_branch
          %897 = sbr.rel (%p895) target = $region120
        $region119: #{tpu_custom_call.1} parent=115 // pred_region
          %898 = dma.done %s891, 128
        $region120: #{tpu_custom_call.1} parent=115 // pred_fallthru
          _
        %s899 = sand.u32 %s57, 1
        %s900 = scalar_lea.sflag [#allocation6], %s899
        %s901 = sand.u32 %s91, 1
        %s902 = smul.addr %s901, 8
        %s903 = scalar_lea.vmem [#allocation5], %s902
        // Predicated region
        $region121: #{tpu_custom_call.1} parent=115 // pred_check
          %p904 = pneg %p104
        $region122: #{tpu_custom_call.1} parent=115 // pred_check_branch
          %906 = sbr.rel (%p904) target = $region124
        $region123: #{tpu_custom_call.1} parent=115 // pred_region
          %907 = dma.done %s900, 128
        $region124: #{tpu_custom_call.1} parent=115 // pred_fallthru
          _
        // Predicated region
        $region125: #{tpu_custom_call.1} parent=115 // pred_check
          %p908 = pneg %p125
        $region126: #{tpu_custom_call.1} parent=115 // pred_check_branch
          %910 = sbr.rel (%p908) target = $region128
        $region127: #{tpu_custom_call.1} parent=115 // pred_region
          %911 = dma.done [#allocation6], 64
        $region128: #{tpu_custom_call.1} parent=115 // pred_fallthru
          _
        // Predicated region
        $region129: #{tpu_custom_call.1} parent=115 // pred_check
          %p912 = pneg %p188
        $region130: #{tpu_custom_call.1} parent=115 // pred_check_branch
          %914 = sbr.rel (%p912) target = $region132
        $region131: #{tpu_custom_call.1} parent=115 // pred_region
          %915 = dma.done [#allocation9], 16
        $region132: #{tpu_custom_call.1} parent=115 // pred_fallthru
          _
        // Predicated region
        $region133: #{tpu_custom_call.1} parent=115 // pred_check
          %p916 = pneg %p230
        $region134: #{tpu_custom_call.1} parent=115 // pred_check_branch
          %918 = sbr.rel (%p916) target = $region136
        $region135: #{tpu_custom_call.1} parent=115 // pred_region
          %919 = dma.done [#allocation9], 16
        $region136: #{tpu_custom_call.1} parent=115 // pred_fallthru
          _
        // Predicated region
        $region137: #{tpu_custom_call.1} parent=115 // pred_check
          %p920 = pneg %p251
        $region138: #{tpu_custom_call.1} parent=115 // pred_check_branch
          %922 = sbr.rel (%p920) target = $region140
        $region139: #{tpu_custom_call.1} parent=115 // pred_region
          %923 = dma.done [#allocation12], 16
        $region140: #{tpu_custom_call.1} parent=115 // pred_fallthru
          _
        // Predicated region
        $region141: #{tpu_custom_call.1} parent=115 // pred_check
          %p924 = pneg %p272
        $region142: #{tpu_custom_call.1} parent=115 // pred_check_branch
          %926 = sbr.rel (%p924) target = $region144
        $region143: #{tpu_custom_call.1} parent=115 // pred_region
          %927 = dma.done [#allocation12], 16
        $region144: #{tpu_custom_call.1} parent=115 // pred_fallthru
          _
        // Predicated region
        $region145: #{tpu_custom_call.1} parent=115 // pred_check
          %p928 = pneg %p314
        $region146: #{tpu_custom_call.1} parent=115 // pred_check_branch
          %930 = sbr.rel (%p928) target = $region148
        $region147: #{tpu_custom_call.1} parent=115 // pred_region
          %931 = dma.done [#allocation15], 16
        $region148: #{tpu_custom_call.1} parent=115 // pred_fallthru
          _
        // Predicated region
        $region149: #{tpu_custom_call.1} parent=115 // pred_check
          %p932 = pneg %p335
        $region150: #{tpu_custom_call.1} parent=115 // pred_check_branch
          %934 = sbr.rel (%p932) target = $region152
        $region151: #{tpu_custom_call.1} parent=115 // pred_region
          %935 = dma.done [#allocation15], 512
        $region152: #{tpu_custom_call.1} parent=115 // pred_fallthru
          _
        // Predicated region
        $region153: #{tpu_custom_call.1} parent=115 // pred_check
          %p936 = pneg %p356
        $region154: #{tpu_custom_call.1} parent=115 // pred_check_branch
          %938 = sbr.rel (%p936) target = $region156
        $region155: #{tpu_custom_call.1} parent=115 // pred_region
          %939 = dma.done [#allocation18], 16
        $region156: #{tpu_custom_call.1} parent=115 // pred_fallthru
          _
        // Predicated region
        $region157: #{tpu_custom_call.1} parent=115 // pred_check
          %p940 = pneg %p377
        $region158: #{tpu_custom_call.1} parent=115 // pred_check_branch
          %942 = sbr.rel (%p940) target = $region160
        $region159: #{tpu_custom_call.1} parent=115 // pred_region
          %943 = dma.done [#allocation18], 512
        $region160: #{tpu_custom_call.1} parent=115 // pred_fallthru
          _
        // Predicated region
        $region161: #{tpu_custom_call.1} parent=115 // pred_check
          %p944 = pneg %p398
        $region162: #{tpu_custom_call.1} parent=115 // pred_check_branch
          %946 = sbr.rel (%p944) target = $region164
        $region163: #{tpu_custom_call.1} parent=115 // pred_region
          %947 = dma.done [#allocation21], 16
        $region164: #{tpu_custom_call.1} parent=115 // pred_fallthru
          _
        // Predicated region
        $region165: #{tpu_custom_call.1} parent=115 // pred_check
          %p948 = pneg %p419
        $region166: #{tpu_custom_call.1} parent=115 // pred_check_branch
          %950 = sbr.rel (%p948) target = $region168
        $region167: #{tpu_custom_call.1} parent=115 // pred_region
          %951 = dma.done [#allocation21], 16
        $region168: #{tpu_custom_call.1} parent=115 // pred_fallthru
          _
        // Predicated region
        $region169: #{tpu_custom_call.1} parent=115 // pred_check
          %p952 = pneg %p440
        $region170: #{tpu_custom_call.1} parent=115 // pred_check_branch
          %954 = sbr.rel (%p952) target = $region172
        $region171: #{tpu_custom_call.1} parent=115 // pred_region
          %955 = dma.done [#allocation24], 16
        $region172: #{tpu_custom_call.1} parent=115 // pred_fallthru
          _
        // Predicated region
        $region173: #{tpu_custom_call.1} parent=115 // pred_check
          %p956 = pneg %p461
        $region174: #{tpu_custom_call.1} parent=115 // pred_check_branch
          %958 = sbr.rel (%p956) target = $region176
        $region175: #{tpu_custom_call.1} parent=115 // pred_region
          %959 = dma.done [#allocation24], 512
        $region176: #{tpu_custom_call.1} parent=115 // pred_fallthru
          _
        // Predicated region
        $region177: #{tpu_custom_call.1} parent=115 // pred_check
          %p960 = pneg %p482
        $region178: #{tpu_custom_call.1} parent=115 // pred_check_branch
          %962 = sbr.rel (%p960) target = $region180
        $region179: #{tpu_custom_call.1} parent=115 // pred_region
          %963 = dma.done [#allocation27], 16
        $region180: #{tpu_custom_call.1} parent=115 // pred_fallthru
          _
        %s964 = sand.u32 %s65, 1
        %s965 = scalar_lea.sflag [#allocation3], %s964
        %s966 = sand.u32 %s65, 1
        %s967 = smul.addr %s966, 8
        %s968 = scalar_lea.vmem [#allocation2], %s967
        %p969 = pneg %p78
        %p970 = pneg %p75
        %s971 = sand.u32 %s57, 1
        %s972 = scalar_lea.sflag [#allocation6], %s971
        %s973 = sand.u32 %s91, 1
        %s974 = smul.addr %s973, 8
        %s975 = scalar_lea.vmem [#allocation5], %s974
        %p976 = pneg %p104
        %p977 = pneg %p101
        %p978 = pneg %p125
        %p979 = pneg %p122
        %p980 = pneg %p146
        %p981 = pneg %p143
        %p982 = pneg %p167
        %p983 = pneg %p164
        %p984 = pneg %p188
        %p985 = pneg %p185
        %p986 = pneg %p209
        %p987 = pneg %p206
        %p988 = pneg %p230
        %p989 = pneg %p227
        %p990 = pneg %p251
        %p991 = pneg %p248
        %p992 = pneg %p272
        %p993 = pneg %p269
        %p994 = pneg %p293
        %p995 = pneg %p290
        %p996 = pneg %p314
        %p997 = pneg %p311
        %p998 = pneg %p335
        %p999 = pneg %p332
        %p1000 = pneg %p356
        %p1001 = pneg %p353
        %p1002 = pneg %p377
        %p1003 = pneg %p374
        %p1004 = pneg %p398
        %p1005 = pneg %p395
        %p1006 = pneg %p419
        %p1007 = pneg %p416
        %p1008 = pneg %p440
        %p1009 = pneg %p437
        %p1010 = pneg %p461
        %p1011 = pneg %p458
        %p1012 = pneg %p482
        %p1013 = pneg %p479
        %p1014 = pneg %p503
        %p1015 = pneg %p500
        %p1016 = pneg %p524
        %p1017 = pneg %p521
        %p1018 = pneg %p545
        %p1019 = pneg %p542
        %p1020 = pneg %p566
        %p1021 = pneg %p563
        %p1022 = pneg %p592
        %p1023 = pneg %p589
        %s1024 = sand.u32 %s579, 1
        %s1025 = scalar_lea.sflag [#allocation4], %s1024
        %s1026 = sand.u32 %s579, 1
        %s1027 = smul.addr %s1026, 8
        %s1028 = scalar_lea.vmem [#allocation28], %s1027
        %p1029 = pneg %p618
        %p1030 = pneg %p615
        %s1031 = sand.u32 %s57, 1
        %s1032 = scalar_lea.sflag [#allocation30], %s1031
        %s1033 = sand.u32 %s605, 1
        %s1034 = smul.addr %s1033, 32
        %s1035 = scalar_lea.vmem [#allocation29], %s1034
        %p1036 = pneg %p644
        %p1037 = pneg %p641
        %s1038 = sand.u32 %s57, 1
        %s1039 = scalar_lea.sflag [#allocation30], %s1038
        %s1040 = sand.u32 %s631, 1
        %s1041 = smul.addr %s1040, 32
        %s1042 = scalar_lea.vmem [#allocation31], %s1041
        %v1043 = vld [vmem:[%s894] sm:$0xff]
        %v1044 = vld [vmem:[%s903] sm:$0xff]
        %v1045 = vld [vmem:[%s4] sm:$0xff]
        %v1046 = vld [vmem:[%s4 + $0x8] sm:$0xff]
        %v1047 = vld [vmem:[%s4 + $0x10] sm:$0xff]
        %v1048 = vld [vmem:[%s4 + $0x18] sm:$0xff]
        %v1049 = vld [vmem:[#allocation8] sm:$0x1]
        %v1051 = vlaneseq
        %v1052 = vshrl.u32 %v1051, 7
        %v1053 = vsub.s32 0, %v1052
        %v1054 = vrot.slane %v1049, %v1053
        %vm1056 = vcmask 261120
        %v1058 = vsel %vm1056, %v1043, 0
        %1060 = vmatprep.subr.mxu0 0.0
        %1061 = vmatpush1.msra.mxu0 0.0
        %1062 = vmatprep.subr.mxu0 0.0
        %1063 = vmatpush1.msra.mxu0 0.0
        %1064 = vmatprep.subr.mxu0 0.0
        %1065 = vmatpush1.msra.mxu0 0.0
        %1066 = vmatprep.subr.mxu0 0.0
        %1067 = vmatpush1.msra.mxu0 0.0
        %1068 = vmatprep.subr.mxu0 0.0
        %1069 = vmatpush1.msra.mxu0 0.0
        %1070 = vmatprep.subr.mxu0 0.0
        %1071 = vmatpush1.msra.mxu0 0.0
        %1072 = vmatprep.subr.mxu0 0.0
        %1073 = vmatpush1.msra.mxu0 0.0
        %1074 = vmatprep.subr.mxu0 0.0
        %1075 = vmatpush1.msra.mxu0 0.0
        %1076 = vmatprep.subr.mxu0 0.0
        %1077 = vmatpush1.msra.mxu0 0.0
        %1078 = vmatprep.subr.mxu0 0.0
        %1079 = vmatpush1.msra.mxu0 0.0
        %1080 = vmatprep.subr.mxu0 0.0
        %1081 = vmatpush1.msra.mxu0 0.0
        %1082 = vmatprep.subr.mxu0 0.0
        %1083 = vmatpush1.msra.mxu0 0.0
        %1084 = vmatprep.subr.mxu0 0.0
        %1085 = vmatpush1.msra.mxu0 %v1048
        %1086 = vmatprep.subr.mxu0 0.0
        %1087 = vmatpush1.msra.mxu0 %v1047
        %1088 = vmatprep.subr.mxu0 0.0
        %1089 = vmatpush1.msra.mxu0 %v1046
        %1090 = vmatprep.subr.mxu0 0.0
        %1091 = vmatpush1.msra.mxu0 %v1045
        %1092 = vmatprep.subr.mxu0 0.0
        %1093 = vmatpush2.msra.mxu0 0.0
        %1094 = vmatprep.subr.mxu0 0.0
        %1095 = vmatpush2.msra.mxu0 0.0
        %1096 = vmatprep.subr.mxu0 0.0
        %1097 = vmatpush2.msra.mxu0 0.0
        %1098 = vmatprep.subr.mxu0 0.0
        %1099 = vmatpush2.msra.mxu0 0.0
        %1100 = vmatprep.subr.mxu0 0.0
        %1101 = vmatpush2.msra.mxu0 0.0
        %1102 = vmatprep.subr.mxu0 0.0
        %1103 = vmatpush2.msra.mxu0 0.0
        %1104 = vmatprep.subr.mxu0 0.0
        %1105 = vmatpush2.msra.mxu0 0.0
        %1106 = vmatprep.subr.mxu0 0.0
        %1107 = vmatpush2.msra.mxu0 0.0
        %1108 = vmatprep.subr.mxu0 0.0
        %1109 = vmatpush2.msra.mxu0 0.0
        %1110 = vmatprep.subr.mxu0 0.0
        %1111 = vmatpush2.msra.mxu0 0.0
        %1112 = vmatprep.subr.mxu0 0.0
        %1113 = vmatpush2.msra.mxu0 0.0
        %1114 = vmatprep.subr.mxu0 0.0
        %1115 = vmatpush2.msra.mxu0 0.0
        %1116 = vmatprep.subr.mxu0 0.0
        %1117 = vmatpush2.msra.mxu0 0.0
        %1118 = vmatprep.subr.mxu0 0.0
        %1119 = vmatpush2.msra.mxu0 0.0
        %1120 = vmatprep.subr.mxu0 0.0
        %1121 = vmatpush2.msra.mxu0 0.0
        %1122 = vmatprep.subr.mxu0 0.0
        %1123 = vmatpush2.msra.mxu0 0.0
        %1124 = vmatprep.mubr.f32.mxu0 0.0
        %1125 = vmatmul.mubr.f32.gmra.mxu0 %v1058
        %v1126 = vpop.f32.mrf.mxu0
        %v1127 = vadd.f32 %v1054, %v1126
        %v1128 = vpop.f32.mrf.mxu0
        %1129 = vdwg.mxu0
        %v1130 = vld [vmem:[#allocation7] sm:$0xf]
        %v1131 = vunpack.c.l.bf16 %v1130
        %1133 = vrot.lane.b32.xlu0 %v1127, 96
        %v1134 = vpop.permute.xlu0 %1133
        %vm1135 = vcmask 64512
        %v1136 = vsel %vm1135, %v1127, 0
        %v1138 = vsel %vm1135, %v1134, 0
        %1140 = vmatprep.subr.mxu0 0.0
        %1141 = vmatpush1.xpose.msra.mxu0 0.0
        %1142 = vmatprep.subr.mxu0 0.0
        %1143 = vmatpush1.xpose.msra.mxu0 0.0
        %1144 = vmatprep.subr.mxu0 0.0
        %1145 = vmatpush1.xpose.msra.mxu0 0.0
        %1146 = vmatprep.subr.mxu0 0.0
        %1147 = vmatpush1.xpose.msra.mxu0 0.0
        %1148 = vmatprep.subr.mxu0 0.0
        %1149 = vmatpush1.xpose.msra.mxu0 0.0
        %1150 = vmatprep.subr.mxu0 0.0
        %1151 = vmatpush1.xpose.msra.mxu0 0.0
        %1152 = vmatprep.subr.mxu0 0.0
        %1153 = vmatpush1.xpose.msra.mxu0 0.0
        %1154 = vmatprep.subr.mxu0 0.0
        %1155 = vmatpush1.xpose.msra.mxu0 0.0
        %1156 = vmatprep.subr.mxu0 0.0
        %1157 = vmatpush1.xpose.msra.mxu0 0.0
        %1158 = vmatprep.subr.mxu0 0.0
        %1159 = vmatpush1.xpose.msra.mxu0 0.0
        %1160 = vmatprep.subr.mxu0 0.0
        %1161 = vmatpush1.xpose.msra.mxu0 0.0
        %1162 = vmatprep.subr.mxu0 0.0
        %1163 = vmatpush1.xpose.msra.mxu0 0.0
        %1164 = vmatprep.subr.mxu0 0.0
        %1165 = vmatpush1.xpose.msra.mxu0 0.0
        %1166 = vmatprep.subr.mxu0 0.0
        %1167 = vmatpush1.xpose.msra.mxu0 0.0
        %1168 = vmatprep.subr.mxu0 0.0
        %1169 = vmatpush1.xpose.msra.mxu0 0.0
        %1170 = vmatprep.subr.mxu0 0.0
        %1171 = vmatpush1.xpose.msra.mxu0 %v1138
        %1172 = vmatprep.subr.mxu0 0.0
        %1173 = vmatpush2.xpose.msra.mxu0 0.0
        %1174 = vmatprep.subr.mxu0 0.0
        %1175 = vmatpush2.xpose.msra.mxu0 0.0
        %1176 = vmatprep.subr.mxu0 0.0
        %1177 = vmatpush2.xpose.msra.mxu0 0.0
        %1178 = vmatprep.subr.mxu0 0.0
        %1179 = vmatpush2.xpose.msra.mxu0 0.0
        %1180 = vmatprep.subr.mxu0 0.0
        %1181 = vmatpush2.xpose.msra.mxu0 0.0
        %1182 = vmatprep.subr.mxu0 0.0
        %1183 = vmatpush2.xpose.msra.mxu0 0.0
        %1184 = vmatprep.subr.mxu0 0.0
        %1185 = vmatpush2.xpose.msra.mxu0 0.0
        %1186 = vmatprep.subr.mxu0 0.0
        %1187 = vmatpush2.xpose.msra.mxu0 0.0
        %1188 = vmatprep.subr.mxu0 0.0
        %1189 = vmatpush2.xpose.msra.mxu0 0.0
        %1190 = vmatprep.subr.mxu0 0.0
        %1191 = vmatpush2.xpose.msra.mxu0 0.0
        %1192 = vmatprep.subr.mxu0 0.0
        %1193 = vmatpush2.xpose.msra.mxu0 0.0
        %1194 = vmatprep.subr.mxu0 0.0
        %1195 = vmatpush2.xpose.msra.mxu0 0.0
        %1196 = vmatprep.subr.mxu0 0.0
        %1197 = vmatpush2.xpose.msra.mxu0 0.0
        %1198 = vmatprep.subr.mxu0 0.0
        %1199 = vmatpush2.xpose.msra.mxu0 0.0
        %1200 = vmatprep.subr.mxu0 0.0
        %1201 = vmatpush2.xpose.msra.mxu0 0.0
        %1202 = vmatprep.subr.mxu0 0.0
        %1203 = vmatpush2.xpose.msra.mxu0 0.0
        %1204 = vmatprep.mubr.f32.mxu0 0.0
        %1205 = vmatmul.mubr.f32.gmra.mxu0 %v1136
        %v1206 = vpop.f32.mrf.mxu0
        %v1207 = vadd.f32 %v1131, %v1206
        %v1208 = vpop.f32.mrf.mxu0
        %1209 = vdwg.mxu0
        %v1210 = vsel %vm1135, %v1207, -inf
        %1211 = vmax.xlane.f32.xlu0 %v1210
        %v1212 = vpop.xlane.xlu0 %1211
        %v1213 = vsub.f32 %v1207, %v1212
        %v1214 = vmul.f32 %v1213, 1.442695
        %v1215 = vpow.pop %v1214
        %v1216 = vsel %vm1135, %v1215, 0.0
        %1217 = vadd.xlane.f32.xlu0 %v1216
        %v1218 = vpop.xlane.xlu0 %1217
        %v1219 = vrcp.pop %v1218
        %v1220 = vmul.f32 %v1215, %v1219
        %1221 = vst.msk [vmem:[%s1035] sm:$0xff] %vm1135, %v1220
        %1222 = vrot.lane.b32.xlu0 %v1127, 64
        %v1223 = vpop.permute.xlu0 %1222
        %v1226 = vsel %vm1135, %v1220, 0
        %1228 = vmatprep.subr.mxu0 0.0
        %1229 = vmatpush1.msra.mxu0 0.0
        %1230 = vmatprep.subr.mxu0 0.0
        %1231 = vmatpush1.msra.mxu0 0.0
        %1232 = vmatprep.subr.mxu0 0.0
        %1233 = vmatpush1.msra.mxu0 0.0
        %1234 = vmatprep.subr.mxu0 0.0
        %1235 = vmatpush1.msra.mxu0 0.0
        %1236 = vmatprep.subr.mxu0 0.0
        %1237 = vmatpush1.msra.mxu0 0.0
        %1238 = vmatprep.subr.mxu0 0.0
        %1239 = vmatpush1.msra.mxu0 0.0
        %1240 = vmatprep.subr.mxu0 0.0
        %1241 = vmatpush1.msra.mxu0 0.0
        %1242 = vmatprep.subr.mxu0 0.0
        %1243 = vmatpush1.msra.mxu0 0.0
        %1244 = vmatprep.subr.mxu0 0.0
        %1245 = vmatpush1.msra.mxu0 0.0
        %1246 = vmatprep.subr.mxu0 0.0
        %1247 = vmatpush1.msra.mxu0 0.0
        %1248 = vmatprep.subr.mxu0 0.0
        %1249 = vmatpush1.msra.mxu0 0.0
        %1250 = vmatprep.subr.mxu0 0.0
        %1251 = vmatpush1.msra.mxu0 0.0
        %1252 = vmatprep.subr.mxu0 0.0
        %1253 = vmatpush1.msra.mxu0 0.0
        %1254 = vmatprep.subr.mxu0 0.0
        %1255 = vmatpush1.msra.mxu0 0.0
        %1256 = vmatprep.subr.mxu0 0.0
        %1257 = vmatpush1.msra.mxu0 0.0
        %1258 = vmatprep.subr.mxu0 0.0
        %1259 = vmatpush1.msra.mxu0 %v1223
        %1260 = vmatprep.subr.mxu0 0.0
        %1261 = vmatpush2.msra.mxu0 0.0
        %1262 = vmatprep.subr.mxu0 0.0
        %1263 = vmatpush2.msra.mxu0 0.0
        %1264 = vmatprep.subr.mxu0 0.0
        %1265 = vmatpush2.msra.mxu0 0.0
        %1266 = vmatprep.subr.mxu0 0.0
        %1267 = vmatpush2.msra.mxu0 0.0
        %1268 = vmatprep.subr.mxu0 0.0
        %1269 = vmatpush2.msra.mxu0 0.0
        %1270 = vmatprep.subr.mxu0 0.0
        %1271 = vmatpush2.msra.mxu0 0.0
        %1272 = vmatprep.subr.mxu0 0.0
        %1273 = vmatpush2.msra.mxu0 0.0
        %1274 = vmatprep.subr.mxu0 0.0
        %1275 = vmatpush2.msra.mxu0 0.0
        %1276 = vmatprep.subr.mxu0 0.0
        %1277 = vmatpush2.msra.mxu0 0.0
        %1278 = vmatprep.subr.mxu0 0.0
        %1279 = vmatpush2.msra.mxu0 0.0
        %1280 = vmatprep.subr.mxu0 0.0
        %1281 = vmatpush2.msra.mxu0 0.0
        %1282 = vmatprep.subr.mxu0 0.0
        %1283 = vmatpush2.msra.mxu0 0.0
        %1284 = vmatprep.subr.mxu0 0.0
        %1285 = vmatpush2.msra.mxu0 0.0
        %1286 = vmatprep.subr.mxu0 0.0
        %1287 = vmatpush2.msra.mxu0 0.0
        %1288 = vmatprep.subr.mxu0 0.0
        %1289 = vmatpush2.msra.mxu0 0.0
        %1290 = vmatprep.subr.mxu0 0.0
        %1291 = vmatpush2.msra.mxu0 0.0
        %1292 = vmatprep.mubr.f32.mxu0 0.0
        %1293 = vmatmul.mubr.f32.gmra.mxu0 %v1226
        %v1294 = vpop.f32.mrf.mxu0
        %v1295 = vadd.f32 0.0, %v1294
        %v1296 = vpop.f32.mrf.mxu0
        %1297 = vdwg.mxu0
        %1298 = vrot.lane.b32.xlu0 %v1127, 120
        %v1299 = vpop.permute.xlu0 %1298
        %1300 = vrot.lane.b32.xlu0 %v1127, 88
        %v1301 = vpop.permute.xlu0 %1300
        %v1302 = vsel %vm1135, %v1299, 0
        %v1304 = vsel %vm1135, %v1301, 0
        %1306 = vmatprep.subr.mxu0 0.0
        %1307 = vmatpush1.xpose.msra.mxu0 0.0
        %1308 = vmatprep.subr.mxu0 0.0
        %1309 = vmatpush1.xpose.msra.mxu0 0.0
        %1310 = vmatprep.subr.mxu0 0.0
        %1311 = vmatpush1.xpose.msra.mxu0 0.0
        %1312 = vmatprep.subr.mxu0 0.0
        %1313 = vmatpush1.xpose.msra.mxu0 0.0
        %1314 = vmatprep.subr.mxu0 0.0
        %1315 = vmatpush1.xpose.msra.mxu0 0.0
        %1316 = vmatprep.subr.mxu0 0.0
        %1317 = vmatpush1.xpose.msra.mxu0 0.0
        %1318 = vmatprep.subr.mxu0 0.0
        %1319 = vmatpush1.xpose.msra.mxu0 0.0
        %1320 = vmatprep.subr.mxu0 0.0
        %1321 = vmatpush1.xpose.msra.mxu0 0.0
        %1322 = vmatprep.subr.mxu0 0.0
        %1323 = vmatpush1.xpose.msra.mxu0 0.0
        %1324 = vmatprep.subr.mxu0 0.0
        %1325 = vmatpush1.xpose.msra.mxu0 0.0
        %1326 = vmatprep.subr.mxu0 0.0
        %1327 = vmatpush1.xpose.msra.mxu0 0.0
        %1328 = vmatprep.subr.mxu0 0.0
        %1329 = vmatpush1.xpose.msra.mxu0 0.0
        %1330 = vmatprep.subr.mxu0 0.0
        %1331 = vmatpush1.xpose.msra.mxu0 0.0
        %1332 = vmatprep.subr.mxu0 0.0
        %1333 = vmatpush1.xpose.msra.mxu0 0.0
        %1334 = vmatprep.subr.mxu0 0.0
        %1335 = vmatpush1.xpose.msra.mxu0 0.0
        %1336 = vmatprep.subr.mxu0 0.0
        %1337 = vmatpush1.xpose.msra.mxu0 %v1304
        %1338 = vmatprep.subr.mxu0 0.0
        %1339 = vmatpush2.xpose.msra.mxu0 0.0
        %1340 = vmatprep.subr.mxu0 0.0
        %1341 = vmatpush2.xpose.msra.mxu0 0.0
        %1342 = vmatprep.subr.mxu0 0.0
        %1343 = vmatpush2.xpose.msra.mxu0 0.0
        %1344 = vmatprep.subr.mxu0 0.0
        %1345 = vmatpush2.xpose.msra.mxu0 0.0
        %1346 = vmatprep.subr.mxu0 0.0
        %1347 = vmatpush2.xpose.msra.mxu0 0.0
        %1348 = vmatprep.subr.mxu0 0.0
        %1349 = vmatpush2.xpose.msra.mxu0 0.0
        %1350 = vmatprep.subr.mxu0 0.0
        %1351 = vmatpush2.xpose.msra.mxu0 0.0
        %1352 = vmatprep.subr.mxu0 0.0
        %1353 = vmatpush2.xpose.msra.mxu0 0.0
        %1354 = vmatprep.subr.mxu0 0.0
        %1355 = vmatpush2.xpose.msra.mxu0 0.0
        %1356 = vmatprep.subr.mxu0 0.0
        %1357 = vmatpush2.xpose.msra.mxu0 0.0
        %1358 = vmatprep.subr.mxu0 0.0
        %1359 = vmatpush2.xpose.msra.mxu0 0.0
        %1360 = vmatprep.subr.mxu0 0.0
        %1361 = vmatpush2.xpose.msra.mxu0 0.0
        %1362 = vmatprep.subr.mxu0 0.0
        %1363 = vmatpush2.xpose.msra.mxu0 0.0
        %1364 = vmatprep.subr.mxu0 0.0
        %1365 = vmatpush2.xpose.msra.mxu0 0.0
        %1366 = vmatprep.subr.mxu0 0.0
        %1367 = vmatpush2.xpose.msra.mxu0 0.0
        %1368 = vmatprep.subr.mxu0 0.0
        %1369 = vmatpush2.xpose.msra.mxu0 0.0
        %1370 = vmatprep.mubr.f32.mxu0 0.0
        %1371 = vmatmul.mubr.f32.gmra.mxu0 %v1302
        %v1372 = vpop.f32.mrf.mxu0
        %v1373 = vadd.f32 %v1131, %v1372
        %v1374 = vpop.f32.mrf.mxu0
        %1375 = vdwg.mxu0
        %v1376 = vsel %vm1135, %v1373, -inf
        %1377 = vmax.xlane.f32.xlu0 %v1376
        %v1378 = vpop.xlane.xlu0 %1377
        %v1379 = vsub.f32 %v1373, %v1378
        %v1380 = vmul.f32 %v1379, 1.442695
        %v1381 = vpow.pop %v1380
        %v1382 = vsel %vm1135, %v1381, 0.0
        %1383 = vadd.xlane.f32.xlu0 %v1382
        %v1384 = vpop.xlane.xlu0 %1383
        %v1385 = vrcp.pop %v1384
        %v1386 = vmul.f32 %v1381, %v1385
        %s1387 = scalar_lea.vmem %s1035, 8 [#allocation29]
        %1388 = vst.msk [vmem:[%s1387] sm:$0xff] %vm1135, %v1386
        %1389 = vrot.lane.b32.xlu0 %v1127, 56
        %v1390 = vpop.permute.xlu0 %1389
        %v1393 = vsel %vm1135, %v1386, 0
        %1395 = vmatprep.subr.mxu0 0.0
        %1396 = vmatpush1.msra.mxu0 0.0
        %1397 = vmatprep.subr.mxu0 0.0
        %1398 = vmatpush1.msra.mxu0 0.0
        %1399 = vmatprep.subr.mxu0 0.0
        %1400 = vmatpush1.msra.mxu0 0.0
        %1401 = vmatprep.subr.mxu0 0.0
        %1402 = vmatpush1.msra.mxu0 0.0
        %1403 = vmatprep.subr.mxu0 0.0
        %1404 = vmatpush1.msra.mxu0 0.0
        %1405 = vmatprep.subr.mxu0 0.0
        %1406 = vmatpush1.msra.mxu0 0.0
        %1407 = vmatprep.subr.mxu0 0.0
        %1408 = vmatpush1.msra.mxu0 0.0
        %1409 = vmatprep.subr.mxu0 0.0
        %1410 = vmatpush1.msra.mxu0 0.0
        %1411 = vmatprep.subr.mxu0 0.0
        %1412 = vmatpush1.msra.mxu0 0.0
        %1413 = vmatprep.subr.mxu0 0.0
        %1414 = vmatpush1.msra.mxu0 0.0
        %1415 = vmatprep.subr.mxu0 0.0
        %1416 = vmatpush1.msra.mxu0 0.0
        %1417 = vmatprep.subr.mxu0 0.0
        %1418 = vmatpush1.msra.mxu0 0.0
        %1419 = vmatprep.subr.mxu0 0.0
        %1420 = vmatpush1.msra.mxu0 0.0
        %1421 = vmatprep.subr.mxu0 0.0
        %1422 = vmatpush1.msra.mxu0 0.0
        %1423 = vmatprep.subr.mxu0 0.0
        %1424 = vmatpush1.msra.mxu0 0.0
        %1425 = vmatprep.subr.mxu0 0.0
        %1426 = vmatpush1.msra.mxu0 %v1390
        %1427 = vmatprep.subr.mxu0 0.0
        %1428 = vmatpush2.msra.mxu0 0.0
        %1429 = vmatprep.subr.mxu0 0.0
        %1430 = vmatpush2.msra.mxu0 0.0
        %1431 = vmatprep.subr.mxu0 0.0
        %1432 = vmatpush2.msra.mxu0 0.0
        %1433 = vmatprep.subr.mxu0 0.0
        %1434 = vmatpush2.msra.mxu0 0.0
        %1435 = vmatprep.subr.mxu0 0.0
        %1436 = vmatpush2.msra.mxu0 0.0
        %1437 = vmatprep.subr.mxu0 0.0
        %1438 = vmatpush2.msra.mxu0 0.0
        %1439 = vmatprep.subr.mxu0 0.0
        %1440 = vmatpush2.msra.mxu0 0.0
        %1441 = vmatprep.subr.mxu0 0.0
        %1442 = vmatpush2.msra.mxu0 0.0
        %1443 = vmatprep.subr.mxu0 0.0
        %1444 = vmatpush2.msra.mxu0 0.0
        %1445 = vmatprep.subr.mxu0 0.0
        %1446 = vmatpush2.msra.mxu0 0.0
        %1447 = vmatprep.subr.mxu0 0.0
        %1448 = vmatpush2.msra.mxu0 0.0
        %1449 = vmatprep.subr.mxu0 0.0
        %1450 = vmatpush2.msra.mxu0 0.0
        %1451 = vmatprep.subr.mxu0 0.0
        %1452 = vmatpush2.msra.mxu0 0.0
        %1453 = vmatprep.subr.mxu0 0.0
        %1454 = vmatpush2.msra.mxu0 0.0
        %1455 = vmatprep.subr.mxu0 0.0
        %1456 = vmatpush2.msra.mxu0 0.0
        %1457 = vmatprep.subr.mxu0 0.0
        %1458 = vmatpush2.msra.mxu0 0.0
        %1459 = vmatprep.mubr.f32.mxu0 0.0
        %1460 = vmatmul.mubr.f32.gmra.mxu0 %v1393
        %v1461 = vpop.f32.mrf.mxu0
        %v1462 = vadd.f32 0.0, %v1461
        %v1463 = vpop.f32.mrf.mxu0
        %1464 = vdwg.mxu0
        %1465 = vrot.lane.b32.xlu0 %v1127, 112
        %v1466 = vpop.permute.xlu0 %1465
        %1467 = vrot.lane.b32.xlu0 %v1127, 80
        %v1468 = vpop.permute.xlu0 %1467
        %v1469 = vsel %vm1135, %v1466, 0
        %v1471 = vsel %vm1135, %v1468, 0
        %1473 = vmatprep.subr.mxu0 0.0
        %1474 = vmatpush1.xpose.msra.mxu0 0.0
        %1475 = vmatprep.subr.mxu0 0.0
        %1476 = vmatpush1.xpose.msra.mxu0 0.0
        %1477 = vmatprep.subr.mxu0 0.0
        %1478 = vmatpush1.xpose.msra.mxu0 0.0
        %1479 = vmatprep.subr.mxu0 0.0
        %1480 = vmatpush1.xpose.msra.mxu0 0.0
        %1481 = vmatprep.subr.mxu0 0.0
        %1482 = vmatpush1.xpose.msra.mxu0 0.0
        %1483 = vmatprep.subr.mxu0 0.0
        %1484 = vmatpush1.xpose.msra.mxu0 0.0
        %1485 = vmatprep.subr.mxu0 0.0
        %1486 = vmatpush1.xpose.msra.mxu0 0.0
        %1487 = vmatprep.subr.mxu0 0.0
        %1488 = vmatpush1.xpose.msra.mxu0 0.0
        %1489 = vmatprep.subr.mxu0 0.0
        %1490 = vmatpush1.xpose.msra.mxu0 0.0
        %1491 = vmatprep.subr.mxu0 0.0
        %1492 = vmatpush1.xpose.msra.mxu0 0.0
        %1493 = vmatprep.subr.mxu0 0.0
        %1494 = vmatpush1.xpose.msra.mxu0 0.0
        %1495 = vmatprep.subr.mxu0 0.0
        %1496 = vmatpush1.xpose.msra.mxu0 0.0
        %1497 = vmatprep.subr.mxu0 0.0
        %1498 = vmatpush1.xpose.msra.mxu0 0.0
        %1499 = vmatprep.subr.mxu0 0.0
        %1500 = vmatpush1.xpose.msra.mxu0 0.0
        %1501 = vmatprep.subr.mxu0 0.0
        %1502 = vmatpush1.xpose.msra.mxu0 0.0
        %1503 = vmatprep.subr.mxu0 0.0
        %1504 = vmatpush1.xpose.msra.mxu0 %v1471
        %1505 = vmatprep.subr.mxu0 0.0
        %1506 = vmatpush2.xpose.msra.mxu0 0.0
        %1507 = vmatprep.subr.mxu0 0.0
        %1508 = vmatpush2.xpose.msra.mxu0 0.0
        %1509 = vmatprep.subr.mxu0 0.0
        %1510 = vmatpush2.xpose.msra.mxu0 0.0
        %1511 = vmatprep.subr.mxu0 0.0
        %1512 = vmatpush2.xpose.msra.mxu0 0.0
        %1513 = vmatprep.subr.mxu0 0.0
        %1514 = vmatpush2.xpose.msra.mxu0 0.0
        %1515 = vmatprep.subr.mxu0 0.0
        %1516 = vmatpush2.xpose.msra.mxu0 0.0
        %1517 = vmatprep.subr.mxu0 0.0
        %1518 = vmatpush2.xpose.msra.mxu0 0.0
        %1519 = vmatprep.subr.mxu0 0.0
        %1520 = vmatpush2.xpose.msra.mxu0 0.0
        %1521 = vmatprep.subr.mxu0 0.0
        %1522 = vmatpush2.xpose.msra.mxu0 0.0
        %1523 = vmatprep.subr.mxu0 0.0
        %1524 = vmatpush2.xpose.msra.mxu0 0.0
        %1525 = vmatprep.subr.mxu0 0.0
        %1526 = vmatpush2.xpose.msra.mxu0 0.0
        %1527 = vmatprep.subr.mxu0 0.0
        %1528 = vmatpush2.xpose.msra.mxu0 0.0
        %1529 = vmatprep.subr.mxu0 0.0
        %1530 = vmatpush2.xpose.msra.mxu0 0.0
        %1531 = vmatprep.subr.mxu0 0.0
        %1532 = vmatpush2.xpose.msra.mxu0 0.0
        %1533 = vmatprep.subr.mxu0 0.0
        %1534 = vmatpush2.xpose.msra.mxu0 0.0
        %1535 = vmatprep.subr.mxu0 0.0
        %1536 = vmatpush2.xpose.msra.mxu0 0.0
        %1537 = vmatprep.mubr.f32.mxu0 0.0
        %1538 = vmatmul.mubr.f32.gmra.mxu0 %v1469
        %v1539 = vpop.f32.mrf.mxu0
        %v1540 = vadd.f32 %v1131, %v1539
        %v1541 = vpop.f32.mrf.mxu0
        %1542 = vdwg.mxu0
        %v1543 = vsel %vm1135, %v1540, -inf
        %1544 = vmax.xlane.f32.xlu0 %v1543
        %v1545 = vpop.xlane.xlu0 %1544
        %v1546 = vsub.f32 %v1540, %v1545
        %v1547 = vmul.f32 %v1546, 1.442695
        %v1548 = vpow.pop %v1547
        %v1549 = vsel %vm1135, %v1548, 0.0
        %1550 = vadd.xlane.f32.xlu0 %v1549
        %v1551 = vpop.xlane.xlu0 %1550
        %v1552 = vrcp.pop %v1551
        %v1553 = vmul.f32 %v1548, %v1552
        %s1554 = scalar_lea.vmem %s1035, 16 [#allocation29]
        %1555 = vst.msk [vmem:[%s1554] sm:$0xff] %vm1135, %v1553
        %1556 = vrot.lane.b32.xlu0 %v1127, 48
        %v1557 = vpop.permute.xlu0 %1556
        %v1560 = vsel %vm1135, %v1553, 0
        %1562 = vmatprep.subr.mxu0 0.0
        %1563 = vmatpush1.msra.mxu0 0.0
        %1564 = vmatprep.subr.mxu0 0.0
        %1565 = vmatpush1.msra.mxu0 0.0
        %1566 = vmatprep.subr.mxu0 0.0
        %1567 = vmatpush1.msra.mxu0 0.0
        %1568 = vmatprep.subr.mxu0 0.0
        %1569 = vmatpush1.msra.mxu0 0.0
        %1570 = vmatprep.subr.mxu0 0.0
        %1571 = vmatpush1.msra.mxu0 0.0
        %1572 = vmatprep.subr.mxu0 0.0
        %1573 = vmatpush1.msra.mxu0 0.0
        %1574 = vmatprep.subr.mxu0 0.0
        %1575 = vmatpush1.msra.mxu0 0.0
        %1576 = vmatprep.subr.mxu0 0.0
        %1577 = vmatpush1.msra.mxu0 0.0
        %1578 = vmatprep.subr.mxu0 0.0
        %1579 = vmatpush1.msra.mxu0 0.0
        %1580 = vmatprep.subr.mxu0 0.0
        %1581 = vmatpush1.msra.mxu0 0.0
        %1582 = vmatprep.subr.mxu0 0.0
        %1583 = vmatpush1.msra.mxu0 0.0
        %1584 = vmatprep.subr.mxu0 0.0
        %1585 = vmatpush1.msra.mxu0 0.0
        %1586 = vmatprep.subr.mxu0 0.0
        %1587 = vmatpush1.msra.mxu0 0.0
        %1588 = vmatprep.subr.mxu0 0.0
        %1589 = vmatpush1.msra.mxu0 0.0
        %1590 = vmatprep.subr.mxu0 0.0
        %1591 = vmatpush1.msra.mxu0 0.0
        %1592 = vmatprep.subr.mxu0 0.0
        %1593 = vmatpush1.msra.mxu0 %v1557
        %1594 = vmatprep.subr.mxu0 0.0
        %1595 = vmatpush2.msra.mxu0 0.0
        %1596 = vmatprep.subr.mxu0 0.0
        %1597 = vmatpush2.msra.mxu0 0.0
        %1598 = vmatprep.subr.mxu0 0.0
        %1599 = vmatpush2.msra.mxu0 0.0
        %1600 = vmatprep.subr.mxu0 0.0
        %1601 = vmatpush2.msra.mxu0 0.0
        %1602 = vmatprep.subr.mxu0 0.0
        %1603 = vmatpush2.msra.mxu0 0.0
        %1604 = vmatprep.subr.mxu0 0.0
        %1605 = vmatpush2.msra.mxu0 0.0
        %1606 = vmatprep.subr.mxu0 0.0
        %1607 = vmatpush2.msra.mxu0 0.0
        %1608 = vmatprep.subr.mxu0 0.0
        %1609 = vmatpush2.msra.mxu0 0.0
        %1610 = vmatprep.subr.mxu0 0.0
        %1611 = vmatpush2.msra.mxu0 0.0
        %1612 = vmatprep.subr.mxu0 0.0
        %1613 = vmatpush2.msra.mxu0 0.0
        %1614 = vmatprep.subr.mxu0 0.0
        %1615 = vmatpush2.msra.mxu0 0.0
        %1616 = vmatprep.subr.mxu0 0.0
        %1617 = vmatpush2.msra.mxu0 0.0
        %1618 = vmatprep.subr.mxu0 0.0
        %1619 = vmatpush2.msra.mxu0 0.0
        %1620 = vmatprep.subr.mxu0 0.0
        %1621 = vmatpush2.msra.mxu0 0.0
        %1622 = vmatprep.subr.mxu0 0.0
        %1623 = vmatpush2.msra.mxu0 0.0
        %1624 = vmatprep.subr.mxu0 0.0
        %1625 = vmatpush2.msra.mxu0 0.0
        %1626 = vmatprep.mubr.f32.mxu0 0.0
        %1627 = vmatmul.mubr.f32.gmra.mxu0 %v1560
        %v1628 = vpop.f32.mrf.mxu0
        %v1629 = vadd.f32 0.0, %v1628
        %v1630 = vpop.f32.mrf.mxu0
        %1631 = vdwg.mxu0
        %1632 = vrot.lane.b32.xlu0 %v1127, 104
        %v1633 = vpop.permute.xlu0 %1632
        %1634 = vrot.lane.b32.xlu0 %v1127, 72
        %v1635 = vpop.permute.xlu0 %1634
        %v1636 = vsel %vm1135, %v1633, 0
        %v1638 = vsel %vm1135, %v1635, 0
        %1640 = vmatprep.subr.mxu0 0.0
        %1641 = vmatpush1.xpose.msra.mxu0 0.0
        %1642 = vmatprep.subr.mxu0 0.0
        %1643 = vmatpush1.xpose.msra.mxu0 0.0
        %1644 = vmatprep.subr.mxu0 0.0
        %1645 = vmatpush1.xpose.msra.mxu0 0.0
        %1646 = vmatprep.subr.mxu0 0.0
        %1647 = vmatpush1.xpose.msra.mxu0 0.0
        %1648 = vmatprep.subr.mxu0 0.0
        %1649 = vmatpush1.xpose.msra.mxu0 0.0
        %1650 = vmatprep.subr.mxu0 0.0
        %1651 = vmatpush1.xpose.msra.mxu0 0.0
        %1652 = vmatprep.subr.mxu0 0.0
        %1653 = vmatpush1.xpose.msra.mxu0 0.0
        %1654 = vmatprep.subr.mxu0 0.0
        %1655 = vmatpush1.xpose.msra.mxu0 0.0
        %1656 = vmatprep.subr.mxu0 0.0
        %1657 = vmatpush1.xpose.msra.mxu0 0.0
        %1658 = vmatprep.subr.mxu0 0.0
        %1659 = vmatpush1.xpose.msra.mxu0 0.0
        %1660 = vmatprep.subr.mxu0 0.0
        %1661 = vmatpush1.xpose.msra.mxu0 0.0
        %1662 = vmatprep.subr.mxu0 0.0
        %1663 = vmatpush1.xpose.msra.mxu0 0.0
        %1664 = vmatprep.subr.mxu0 0.0
        %1665 = vmatpush1.xpose.msra.mxu0 0.0
        %1666 = vmatprep.subr.mxu0 0.0
        %1667 = vmatpush1.xpose.msra.mxu0 0.0
        %1668 = vmatprep.subr.mxu0 0.0
        %1669 = vmatpush1.xpose.msra.mxu0 0.0
        %1670 = vmatprep.subr.mxu0 0.0
        %1671 = vmatpush1.xpose.msra.mxu0 %v1638
        %1672 = vmatprep.subr.mxu0 0.0
        %1673 = vmatpush2.xpose.msra.mxu0 0.0
        %1674 = vmatprep.subr.mxu0 0.0
        %1675 = vmatpush2.xpose.msra.mxu0 0.0
        %1676 = vmatprep.subr.mxu0 0.0
        %1677 = vmatpush2.xpose.msra.mxu0 0.0
        %1678 = vmatprep.subr.mxu0 0.0
        %1679 = vmatpush2.xpose.msra.mxu0 0.0
        %1680 = vmatprep.subr.mxu0 0.0
        %1681 = vmatpush2.xpose.msra.mxu0 0.0
        %1682 = vmatprep.subr.mxu0 0.0
        %1683 = vmatpush2.xpose.msra.mxu0 0.0
        %1684 = vmatprep.subr.mxu0 0.0
        %1685 = vmatpush2.xpose.msra.mxu0 0.0
        %1686 = vmatprep.subr.mxu0 0.0
        %1687 = vmatpush2.xpose.msra.mxu0 0.0
        %1688 = vmatprep.subr.mxu0 0.0
        %1689 = vmatpush2.xpose.msra.mxu0 0.0
        %1690 = vmatprep.subr.mxu0 0.0
        %1691 = vmatpush2.xpose.msra.mxu0 0.0
        %1692 = vmatprep.subr.mxu0 0.0
        %1693 = vmatpush2.xpose.msra.mxu0 0.0
        %1694 = vmatprep.subr.mxu0 0.0
        %1695 = vmatpush2.xpose.msra.mxu0 0.0
        %1696 = vmatprep.subr.mxu0 0.0
        %1697 = vmatpush2.xpose.msra.mxu0 0.0
        %1698 = vmatprep.subr.mxu0 0.0
        %1699 = vmatpush2.xpose.msra.mxu0 0.0
        %1700 = vmatprep.subr.mxu0 0.0
        %1701 = vmatpush2.xpose.msra.mxu0 0.0
        %1702 = vmatprep.subr.mxu0 0.0
        %1703 = vmatpush2.xpose.msra.mxu0 0.0
        %1704 = vmatprep.mubr.f32.mxu0 0.0
        %1705 = vmatmul.mubr.f32.gmra.mxu0 %v1636
        %v1706 = vpop.f32.mrf.mxu0
        %v1707 = vadd.f32 %v1131, %v1706
        %v1708 = vpop.f32.mrf.mxu0
        %1709 = vdwg.mxu0
        %v1710 = vsel %vm1135, %v1707, -inf
        %1711 = vmax.xlane.f32.xlu0 %v1710
        %v1712 = vpop.xlane.xlu0 %1711
        %v1713 = vsub.f32 %v1707, %v1712
        %v1714 = vmul.f32 %v1713, 1.442695
        %v1715 = vpow.pop %v1714
        %v1716 = vsel %vm1135, %v1715, 0.0
        %1717 = vadd.xlane.f32.xlu0 %v1716
        %v1718 = vpop.xlane.xlu0 %1717
        %v1719 = vrcp.pop %v1718
        %v1720 = vmul.f32 %v1715, %v1719
        %s1721 = scalar_lea.vmem %s1035, 24 [#allocation29]
        %1722 = vst.msk [vmem:[%s1721] sm:$0xff] %vm1135, %v1720
        %1723 = vrot.lane.b32.xlu0 %v1127, 40
        %v1724 = vpop.permute.xlu0 %1723
        %v1727 = vsel %vm1135, %v1720, 0
        %1729 = vmatprep.subr.mxu0 0.0
        %1730 = vmatpush1.msra.mxu0 0.0
        %1731 = vmatprep.subr.mxu0 0.0
        %1732 = vmatpush1.msra.mxu0 0.0
        %1733 = vmatprep.subr.mxu0 0.0
        %1734 = vmatpush1.msra.mxu0 0.0
        %1735 = vmatprep.subr.mxu0 0.0
        %1736 = vmatpush1.msra.mxu0 0.0
        %1737 = vmatprep.subr.mxu0 0.0
        %1738 = vmatpush1.msra.mxu0 0.0
        %1739 = vmatprep.subr.mxu0 0.0
        %1740 = vmatpush1.msra.mxu0 0.0
        %1741 = vmatprep.subr.mxu0 0.0
        %1742 = vmatpush1.msra.mxu0 0.0
        %1743 = vmatprep.subr.mxu0 0.0
        %1744 = vmatpush1.msra.mxu0 0.0
        %1745 = vmatprep.subr.mxu0 0.0
        %1746 = vmatpush1.msra.mxu0 0.0
        %1747 = vmatprep.subr.mxu0 0.0
        %1748 = vmatpush1.msra.mxu0 0.0
        %1749 = vmatprep.subr.mxu0 0.0
        %1750 = vmatpush1.msra.mxu0 0.0
        %1751 = vmatprep.subr.mxu0 0.0
        %1752 = vmatpush1.msra.mxu0 0.0
        %1753 = vmatprep.subr.mxu0 0.0
        %1754 = vmatpush1.msra.mxu0 0.0
        %1755 = vmatprep.subr.mxu0 0.0
        %1756 = vmatpush1.msra.mxu0 0.0
        %1757 = vmatprep.subr.mxu0 0.0
        %1758 = vmatpush1.msra.mxu0 0.0
        %1759 = vmatprep.subr.mxu0 0.0
        %1760 = vmatpush1.msra.mxu0 %v1724
        %1761 = vmatprep.subr.mxu0 0.0
        %1762 = vmatpush2.msra.mxu0 0.0
        %1763 = vmatprep.subr.mxu0 0.0
        %1764 = vmatpush2.msra.mxu0 0.0
        %1765 = vmatprep.subr.mxu0 0.0
        %1766 = vmatpush2.msra.mxu0 0.0
        %1767 = vmatprep.subr.mxu0 0.0
        %1768 = vmatpush2.msra.mxu0 0.0
        %1769 = vmatprep.subr.mxu0 0.0
        %1770 = vmatpush2.msra.mxu0 0.0
        %1771 = vmatprep.subr.mxu0 0.0
        %1772 = vmatpush2.msra.mxu0 0.0
        %1773 = vmatprep.subr.mxu0 0.0
        %1774 = vmatpush2.msra.mxu0 0.0
        %1775 = vmatprep.subr.mxu0 0.0
        %1776 = vmatpush2.msra.mxu0 0.0
        %1777 = vmatprep.subr.mxu0 0.0
        %1778 = vmatpush2.msra.mxu0 0.0
        %1779 = vmatprep.subr.mxu0 0.0
        %1780 = vmatpush2.msra.mxu0 0.0
        %1781 = vmatprep.subr.mxu0 0.0
        %1782 = vmatpush2.msra.mxu0 0.0
        %1783 = vmatprep.subr.mxu0 0.0
        %1784 = vmatpush2.msra.mxu0 0.0
        %1785 = vmatprep.subr.mxu0 0.0
        %1786 = vmatpush2.msra.mxu0 0.0
        %1787 = vmatprep.subr.mxu0 0.0
        %1788 = vmatpush2.msra.mxu0 0.0
        %1789 = vmatprep.subr.mxu0 0.0
        %1790 = vmatpush2.msra.mxu0 0.0
        %1791 = vmatprep.subr.mxu0 0.0
        %1792 = vmatpush2.msra.mxu0 0.0
        %1793 = vmatprep.mubr.f32.mxu0 0.0
        %1794 = vmatmul.mubr.f32.gmra.mxu0 %v1727
        %v1795 = vpop.f32.mrf.mxu0
        %v1796 = vadd.f32 0.0, %v1795
        %v1797 = vpop.f32.mrf.mxu0
        %1798 = vdwg.mxu0
        %1800 = vrot.lane.b32.xlu0 %v1462, 8
        %v1801 = vpop.permute.xlu0 %1800
        %1804 = vrot.lane.b32.xlu0 %v1629, 16
        %v1805 = vpop.permute.xlu0 %1804
        %1808 = vrot.lane.b32.xlu0 %v1796, 24
        %v1809 = vpop.permute.xlu0 %1808
        %v1811 = vsel %vm1135, %v1295, %v1801
        %vm1812 = vcmask 130048
        %v1813 = vsel %vm1812, %v1811, %v1805
        %vm1814 = vcmask 195584
        %v1815 = vsel %vm1814, %v1813, %v1809
        %v1816 = vld [vmem:[%s6] sm:$0xff]
        %v1817 = vld [vmem:[%s6 + $0x8] sm:$0xff]
        %v1818 = vld [vmem:[%s6 + $0x10] sm:$0xff]
        %v1819 = vld [vmem:[%s6 + $0x18] sm:$0xff]
        %v1820 = vld [vmem:[#allocation10] sm:$0x1]
        %v1822 = vlaneseq
        %v1823 = vshrl.u32 %v1822, 7
        %v1824 = vsub.s32 0, %v1823
        %v1825 = vrot.slane %v1820, %v1824
        %v1828 = vsel %vm1056, %v1815, 0
        %1830 = vmatprep.subr.mxu0 0.0
        %1831 = vmatpush1.msra.mxu0 0.0
        %1832 = vmatprep.subr.mxu0 0.0
        %1833 = vmatpush1.msra.mxu0 0.0
        %1834 = vmatprep.subr.mxu0 0.0
        %1835 = vmatpush1.msra.mxu0 0.0
        %1836 = vmatprep.subr.mxu0 0.0
        %1837 = vmatpush1.msra.mxu0 0.0
        %1838 = vmatprep.subr.mxu0 0.0
        %1839 = vmatpush1.msra.mxu0 0.0
        %1840 = vmatprep.subr.mxu0 0.0
        %1841 = vmatpush1.msra.mxu0 0.0
        %1842 = vmatprep.subr.mxu0 0.0
        %1843 = vmatpush1.msra.mxu0 0.0
        %1844 = vmatprep.subr.mxu0 0.0
        %1845 = vmatpush1.msra.mxu0 0.0
        %1846 = vmatprep.subr.mxu0 0.0
        %1847 = vmatpush1.msra.mxu0 0.0
        %1848 = vmatprep.subr.mxu0 0.0
        %1849 = vmatpush1.msra.mxu0 0.0
        %1850 = vmatprep.subr.mxu0 0.0
        %1851 = vmatpush1.msra.mxu0 0.0
        %1852 = vmatprep.subr.mxu0 0.0
        %1853 = vmatpush1.msra.mxu0 0.0
        %1854 = vmatprep.subr.mxu0 0.0
        %1855 = vmatpush1.msra.mxu0 %v1819
        %1856 = vmatprep.subr.mxu0 0.0
        %1857 = vmatpush1.msra.mxu0 %v1818
        %1858 = vmatprep.subr.mxu0 0.0
        %1859 = vmatpush1.msra.mxu0 %v1817
        %1860 = vmatprep.subr.mxu0 0.0
        %1861 = vmatpush1.msra.mxu0 %v1816
        %1862 = vmatprep.subr.mxu0 0.0
        %1863 = vmatpush2.msra.mxu0 0.0
        %1864 = vmatprep.subr.mxu0 0.0
        %1865 = vmatpush2.msra.mxu0 0.0
        %1866 = vmatprep.subr.mxu0 0.0
        %1867 = vmatpush2.msra.mxu0 0.0
        %1868 = vmatprep.subr.mxu0 0.0
        %1869 = vmatpush2.msra.mxu0 0.0
        %1870 = vmatprep.subr.mxu0 0.0
        %1871 = vmatpush2.msra.mxu0 0.0
        %1872 = vmatprep.subr.mxu0 0.0
        %1873 = vmatpush2.msra.mxu0 0.0
        %1874 = vmatprep.subr.mxu0 0.0
        %1875 = vmatpush2.msra.mxu0 0.0
        %1876 = vmatprep.subr.mxu0 0.0
        %1877 = vmatpush2.msra.mxu0 0.0
        %1878 = vmatprep.subr.mxu0 0.0
        %1879 = vmatpush2.msra.mxu0 0.0
        %1880 = vmatprep.subr.mxu0 0.0
        %1881 = vmatpush2.msra.mxu0 0.0
        %1882 = vmatprep.subr.mxu0 0.0
        %1883 = vmatpush2.msra.mxu0 0.0
        %1884 = vmatprep.subr.mxu0 0.0
        %1885 = vmatpush2.msra.mxu0 0.0
        %1886 = vmatprep.subr.mxu0 0.0
        %1887 = vmatpush2.msra.mxu0 0.0
        %1888 = vmatprep.subr.mxu0 0.0
        %1889 = vmatpush2.msra.mxu0 0.0
        %1890 = vmatprep.subr.mxu0 0.0
        %1891 = vmatpush2.msra.mxu0 0.0
        %1892 = vmatprep.subr.mxu0 0.0
        %1893 = vmatpush2.msra.mxu0 0.0
        %1894 = vmatprep.mubr.f32.mxu0 0.0
        %1895 = vmatmul.mubr.f32.gmra.mxu0 %v1828
        %v1896 = vpop.f32.mrf.mxu0
        %v1897 = vadd.f32 %v1825, %v1896
        %v1898 = vpop.f32.mrf.mxu0
        %1899 = vdwg.mxu0
        %v1900 = vadd.f32 %v1043, %v1897
        %v1901 = vld [vmem:[#allocation11] sm:$0x1]
        %v1902 = vld [vmem:[#allocation13] sm:$0x1]
        %v1903 = vsel %vm1056, %v1900, 0.0
        %1904 = vadd.xlane.f32.xlu0 %v1903
        %v1905 = vpop.xlane.xlu0 %1904
        %v1906 = vrcp.pop 32.0
        %v1907 = vmul.f32 %v1905, %v1906
        %v1908 = vsub.f32 %v1900, %v1907
        %v1909 = vmul.f32 %v1908, %v1908
        %v1910 = vsel %vm1056, %v1909, 0.0
        %1911 = vadd.xlane.f32.xlu0 %v1910
        %v1912 = vpop.xlane.xlu0 %1911
        %v1913 = vmul.f32 %v1912, %v1906
        %v1914 = vadd.f32 %v1913, 1e-05
        %v1915 = vrsqrt.pop %v1914
        %v1916 = vmul.f32 %v1908, %v1915
        %v1918 = vlaneseq
        %v1919 = vshrl.u32 %v1918, 7
        %v1920 = vsub.s32 0, %v1919
        %v1921 = vrot.slane %v1901, %v1920
        %v1923 = vmul.f32 %v1916, %v1921
        %v1925 = vlaneseq
        %v1926 = vshrl.u32 %v1925, 7
        %v1927 = vsub.s32 0, %v1926
        %v1928 = vrot.slane %v1902, %v1927
        %v1930 = vadd.f32 %v1923, %v1928
        %v1931 = vld [vmem:[%s10] sm:$0xff]
        %v1932 = vld [vmem:[%s10 + $0x8] sm:$0xff]
        %v1933 = vld [vmem:[%s10 + $0x10] sm:$0xff]
        %v1934 = vld [vmem:[%s10 + $0x18] sm:$0xff]
        %v1935 = vld [vmem:[#allocation14] sm:$0x1]
        %v1937 = vlaneseq
        %v1938 = vshrl.u32 %v1937, 7
        %v1939 = vsub.s32 0, %v1938
        %v1940 = vrot.slane %v1935, %v1939
        %v1943 = vsel %vm1056, %v1930, 0
        %1945 = vmatprep.subr.mxu0 0.0
        %1946 = vmatpush1.msra.mxu0 0.0
        %1947 = vmatprep.subr.mxu0 0.0
        %1948 = vmatpush1.msra.mxu0 0.0
        %1949 = vmatprep.subr.mxu0 0.0
        %1950 = vmatpush1.msra.mxu0 0.0
        %1951 = vmatprep.subr.mxu0 0.0
        %1952 = vmatpush1.msra.mxu0 0.0
        %1953 = vmatprep.subr.mxu0 0.0
        %1954 = vmatpush1.msra.mxu0 0.0
        %1955 = vmatprep.subr.mxu0 0.0
        %1956 = vmatpush1.msra.mxu0 0.0
        %1957 = vmatprep.subr.mxu0 0.0
        %1958 = vmatpush1.msra.mxu0 0.0
        %1959 = vmatprep.subr.mxu0 0.0
        %1960 = vmatpush1.msra.mxu0 0.0
        %1961 = vmatprep.subr.mxu0 0.0
        %1962 = vmatpush1.msra.mxu0 0.0
        %1963 = vmatprep.subr.mxu0 0.0
        %1964 = vmatpush1.msra.mxu0 0.0
        %1965 = vmatprep.subr.mxu0 0.0
        %1966 = vmatpush1.msra.mxu0 0.0
        %1967 = vmatprep.subr.mxu0 0.0
        %1968 = vmatpush1.msra.mxu0 0.0
        %1969 = vmatprep.subr.mxu0 0.0
        %1970 = vmatpush1.msra.mxu0 %v1934
        %1971 = vmatprep.subr.mxu0 0.0
        %1972 = vmatpush1.msra.mxu0 %v1933
        %1973 = vmatprep.subr.mxu0 0.0
        %1974 = vmatpush1.msra.mxu0 %v1932
        %1975 = vmatprep.subr.mxu0 0.0
        %1976 = vmatpush1.msra.mxu0 %v1931
        %1977 = vmatprep.subr.mxu0 0.0
        %1978 = vmatpush2.msra.mxu0 0.0
        %1979 = vmatprep.subr.mxu0 0.0
        %1980 = vmatpush2.msra.mxu0 0.0
        %1981 = vmatprep.subr.mxu0 0.0
        %1982 = vmatpush2.msra.mxu0 0.0
        %1983 = vmatprep.subr.mxu0 0.0
        %1984 = vmatpush2.msra.mxu0 0.0
        %1985 = vmatprep.subr.mxu0 0.0
        %1986 = vmatpush2.msra.mxu0 0.0
        %1987 = vmatprep.subr.mxu0 0.0
        %1988 = vmatpush2.msra.mxu0 0.0
        %1989 = vmatprep.subr.mxu0 0.0
        %1990 = vmatpush2.msra.mxu0 0.0
        %1991 = vmatprep.subr.mxu0 0.0
        %1992 = vmatpush2.msra.mxu0 0.0
        %1993 = vmatprep.subr.mxu0 0.0
        %1994 = vmatpush2.msra.mxu0 0.0
        %1995 = vmatprep.subr.mxu0 0.0
        %1996 = vmatpush2.msra.mxu0 0.0
        %1997 = vmatprep.subr.mxu0 0.0
        %1998 = vmatpush2.msra.mxu0 0.0
        %1999 = vmatprep.subr.mxu0 0.0
        %2000 = vmatpush2.msra.mxu0 0.0
        %2001 = vmatprep.subr.mxu0 0.0
        %2002 = vmatpush2.msra.mxu0 0.0
        %2003 = vmatprep.subr.mxu0 0.0
        %2004 = vmatpush2.msra.mxu0 0.0
        %2005 = vmatprep.subr.mxu0 0.0
        %2006 = vmatpush2.msra.mxu0 0.0
        %2007 = vmatprep.subr.mxu0 0.0
        %2008 = vmatpush2.msra.mxu0 0.0
        %2009 = vmatprep.mubr.f32.mxu0 0.0
        %2010 = vmatmul.mubr.f32.gmra.mxu0 %v1943
        %v2011 = vpop.f32.mrf.mxu0
        %v2012 = vadd.f32 %v1940, %v2011
        %v2013 = vpop.f32.mrf.mxu0
        %2014 = vdwg.mxu0
        %v2015 = vld [vmem:[#allocation16] sm:$0xff]
        %v2016 = vld [vmem:[#allocation16 + $0x8] sm:$0xff]
        %v2017 = vld [vmem:[#allocation16 + $0x10] sm:$0xff]
        %v2018 = vld [vmem:[#allocation16 + $0x18] sm:$0xff]
        %v2019 = vld [vmem:[#allocation17] sm:$0x1]
        %v2021 = vlaneseq
        %v2022 = vshrl.u32 %v2021, 7
        %v2023 = vsub.s32 0, %v2022
        %v2024 = vrot.slane %v2019, %v2023
        %v2027 = vsel %vm1056, %v1044, 0
        %2029 = vmatprep.subr.mxu0 0.0
        %2030 = vmatpush1.msra.mxu0 0.0
        %2031 = vmatprep.subr.mxu0 0.0
        %2032 = vmatpush1.msra.mxu0 0.0
        %2033 = vmatprep.subr.mxu0 0.0
        %2034 = vmatpush1.msra.mxu0 0.0
        %2035 = vmatprep.subr.mxu0 0.0
        %2036 = vmatpush1.msra.mxu0 0.0
        %2037 = vmatprep.subr.mxu0 0.0
        %2038 = vmatpush1.msra.mxu0 0.0
        %2039 = vmatprep.subr.mxu0 0.0
        %2040 = vmatpush1.msra.mxu0 0.0
        %2041 = vmatprep.subr.mxu0 0.0
        %2042 = vmatpush1.msra.mxu0 0.0
        %2043 = vmatprep.subr.mxu0 0.0
        %2044 = vmatpush1.msra.mxu0 0.0
        %2045 = vmatprep.subr.mxu0 0.0
        %2046 = vmatpush1.msra.mxu0 0.0
        %2047 = vmatprep.subr.mxu0 0.0
        %2048 = vmatpush1.msra.mxu0 0.0
        %2049 = vmatprep.subr.mxu0 0.0
        %2050 = vmatpush1.msra.mxu0 0.0
        %2051 = vmatprep.subr.mxu0 0.0
        %2052 = vmatpush1.msra.mxu0 0.0
        %2053 = vmatprep.subr.mxu0 0.0
        %2054 = vmatpush1.msra.mxu0 %v2018
        %2055 = vmatprep.subr.mxu0 0.0
        %2056 = vmatpush1.msra.mxu0 %v2017
        %2057 = vmatprep.subr.mxu0 0.0
        %2058 = vmatpush1.msra.mxu0 %v2016
        %2059 = vmatprep.subr.mxu0 0.0
        %2060 = vmatpush1.msra.mxu0 %v2015
        %2061 = vmatprep.subr.mxu0 0.0
        %2062 = vmatpush2.msra.mxu0 0.0
        %2063 = vmatprep.subr.mxu0 0.0
        %2064 = vmatpush2.msra.mxu0 0.0
        %2065 = vmatprep.subr.mxu0 0.0
        %2066 = vmatpush2.msra.mxu0 0.0
        %2067 = vmatprep.subr.mxu0 0.0
        %2068 = vmatpush2.msra.mxu0 0.0
        %2069 = vmatprep.subr.mxu0 0.0
        %2070 = vmatpush2.msra.mxu0 0.0
        %2071 = vmatprep.subr.mxu0 0.0
        %2072 = vmatpush2.msra.mxu0 0.0
        %2073 = vmatprep.subr.mxu0 0.0
        %2074 = vmatpush2.msra.mxu0 0.0
        %2075 = vmatprep.subr.mxu0 0.0
        %2076 = vmatpush2.msra.mxu0 0.0
        %2077 = vmatprep.subr.mxu0 0.0
        %2078 = vmatpush2.msra.mxu0 0.0
        %2079 = vmatprep.subr.mxu0 0.0
        %2080 = vmatpush2.msra.mxu0 0.0
        %2081 = vmatprep.subr.mxu0 0.0
        %2082 = vmatpush2.msra.mxu0 0.0
        %2083 = vmatprep.subr.mxu0 0.0
        %2084 = vmatpush2.msra.mxu0 0.0
        %2085 = vmatprep.subr.mxu0 0.0
        %2086 = vmatpush2.msra.mxu0 0.0
        %2087 = vmatprep.subr.mxu0 0.0
        %2088 = vmatpush2.msra.mxu0 0.0
        %2089 = vmatprep.subr.mxu0 0.0
        %2090 = vmatpush2.msra.mxu0 0.0
        %2091 = vmatprep.subr.mxu0 0.0
        %2092 = vmatpush2.msra.mxu0 0.0
        %2093 = vmatprep.mubr.f32.mxu0 0.0
        %2094 = vmatmul.mubr.f32.gmra.mxu0 %v2027
        %v2095 = vpop.f32.mrf.mxu0
        %v2096 = vadd.f32 %v2024, %v2095
        %v2097 = vpop.f32.mrf.mxu0
        %2098 = vdwg.mxu0
        %v2099 = vld [vmem:[%s3] sm:$0xf]
        %v2100 = vunpack.c.l.bf16 %v2099
        %v2102 = vsel %vm1135, %v2012, 0
        %v2105 = vsel %vm1135, %v2096, 0
        %2107 = vmatprep.subr.mxu0 0.0
        %2108 = vmatpush1.xpose.msra.mxu0 0.0
        %2109 = vmatprep.subr.mxu0 0.0
        %2110 = vmatpush1.xpose.msra.mxu0 0.0
        %2111 = vmatprep.subr.mxu0 0.0
        %2112 = vmatpush1.xpose.msra.mxu0 0.0
        %2113 = vmatprep.subr.mxu0 0.0
        %2114 = vmatpush1.xpose.msra.mxu0 0.0
        %2115 = vmatprep.subr.mxu0 0.0
        %2116 = vmatpush1.xpose.msra.mxu0 0.0
        %2117 = vmatprep.subr.mxu0 0.0
        %2118 = vmatpush1.xpose.msra.mxu0 0.0
        %2119 = vmatprep.subr.mxu0 0.0
        %2120 = vmatpush1.xpose.msra.mxu0 0.0
        %2121 = vmatprep.subr.mxu0 0.0
        %2122 = vmatpush1.xpose.msra.mxu0 0.0
        %2123 = vmatprep.subr.mxu0 0.0
        %2124 = vmatpush1.xpose.msra.mxu0 0.0
        %2125 = vmatprep.subr.mxu0 0.0
        %2126 = vmatpush1.xpose.msra.mxu0 0.0
        %2127 = vmatprep.subr.mxu0 0.0
        %2128 = vmatpush1.xpose.msra.mxu0 0.0
        %2129 = vmatprep.subr.mxu0 0.0
        %2130 = vmatpush1.xpose.msra.mxu0 0.0
        %2131 = vmatprep.subr.mxu0 0.0
        %2132 = vmatpush1.xpose.msra.mxu0 0.0
        %2133 = vmatprep.subr.mxu0 0.0
        %2134 = vmatpush1.xpose.msra.mxu0 0.0
        %2135 = vmatprep.subr.mxu0 0.0
        %2136 = vmatpush1.xpose.msra.mxu0 0.0
        %2137 = vmatprep.subr.mxu0 0.0
        %2138 = vmatpush1.xpose.msra.mxu0 %v2105
        %2139 = vmatprep.subr.mxu0 0.0
        %2140 = vmatpush2.xpose.msra.mxu0 0.0
        %2141 = vmatprep.subr.mxu0 0.0
        %2142 = vmatpush2.xpose.msra.mxu0 0.0
        %2143 = vmatprep.subr.mxu0 0.0
        %2144 = vmatpush2.xpose.msra.mxu0 0.0
        %2145 = vmatprep.subr.mxu0 0.0
        %2146 = vmatpush2.xpose.msra.mxu0 0.0
        %2147 = vmatprep.subr.mxu0 0.0
        %2148 = vmatpush2.xpose.msra.mxu0 0.0
        %2149 = vmatprep.subr.mxu0 0.0
        %2150 = vmatpush2.xpose.msra.mxu0 0.0
        %2151 = vmatprep.subr.mxu0 0.0
        %2152 = vmatpush2.xpose.msra.mxu0 0.0
        %2153 = vmatprep.subr.mxu0 0.0
        %2154 = vmatpush2.xpose.msra.mxu0 0.0
        %2155 = vmatprep.subr.mxu0 0.0
        %2156 = vmatpush2.xpose.msra.mxu0 0.0
        %2157 = vmatprep.subr.mxu0 0.0
        %2158 = vmatpush2.xpose.msra.mxu0 0.0
        %2159 = vmatprep.subr.mxu0 0.0
        %2160 = vmatpush2.xpose.msra.mxu0 0.0
        %2161 = vmatprep.subr.mxu0 0.0
        %2162 = vmatpush2.xpose.msra.mxu0 0.0
        %2163 = vmatprep.subr.mxu0 0.0
        %2164 = vmatpush2.xpose.msra.mxu0 0.0
        %2165 = vmatprep.subr.mxu0 0.0
        %2166 = vmatpush2.xpose.msra.mxu0 0.0
        %2167 = vmatprep.subr.mxu0 0.0
        %2168 = vmatpush2.xpose.msra.mxu0 0.0
        %2169 = vmatprep.subr.mxu0 0.0
        %2170 = vmatpush2.xpose.msra.mxu0 0.0
        %2171 = vmatprep.mubr.f32.mxu0 0.0
        %2172 = vmatmul.mubr.f32.gmra.mxu0 %v2102
        %v2173 = vpop.f32.mrf.mxu0
        %v2174 = vadd.f32 %v2100, %v2173
        %v2175 = vpop.f32.mrf.mxu0
        %2176 = vdwg.mxu0
        %v2177 = vsel %vm1135, %v2174, -inf
        %2178 = vmax.xlane.f32.xlu0 %v2177
        %v2179 = vpop.xlane.xlu0 %2178
        %v2180 = vsub.f32 %v2174, %v2179
        %v2181 = vmul.f32 %v2180, 1.442695
        %v2182 = vpow.pop %v2181
        %v2183 = vsel %vm1135, %v2182, 0.0
        %2184 = vadd.xlane.f32.xlu0 %v2183
        %v2185 = vpop.xlane.xlu0 %2184
        %v2186 = vrcp.pop %v2185
        %v2187 = vmul.f32 %v2182, %v2186
        %2188 = vst.msk [vmem:[%s1042] sm:$0xff] %vm1135, %v2187
        %2189 = vrot.lane.b32.xlu0 %v2096, 96
        %v2190 = vpop.permute.xlu0 %2189
        %v2193 = vsel %vm1135, %v2187, 0
        %2195 = vmatprep.subr.mxu0 0.0
        %2196 = vmatpush1.msra.mxu0 0.0
        %2197 = vmatprep.subr.mxu0 0.0
        %2198 = vmatpush1.msra.mxu0 0.0
        %2199 = vmatprep.subr.mxu0 0.0
        %2200 = vmatpush1.msra.mxu0 0.0
        %2201 = vmatprep.subr.mxu0 0.0
        %2202 = vmatpush1.msra.mxu0 0.0
        %2203 = vmatprep.subr.mxu0 0.0
        %2204 = vmatpush1.msra.mxu0 0.0
        %2205 = vmatprep.subr.mxu0 0.0
        %2206 = vmatpush1.msra.mxu0 0.0
        %2207 = vmatprep.subr.mxu0 0.0
        %2208 = vmatpush1.msra.mxu0 0.0
        %2209 = vmatprep.subr.mxu0 0.0
        %2210 = vmatpush1.msra.mxu0 0.0
        %2211 = vmatprep.subr.mxu0 0.0
        %2212 = vmatpush1.msra.mxu0 0.0
        %2213 = vmatprep.subr.mxu0 0.0
        %2214 = vmatpush1.msra.mxu0 0.0
        %2215 = vmatprep.subr.mxu0 0.0
        %2216 = vmatpush1.msra.mxu0 0.0
        %2217 = vmatprep.subr.mxu0 0.0
        %2218 = vmatpush1.msra.mxu0 0.0
        %2219 = vmatprep.subr.mxu0 0.0
        %2220 = vmatpush1.msra.mxu0 0.0
        %2221 = vmatprep.subr.mxu0 0.0
        %2222 = vmatpush1.msra.mxu0 0.0
        %2223 = vmatprep.subr.mxu0 0.0
        %2224 = vmatpush1.msra.mxu0 0.0
        %2225 = vmatprep.subr.mxu0 0.0
        %2226 = vmatpush1.msra.mxu0 %v2190
        %2227 = vmatprep.subr.mxu0 0.0
        %2228 = vmatpush2.msra.mxu0 0.0
        %2229 = vmatprep.subr.mxu0 0.0
        %2230 = vmatpush2.msra.mxu0 0.0
        %2231 = vmatprep.subr.mxu0 0.0
        %2232 = vmatpush2.msra.mxu0 0.0
        %2233 = vmatprep.subr.mxu0 0.0
        %2234 = vmatpush2.msra.mxu0 0.0
        %2235 = vmatprep.subr.mxu0 0.0
        %2236 = vmatpush2.msra.mxu0 0.0
        %2237 = vmatprep.subr.mxu0 0.0
        %2238 = vmatpush2.msra.mxu0 0.0
        %2239 = vmatprep.subr.mxu0 0.0
        %2240 = vmatpush2.msra.mxu0 0.0
        %2241 = vmatprep.subr.mxu0 0.0
        %2242 = vmatpush2.msra.mxu0 0.0
        %2243 = vmatprep.subr.mxu0 0.0
        %2244 = vmatpush2.msra.mxu0 0.0
        %2245 = vmatprep.subr.mxu0 0.0
        %2246 = vmatpush2.msra.mxu0 0.0
        %2247 = vmatprep.subr.mxu0 0.0
        %2248 = vmatpush2.msra.mxu0 0.0
        %2249 = vmatprep.subr.mxu0 0.0
        %2250 = vmatpush2.msra.mxu0 0.0
        %2251 = vmatprep.subr.mxu0 0.0
        %2252 = vmatpush2.msra.mxu0 0.0
        %2253 = vmatprep.subr.mxu0 0.0
        %2254 = vmatpush2.msra.mxu0 0.0
        %2255 = vmatprep.subr.mxu0 0.0
        %2256 = vmatpush2.msra.mxu0 0.0
        %2257 = vmatprep.subr.mxu0 0.0
        %2258 = vmatpush2.msra.mxu0 0.0
        %2259 = vmatprep.mubr.f32.mxu0 0.0
        %2260 = vmatmul.mubr.f32.gmra.mxu0 %v2193
        %v2261 = vpop.f32.mrf.mxu0
        %v2262 = vadd.f32 0.0, %v2261
        %v2263 = vpop.f32.mrf.mxu0
        %2264 = vdwg.mxu0
        %2265 = vrot.lane.b32.xlu0 %v2012, 120
        %v2266 = vpop.permute.xlu0 %2265
        %2267 = vrot.lane.b32.xlu0 %v2096, 120
        %v2268 = vpop.permute.xlu0 %2267
        %v2269 = vsel %vm1135, %v2266, 0
        %v2271 = vsel %vm1135, %v2268, 0
        %2273 = vmatprep.subr.mxu0 0.0
        %2274 = vmatpush1.xpose.msra.mxu0 0.0
        %2275 = vmatprep.subr.mxu0 0.0
        %2276 = vmatpush1.xpose.msra.mxu0 0.0
        %2277 = vmatprep.subr.mxu0 0.0
        %2278 = vmatpush1.xpose.msra.mxu0 0.0
        %2279 = vmatprep.subr.mxu0 0.0
        %2280 = vmatpush1.xpose.msra.mxu0 0.0
        %2281 = vmatprep.subr.mxu0 0.0
        %2282 = vmatpush1.xpose.msra.mxu0 0.0
        %2283 = vmatprep.subr.mxu0 0.0
        %2284 = vmatpush1.xpose.msra.mxu0 0.0
        %2285 = vmatprep.subr.mxu0 0.0
        %2286 = vmatpush1.xpose.msra.mxu0 0.0
        %2287 = vmatprep.subr.mxu0 0.0
        %2288 = vmatpush1.xpose.msra.mxu0 0.0
        %2289 = vmatprep.subr.mxu0 0.0
        %2290 = vmatpush1.xpose.msra.mxu0 0.0
        %2291 = vmatprep.subr.mxu0 0.0
        %2292 = vmatpush1.xpose.msra.mxu0 0.0
        %2293 = vmatprep.subr.mxu0 0.0
        %2294 = vmatpush1.xpose.msra.mxu0 0.0
        %2295 = vmatprep.subr.mxu0 0.0
        %2296 = vmatpush1.xpose.msra.mxu0 0.0
        %2297 = vmatprep.subr.mxu0 0.0
        %2298 = vmatpush1.xpose.msra.mxu0 0.0
        %2299 = vmatprep.subr.mxu0 0.0
        %2300 = vmatpush1.xpose.msra.mxu0 0.0
        %2301 = vmatprep.subr.mxu0 0.0
        %2302 = vmatpush1.xpose.msra.mxu0 0.0
        %2303 = vmatprep.subr.mxu0 0.0
        %2304 = vmatpush1.xpose.msra.mxu0 %v2271
        %2305 = vmatprep.subr.mxu0 0.0
        %2306 = vmatpush2.xpose.msra.mxu0 0.0
        %2307 = vmatprep.subr.mxu0 0.0
        %2308 = vmatpush2.xpose.msra.mxu0 0.0
        %2309 = vmatprep.subr.mxu0 0.0
        %2310 = vmatpush2.xpose.msra.mxu0 0.0
        %2311 = vmatprep.subr.mxu0 0.0
        %2312 = vmatpush2.xpose.msra.mxu0 0.0
        %2313 = vmatprep.subr.mxu0 0.0
        %2314 = vmatpush2.xpose.msra.mxu0 0.0
        %2315 = vmatprep.subr.mxu0 0.0
        %2316 = vmatpush2.xpose.msra.mxu0 0.0
        %2317 = vmatprep.subr.mxu0 0.0
        %2318 = vmatpush2.xpose.msra.mxu0 0.0
        %2319 = vmatprep.subr.mxu0 0.0
        %2320 = vmatpush2.xpose.msra.mxu0 0.0
        %2321 = vmatprep.subr.mxu0 0.0
        %2322 = vmatpush2.xpose.msra.mxu0 0.0
        %2323 = vmatprep.subr.mxu0 0.0
        %2324 = vmatpush2.xpose.msra.mxu0 0.0
        %2325 = vmatprep.subr.mxu0 0.0
        %2326 = vmatpush2.xpose.msra.mxu0 0.0
        %2327 = vmatprep.subr.mxu0 0.0
        %2328 = vmatpush2.xpose.msra.mxu0 0.0
        %2329 = vmatprep.subr.mxu0 0.0
        %2330 = vmatpush2.xpose.msra.mxu0 0.0
        %2331 = vmatprep.subr.mxu0 0.0
        %2332 = vmatpush2.xpose.msra.mxu0 0.0
        %2333 = vmatprep.subr.mxu0 0.0
        %2334 = vmatpush2.xpose.msra.mxu0 0.0
        %2335 = vmatprep.subr.mxu0 0.0
        %2336 = vmatpush2.xpose.msra.mxu0 0.0
        %2337 = vmatprep.mubr.f32.mxu0 0.0
        %2338 = vmatmul.mubr.f32.gmra.mxu0 %v2269
        %v2339 = vpop.f32.mrf.mxu0
        %v2340 = vadd.f32 %v2100, %v2339
        %v2341 = vpop.f32.mrf.mxu0
        %2342 = vdwg.mxu0
        %v2343 = vsel %vm1135, %v2340, -inf
        %2344 = vmax.xlane.f32.xlu0 %v2343
        %v2345 = vpop.xlane.xlu0 %2344
        %v2346 = vsub.f32 %v2340, %v2345
        %v2347 = vmul.f32 %v2346, 1.442695
        %v2348 = vpow.pop %v2347
        %v2349 = vsel %vm1135, %v2348, 0.0
        %2350 = vadd.xlane.f32.xlu0 %v2349
        %v2351 = vpop.xlane.xlu0 %2350
        %v2352 = vrcp.pop %v2351
        %v2353 = vmul.f32 %v2348, %v2352
        %s2354 = scalar_lea.vmem %s1042, 8 [#allocation31]
        %2355 = vst.msk [vmem:[%s2354] sm:$0xff] %vm1135, %v2353
        %2356 = vrot.lane.b32.xlu0 %v2096, 88
        %v2357 = vpop.permute.xlu0 %2356
        %v2360 = vsel %vm1135, %v2353, 0
        %2362 = vmatprep.subr.mxu0 0.0
        %2363 = vmatpush1.msra.mxu0 0.0
        %2364 = vmatprep.subr.mxu0 0.0
        %2365 = vmatpush1.msra.mxu0 0.0
        %2366 = vmatprep.subr.mxu0 0.0
        %2367 = vmatpush1.msra.mxu0 0.0
        %2368 = vmatprep.subr.mxu0 0.0
        %2369 = vmatpush1.msra.mxu0 0.0
        %2370 = vmatprep.subr.mxu0 0.0
        %2371 = vmatpush1.msra.mxu0 0.0
        %2372 = vmatprep.subr.mxu0 0.0
        %2373 = vmatpush1.msra.mxu0 0.0
        %2374 = vmatprep.subr.mxu0 0.0
        %2375 = vmatpush1.msra.mxu0 0.0
        %2376 = vmatprep.subr.mxu0 0.0
        %2377 = vmatpush1.msra.mxu0 0.0
        %2378 = vmatprep.subr.mxu0 0.0
        %2379 = vmatpush1.msra.mxu0 0.0
        %2380 = vmatprep.subr.mxu0 0.0
        %2381 = vmatpush1.msra.mxu0 0.0
        %2382 = vmatprep.subr.mxu0 0.0
        %2383 = vmatpush1.msra.mxu0 0.0
        %2384 = vmatprep.subr.mxu0 0.0
        %2385 = vmatpush1.msra.mxu0 0.0
        %2386 = vmatprep.subr.mxu0 0.0
        %2387 = vmatpush1.msra.mxu0 0.0
        %2388 = vmatprep.subr.mxu0 0.0
        %2389 = vmatpush1.msra.mxu0 0.0
        %2390 = vmatprep.subr.mxu0 0.0
        %2391 = vmatpush1.msra.mxu0 0.0
        %2392 = vmatprep.subr.mxu0 0.0
        %2393 = vmatpush1.msra.mxu0 %v2357
        %2394 = vmatprep.subr.mxu0 0.0
        %2395 = vmatpush2.msra.mxu0 0.0
        %2396 = vmatprep.subr.mxu0 0.0
        %2397 = vmatpush2.msra.mxu0 0.0
        %2398 = vmatprep.subr.mxu0 0.0
        %2399 = vmatpush2.msra.mxu0 0.0
        %2400 = vmatprep.subr.mxu0 0.0
        %2401 = vmatpush2.msra.mxu0 0.0
        %2402 = vmatprep.subr.mxu0 0.0
        %2403 = vmatpush2.msra.mxu0 0.0
        %2404 = vmatprep.subr.mxu0 0.0
        %2405 = vmatpush2.msra.mxu0 0.0
        %2406 = vmatprep.subr.mxu0 0.0
        %2407 = vmatpush2.msra.mxu0 0.0
        %2408 = vmatprep.subr.mxu0 0.0
        %2409 = vmatpush2.msra.mxu0 0.0
        %2410 = vmatprep.subr.mxu0 0.0
        %2411 = vmatpush2.msra.mxu0 0.0
        %2412 = vmatprep.subr.mxu0 0.0
        %2413 = vmatpush2.msra.mxu0 0.0
        %2414 = vmatprep.subr.mxu0 0.0
        %2415 = vmatpush2.msra.mxu0 0.0
        %2416 = vmatprep.subr.mxu0 0.0
        %2417 = vmatpush2.msra.mxu0 0.0
        %2418 = vmatprep.subr.mxu0 0.0
        %2419 = vmatpush2.msra.mxu0 0.0
        %2420 = vmatprep.subr.mxu0 0.0
        %2421 = vmatpush2.msra.mxu0 0.0
        %2422 = vmatprep.subr.mxu0 0.0
        %2423 = vmatpush2.msra.mxu0 0.0
        %2424 = vmatprep.subr.mxu0 0.0
        %2425 = vmatpush2.msra.mxu0 0.0
        %2426 = vmatprep.mubr.f32.mxu0 0.0
        %2427 = vmatmul.mubr.f32.gmra.mxu0 %v2360
        %v2428 = vpop.f32.mrf.mxu0
        %v2429 = vadd.f32 0.0, %v2428
        %v2430 = vpop.f32.mrf.mxu0
        %2431 = vdwg.mxu0
        %2432 = vrot.lane.b32.xlu0 %v2012, 112
        %v2433 = vpop.permute.xlu0 %2432
        %2434 = vrot.lane.b32.xlu0 %v2096, 112
        %v2435 = vpop.permute.xlu0 %2434
        %v2436 = vsel %vm1135, %v2433, 0
        %v2438 = vsel %vm1135, %v2435, 0
        %2440 = vmatprep.subr.mxu0 0.0
        %2441 = vmatpush1.xpose.msra.mxu0 0.0
        %2442 = vmatprep.subr.mxu0 0.0
        %2443 = vmatpush1.xpose.msra.mxu0 0.0
        %2444 = vmatprep.subr.mxu0 0.0
        %2445 = vmatpush1.xpose.msra.mxu0 0.0
        %2446 = vmatprep.subr.mxu0 0.0
        %2447 = vmatpush1.xpose.msra.mxu0 0.0
        %2448 = vmatprep.subr.mxu0 0.0
        %2449 = vmatpush1.xpose.msra.mxu0 0.0
        %2450 = vmatprep.subr.mxu0 0.0
        %2451 = vmatpush1.xpose.msra.mxu0 0.0
        %2452 = vmatprep.subr.mxu0 0.0
        %2453 = vmatpush1.xpose.msra.mxu0 0.0
        %2454 = vmatprep.subr.mxu0 0.0
        %2455 = vmatpush1.xpose.msra.mxu0 0.0
        %2456 = vmatprep.subr.mxu0 0.0
        %2457 = vmatpush1.xpose.msra.mxu0 0.0
        %2458 = vmatprep.subr.mxu0 0.0
        %2459 = vmatpush1.xpose.msra.mxu0 0.0
        %2460 = vmatprep.subr.mxu0 0.0
        %2461 = vmatpush1.xpose.msra.mxu0 0.0
        %2462 = vmatprep.subr.mxu0 0.0
        %2463 = vmatpush1.xpose.msra.mxu0 0.0
        %2464 = vmatprep.subr.mxu0 0.0
        %2465 = vmatpush1.xpose.msra.mxu0 0.0
        %2466 = vmatprep.subr.mxu0 0.0
        %2467 = vmatpush1.xpose.msra.mxu0 0.0
        %2468 = vmatprep.subr.mxu0 0.0
        %2469 = vmatpush1.xpose.msra.mxu0 0.0
        %2470 = vmatprep.subr.mxu0 0.0
        %2471 = vmatpush1.xpose.msra.mxu0 %v2438
        %2472 = vmatprep.subr.mxu0 0.0
        %2473 = vmatpush2.xpose.msra.mxu0 0.0
        %2474 = vmatprep.subr.mxu0 0.0
        %2475 = vmatpush2.xpose.msra.mxu0 0.0
        %2476 = vmatprep.subr.mxu0 0.0
        %2477 = vmatpush2.xpose.msra.mxu0 0.0
        %2478 = vmatprep.subr.mxu0 0.0
        %2479 = vmatpush2.xpose.msra.mxu0 0.0
        %2480 = vmatprep.subr.mxu0 0.0
        %2481 = vmatpush2.xpose.msra.mxu0 0.0
        %2482 = vmatprep.subr.mxu0 0.0
        %2483 = vmatpush2.xpose.msra.mxu0 0.0
        %2484 = vmatprep.subr.mxu0 0.0
        %2485 = vmatpush2.xpose.msra.mxu0 0.0
        %2486 = vmatprep.subr.mxu0 0.0
        %2487 = vmatpush2.xpose.msra.mxu0 0.0
        %2488 = vmatprep.subr.mxu0 0.0
        %2489 = vmatpush2.xpose.msra.mxu0 0.0
        %2490 = vmatprep.subr.mxu0 0.0
        %2491 = vmatpush2.xpose.msra.mxu0 0.0
        %2492 = vmatprep.subr.mxu0 0.0
        %2493 = vmatpush2.xpose.msra.mxu0 0.0
        %2494 = vmatprep.subr.mxu0 0.0
        %2495 = vmatpush2.xpose.msra.mxu0 0.0
        %2496 = vmatprep.subr.mxu0 0.0
        %2497 = vmatpush2.xpose.msra.mxu0 0.0
        %2498 = vmatprep.subr.mxu0 0.0
        %2499 = vmatpush2.xpose.msra.mxu0 0.0
        %2500 = vmatprep.subr.mxu0 0.0
        %2501 = vmatpush2.xpose.msra.mxu0 0.0
        %2502 = vmatprep.subr.mxu0 0.0
        %2503 = vmatpush2.xpose.msra.mxu0 0.0
        %2504 = vmatprep.mubr.f32.mxu0 0.0
        %2505 = vmatmul.mubr.f32.gmra.mxu0 %v2436
        %v2506 = vpop.f32.mrf.mxu0
        %v2507 = vadd.f32 %v2100, %v2506
        %v2508 = vpop.f32.mrf.mxu0
        %2509 = vdwg.mxu0
        %v2510 = vsel %vm1135, %v2507, -inf
        %2511 = vmax.xlane.f32.xlu0 %v2510
        %v2512 = vpop.xlane.xlu0 %2511
        %v2513 = vsub.f32 %v2507, %v2512
        %v2514 = vmul.f32 %v2513, 1.442695
        %v2515 = vpow.pop %v2514
        %v2516 = vsel %vm1135, %v2515, 0.0
        %2517 = vadd.xlane.f32.xlu0 %v2516
        %v2518 = vpop.xlane.xlu0 %2517
        %v2519 = vrcp.pop %v2518
        %v2520 = vmul.f32 %v2515, %v2519
        %s2521 = scalar_lea.vmem %s1042, 16 [#allocation31]
        %2522 = vst.msk [vmem:[%s2521] sm:$0xff] %vm1135, %v2520
        %2523 = vrot.lane.b32.xlu0 %v2096, 80
        %v2524 = vpop.permute.xlu0 %2523
        %v2527 = vsel %vm1135, %v2520, 0
        %2529 = vmatprep.subr.mxu0 0.0
        %2530 = vmatpush1.msra.mxu0 0.0
        %2531 = vmatprep.subr.mxu0 0.0
        %2532 = vmatpush1.msra.mxu0 0.0
        %2533 = vmatprep.subr.mxu0 0.0
        %2534 = vmatpush1.msra.mxu0 0.0
        %2535 = vmatprep.subr.mxu0 0.0
        %2536 = vmatpush1.msra.mxu0 0.0
        %2537 = vmatprep.subr.mxu0 0.0
        %2538 = vmatpush1.msra.mxu0 0.0
        %2539 = vmatprep.subr.mxu0 0.0
        %2540 = vmatpush1.msra.mxu0 0.0
        %2541 = vmatprep.subr.mxu0 0.0
        %2542 = vmatpush1.msra.mxu0 0.0
        %2543 = vmatprep.subr.mxu0 0.0
        %2544 = vmatpush1.msra.mxu0 0.0
        %2545 = vmatprep.subr.mxu0 0.0
        %2546 = vmatpush1.msra.mxu0 0.0
        %2547 = vmatprep.subr.mxu0 0.0
        %2548 = vmatpush1.msra.mxu0 0.0
        %2549 = vmatprep.subr.mxu0 0.0
        %2550 = vmatpush1.msra.mxu0 0.0
        %2551 = vmatprep.subr.mxu0 0.0
        %2552 = vmatpush1.msra.mxu0 0.0
        %2553 = vmatprep.subr.mxu0 0.0
        %2554 = vmatpush1.msra.mxu0 0.0
        %2555 = vmatprep.subr.mxu0 0.0
        %2556 = vmatpush1.msra.mxu0 0.0
        %2557 = vmatprep.subr.mxu0 0.0
        %2558 = vmatpush1.msra.mxu0 0.0
        %2559 = vmatprep.subr.mxu0 0.0
        %2560 = vmatpush1.msra.mxu0 %v2524
        %2561 = vmatprep.subr.mxu0 0.0
        %2562 = vmatpush2.msra.mxu0 0.0
        %2563 = vmatprep.subr.mxu0 0.0
        %2564 = vmatpush2.msra.mxu0 0.0
        %2565 = vmatprep.subr.mxu0 0.0
        %2566 = vmatpush2.msra.mxu0 0.0
        %2567 = vmatprep.subr.mxu0 0.0
        %2568 = vmatpush2.msra.mxu0 0.0
        %2569 = vmatprep.subr.mxu0 0.0
        %2570 = vmatpush2.msra.mxu0 0.0
        %2571 = vmatprep.subr.mxu0 0.0
        %2572 = vmatpush2.msra.mxu0 0.0
        %2573 = vmatprep.subr.mxu0 0.0
        %2574 = vmatpush2.msra.mxu0 0.0
        %2575 = vmatprep.subr.mxu0 0.0
        %2576 = vmatpush2.msra.mxu0 0.0
        %2577 = vmatprep.subr.mxu0 0.0
        %2578 = vmatpush2.msra.mxu0 0.0
        %2579 = vmatprep.subr.mxu0 0.0
        %2580 = vmatpush2.msra.mxu0 0.0
        %2581 = vmatprep.subr.mxu0 0.0
        %2582 = vmatpush2.msra.mxu0 0.0
        %2583 = vmatprep.subr.mxu0 0.0
        %2584 = vmatpush2.msra.mxu0 0.0
        %2585 = vmatprep.subr.mxu0 0.0
        %2586 = vmatpush2.msra.mxu0 0.0
        %2587 = vmatprep.subr.mxu0 0.0
        %2588 = vmatpush2.msra.mxu0 0.0
        %2589 = vmatprep.subr.mxu0 0.0
        %2590 = vmatpush2.msra.mxu0 0.0
        %2591 = vmatprep.subr.mxu0 0.0
        %2592 = vmatpush2.msra.mxu0 0.0
        %2593 = vmatprep.mubr.f32.mxu0 0.0
        %2594 = vmatmul.mubr.f32.gmra.mxu0 %v2527
        %v2595 = vpop.f32.mrf.mxu0
        %v2596 = vadd.f32 0.0, %v2595
        %v2597 = vpop.f32.mrf.mxu0
        %2598 = vdwg.mxu0
        %2599 = vrot.lane.b32.xlu0 %v2012, 104
        %v2600 = vpop.permute.xlu0 %2599
        %2601 = vrot.lane.b32.xlu0 %v2096, 104
        %v2602 = vpop.permute.xlu0 %2601
        %v2603 = vsel %vm1135, %v2600, 0
        %v2605 = vsel %vm1135, %v2602, 0
        %2607 = vmatprep.subr.mxu0 0.0
        %2608 = vmatpush1.xpose.msra.mxu0 0.0
        %2609 = vmatprep.subr.mxu0 0.0
        %2610 = vmatpush1.xpose.msra.mxu0 0.0
        %2611 = vmatprep.subr.mxu0 0.0
        %2612 = vmatpush1.xpose.msra.mxu0 0.0
        %2613 = vmatprep.subr.mxu0 0.0
        %2614 = vmatpush1.xpose.msra.mxu0 0.0
        %2615 = vmatprep.subr.mxu0 0.0
        %2616 = vmatpush1.xpose.msra.mxu0 0.0
        %2617 = vmatprep.subr.mxu0 0.0
        %2618 = vmatpush1.xpose.msra.mxu0 0.0
        %2619 = vmatprep.subr.mxu0 0.0
        %2620 = vmatpush1.xpose.msra.mxu0 0.0
        %2621 = vmatprep.subr.mxu0 0.0
        %2622 = vmatpush1.xpose.msra.mxu0 0.0
        %2623 = vmatprep.subr.mxu0 0.0
        %2624 = vmatpush1.xpose.msra.mxu0 0.0
        %2625 = vmatprep.subr.mxu0 0.0
        %2626 = vmatpush1.xpose.msra.mxu0 0.0
        %2627 = vmatprep.subr.mxu0 0.0
        %2628 = vmatpush1.xpose.msra.mxu0 0.0
        %2629 = vmatprep.subr.mxu0 0.0
        %2630 = vmatpush1.xpose.msra.mxu0 0.0
        %2631 = vmatprep.subr.mxu0 0.0
        %2632 = vmatpush1.xpose.msra.mxu0 0.0
        %2633 = vmatprep.subr.mxu0 0.0
        %2634 = vmatpush1.xpose.msra.mxu0 0.0
        %2635 = vmatprep.subr.mxu0 0.0
        %2636 = vmatpush1.xpose.msra.mxu0 0.0
        %2637 = vmatprep.subr.mxu0 0.0
        %2638 = vmatpush1.xpose.msra.mxu0 %v2605
        %2639 = vmatprep.subr.mxu0 0.0
        %2640 = vmatpush2.xpose.msra.mxu0 0.0
        %2641 = vmatprep.subr.mxu0 0.0
        %2642 = vmatpush2.xpose.msra.mxu0 0.0
        %2643 = vmatprep.subr.mxu0 0.0
        %2644 = vmatpush2.xpose.msra.mxu0 0.0
        %2645 = vmatprep.subr.mxu0 0.0
        %2646 = vmatpush2.xpose.msra.mxu0 0.0
        %2647 = vmatprep.subr.mxu0 0.0
        %2648 = vmatpush2.xpose.msra.mxu0 0.0
        %2649 = vmatprep.subr.mxu0 0.0
        %2650 = vmatpush2.xpose.msra.mxu0 0.0
        %2651 = vmatprep.subr.mxu0 0.0
        %2652 = vmatpush2.xpose.msra.mxu0 0.0
        %2653 = vmatprep.subr.mxu0 0.0
        %2654 = vmatpush2.xpose.msra.mxu0 0.0
        %2655 = vmatprep.subr.mxu0 0.0
        %2656 = vmatpush2.xpose.msra.mxu0 0.0
        %2657 = vmatprep.subr.mxu0 0.0
        %2658 = vmatpush2.xpose.msra.mxu0 0.0
        %2659 = vmatprep.subr.mxu0 0.0
        %2660 = vmatpush2.xpose.msra.mxu0 0.0
        %2661 = vmatprep.subr.mxu0 0.0
        %2662 = vmatpush2.xpose.msra.mxu0 0.0
        %2663 = vmatprep.subr.mxu0 0.0
        %2664 = vmatpush2.xpose.msra.mxu0 0.0
        %2665 = vmatprep.subr.mxu0 0.0
        %2666 = vmatpush2.xpose.msra.mxu0 0.0
        %2667 = vmatprep.subr.mxu0 0.0
        %2668 = vmatpush2.xpose.msra.mxu0 0.0
        %2669 = vmatprep.subr.mxu0 0.0
        %2670 = vmatpush2.xpose.msra.mxu0 0.0
        %2671 = vmatprep.mubr.f32.mxu0 0.0
        %2672 = vmatmul.mubr.f32.gmra.mxu0 %v2603
        %v2673 = vpop.f32.mrf.mxu0
        %v2674 = vadd.f32 %v2100, %v2673
        %v2675 = vpop.f32.mrf.mxu0
        %2676 = vdwg.mxu0
        %v2677 = vsel %vm1135, %v2674, -inf
        %2678 = vmax.xlane.f32.xlu0 %v2677
        %v2679 = vpop.xlane.xlu0 %2678
        %v2680 = vsub.f32 %v2674, %v2679
        %v2681 = vmul.f32 %v2680, 1.442695
        %v2682 = vpow.pop %v2681
        %v2683 = vsel %vm1135, %v2682, 0.0
        %2684 = vadd.xlane.f32.xlu0 %v2683
        %v2685 = vpop.xlane.xlu0 %2684
        %v2686 = vrcp.pop %v2685
        %v2687 = vmul.f32 %v2682, %v2686
        %s2688 = scalar_lea.vmem %s1042, 24 [#allocation31]
        %2689 = vst.msk [vmem:[%s2688] sm:$0xff] %vm1135, %v2687
        %2690 = vrot.lane.b32.xlu0 %v2096, 72
        %v2691 = vpop.permute.xlu0 %2690
        %v2694 = vsel %vm1135, %v2687, 0
        %2696 = vmatprep.subr.mxu0 0.0
        %2697 = vmatpush1.msra.mxu0 0.0
        %2698 = vmatprep.subr.mxu0 0.0
        %2699 = vmatpush1.msra.mxu0 0.0
        %2700 = vmatprep.subr.mxu0 0.0
        %2701 = vmatpush1.msra.mxu0 0.0
        %2702 = vmatprep.subr.mxu0 0.0
        %2703 = vmatpush1.msra.mxu0 0.0
        %2704 = vmatprep.subr.mxu0 0.0
        %2705 = vmatpush1.msra.mxu0 0.0
        %2706 = vmatprep.subr.mxu0 0.0
        %2707 = vmatpush1.msra.mxu0 0.0
        %2708 = vmatprep.subr.mxu0 0.0
        %2709 = vmatpush1.msra.mxu0 0.0
        %2710 = vmatprep.subr.mxu0 0.0
        %2711 = vmatpush1.msra.mxu0 0.0
        %2712 = vmatprep.subr.mxu0 0.0
        %2713 = vmatpush1.msra.mxu0 0.0
        %2714 = vmatprep.subr.mxu0 0.0
        %2715 = vmatpush1.msra.mxu0 0.0
        %2716 = vmatprep.subr.mxu0 0.0
        %2717 = vmatpush1.msra.mxu0 0.0
        %2718 = vmatprep.subr.mxu0 0.0
        %2719 = vmatpush1.msra.mxu0 0.0
        %2720 = vmatprep.subr.mxu0 0.0
        %2721 = vmatpush1.msra.mxu0 0.0
        %2722 = vmatprep.subr.mxu0 0.0
        %2723 = vmatpush1.msra.mxu0 0.0
        %2724 = vmatprep.subr.mxu0 0.0
        %2725 = vmatpush1.msra.mxu0 0.0
        %2726 = vmatprep.subr.mxu0 0.0
        %2727 = vmatpush1.msra.mxu0 %v2691
        %2728 = vmatprep.subr.mxu0 0.0
        %2729 = vmatpush2.msra.mxu0 0.0
        %2730 = vmatprep.subr.mxu0 0.0
        %2731 = vmatpush2.msra.mxu0 0.0
        %2732 = vmatprep.subr.mxu0 0.0
        %2733 = vmatpush2.msra.mxu0 0.0
        %2734 = vmatprep.subr.mxu0 0.0
        %2735 = vmatpush2.msra.mxu0 0.0
        %2736 = vmatprep.subr.mxu0 0.0
        %2737 = vmatpush2.msra.mxu0 0.0
        %2738 = vmatprep.subr.mxu0 0.0
        %2739 = vmatpush2.msra.mxu0 0.0
        %2740 = vmatprep.subr.mxu0 0.0
        %2741 = vmatpush2.msra.mxu0 0.0
        %2742 = vmatprep.subr.mxu0 0.0
        %2743 = vmatpush2.msra.mxu0 0.0
        %2744 = vmatprep.subr.mxu0 0.0
        %2745 = vmatpush2.msra.mxu0 0.0
        %2746 = vmatprep.subr.mxu0 0.0
        %2747 = vmatpush2.msra.mxu0 0.0
        %2748 = vmatprep.subr.mxu0 0.0
        %2749 = vmatpush2.msra.mxu0 0.0
        %2750 = vmatprep.subr.mxu0 0.0
        %2751 = vmatpush2.msra.mxu0 0.0
        %2752 = vmatprep.subr.mxu0 0.0
        %2753 = vmatpush2.msra.mxu0 0.0
        %2754 = vmatprep.subr.mxu0 0.0
        %2755 = vmatpush2.msra.mxu0 0.0
        %2756 = vmatprep.subr.mxu0 0.0
        %2757 = vmatpush2.msra.mxu0 0.0
        %2758 = vmatprep.subr.mxu0 0.0
        %2759 = vmatpush2.msra.mxu0 0.0
        %2760 = vmatprep.mubr.f32.mxu0 0.0
        %2761 = vmatmul.mubr.f32.gmra.mxu0 %v2694
        %v2762 = vpop.f32.mrf.mxu0
        %v2763 = vadd.f32 0.0, %v2762
        %v2764 = vpop.f32.mrf.mxu0
        %2765 = vdwg.mxu0
        %2767 = vrot.lane.b32.xlu0 %v2429, 8
        %v2768 = vpop.permute.xlu0 %2767
        %2771 = vrot.lane.b32.xlu0 %v2596, 16
        %v2772 = vpop.permute.xlu0 %2771
        %2775 = vrot.lane.b32.xlu0 %v2763, 24
        %v2776 = vpop.permute.xlu0 %2775
        %v2778 = vsel %vm1135, %v2262, %v2768
        %v2779 = vsel %vm1812, %v2778, %v2772
        %v2780 = vsel %vm1814, %v2779, %v2776
        %v2781 = vld [vmem:[#allocation19] sm:$0xff]
        %v2782 = vld [vmem:[#allocation19 + $0x8] sm:$0xff]
        %v2783 = vld [vmem:[#allocation19 + $0x10] sm:$0xff]
        %v2784 = vld [vmem:[#allocation19 + $0x18] sm:$0xff]
        %v2785 = vld [vmem:[#allocation20] sm:$0x1]
        %v2787 = vlaneseq
        %v2788 = vshrl.u32 %v2787, 7
        %v2789 = vsub.s32 0, %v2788
        %v2790 = vrot.slane %v2785, %v2789
        %v2793 = vsel %vm1056, %v2780, 0
        %2795 = vmatprep.subr.mxu0 0.0
        %2796 = vmatpush1.msra.mxu0 0.0
        %2797 = vmatprep.subr.mxu0 0.0
        %2798 = vmatpush1.msra.mxu0 0.0
        %2799 = vmatprep.subr.mxu0 0.0
        %2800 = vmatpush1.msra.mxu0 0.0
        %2801 = vmatprep.subr.mxu0 0.0
        %2802 = vmatpush1.msra.mxu0 0.0
        %2803 = vmatprep.subr.mxu0 0.0
        %2804 = vmatpush1.msra.mxu0 0.0
        %2805 = vmatprep.subr.mxu0 0.0
        %2806 = vmatpush1.msra.mxu0 0.0
        %2807 = vmatprep.subr.mxu0 0.0
        %2808 = vmatpush1.msra.mxu0 0.0
        %2809 = vmatprep.subr.mxu0 0.0
        %2810 = vmatpush1.msra.mxu0 0.0
        %2811 = vmatprep.subr.mxu0 0.0
        %2812 = vmatpush1.msra.mxu0 0.0
        %2813 = vmatprep.subr.mxu0 0.0
        %2814 = vmatpush1.msra.mxu0 0.0
        %2815 = vmatprep.subr.mxu0 0.0
        %2816 = vmatpush1.msra.mxu0 0.0
        %2817 = vmatprep.subr.mxu0 0.0
        %2818 = vmatpush1.msra.mxu0 0.0
        %2819 = vmatprep.subr.mxu0 0.0
        %2820 = vmatpush1.msra.mxu0 %v2784
        %2821 = vmatprep.subr.mxu0 0.0
        %2822 = vmatpush1.msra.mxu0 %v2783
        %2823 = vmatprep.subr.mxu0 0.0
        %2824 = vmatpush1.msra.mxu0 %v2782
        %2825 = vmatprep.subr.mxu0 0.0
        %2826 = vmatpush1.msra.mxu0 %v2781
        %2827 = vmatprep.subr.mxu0 0.0
        %2828 = vmatpush2.msra.mxu0 0.0
        %2829 = vmatprep.subr.mxu0 0.0
        %2830 = vmatpush2.msra.mxu0 0.0
        %2831 = vmatprep.subr.mxu0 0.0
        %2832 = vmatpush2.msra.mxu0 0.0
        %2833 = vmatprep.subr.mxu0 0.0
        %2834 = vmatpush2.msra.mxu0 0.0
        %2835 = vmatprep.subr.mxu0 0.0
        %2836 = vmatpush2.msra.mxu0 0.0
        %2837 = vmatprep.subr.mxu0 0.0
        %2838 = vmatpush2.msra.mxu0 0.0
        %2839 = vmatprep.subr.mxu0 0.0
        %2840 = vmatpush2.msra.mxu0 0.0
        %2841 = vmatprep.subr.mxu0 0.0
        %2842 = vmatpush2.msra.mxu0 0.0
        %2843 = vmatprep.subr.mxu0 0.0
        %2844 = vmatpush2.msra.mxu0 0.0
        %2845 = vmatprep.subr.mxu0 0.0
        %2846 = vmatpush2.msra.mxu0 0.0
        %2847 = vmatprep.subr.mxu0 0.0
        %2848 = vmatpush2.msra.mxu0 0.0
        %2849 = vmatprep.subr.mxu0 0.0
        %2850 = vmatpush2.msra.mxu0 0.0
        %2851 = vmatprep.subr.mxu0 0.0
        %2852 = vmatpush2.msra.mxu0 0.0
        %2853 = vmatprep.subr.mxu0 0.0
        %2854 = vmatpush2.msra.mxu0 0.0
        %2855 = vmatprep.subr.mxu0 0.0
        %2856 = vmatpush2.msra.mxu0 0.0
        %2857 = vmatprep.subr.mxu0 0.0
        %2858 = vmatpush2.msra.mxu0 0.0
        %2859 = vmatprep.mubr.f32.mxu0 0.0
        %2860 = vmatmul.mubr.f32.gmra.mxu0 %v2793
        %v2861 = vpop.f32.mrf.mxu0
        %v2862 = vadd.f32 %v2790, %v2861
        %v2863 = vpop.f32.mrf.mxu0
        %2864 = vdwg.mxu0
        %v2865 = vadd.f32 %v1930, %v2862
        %v2866 = vld [vmem:[#allocation22] sm:$0x1]
        %v2867 = vld [vmem:[#allocation23] sm:$0x1]
        %v2868 = vsel %vm1056, %v2865, 0.0
        %2869 = vadd.xlane.f32.xlu0 %v2868
        %v2870 = vpop.xlane.xlu0 %2869
        %v2871 = vmul.f32 %v2870, %v1906
        %v2872 = vsub.f32 %v2865, %v2871
        %v2873 = vmul.f32 %v2872, %v2872
        %v2874 = vsel %vm1056, %v2873, 0.0
        %2875 = vadd.xlane.f32.xlu0 %v2874
        %v2876 = vpop.xlane.xlu0 %2875
        %v2877 = vmul.f32 %v2876, %v1906
        %v2878 = vadd.f32 %v2877, 1e-05
        %v2879 = vrsqrt.pop %v2878
        %v2880 = vmul.f32 %v2872, %v2879
        %v2882 = vlaneseq
        %v2883 = vshrl.u32 %v2882, 7
        %v2884 = vsub.s32 0, %v2883
        %v2885 = vrot.slane %v2866, %v2884
        %v2887 = vmul.f32 %v2880, %v2885
        %v2889 = vlaneseq
        %v2890 = vshrl.u32 %v2889, 7
        %v2891 = vsub.s32 0, %v2890
        %v2892 = vrot.slane %v2867, %v2891
        %v2894 = vadd.f32 %v2887, %v2892
        %v2895 = vld [vmem:[#allocation25] sm:$0xff]
        %v2896 = vld [vmem:[#allocation25 + $0x8] sm:$0xff]
        %v2897 = vld [vmem:[#allocation25 + $0x10] sm:$0xff]
        %v2898 = vld [vmem:[#allocation25 + $0x18] sm:$0xff]
        %v2899 = vld [vmem:[#allocation26] sm:$0x1]
        %v2901 = vlaneseq
        %v2902 = vshrl.u32 %v2901, 7
        %v2903 = vsub.s32 0, %v2902
        %v2904 = vrot.slane %v2899, %v2903
        %v2907 = vsel %vm1056, %v2894, 0
        %2909 = vmatprep.subr.mxu0 0.0
        %2910 = vmatpush1.msra.mxu0 0.0
        %2911 = vmatprep.subr.mxu0 0.0
        %2912 = vmatpush1.msra.mxu0 0.0
        %2913 = vmatprep.subr.mxu0 0.0
        %2914 = vmatpush1.msra.mxu0 0.0
        %2915 = vmatprep.subr.mxu0 0.0
        %2916 = vmatpush1.msra.mxu0 0.0
        %2917 = vmatprep.subr.mxu0 0.0
        %2918 = vmatpush1.msra.mxu0 0.0
        %2919 = vmatprep.subr.mxu0 0.0
        %2920 = vmatpush1.msra.mxu0 0.0
        %2921 = vmatprep.subr.mxu0 0.0
        %2922 = vmatpush1.msra.mxu0 0.0
        %2923 = vmatprep.subr.mxu0 0.0
        %2924 = vmatpush1.msra.mxu0 0.0
        %2925 = vmatprep.subr.mxu0 0.0
        %2926 = vmatpush1.msra.mxu0 0.0
        %2927 = vmatprep.subr.mxu0 0.0
        %2928 = vmatpush1.msra.mxu0 0.0
        %2929 = vmatprep.subr.mxu0 0.0
        %2930 = vmatpush1.msra.mxu0 0.0
        %2931 = vmatprep.subr.mxu0 0.0
        %2932 = vmatpush1.msra.mxu0 0.0
        %2933 = vmatprep.subr.mxu0 0.0
        %2934 = vmatpush1.msra.mxu0 %v2898
        %2935 = vmatprep.subr.mxu0 0.0
        %2936 = vmatpush1.msra.mxu0 %v2897
        %2937 = vmatprep.subr.mxu0 0.0
        %2938 = vmatpush1.msra.mxu0 %v2896
        %2939 = vmatprep.subr.mxu0 0.0
        %2940 = vmatpush1.msra.mxu0 %v2895
        %2941 = vmatprep.subr.mxu0 0.0
        %2942 = vmatpush2.msra.mxu0 0.0
        %2943 = vmatprep.subr.mxu0 0.0
        %2944 = vmatpush2.msra.mxu0 0.0
        %2945 = vmatprep.subr.mxu0 0.0
        %2946 = vmatpush2.msra.mxu0 0.0
        %2947 = vmatprep.subr.mxu0 0.0
        %2948 = vmatpush2.msra.mxu0 0.0
        %2949 = vmatprep.subr.mxu0 0.0
        %2950 = vmatpush2.msra.mxu0 0.0
        %2951 = vmatprep.subr.mxu0 0.0
        %2952 = vmatpush2.msra.mxu0 0.0
        %2953 = vmatprep.subr.mxu0 0.0
        %2954 = vmatpush2.msra.mxu0 0.0
        %2955 = vmatprep.subr.mxu0 0.0
        %2956 = vmatpush2.msra.mxu0 0.0
        %2957 = vmatprep.subr.mxu0 0.0
        %2958 = vmatpush2.msra.mxu0 0.0
        %2959 = vmatprep.subr.mxu0 0.0
        %2960 = vmatpush2.msra.mxu0 0.0
        %2961 = vmatprep.subr.mxu0 0.0
        %2962 = vmatpush2.msra.mxu0 0.0
        %2963 = vmatprep.subr.mxu0 0.0
        %2964 = vmatpush2.msra.mxu0 0.0
        %2965 = vmatprep.subr.mxu0 0.0
        %2966 = vmatpush2.msra.mxu0 0.0
        %2967 = vmatprep.subr.mxu0 0.0
        %2968 = vmatpush2.msra.mxu0 0.0
        %2969 = vmatprep.subr.mxu0 0.0
        %2970 = vmatpush2.msra.mxu0 0.0
        %2971 = vmatprep.subr.mxu0 0.0
        %2972 = vmatpush2.msra.mxu0 0.0
        %2973 = vmatprep.mubr.f32.mxu0 0.0
        %2974 = vmatmul.mubr.f32.gmra.mxu0 %v2907
        %v2975 = vpop.f32.mrf.mxu0
        %v2976 = vadd.f32 %v2904, %v2975
        %v2977 = vpop.f32.mrf.mxu0
        %2978 = vdwg.mxu0
        %v2979 = vmax.f32 %v2976, 0.0
        %v2980 = vld [vmem:[%s20] sm:$0xff]
        %v2981 = vld [vmem:[%s20 + $0x8] sm:$0xff]
        %v2982 = vld [vmem:[%s20 + $0x10] sm:$0xff]
        %v2983 = vld [vmem:[%s20 + $0x18] sm:$0xff]
        %v2984 = vld [vmem:[%s20 + $0x20] sm:$0xff]
        %v2985 = vld [vmem:[%s20 + $0x28] sm:$0xff]
        %v2986 = vld [vmem:[%s20 + $0x30] sm:$0xff]
        %v2987 = vld [vmem:[%s20 + $0x38] sm:$0xff]
        %v2988 = vld [vmem:[%s21] sm:$0x1]
        %v2990 = vlaneseq
        %v2991 = vshrl.u32 %v2990, 7
        %v2992 = vsub.s32 0, %v2991
        %v2993 = vrot.slane %v2988, %v2992
        %vm2995 = vcmask 523264
        %v2997 = vsel %vm2995, %v2979, 0
        %2999 = vmatprep.subr.mxu0 0.0
        %3000 = vmatpush1.msra.mxu0 0.0
        %3001 = vmatprep.subr.mxu0 0.0
        %3002 = vmatpush1.msra.mxu0 0.0
        %3003 = vmatprep.subr.mxu0 0.0
        %3004 = vmatpush1.msra.mxu0 0.0
        %3005 = vmatprep.subr.mxu0 0.0
        %3006 = vmatpush1.msra.mxu0 0.0
        %3007 = vmatprep.subr.mxu0 0.0
        %3008 = vmatpush1.msra.mxu0 0.0
        %3009 = vmatprep.subr.mxu0 0.0
        %3010 = vmatpush1.msra.mxu0 0.0
        %3011 = vmatprep.subr.mxu0 0.0
        %3012 = vmatpush1.msra.mxu0 0.0
        %3013 = vmatprep.subr.mxu0 0.0
        %3014 = vmatpush1.msra.mxu0 0.0
        %3015 = vmatprep.subr.mxu0 0.0
        %3016 = vmatpush1.msra.mxu0 %v2987
        %3017 = vmatprep.subr.mxu0 0.0
        %3018 = vmatpush1.msra.mxu0 %v2986
        %3019 = vmatprep.subr.mxu0 0.0
        %3020 = vmatpush1.msra.mxu0 %v2985
        %3021 = vmatprep.subr.mxu0 0.0
        %3022 = vmatpush1.msra.mxu0 %v2984
        %3023 = vmatprep.subr.mxu0 0.0
        %3024 = vmatpush1.msra.mxu0 %v2983
        %3025 = vmatprep.subr.mxu0 0.0
        %3026 = vmatpush1.msra.mxu0 %v2982
        %3027 = vmatprep.subr.mxu0 0.0
        %3028 = vmatpush1.msra.mxu0 %v2981
        %3029 = vmatprep.subr.mxu0 0.0
        %3030 = vmatpush1.msra.mxu0 %v2980
        %3031 = vmatprep.subr.mxu0 0.0
        %3032 = vmatpush2.msra.mxu0 0.0
        %3033 = vmatprep.subr.mxu0 0.0
        %3034 = vmatpush2.msra.mxu0 0.0
        %3035 = vmatprep.subr.mxu0 0.0
        %3036 = vmatpush2.msra.mxu0 0.0
        %3037 = vmatprep.subr.mxu0 0.0
        %3038 = vmatpush2.msra.mxu0 0.0
        %3039 = vmatprep.subr.mxu0 0.0
        %3040 = vmatpush2.msra.mxu0 0.0
        %3041 = vmatprep.subr.mxu0 0.0
        %3042 = vmatpush2.msra.mxu0 0.0
        %3043 = vmatprep.subr.mxu0 0.0
        %3044 = vmatpush2.msra.mxu0 0.0
        %3045 = vmatprep.subr.mxu0 0.0
        %3046 = vmatpush2.msra.mxu0 0.0
        %3047 = vmatprep.subr.mxu0 0.0
        %3048 = vmatpush2.msra.mxu0 0.0
        %3049 = vmatprep.subr.mxu0 0.0
        %3050 = vmatpush2.msra.mxu0 0.0
        %3051 = vmatprep.subr.mxu0 0.0
        %3052 = vmatpush2.msra.mxu0 0.0
        %3053 = vmatprep.subr.mxu0 0.0
        %3054 = vmatpush2.msra.mxu0 0.0
        %3055 = vmatprep.subr.mxu0 0.0
        %3056 = vmatpush2.msra.mxu0 0.0
        %3057 = vmatprep.subr.mxu0 0.0
        %3058 = vmatpush2.msra.mxu0 0.0
        %3059 = vmatprep.subr.mxu0 0.0
        %3060 = vmatpush2.msra.mxu0 0.0
        %3061 = vmatprep.subr.mxu0 0.0
        %3062 = vmatpush2.msra.mxu0 0.0
        %3063 = vmatprep.mubr.f32.mxu0 0.0
        %3064 = vmatmul.mubr.f32.gmra.mxu0 %v2997
        %v3065 = vpop.f32.mrf.mxu0
        %v3066 = vadd.f32 %v2993, %v3065
        %v3067 = vpop.f32.mrf.mxu0
        %3068 = vdwg.mxu0
        %v3069 = vadd.f32 %v2894, %v3066
        %v3070 = vld [vmem:[%s22] sm:$0x1]
        %v3071 = vld [vmem:[%s23] sm:$0x1]
        %v3072 = vsel %vm1056, %v3069, 0.0
        %3073 = vadd.xlane.f32.xlu0 %v3072
        %v3074 = vpop.xlane.xlu0 %3073
        %v3075 = vmul.f32 %v3074, %v1906
        %v3076 = vsub.f32 %v3069, %v3075
        %v3077 = vmul.f32 %v3076, %v3076
        %v3078 = vsel %vm1056, %v3077, 0.0
        %3079 = vadd.xlane.f32.xlu0 %v3078
        %v3080 = vpop.xlane.xlu0 %3079
        %v3081 = vmul.f32 %v3080, %v1906
        %v3082 = vadd.f32 %v3081, 1e-05
        %v3083 = vrsqrt.pop %v3082
        %v3084 = vmul.f32 %v3076, %v3083
        %v3086 = vlaneseq
        %v3087 = vshrl.u32 %v3086, 7
        %v3088 = vsub.s32 0, %v3087
        %v3089 = vrot.slane %v3070, %v3088
        %v3091 = vmul.f32 %v3084, %v3089
        %v3093 = vlaneseq
        %v3094 = vshrl.u32 %v3093, 7
        %v3095 = vsub.s32 0, %v3094
        %v3096 = vrot.slane %v3071, %v3095
        %v3098 = vadd.f32 %v3091, %v3096
        %3099 = vst.msk [vmem:[%s1028] sm:$0xff] %vm1056, %v3098
        %s3100 = sand.u32 %s579, 1
        %s3101 = scalar_lea.sflag [#allocation4], %s3100
        %s3102 = sand.u32 %s579, 1
        %s3103 = smul.addr %s3102, 8
        %s3104 = scalar_lea.vmem [#allocation28], %s3103
        %s3105 = sand.u32 %s57, 1
        %s3106 = scalar_lea.sflag [#allocation30], %s3105
        %s3107 = sand.u32 %s605, 1
        %s3108 = smul.addr %s3107, 32
        %s3109 = scalar_lea.vmem [#allocation29], %s3108
        %s3110 = sand.u32 %s57, 1
        %s3111 = scalar_lea.sflag [#allocation30], %s3110
        %s3112 = sand.u32 %s631, 1
        %s3113 = smul.addr %s3112, 32
        %s3114 = scalar_lea.vmem [#allocation31], %s3113
        // Predicated region
        $region181: #{tpu_custom_call.1} parent=115 // pred_check
          %p3115 = pneg %p589
        $region182: #{tpu_custom_call.1} parent=115 // pred_check_branch
          %3117 = sbr.rel (%p3115) target = $region184
        $region183: #{tpu_custom_call.1} parent=115 // pred_region
          %s3119 = ssub.s32 128, 128
          %3120 = vsyncadd %s3101, %s3119
          %s3121 = smul.addr %s57, 128
          %s3122 = scalar_lea.hbm %s24, %s3121
          %s3124 = sshll.u32 %s3104, 4
          %s3125 = int_to_ptr.vmem [resolvable:$true] %s3124
          %3127 = dma.vmem_to_hbm [thread:$0]  %s3125, 128, %s3122, %s3101
        $region184: #{tpu_custom_call.1} parent=115 // pred_fallthru
          _
        // Predicated region
        $region185: #{tpu_custom_call.1} parent=115 // pred_check
          %p3128 = pneg %p615
        $region186: #{tpu_custom_call.1} parent=115 // pred_check_branch
          %3130 = sbr.rel (%p3128) target = $region188
        $region187: #{tpu_custom_call.1} parent=115 // pred_region
          %s3132 = ssub.s32 512, 512
          %3133 = vsyncadd %s3106, %s3132
          %s3134 = smul.addr %s57, 4
          %s3135 = smul.addr %s3134, 128
          %s3136 = scalar_lea.hbm %s25, %s3135
          %s3137 = sshll.u32 %s3109, 4
          %s3138 = int_to_ptr.vmem [resolvable:$true] %s3137
          %3143 = dma.vmem_to_hbm [thread:$0]  %s3138, 512, %s3136, %s3106, 128, 128, 8
        $region188: #{tpu_custom_call.1} parent=115 // pred_fallthru
          _
        // Predicated region
        $region189: #{tpu_custom_call.1} parent=115 // pred_check
          %p3144 = pneg %p641
        $region190: #{tpu_custom_call.1} parent=115 // pred_check_branch
          %3146 = sbr.rel (%p3144) target = $region192
        $region191: #{tpu_custom_call.1} parent=115 // pred_region
          %s3148 = ssub.s32 512, 512
          %3149 = vsyncadd %s3111, %s3148
          %s3150 = smul.addr %s57, 4
          %s3151 = smul.addr %s3150, 128
          %s3152 = scalar_lea.hbm %s26, %s3151
          %s3153 = sshll.u32 %s3114, 4
          %s3154 = int_to_ptr.vmem [resolvable:$true] %s3153
          %3159 = dma.vmem_to_hbm [thread:$0]  %s3154, 512, %s3152, %s3111, 128, 128, 8
        $region192: #{tpu_custom_call.1} parent=115 // pred_fallthru
          _
      $region116: #{tpu_custom_call.1} parent=5 // pred_fallthru
        _
      %p3160 = scmp.le.s32.totalorder 2, %s52
      // Predicated region
      $region193: #{tpu_custom_call.1} parent=5 // pred_check
        %p3161 = pneg %p3160
      $region194: #{tpu_custom_call.1} parent=5 // pred_check_branch
        %3163 = sbr.rel (%p3161) target = $region196
      $region195: #{tpu_custom_call.1} parent=5 // pred_region
        %s3164 = ssub.s32 %s52, 2
        // Predicated region
        $region197: #{tpu_custom_call.1} parent=195 // pred_check
          %p3165 = pneg %p595
        $region198: #{tpu_custom_call.1} parent=195 // pred_check_branch
          %3167 = sbr.rel (%p3165) target = $region200
        $region199: #{tpu_custom_call.1} parent=195 // pred_region
          %s3168 = sand.u32 %s580, 1
          %s3169 = scalar_lea.sflag [#allocation4], %s3168
          %s3170 = sand.u32 %s580, 1
          %s3171 = smul.addr %s3170, 8
          %s3172 = scalar_lea.vmem [#allocation28], %s3171
          %3173 = dma.done %s3169, 128
        $region200: #{tpu_custom_call.1} parent=195 // pred_fallthru
          _
        // Predicated region
        $region201: #{tpu_custom_call.1} parent=195 // pred_check
          %p3174 = pneg %p621
        $region202: #{tpu_custom_call.1} parent=195 // pred_check_branch
          %3176 = sbr.rel (%p3174) target = $region204
        $region203: #{tpu_custom_call.1} parent=195 // pred_region
          %s3177 = sand.u32 %s58, 1
          %s3178 = scalar_lea.sflag [#allocation30], %s3177
          %s3179 = sand.u32 %s606, 1
          %s3180 = smul.addr %s3179, 32
          %s3181 = scalar_lea.vmem [#allocation29], %s3180
          %3182 = dma.done %s3178, 512
        $region204: #{tpu_custom_call.1} parent=195 // pred_fallthru
          _
        // Predicated region
        $region205: #{tpu_custom_call.1} parent=195 // pred_check
          %p3183 = pneg %p647
        $region206: #{tpu_custom_call.1} parent=195 // pred_check_branch
          %3185 = sbr.rel (%p3183) target = $region208
        $region207: #{tpu_custom_call.1} parent=195 // pred_region
          %s3186 = sand.u32 %s58, 1
          %s3187 = scalar_lea.sflag [#allocation30], %s3186
          %s3188 = sand.u32 %s632, 1
          %s3189 = smul.addr %s3188, 32
          %s3190 = scalar_lea.vmem [#allocation31], %s3189
          %3191 = dma.done %s3187, 512
        $region208: #{tpu_custom_call.1} parent=195 // pred_fallthru
          _
      $region196: #{tpu_custom_call.1} parent=5 // pred_fallthru
        _
    $region6: #{tpu_custom_call.1} parent=1 // loop_footer
      %s56 = sadd.s32 1, %s52
    $region7: #{tpu_custom_call.1} parent=1 // loop_footer_branch
      %51 = sbr.rel target = $region3
    $region8: #{tpu_custom_call.1} parent=1 // loop_exit
      _
    %3192 = vsyncpa [#allocation3], 1
    %s3193 = scalar_lea.sflag [#allocation3], 1
    %3194 = vsyncpa %s3193, 1
    %3195 = vsyncpa [#allocation6], 1
    %s3196 = scalar_lea.sflag [#allocation6], 1
    %3197 = vsyncpa %s3196, 1
    %3198 = vsyncpa [#allocation9], 1
    %3199 = vsyncpa [#allocation12], 1
    %3200 = vsyncpa [#allocation15], 1
    %3201 = vsyncpa [#allocation18], 1
    %3202 = vsyncpa [#allocation21], 1
    %3203 = vsyncpa [#allocation24], 1
    %3204 = vsyncpa [#allocation27], 1
    %3205 = vsyncpa [#allocation4], 1
    %s3206 = scalar_lea.sflag [#allocation4], 1
    %3207 = vsyncpa %s3206, 1
    %3208 = vsyncpa [#allocation30], 1
    %s3209 = scalar_lea.sflag [#allocation30], 1
    %3210 = vsyncpa %s3209, 1

</llo_original>
